<compile_context>
chip_gen: v7x
topology: tpu7x:2x2x1
jax: 0.10.0
libtpu: 0.0.40
codegen_flags: <defaults>
</compile_context>

<pallas_src>
import math
from functools import partial

import jax
import jax.numpy as jnp
from jax.experimental import pallas as pl
from jax.experimental.pallas import tpu as pltpu

LN_EPS_BERT = 1e-12      # BERT LayerNorm eps
LN_EPS_CLS = 1e-5        # nn.LayerNorm default eps
NEG_SLOPE = 0.01         # nn.LeakyReLU default negative_slope
HP = 128                 # lane-dense padding of the 11-wide LSTM/classifier features


def _layernorm(x, g, b, eps):
    mu = jnp.mean(x, axis=-1, keepdims=True)
    var = jnp.mean((x - mu) ** 2, axis=-1, keepdims=True)
    return (x - mu) * jax.lax.rsqrt(var + eps) * g + b


# ----------------------------- fused kernel ----------------------------------

def fused_forward_kernel(num_heads, num_layers, n_valid,
                         ids_ref, mask_ref, wemb_ref, pt_ref, eg_ref, eb_ref,
                         wqh_ref, wkh_ref, wvh_ref, bqh_ref, bkh_ref, bvh_ref,
                         woh_ref, bo_ref, ln1g_ref, ln1b_ref,
                         wi_ref, bi_ref, wo2_ref, bo2_ref, ln2g_ref, ln2b_ref,
                         wp_ref, bp_ref,
                         wih0_hbm, whh0_hbm, b0_ref, wl1_hbm, b1_ref,
                         sm_ref, wc_hbm, bc_ref, cg_ref, cb_ref,
                         out_ref,
                         wih0_buf, whh0_buf, wl1_buf, wc_buf, dma_sem):
    B, S = mask_ref.shape
    BS = B * S
    V, H = wemb_ref.shape
    nh = num_heads
    hd = H // nh

    # --- start DMA of the tail-stage (LSTM / classifier) weights now so their
    #     HBM->VMEM transfer overlaps the encoder compute (waited on before LSTM).
    tail_copies = (
        pltpu.make_async_copy(wih0_hbm, wih0_buf, dma_sem.at[0]),
        pltpu.make_async_copy(whh0_hbm, whh0_buf, dma_sem.at[1]),
        pltpu.make_async_copy(wl1_hbm, wl1_buf, dma_sem.at[2]),
        pltpu.make_async_copy(wc_hbm, wc_buf, dma_sem.at[3]),
    )
    for cp in tail_copies:
        cp.start()

    # --- embeddings: exact word-embedding row-select via one-hot matmul (MXU);
    #     position + token-type(0) rows pre-folded into pt_ref at pack time.
    onehot = (jax.lax.broadcasted_iota(jnp.int32, (BS, V), 1)
              == ids_ref[...]).astype(jnp.float32)
    wemb = jnp.dot(onehot, wemb_ref[...], preferred_element_type=jnp.float32)   # (BS,H)
    pt = pt_ref[...]
    emb = wemb.reshape(B, S, H) + pt[:S, :][None, :, :]
    x = _layernorm(emb.reshape(BS, H), eg_ref[...], eb_ref[...], LN_EPS_BERT)

    # additive attention mask, materialized ONCE as (B, S, S)
    mask_f = mask_ref[...].astype(jnp.float32)
    ext = jnp.broadcast_to(((1.0 - mask_f) * (-10000.0))[:, None, :], (B, S, S))

    def dense(v, w, b):                  # bf16 weights, f32 MXU accumulation
        return jnp.dot(v.astype(w.dtype), w, preferred_element_type=jnp.float32) + b

    # ---- encoder layers (static unroll; per-layer weights stacked on axis 0;
    #      q/k/v and output-projection weights pre-split per head at pack time
    #      so no sub-128-lane activation slicing happens in-kernel) -------------
    for l in range(num_layers):
        xb = x.astype(jnp.bfloat16)
        wq_l, wk_l, wv_l = wqh_ref[l], wkh_ref[l], wvh_ref[l]
        bq_l, bk_l, bv_l = bqh_ref[l], bkh_ref[l], bvh_ref[l]
        wo_l = woh_ref[l]

        head_outs = []
        for h in range(nh):              # static head loop, no lane slicing
            qh = (jnp.dot(xb, wq_l[h], preferred_element_type=jnp.float32)
                  + bq_l[h]).reshape(B, S, hd)         # 1/sqrt(hd) folded into Wq
            kh = (jnp.dot(xb, wk_l[h], preferred_element_type=jnp.float32)
                  + bk_l[h]).reshape(B, S, hd)
            vh = (jnp.dot(xb, wv_l[h], preferred_element_type=jnp.float32)
                  + bv_l[h]).reshape(B, S, hd)
            s = jnp.einsum('bid,bjd->bij', qh, kh,
                           preferred_element_type=jnp.float32) + ext
            m = jnp.max(s, axis=-1, keepdims=True)
            e = jnp.exp(s - m)
            p = e * pl.reciprocal(jnp.sum(e, axis=-1, keepdims=True), approx=True)
            ctx = jnp.einsum('bij,bjd->bid', p, vh,
                             preferred_element_type=jnp.float32).reshape(BS, hd)
            head_outs.append(jnp.dot(ctx.astype(wo_l.dtype), wo_l[h],
                                     preferred_element_type=jnp.float32))
        # balanced-tree accumulation of the per-head output projections
        while len(head_outs) > 1:
            head_outs = [head_outs[i] + head_outs[i + 1] if i + 1 < len(head_outs)
                         else head_outs[i]
                         for i in range(0, len(head_outs), 2)]
        attn = head_outs[0] + bo_ref[l]

        h1 = _layernorm(attn + x, ln1g_ref[l], ln1b_ref[l], LN_EPS_BERT)
        # TODO(synk): HF BERT uses exact erf-GELU; tanh-approx GELU used for robust lowering.
        inter = jax.nn.gelu(dense(h1, wi_ref[l], bi_ref[l]), approximate=True)
        ffn = dense(inter, wo2_ref[l], bo2_ref[l])
        x = _layernorm(ffn + h1, ln2g_ref[l], ln2b_ref[l], LN_EPS_BERT)

    # ---- BERT pooler on the CLS token -----------------------------------------
    cls = x.reshape(B, S, H)[:, 0, :]                                   # (B, H)
    pooled = jnp.tanh(jnp.dot(cls.astype(wp_ref.dtype), wp_ref[...],
                              preferred_element_type=jnp.float32) + bp_ref[...])

    # ---- tail-stage weights: DMA has been overlapping the encoder; wait now ---
    for cp in tail_copies:
        cp.wait()

    # ---- 2-layer LSTM over the batch axis --------------------------------------
    # (pooled.unsqueeze(0), batch_first=True => seq_len == B, batch == 1;
    #  inter-layer dropout(0.1) is identity at inference)
    # layer-0 input projection batched over all timesteps in ONE matmul:
    x_gates = (jnp.dot(pooled.astype(jnp.bfloat16), wih0_buf[...],
                       preferred_element_type=jnp.float32) + b0_ref[...])   # (B, 4*HP)
    w_hh0 = whh0_buf[...]
    w_l1 = wl1_buf[...]
    b1 = b1_ref[...]

    def gates(g):                        # gate blocks are 128-lane aligned
        i_g = jax.nn.sigmoid(g[:, 0 * HP:1 * HP])
        f_g = jax.nn.sigmoid(g[:, 1 * HP:2 * HP])
        g_g = jnp.tanh(g[:, 2 * HP:3 * HP])
        o_g = jax.nn.sigmoid(g[:, 3 * HP:4 * HP])
        return i_g, f_g, g_g, o_g

    h1s = jnp.zeros((1, HP), jnp.float32)
    c1s = jnp.zeros((1, HP), jnp.float32)
    h2s = jnp.zeros((1, HP), jnp.float32)
    c2s = jnp.zeros((1, HP), jnp.float32)
    outs = []
    for t in range(B):                   # static unroll; sequence length == B
        g1 = x_gates[t:t + 1, :] + jnp.dot(h1s.astype(jnp.bfloat16), w_hh0,
                                           preferred_element_type=jnp.float32)
        i1, f1, gg1, o1 = gates(g1)
        c1s = f1 * c1s + i1 * gg1
        h1s = o1 * jnp.tanh(c1s)
        # layer-1 input & recurrent weights fused: [h1 | h2] @ [[w_ih1],[w_hh1]]
        xh = jnp.concatenate([h1s, h2s], axis=-1)            # (1, 2*HP), tile-aligned
        g2 = jnp.dot(xh.astype(jnp.bfloat16), w_l1,
                     preferred_element_type=jnp.float32) + b1
        i2, f2, gg2, o2 = gates(g2)
        c2s = f2 * c2s + i2 * gg2
        h2s = o2 * jnp.tanh(c2s)
        outs.append(h2s)
    lstm_out = jnp.concatenate(outs, axis=0)                 # (B, HP); padded lanes == 0

    # ---- residual add + classifier head (lane-padded nv -> HP) ------------------
    # place last_layer_sm into lanes [0, n_valid) via an exact 0/1 selector matmul
    row = jax.lax.broadcasted_iota(jnp.int32, (n_valid, HP), 0)
    col = jax.lax.broadcasted_iota(jnp.int32, (n_valid, HP), 1)
    eye_pad = (row == col).astype(jnp.float32)
    sm_pad = jnp.dot(sm_ref[...], eye_pad, preferred_element_type=jnp.float32)
    feat = lstm_out + sm_pad                                  # (B, HP)

    lane = jax.lax.broadcasted_iota(jnp.int32, (1, HP), 1)
    fmask = (lane < n_valid).astype(jnp.float32)
    inv_n = 1.0 / float(n_valid)

    def ln_masked(v, g, b):              # LayerNorm over the first n_valid lanes only
        mu = jnp.sum(v * fmask, axis=-1, keepdims=True) * inv_n
        d = (v - mu) * fmask
        var = jnp.sum(d * d, axis=-1, keepdims=True) * inv_n
        return d * jax.lax.rsqrt(var + LN_EPS_CLS) * g + b    # padded g,b == 0

    hcl = feat
    for i in range(3):
        hcl = jnp.dot(hcl.astype(jnp.bfloat16), wc_buf[i],
                      preferred_element_type=jnp.float32) + bc_ref[i]
        hcl = ln_masked(hcl, cg_ref[i], cb_ref[i])
        hcl = jnp.where(hcl >= 0.0, hcl, NEG_SLOPE * hcl)     # LeakyReLU
        # Dropout(0.3) after blocks 1 & 2 is identity at inference

    out_ref[...] = hcl[:, :n_valid]                           # (B, n_valid)


# ----------------------------- wrapper ----------------------------------------

def bert_classifier_em_forward(params, input_ids, attention_mask, last_layer_sm, cfg):
    B, S = input_ids.shape
    H = cfg['hidden']
    nv = cfg['num_labels']

    vm = pl.BlockSpec(memory_space=pltpu.MemorySpace.VMEM)
    hbm = pl.BlockSpec(memory_space=pl.ANY)    # tail weights: manual DMA inside kernel

    ids2 = input_ids.reshape(B * S, 1).astype(jnp.int32)

    args_specs = [
        (ids2, vm), (attention_mask.astype(jnp.int32), vm),
        (params['word_emb'], vm), (params['pt_emb'], vm),
        (params['emb_ln_g'], vm), (params['emb_ln_b'], vm),
        (params['wqh'], vm), (params['wkh'], vm), (params['wvh'], vm),
        (params['bqh'], vm), (params['bkh'], vm), (params['bvh'], vm),
        (params['woh'], vm), (params['bo'], vm),
        (params['ln1_g'], vm), (params['ln1_b'], vm),
        (params['wi'], vm), (params['bi'], vm),
        (params['wo2'], vm), (params['bo2'], vm),
        (params['ln2_g'], vm), (params['ln2_b'], vm),
        (params['wp'], vm), (params['bp'], vm),
        (params['w_ih0'], hbm), (params['w_hh0'], hbm), (params['b_l0'], vm),
        (params['w_l1'], hbm), (params['b_l1'], vm),
        (last_layer_sm.astype(jnp.float32), vm),
        (params['wc'], hbm), (params['bc'], vm),
        (params['cg'], vm), (params['cb'], vm),
    ]
    args = [a for a, _ in args_specs]
    specs = [s for _, s in args_specs]

    return pl.pallas_call(
        partial(fused_forward_kernel, cfg['num_heads'], cfg['layers'], nv),
        out_shape=jax.ShapeDtypeStruct((B, nv), jnp.float32),
        in_specs=specs,
        out_specs=vm,
        scratch_shapes=[
            pltpu.VMEM((H, 4 * HP), jnp.bfloat16),        # w_ih0
            pltpu.VMEM((HP, 4 * HP), jnp.bfloat16),       # w_hh0
            pltpu.VMEM((2 * HP, 4 * HP), jnp.bfloat16),   # fused layer-1 [w_ih1; w_hh1]
            pltpu.VMEM((3, HP, HP), jnp.bfloat16),        # classifier weights
            pltpu.SemaphoreType.DMA((4,)),
        ],
    )(*args)


# ----------------------------- parameter packing ------------------------------

def init_params(key, cfg):
    H, I, L = cfg['hidden'], cfg['intermediate'], cfg['layers']
    nh = cfg['num_heads']
    hd = H // nh
    nv = cfg['num_labels']                 # == hidden_size of LSTM / classifier (11)
    keys = iter(jax.random.split(key, 64))

    def nrm(shape, scale=0.02):
        return (scale * jax.random.normal(next(keys), shape)).astype(jnp.float32)

    def padded(x, shape):
        z = jnp.zeros(shape, jnp.float32)
        return z.at[tuple(slice(0, s) for s in x.shape)].set(x)

    p = {}
    # embeddings (word table kept f32 so the in-kernel one-hot row-select is exact;
    # position + token-type(0) rows folded into one table at pack time)
    p['word_emb'] = nrm((cfg['vocab'], H))
    p['pt_emb'] = nrm((cfg['max_pos'], H)) + nrm((cfg['type_vocab'], H))[0][None, :]
    p['emb_ln_g'] = jnp.ones((1, H), jnp.float32)
    p['emb_ln_b'] = jnp.zeros((1, H), jnp.float32)

    # encoder: per-layer weights stacked on axis 0; q/k/v and output-projection
    # weights pre-split per attention head; 1/sqrt(hd) folded into Wq (and its bias);
    # matmul weights bf16, biases / LN params f32.
    wq = nrm((L, H, H)) * (1.0 / math.sqrt(hd))
    wk = nrm((L, H, H))
    wv = nrm((L, H, H))
    split = lambda w: w.reshape(L, H, nh, hd).transpose(0, 2, 1, 3).astype(jnp.bfloat16)
    p['wqh'], p['wkh'], p['wvh'] = split(wq), split(wk), split(wv)   # (L, nh, H, hd)
    p['bqh'] = jnp.zeros((L, nh, 1, hd), jnp.float32)
    p['bkh'] = jnp.zeros((L, nh, 1, hd), jnp.float32)
    p['bvh'] = jnp.zeros((L, nh, 1, hd), jnp.float32)
    p['woh'] = nrm((L, H, H)).reshape(L, nh, hd, H).astype(jnp.bfloat16)
    p['bo'] = jnp.zeros((L, 1, H), jnp.float32)
    p['ln1_g'] = jnp.ones((L, 1, H), jnp.float32)
    p['ln1_b'] = jnp.zeros((L, 1, H), jnp.float32)
    p['wi'] = nrm((L, H, I)).astype(jnp.bfloat16)
    p['bi'] = jnp.zeros((L, 1, I), jnp.float32)
    p['wo2'] = nrm((L, I, H)).astype(jnp.bfloat16)
    p['bo2'] = jnp.zeros((L, 1, H), jnp.float32)
    p['ln2_g'] = jnp.ones((L, 1, H), jnp.float32)
    p['ln2_b'] = jnp.zeros((L, 1, H), jnp.float32)

    # pooler (bf16 weight, f32 bias)
    p['wp'] = nrm((H, H), 0.05).astype(jnp.bfloat16)
    p['bp'] = jnp.zeros((1, H), jnp.float32)

    # 2-layer LSTM (hidden = nv), gate blocks [i|f|g|o] each lane-padded to HP so
    # gate slices stay 128-lane aligned; matmul weights bf16, combined biases f32.
    p['w_ih0'] = padded(nrm((H, 4, nv), 0.1), (H, 4, HP)).reshape(H, 4 * HP).astype(jnp.bfloat16)
    p['w_hh0'] = padded(nrm((nv, 4, nv), 0.1), (HP, 4, HP)).reshape(HP, 4 * HP).astype(jnp.bfloat16)
    p['b_l0'] = padded(nrm((1, 4, nv), 0.1), (1, 4, HP)).reshape(1, 4 * HP)   # b_ih + b_hh
    w_ih1 = padded(nrm((nv, 4, nv), 0.1), (HP, 4, HP)).reshape(HP, 4 * HP)
    w_hh1 = padded(nrm((nv, 4, nv), 0.1), (HP, 4, HP)).reshape(HP, 4 * HP)
    p['w_l1'] = jnp.concatenate([w_ih1, w_hh1], axis=0).astype(jnp.bfloat16)  # (2HP, 4HP)
    p['b_l1'] = padded(nrm((1, 4, nv), 0.1), (1, 4, HP)).reshape(1, 4 * HP)

    # classifier: 3x [Linear(nv,nv) -> LayerNorm(nv) -> LeakyReLU], lane-padded;
    # padded gamma/bias/weight rows & cols are exactly zero (keeps padded lanes 0).
    p['wc'] = padded(nrm((3, nv, nv), 0.3), (3, HP, HP)).astype(jnp.bfloat16)
    p['bc'] = padded(nrm((3, 1, nv), 0.1), (3, 1, HP))
    p['cg'] = padded(jnp.ones((3, 1, nv), jnp.float32), (3, 1, HP))           # padded gamma = 0
    p['cb'] = jnp.zeros((3, 1, HP), jnp.float32)
    return p


# ----------------------------- main --------------------------------------------

if __name__ == "__main__":
    cfg = dict(vocab=100, max_pos=16, type_vocab=2,
               hidden=32, num_heads=4, intermediate=128, layers=2,
               num_labels=11)

    key = jax.random.PRNGKey(0)
    pkey, ikey, skey = jax.random.split(key, 3)
    params = init_params(pkey, cfg)

    B, S = 2, 8
    input_ids = jax.random.randint(ikey, (B, S), 0, cfg['vocab'], dtype=jnp.int32)
    attention_mask = jnp.ones((B, S), jnp.int32).at[1, 6:].set(0)   # pad last 2 tokens of seq 1
    last_layer_sm = 0.1 * jax.random.normal(skey, (B, cfg['num_labels']), jnp.float32)

    fwd = jax.jit(partial(bert_classifier_em_forward, cfg=cfg))
    probs = fwd(params, input_ids, attention_mask, last_layer_sm)
    probs = jax.block_until_ready(probs)

    assert probs.shape == (B, cfg['num_labels']) and probs.dtype == jnp.float32
    assert bool(jnp.all(jnp.isfinite(probs)))
    print("KERNEL_OK")
</pallas_src>

<mosaic_0001>
module attributes {stable_mosaic.version = 11 : i64} {
  func.func @fused_forward_kernel(%arg0: memref<16x1xi32, #tpu.memory_space<vmem>>, %arg1: memref<2x8xi32, #tpu.memory_space<vmem>>, %arg2: memref<100x32xf32, #tpu.memory_space<vmem>>, %arg3: memref<16x32xf32, #tpu.memory_space<vmem>>, %arg4: memref<1x32xf32, #tpu.memory_space<vmem>>, %arg5: memref<1x32xf32, #tpu.memory_space<vmem>>, %arg6: memref<2x4x32x8xbf16, #tpu.memory_space<vmem>>, %arg7: memref<2x4x32x8xbf16, #tpu.memory_space<vmem>>, %arg8: memref<2x4x32x8xbf16, #tpu.memory_space<vmem>>, %arg9: memref<2x4x1x8xf32, #tpu.memory_space<vmem>>, %arg10: memref<2x4x1x8xf32, #tpu.memory_space<vmem>>, %arg11: memref<2x4x1x8xf32, #tpu.memory_space<vmem>>, %arg12: memref<2x4x8x32xbf16, #tpu.memory_space<vmem>>, %arg13: memref<2x1x32xf32, #tpu.memory_space<vmem>>, %arg14: memref<2x1x32xf32, #tpu.memory_space<vmem>>, %arg15: memref<2x1x32xf32, #tpu.memory_space<vmem>>, %arg16: memref<2x32x128xbf16, #tpu.memory_space<vmem>>, %arg17: memref<2x1x128xf32, #tpu.memory_space<vmem>>, %arg18: memref<2x128x32xbf16, #tpu.memory_space<vmem>>, %arg19: memref<2x1x32xf32, #tpu.memory_space<vmem>>, %arg20: memref<2x1x32xf32, #tpu.memory_space<vmem>>, %arg21: memref<2x1x32xf32, #tpu.memory_space<vmem>>, %arg22: memref<32x32xbf16, #tpu.memory_space<vmem>>, %arg23: memref<1x32xf32, #tpu.memory_space<vmem>>, %arg24: memref<32x512xbf16, #tpu.memory_space<any>>, %arg25: memref<128x512xbf16, #tpu.memory_space<any>>, %arg26: memref<1x512xf32, #tpu.memory_space<vmem>>, %arg27: memref<256x512xbf16, #tpu.memory_space<any>>, %arg28: memref<1x512xf32, #tpu.memory_space<vmem>>, %arg29: memref<2x11xf32, #tpu.memory_space<vmem>>, %arg30: memref<3x128x128xbf16, #tpu.memory_space<any>>, %arg31: memref<3x1x128xf32, #tpu.memory_space<vmem>>, %arg32: memref<3x1x128xf32, #tpu.memory_space<vmem>>, %arg33: memref<3x1x128xf32, #tpu.memory_space<vmem>>, %arg34: memref<2x11xf32, #tpu.memory_space<vmem>>, %arg35: memref<32x512xbf16, #tpu.memory_space<vmem>>, %arg36: memref<128x512xbf16, #tpu.memory_space<vmem>>, %arg37: memref<256x512xbf16, #tpu.memory_space<vmem>>, %arg38: memref<3x128x128xbf16, #tpu.memory_space<vmem>>, %arg39: memref<4x!tpu.dma_semaphore, #tpu.memory_space<semaphore_mem>>) attributes {dimension_semantics = [], scalar_prefetch = 0 : i64, scratch_operands = 5 : i64, tpu.core_type = #tpu.core_type<tc>} {
    %c0_i32 = arith.constant 0 : i32
    %0 = tpu.memref_slice %arg39[%c0_i32] : memref<4x!tpu.dma_semaphore, #tpu.memory_space<semaphore_mem>> -> memref<1x!tpu.dma_semaphore, #tpu.memory_space<semaphore_mem>>
    %1 = tpu.memref_squeeze %0 : memref<1x!tpu.dma_semaphore, #tpu.memory_space<semaphore_mem>> -> memref<!tpu.dma_semaphore, #tpu.memory_space<semaphore_mem>>
    tpu.enqueue_dma source(%arg24 : memref<32x512xbf16, #tpu.memory_space<any>>) target(%arg35 : memref<32x512xbf16, #tpu.memory_space<vmem>>) target_semaphore(%1 : memref<!tpu.dma_semaphore, #tpu.memory_space<semaphore_mem>>)
    %c1_i32 = arith.constant 1 : i32
    %2 = tpu.memref_slice %arg39[%c1_i32] : memref<4x!tpu.dma_semaphore, #tpu.memory_space<semaphore_mem>> -> memref<1x!tpu.dma_semaphore, #tpu.memory_space<semaphore_mem>>
    %3 = tpu.memref_squeeze %2 : memref<1x!tpu.dma_semaphore, #tpu.memory_space<semaphore_mem>> -> memref<!tpu.dma_semaphore, #tpu.memory_space<semaphore_mem>>
    tpu.enqueue_dma source(%arg25 : memref<128x512xbf16, #tpu.memory_space<any>>) target(%arg36 : memref<128x512xbf16, #tpu.memory_space<vmem>>) target_semaphore(%3 : memref<!tpu.dma_semaphore, #tpu.memory_space<semaphore_mem>>)
    %c2_i32 = arith.constant 2 : i32
    %4 = tpu.memref_slice %arg39[%c2_i32] : memref<4x!tpu.dma_semaphore, #tpu.memory_space<semaphore_mem>> -> memref<1x!tpu.dma_semaphore, #tpu.memory_space<semaphore_mem>>
    %5 = tpu.memref_squeeze %4 : memref<1x!tpu.dma_semaphore, #tpu.memory_space<semaphore_mem>> -> memref<!tpu.dma_semaphore, #tpu.memory_space<semaphore_mem>>
    tpu.enqueue_dma source(%arg27 : memref<256x512xbf16, #tpu.memory_space<any>>) target(%arg37 : memref<256x512xbf16, #tpu.memory_space<vmem>>) target_semaphore(%5 : memref<!tpu.dma_semaphore, #tpu.memory_space<semaphore_mem>>)
    %c3_i32 = arith.constant 3 : i32
    %6 = tpu.memref_slice %arg39[%c3_i32] : memref<4x!tpu.dma_semaphore, #tpu.memory_space<semaphore_mem>> -> memref<1x!tpu.dma_semaphore, #tpu.memory_space<semaphore_mem>>
    %7 = tpu.memref_squeeze %6 : memref<1x!tpu.dma_semaphore, #tpu.memory_space<semaphore_mem>> -> memref<!tpu.dma_semaphore, #tpu.memory_space<semaphore_mem>>
    tpu.enqueue_dma source(%arg30 : memref<3x128x128xbf16, #tpu.memory_space<any>>) target(%arg38 : memref<3x128x128xbf16, #tpu.memory_space<vmem>>) target_semaphore(%7 : memref<!tpu.dma_semaphore, #tpu.memory_space<semaphore_mem>>)
    %8 = tpu.iota {dimensions = array<i32: 1>} : vector<16x100xi32>
    %c0 = arith.constant 0 : index
    %c0_0 = arith.constant 0 : index
    %9 = vector.load %arg0[%c0, %c0_0] : memref<16x1xi32, #tpu.memory_space<vmem>>, vector<16x1xi32>
    %10 = vector.broadcast %9 : vector<16x1xi32> to vector<16x100xi32>
    %11 = arith.cmpi eq, %8, %10 : vector<16x100xi32>
    %12 = arith.extui %11 : vector<16x100xi1> to vector<16x100xi32>
    %13 = arith.sitofp %12 : vector<16x100xi32> to vector<16x100xf32>
    %c0_1 = arith.constant 0 : index
    %c0_2 = arith.constant 0 : index
    %14 = vector.load %arg2[%c0_1, %c0_2] : memref<100x32xf32, #tpu.memory_space<vmem>>, vector<100x32xf32>
    %cst = arith.constant dense<0.000000e+00> : vector<16x32xf32>
    %15 = tpu.matmul %13, %14, %cst {dimension_numbers = #tpu.dot_dimension_numbers<[1], [0], [0], [1], [0, 0, 1, 1], [], []>} : vector<16x100xf32>, vector<100x32xf32>, vector<16x32xf32> -> vector<16x32xf32>
    %c0_3 = arith.constant 0 : index
    %c0_4 = arith.constant 0 : index
    %16 = vector.load %arg3[%c0_3, %c0_4] : memref<16x32xf32, #tpu.memory_space<vmem>>, vector<16x32xf32>
    %17 = vector.shape_cast %15 : vector<16x32xf32> to vector<2x8x32xf32>
    %18 = vector.extract_strided_slice %16 {offsets = [0, 0], sizes = [8, 32], strides = [1, 1]} : vector<16x32xf32> to vector<8x32xf32>
    %19 = vector.shape_cast %18 : vector<8x32xf32> to vector<1x8x32xf32>
    %20 = vector.broadcast %19 : vector<1x8x32xf32> to vector<2x8x32xf32>
    %21 = arith.addf %17, %20 : vector<2x8x32xf32>
    %22 = vector.shape_cast %21 : vector<2x8x32xf32> to vector<16x32xf32>
    %c0_5 = arith.constant 0 : index
    %c0_6 = arith.constant 0 : index
    %23 = vector.load %arg4[%c0_5, %c0_6] : memref<1x32xf32, #tpu.memory_space<vmem>>, vector<1x32xf32>
    %c0_7 = arith.constant 0 : index
    %c0_8 = arith.constant 0 : index
    %24 = vector.load %arg5[%c0_7, %c0_8] : memref<1x32xf32, #tpu.memory_space<vmem>>, vector<1x32xf32>
    %cst_9 = arith.constant dense<0.000000e+00> : vector<16xf32>
    %25 = vector.multi_reduction <add>, %22, %cst_9 [1] : vector<16x32xf32> to vector<16xf32>
    %26 = vector.shape_cast %25 : vector<16xf32> to vector<16x1xf32>
    %cst_10 = arith.constant 3.200000e+01 : f32
    %27 = vector.broadcast %cst_10 : f32 to vector<16x1xf32>
    %28 = arith.divf %26, %27 : vector<16x1xf32>
    %29 = vector.broadcast %28 : vector<16x1xf32> to vector<16x32xf32>
    %30 = arith.subf %22, %29 : vector<16x32xf32>
    %31 = arith.mulf %30, %30 : vector<16x32xf32>
    %cst_11 = arith.constant dense<0.000000e+00> : vector<16xf32>
    %32 = vector.multi_reduction <add>, %31, %cst_11 [1] : vector<16x32xf32> to vector<16xf32>
    %33 = vector.shape_cast %32 : vector<16xf32> to vector<16x1xf32>
    %cst_12 = arith.constant 3.200000e+01 : f32
    %34 = vector.broadcast %cst_12 : f32 to vector<16x1xf32>
    %35 = arith.divf %33, %34 : vector<16x1xf32>
    %36 = vector.broadcast %28 : vector<16x1xf32> to vector<16x32xf32>
    %37 = arith.subf %22, %36 : vector<16x32xf32>
    %cst_13 = arith.constant 9.99999996E-13 : f32
    %38 = vector.broadcast %cst_13 : f32 to vector<16x1xf32>
    %39 = arith.addf %35, %38 : vector<16x1xf32>
    %40 = math.rsqrt %39 : vector<16x1xf32>
    %41 = vector.broadcast %40 : vector<16x1xf32> to vector<16x32xf32>
    %42 = arith.mulf %37, %41 : vector<16x32xf32>
    %43 = vector.broadcast %23 : vector<1x32xf32> to vector<16x32xf32>
    %44 = arith.mulf %42, %43 : vector<16x32xf32>
    %45 = vector.broadcast %24 : vector<1x32xf32> to vector<16x32xf32>
    %46 = arith.addf %44, %45 : vector<16x32xf32>
    %c0_14 = arith.constant 0 : index
    %c0_15 = arith.constant 0 : index
    %47 = vector.load %arg1[%c0_14, %c0_15] : memref<2x8xi32, #tpu.memory_space<vmem>>, vector<2x8xi32>
    %48 = arith.sitofp %47 : vector<2x8xi32> to vector<2x8xf32>
    %cst_16 = arith.constant 1.000000e+00 : f32
    %49 = vector.broadcast %cst_16 : f32 to vector<2x8xf32>
    %50 = arith.subf %49, %48 : vector<2x8xf32>
    %cst_17 = arith.constant -1.000000e+04 : f32
    %51 = vector.broadcast %cst_17 : f32 to vector<2x8xf32>
    %52 = arith.mulf %50, %51 : vector<2x8xf32>
    %53 = vector.shape_cast %52 : vector<2x8xf32> to vector<2x1x8xf32>
    %54 = vector.shape_cast %53 : vector<2x1x8xf32> to vector<2x1x8xf32>
    %55 = vector.broadcast %54 : vector<2x1x8xf32> to vector<2x8x8xf32>
    %56 = arith.truncf %46 : vector<16x32xf32> to vector<16x32xbf16>
    %c0_18 = arith.constant 0 : index
    %c0_19 = arith.constant 0 : index
    %c0_20 = arith.constant 0 : index
    %c0_21 = arith.constant 0 : index
    %57 = vector.load %arg6[%c0_18, %c0_19, %c0_20, %c0_21] : memref<2x4x32x8xbf16, #tpu.memory_space<vmem>>, vector<1x4x32x8xbf16>
    %58 = vector.shape_cast %57 : vector<1x4x32x8xbf16> to vector<4x32x8xbf16>
    %c0_22 = arith.constant 0 : index
    %c0_23 = arith.constant 0 : index
    %c0_24 = arith.constant 0 : index
    %c0_25 = arith.constant 0 : index
    %59 = vector.load %arg7[%c0_22, %c0_23, %c0_24, %c0_25] : memref<2x4x32x8xbf16, #tpu.memory_space<vmem>>, vector<1x4x32x8xbf16>
    %60 = vector.shape_cast %59 : vector<1x4x32x8xbf16> to vector<4x32x8xbf16>
    %c0_26 = arith.constant 0 : index
    %c0_27 = arith.constant 0 : index
    %c0_28 = arith.constant 0 : index
    %c0_29 = arith.constant 0 : index
    %61 = vector.load %arg8[%c0_26, %c0_27, %c0_28, %c0_29] : memref<2x4x32x8xbf16, #tpu.memory_space<vmem>>, vector<1x4x32x8xbf16>
    %62 = vector.shape_cast %61 : vector<1x4x32x8xbf16> to vector<4x32x8xbf16>
    %c0_30 = arith.constant 0 : index
    %c0_31 = arith.constant 0 : index
    %c0_32 = arith.constant 0 : index
    %c0_33 = arith.constant 0 : index
    %63 = vector.load %arg9[%c0_30, %c0_31, %c0_32, %c0_33] : memref<2x4x1x8xf32, #tpu.memory_space<vmem>>, vector<1x4x1x8xf32>
    %64 = vector.shape_cast %63 : vector<1x4x1x8xf32> to vector<4x1x8xf32>
    %c0_34 = arith.constant 0 : index
    %c0_35 = arith.constant 0 : index
    %c0_36 = arith.constant 0 : index
    %c0_37 = arith.constant 0 : index
    %65 = vector.load %arg10[%c0_34, %c0_35, %c0_36, %c0_37] : memref<2x4x1x8xf32, #tpu.memory_space<vmem>>, vector<1x4x1x8xf32>
    %66 = vector.shape_cast %65 : vector<1x4x1x8xf32> to vector<4x1x8xf32>
    %c0_38 = arith.constant 0 : index
    %c0_39 = arith.constant 0 : index
    %c0_40 = arith.constant 0 : index
    %c0_41 = arith.constant 0 : index
    %67 = vector.load %arg11[%c0_38, %c0_39, %c0_40, %c0_41] : memref<2x4x1x8xf32, #tpu.memory_space<vmem>>, vector<1x4x1x8xf32>
    %68 = vector.shape_cast %67 : vector<1x4x1x8xf32> to vector<4x1x8xf32>
    %c0_42 = arith.constant 0 : index
    %c0_43 = arith.constant 0 : index
    %c0_44 = arith.constant 0 : index
    %c0_45 = arith.constant 0 : index
    %69 = vector.load %arg12[%c0_42, %c0_43, %c0_44, %c0_45] : memref<2x4x8x32xbf16, #tpu.memory_space<vmem>>, vector<1x4x8x32xbf16>
    %70 = vector.shape_cast %69 : vector<1x4x8x32xbf16> to vector<4x8x32xbf16>
    %71 = vector.extract_strided_slice %58 {offsets = [0, 0, 0], sizes = [1, 32, 8], strides = [1, 1, 1]} : vector<4x32x8xbf16> to vector<1x32x8xbf16>
    %72 = vector.shape_cast %71 : vector<1x32x8xbf16> to vector<32x8xbf16>
    %cst_46 = arith.constant dense<0.000000e+00> : vector<16x8xf32>
    %73 = tpu.matmul %56, %72, %cst_46 {dimension_numbers = #tpu.dot_dimension_numbers<[1], [0], [0], [1], [0, 0, 1, 1], [], []>} : vector<16x32xbf16>, vector<32x8xbf16>, vector<16x8xf32> -> vector<16x8xf32>
    %74 = vector.extract_strided_slice %64 {offsets = [0, 0, 0], sizes = [1, 1, 8], strides = [1, 1, 1]} : vector<4x1x8xf32> to vector<1x1x8xf32>
    %75 = vector.shape_cast %74 : vector<1x1x8xf32> to vector<1x8xf32>
    %76 = vector.broadcast %75 : vector<1x8xf32> to vector<16x8xf32>
    %77 = arith.addf %73, %76 : vector<16x8xf32>
    %78 = vector.shape_cast %77 : vector<16x8xf32> to vector<2x8x8xf32>
    %79 = vector.extract_strided_slice %60 {offsets = [0, 0, 0], sizes = [1, 32, 8], strides = [1, 1, 1]} : vector<4x32x8xbf16> to vector<1x32x8xbf16>
    %80 = vector.shape_cast %79 : vector<1x32x8xbf16> to vector<32x8xbf16>
    %cst_47 = arith.constant dense<0.000000e+00> : vector<16x8xf32>
    %81 = tpu.matmul %56, %80, %cst_47 {dimension_numbers = #tpu.dot_dimension_numbers<[1], [0], [0], [1], [0, 0, 1, 1], [], []>} : vector<16x32xbf16>, vector<32x8xbf16>, vector<16x8xf32> -> vector<16x8xf32>
    %82 = vector.extract_strided_slice %66 {offsets = [0, 0, 0], sizes = [1, 1, 8], strides = [1, 1, 1]} : vector<4x1x8xf32> to vector<1x1x8xf32>
    %83 = vector.shape_cast %82 : vector<1x1x8xf32> to vector<1x8xf32>
    %84 = vector.broadcast %83 : vector<1x8xf32> to vector<16x8xf32>
    %85 = arith.addf %81, %84 : vector<16x8xf32>
    %86 = vector.shape_cast %85 : vector<16x8xf32> to vector<2x8x8xf32>
    %87 = vector.extract_strided_slice %62 {offsets = [0, 0, 0], sizes = [1, 32, 8], strides = [1, 1, 1]} : vector<4x32x8xbf16> to vector<1x32x8xbf16>
    %88 = vector.shape_cast %87 : vector<1x32x8xbf16> to vector<32x8xbf16>
    %cst_48 = arith.constant dense<0.000000e+00> : vector<16x8xf32>
    %89 = tpu.matmul %56, %88, %cst_48 {dimension_numbers = #tpu.dot_dimension_numbers<[1], [0], [0], [1], [0, 0, 1, 1], [], []>} : vector<16x32xbf16>, vector<32x8xbf16>, vector<16x8xf32> -> vector<16x8xf32>
    %90 = vector.extract_strided_slice %68 {offsets = [0, 0, 0], sizes = [1, 1, 8], strides = [1, 1, 1]} : vector<4x1x8xf32> to vector<1x1x8xf32>
    %91 = vector.shape_cast %90 : vector<1x1x8xf32> to vector<1x8xf32>
    %92 = vector.broadcast %91 : vector<1x8xf32> to vector<16x8xf32>
    %93 = arith.addf %89, %92 : vector<16x8xf32>
    %94 = vector.shape_cast %93 : vector<16x8xf32> to vector<2x8x8xf32>
    "tpu.trace_start"() <{level = 10 : i32, message = "bid,bjd->bij"}> : () -> ()
    %cst_49 = arith.constant dense<0.000000e+00> : vector<2x8x8xf32>
    %95 = tpu.matmul %78, %86, %cst_49 {dimension_numbers = #tpu.dot_dimension_numbers<[2], [2], [1], [1], [0, 0, 0, 1, 1, 1], [0], [0]>} : vector<2x8x8xf32>, vector<2x8x8xf32>, vector<2x8x8xf32> -> vector<2x8x8xf32>
    "tpu.trace_stop"() : () -> ()
    %96 = arith.addf %95, %55 : vector<2x8x8xf32>
    %cst_50 = arith.constant dense<0xFF800000> : vector<2x8xf32>
    %97 = vector.multi_reduction <maximumf>, %96, %cst_50 [2] : vector<2x8x8xf32> to vector<2x8xf32>
    %98 = vector.shape_cast %97 : vector<2x8xf32> to vector<2x8x1xf32>
    %99 = vector.broadcast %98 : vector<2x8x1xf32> to vector<2x8x8xf32>
    %100 = arith.subf %96, %99 : vector<2x8x8xf32>
    %101 = math.exp %100 : vector<2x8x8xf32>
    %cst_51 = arith.constant dense<0.000000e+00> : vector<2x8xf32>
    %102 = vector.multi_reduction <add>, %101, %cst_51 [2] : vector<2x8x8xf32> to vector<2x8xf32>
    %103 = vector.shape_cast %102 : vector<2x8xf32> to vector<2x8x1xf32>
    %104 = tpu.reciprocal %103 {approx = true} : vector<2x8x1xf32> -> vector<2x8x1xf32>
    %105 = vector.broadcast %104 : vector<2x8x1xf32> to vector<2x8x8xf32>
    %106 = arith.mulf %101, %105 : vector<2x8x8xf32>
    "tpu.trace_start"() <{level = 10 : i32, message = "bij,bjd->bid"}> : () -> ()
    %cst_52 = arith.constant dense<0.000000e+00> : vector<2x8x8xf32>
    %107 = tpu.matmul %106, %94, %cst_52 {dimension_numbers = #tpu.dot_dimension_numbers<[2], [1], [1], [2], [0, 0, 0, 1, 1, 2], [0], [0]>} : vector<2x8x8xf32>, vector<2x8x8xf32>, vector<2x8x8xf32> -> vector<2x8x8xf32>
    "tpu.trace_stop"() : () -> ()
    %108 = vector.shape_cast %107 : vector<2x8x8xf32> to vector<16x8xf32>
    %109 = arith.truncf %108 : vector<16x8xf32> to vector<16x8xbf16>
    %110 = vector.extract_strided_slice %70 {offsets = [0, 0, 0], sizes = [1, 8, 32], strides = [1, 1, 1]} : vector<4x8x32xbf16> to vector<1x8x32xbf16>
    %111 = vector.shape_cast %110 : vector<1x8x32xbf16> to vector<8x32xbf16>
    %cst_53 = arith.constant dense<0.000000e+00> : vector<16x32xf32>
    %112 = tpu.matmul %109, %111, %cst_53 {dimension_numbers = #tpu.dot_dimension_numbers<[1], [0], [0], [1], [0, 0, 1, 1], [], []>} : vector<16x8xbf16>, vector<8x32xbf16>, vector<16x32xf32> -> vector<16x32xf32>
    %113 = vector.extract_strided_slice %58 {offsets = [1, 0, 0], sizes = [1, 32, 8], strides = [1, 1, 1]} : vector<4x32x8xbf16> to vector<1x32x8xbf16>
    %114 = vector.shape_cast %113 : vector<1x32x8xbf16> to vector<32x8xbf16>
    %cst_54 = arith.constant dense<0.000000e+00> : vector<16x8xf32>
    %115 = tpu.matmul %56, %114, %cst_54 {dimension_numbers = #tpu.dot_dimension_numbers<[1], [0], [0], [1], [0, 0, 1, 1], [], []>} : vector<16x32xbf16>, vector<32x8xbf16>, vector<16x8xf32> -> vector<16x8xf32>
    %116 = vector.extract_strided_slice %64 {offsets = [1, 0, 0], sizes = [1, 1, 8], strides = [1, 1, 1]} : vector<4x1x8xf32> to vector<1x1x8xf32>
    %117 = vector.shape_cast %116 : vector<1x1x8xf32> to vector<1x8xf32>
    %118 = vector.broadcast %117 : vector<1x8xf32> to vector<16x8xf32>
    %119 = arith.addf %115, %118 : vector<16x8xf32>
    %120 = vector.shape_cast %119 : vector<16x8xf32> to vector<2x8x8xf32>
    %121 = vector.extract_strided_slice %60 {offsets = [1, 0, 0], sizes = [1, 32, 8], strides = [1, 1, 1]} : vector<4x32x8xbf16> to vector<1x32x8xbf16>
    %122 = vector.shape_cast %121 : vector<1x32x8xbf16> to vector<32x8xbf16>
    %cst_55 = arith.constant dense<0.000000e+00> : vector<16x8xf32>
    %123 = tpu.matmul %56, %122, %cst_55 {dimension_numbers = #tpu.dot_dimension_numbers<[1], [0], [0], [1], [0, 0, 1, 1], [], []>} : vector<16x32xbf16>, vector<32x8xbf16>, vector<16x8xf32> -> vector<16x8xf32>
    %124 = vector.extract_strided_slice %66 {offsets = [1, 0, 0], sizes = [1, 1, 8], strides = [1, 1, 1]} : vector<4x1x8xf32> to vector<1x1x8xf32>
    %125 = vector.shape_cast %124 : vector<1x1x8xf32> to vector<1x8xf32>
    %126 = vector.broadcast %125 : vector<1x8xf32> to vector<16x8xf32>
    %127 = arith.addf %123, %126 : vector<16x8xf32>
    %128 = vector.shape_cast %127 : vector<16x8xf32> to vector<2x8x8xf32>
    %129 = vector.extract_strided_slice %62 {offsets = [1, 0, 0], sizes = [1, 32, 8], strides = [1, 1, 1]} : vector<4x32x8xbf16> to vector<1x32x8xbf16>
    %130 = vector.shape_cast %129 : vector<1x32x8xbf16> to vector<32x8xbf16>
    %cst_56 = arith.constant dense<0.000000e+00> : vector<16x8xf32>
    %131 = tpu.matmul %56, %130, %cst_56 {dimension_numbers = #tpu.dot_dimension_numbers<[1], [0], [0], [1], [0, 0, 1, 1], [], []>} : vector<16x32xbf16>, vector<32x8xbf16>, vector<16x8xf32> -> vector<16x8xf32>
    %132 = vector.extract_strided_slice %68 {offsets = [1, 0, 0], sizes = [1, 1, 8], strides = [1, 1, 1]} : vector<4x1x8xf32> to vector<1x1x8xf32>
    %133 = vector.shape_cast %132 : vector<1x1x8xf32> to vector<1x8xf32>
    %134 = vector.broadcast %133 : vector<1x8xf32> to vector<16x8xf32>
    %135 = arith.addf %131, %134 : vector<16x8xf32>
    %136 = vector.shape_cast %135 : vector<16x8xf32> to vector<2x8x8xf32>
    "tpu.trace_start"() <{level = 10 : i32, message = "bid,bjd->bij"}> : () -> ()
    %cst_57 = arith.constant dense<0.000000e+00> : vector<2x8x8xf32>
    %137 = tpu.matmul %120, %128, %cst_57 {dimension_numbers = #tpu.dot_dimension_numbers<[2], [2], [1], [1], [0, 0, 0, 1, 1, 1], [0], [0]>} : vector<2x8x8xf32>, vector<2x8x8xf32>, vector<2x8x8xf32> -> vector<2x8x8xf32>
    "tpu.trace_stop"() : () -> ()
    %138 = arith.addf %137, %55 : vector<2x8x8xf32>
    %cst_58 = arith.constant dense<0xFF800000> : vector<2x8xf32>
    %139 = vector.multi_reduction <maximumf>, %138, %cst_58 [2] : vector<2x8x8xf32> to vector<2x8xf32>
    %140 = vector.shape_cast %139 : vector<2x8xf32> to vector<2x8x1xf32>
    %141 = vector.broadcast %140 : vector<2x8x1xf32> to vector<2x8x8xf32>
    %142 = arith.subf %138, %141 : vector<2x8x8xf32>
    %143 = math.exp %142 : vector<2x8x8xf32>
    %cst_59 = arith.constant dense<0.000000e+00> : vector<2x8xf32>
    %144 = vector.multi_reduction <add>, %143, %cst_59 [2] : vector<2x8x8xf32> to vector<2x8xf32>
    %145 = vector.shape_cast %144 : vector<2x8xf32> to vector<2x8x1xf32>
    %146 = tpu.reciprocal %145 {approx = true} : vector<2x8x1xf32> -> vector<2x8x1xf32>
    %147 = vector.broadcast %146 : vector<2x8x1xf32> to vector<2x8x8xf32>
    %148 = arith.mulf %143, %147 : vector<2x8x8xf32>
    "tpu.trace_start"() <{level = 10 : i32, message = "bij,bjd->bid"}> : () -> ()
    %cst_60 = arith.constant dense<0.000000e+00> : vector<2x8x8xf32>
    %149 = tpu.matmul %148, %136, %cst_60 {dimension_numbers = #tpu.dot_dimension_numbers<[2], [1], [1], [2], [0, 0, 0, 1, 1, 2], [0], [0]>} : vector<2x8x8xf32>, vector<2x8x8xf32>, vector<2x8x8xf32> -> vector<2x8x8xf32>
    "tpu.trace_stop"() : () -> ()
    %150 = vector.shape_cast %149 : vector<2x8x8xf32> to vector<16x8xf32>
    %151 = arith.truncf %150 : vector<16x8xf32> to vector<16x8xbf16>
    %152 = vector.extract_strided_slice %70 {offsets = [1, 0, 0], sizes = [1, 8, 32], strides = [1, 1, 1]} : vector<4x8x32xbf16> to vector<1x8x32xbf16>
    %153 = vector.shape_cast %152 : vector<1x8x32xbf16> to vector<8x32xbf16>
    %cst_61 = arith.constant dense<0.000000e+00> : vector<16x32xf32>
    %154 = tpu.matmul %151, %153, %cst_61 {dimension_numbers = #tpu.dot_dimension_numbers<[1], [0], [0], [1], [0, 0, 1, 1], [], []>} : vector<16x8xbf16>, vector<8x32xbf16>, vector<16x32xf32> -> vector<16x32xf32>
    %155 = vector.extract_strided_slice %58 {offsets = [2, 0, 0], sizes = [1, 32, 8], strides = [1, 1, 1]} : vector<4x32x8xbf16> to vector<1x32x8xbf16>
    %156 = vector.shape_cast %155 : vector<1x32x8xbf16> to vector<32x8xbf16>
    %cst_62 = arith.constant dense<0.000000e+00> : vector<16x8xf32>
    %157 = tpu.matmul %56, %156, %cst_62 {dimension_numbers = #tpu.dot_dimension_numbers<[1], [0], [0], [1], [0, 0, 1, 1], [], []>} : vector<16x32xbf16>, vector<32x8xbf16>, vector<16x8xf32> -> vector<16x8xf32>
    %158 = vector.extract_strided_slice %64 {offsets = [2, 0, 0], sizes = [1, 1, 8], strides = [1, 1, 1]} : vector<4x1x8xf32> to vector<1x1x8xf32>
    %159 = vector.shape_cast %158 : vector<1x1x8xf32> to vector<1x8xf32>
    %160 = vector.broadcast %159 : vector<1x8xf32> to vector<16x8xf32>
    %161 = arith.addf %157, %160 : vector<16x8xf32>
    %162 = vector.shape_cast %161 : vector<16x8xf32> to vector<2x8x8xf32>
    %163 = vector.extract_strided_slice %60 {offsets = [2, 0, 0], sizes = [1, 32, 8], strides = [1, 1, 1]} : vector<4x32x8xbf16> to vector<1x32x8xbf16>
    %164 = vector.shape_cast %163 : vector<1x32x8xbf16> to vector<32x8xbf16>
    %cst_63 = arith.constant dense<0.000000e+00> : vector<16x8xf32>
    %165 = tpu.matmul %56, %164, %cst_63 {dimension_numbers = #tpu.dot_dimension_numbers<[1], [0], [0], [1], [0, 0, 1, 1], [], []>} : vector<16x32xbf16>, vector<32x8xbf16>, vector<16x8xf32> -> vector<16x8xf32>
    %166 = vector.extract_strided_slice %66 {offsets = [2, 0, 0], sizes = [1, 1, 8], strides = [1, 1, 1]} : vector<4x1x8xf32> to vector<1x1x8xf32>
    %167 = vector.shape_cast %166 : vector<1x1x8xf32> to vector<1x8xf32>
    %168 = vector.broadcast %167 : vector<1x8xf32> to vector<16x8xf32>
    %169 = arith.addf %165, %168 : vector<16x8xf32>
    %170 = vector.shape_cast %169 : vector<16x8xf32> to vector<2x8x8xf32>
    %171 = vector.extract_strided_slice %62 {offsets = [2, 0, 0], sizes = [1, 32, 8], strides = [1, 1, 1]} : vector<4x32x8xbf16> to vector<1x32x8xbf16>
    %172 = vector.shape_cast %171 : vector<1x32x8xbf16> to vector<32x8xbf16>
    %cst_64 = arith.constant dense<0.000000e+00> : vector<16x8xf32>
    %173 = tpu.matmul %56, %172, %cst_64 {dimension_numbers = #tpu.dot_dimension_numbers<[1], [0], [0], [1], [0, 0, 1, 1], [], []>} : vector<16x32xbf16>, vector<32x8xbf16>, vector<16x8xf32> -> vector<16x8xf32>
    %174 = vector.extract_strided_slice %68 {offsets = [2, 0, 0], sizes = [1, 1, 8], strides = [1, 1, 1]} : vector<4x1x8xf32> to vector<1x1x8xf32>
    %175 = vector.shape_cast %174 : vector<1x1x8xf32> to vector<1x8xf32>
    %176 = vector.broadcast %175 : vector<1x8xf32> to vector<16x8xf32>
    %177 = arith.addf %173, %176 : vector<16x8xf32>
    %178 = vector.shape_cast %177 : vector<16x8xf32> to vector<2x8x8xf32>
    "tpu.trace_start"() <{level = 10 : i32, message = "bid,bjd->bij"}> : () -> ()
    %cst_65 = arith.constant dense<0.000000e+00> : vector<2x8x8xf32>
    %179 = tpu.matmul %162, %170, %cst_65 {dimension_numbers = #tpu.dot_dimension_numbers<[2], [2], [1], [1], [0, 0, 0, 1, 1, 1], [0], [0]>} : vector<2x8x8xf32>, vector<2x8x8xf32>, vector<2x8x8xf32> -> vector<2x8x8xf32>
    "tpu.trace_stop"() : () -> ()
    %180 = arith.addf %179, %55 : vector<2x8x8xf32>
    %cst_66 = arith.constant dense<0xFF800000> : vector<2x8xf32>
    %181 = vector.multi_reduction <maximumf>, %180, %cst_66 [2] : vector<2x8x8xf32> to vector<2x8xf32>
    %182 = vector.shape_cast %181 : vector<2x8xf32> to vector<2x8x1xf32>
    %183 = vector.broadcast %182 : vector<2x8x1xf32> to vector<2x8x8xf32>
    %184 = arith.subf %180, %183 : vector<2x8x8xf32>
    %185 = math.exp %184 : vector<2x8x8xf32>
    %cst_67 = arith.constant dense<0.000000e+00> : vector<2x8xf32>
    %186 = vector.multi_reduction <add>, %185, %cst_67 [2] : vector<2x8x8xf32> to vector<2x8xf32>
    %187 = vector.shape_cast %186 : vector<2x8xf32> to vector<2x8x1xf32>
    %188 = tpu.reciprocal %187 {approx = true} : vector<2x8x1xf32> -> vector<2x8x1xf32>
    %189 = vector.broadcast %188 : vector<2x8x1xf32> to vector<2x8x8xf32>
    %190 = arith.mulf %185, %189 : vector<2x8x8xf32>
    "tpu.trace_start"() <{level = 10 : i32, message = "bij,bjd->bid"}> : () -> ()
    %cst_68 = arith.constant dense<0.000000e+00> : vector<2x8x8xf32>
    %191 = tpu.matmul %190, %178, %cst_68 {dimension_numbers = #tpu.dot_dimension_numbers<[2], [1], [1], [2], [0, 0, 0, 1, 1, 2], [0], [0]>} : vector<2x8x8xf32>, vector<2x8x8xf32>, vector<2x8x8xf32> -> vector<2x8x8xf32>
    "tpu.trace_stop"() : () -> ()
    %192 = vector.shape_cast %191 : vector<2x8x8xf32> to vector<16x8xf32>
    %193 = arith.truncf %192 : vector<16x8xf32> to vector<16x8xbf16>
    %194 = vector.extract_strided_slice %70 {offsets = [2, 0, 0], sizes = [1, 8, 32], strides = [1, 1, 1]} : vector<4x8x32xbf16> to vector<1x8x32xbf16>
    %195 = vector.shape_cast %194 : vector<1x8x32xbf16> to vector<8x32xbf16>
    %cst_69 = arith.constant dense<0.000000e+00> : vector<16x32xf32>
    %196 = tpu.matmul %193, %195, %cst_69 {dimension_numbers = #tpu.dot_dimension_numbers<[1], [0], [0], [1], [0, 0, 1, 1], [], []>} : vector<16x8xbf16>, vector<8x32xbf16>, vector<16x32xf32> -> vector<16x32xf32>
    %197 = vector.extract_strided_slice %58 {offsets = [3, 0, 0], sizes = [1, 32, 8], strides = [1, 1, 1]} : vector<4x32x8xbf16> to vector<1x32x8xbf16>
    %198 = vector.shape_cast %197 : vector<1x32x8xbf16> to vector<32x8xbf16>
    %cst_70 = arith.constant dense<0.000000e+00> : vector<16x8xf32>
    %199 = tpu.matmul %56, %198, %cst_70 {dimension_numbers = #tpu.dot_dimension_numbers<[1], [0], [0], [1], [0, 0, 1, 1], [], []>} : vector<16x32xbf16>, vector<32x8xbf16>, vector<16x8xf32> -> vector<16x8xf32>
    %200 = vector.extract_strided_slice %64 {offsets = [3, 0, 0], sizes = [1, 1, 8], strides = [1, 1, 1]} : vector<4x1x8xf32> to vector<1x1x8xf32>
    %201 = vector.shape_cast %200 : vector<1x1x8xf32> to vector<1x8xf32>
    %202 = vector.broadcast %201 : vector<1x8xf32> to vector<16x8xf32>
    %203 = arith.addf %199, %202 : vector<16x8xf32>
    %204 = vector.shape_cast %203 : vector<16x8xf32> to vector<2x8x8xf32>
    %205 = vector.extract_strided_slice %60 {offsets = [3, 0, 0], sizes = [1, 32, 8], strides = [1, 1, 1]} : vector<4x32x8xbf16> to vector<1x32x8xbf16>
    %206 = vector.shape_cast %205 : vector<1x32x8xbf16> to vector<32x8xbf16>
    %cst_71 = arith.constant dense<0.000000e+00> : vector<16x8xf32>
    %207 = tpu.matmul %56, %206, %cst_71 {dimension_numbers = #tpu.dot_dimension_numbers<[1], [0], [0], [1], [0, 0, 1, 1], [], []>} : vector<16x32xbf16>, vector<32x8xbf16>, vector<16x8xf32> -> vector<16x8xf32>
    %208 = vector.extract_strided_slice %66 {offsets = [3, 0, 0], sizes = [1, 1, 8], strides = [1, 1, 1]} : vector<4x1x8xf32> to vector<1x1x8xf32>
    %209 = vector.shape_cast %208 : vector<1x1x8xf32> to vector<1x8xf32>
    %210 = vector.broadcast %209 : vector<1x8xf32> to vector<16x8xf32>
    %211 = arith.addf %207, %210 : vector<16x8xf32>
    %212 = vector.shape_cast %211 : vector<16x8xf32> to vector<2x8x8xf32>
    %213 = vector.extract_strided_slice %62 {offsets = [3, 0, 0], sizes = [1, 32, 8], strides = [1, 1, 1]} : vector<4x32x8xbf16> to vector<1x32x8xbf16>
    %214 = vector.shape_cast %213 : vector<1x32x8xbf16> to vector<32x8xbf16>
    %cst_72 = arith.constant dense<0.000000e+00> : vector<16x8xf32>
    %215 = tpu.matmul %56, %214, %cst_72 {dimension_numbers = #tpu.dot_dimension_numbers<[1], [0], [0], [1], [0, 0, 1, 1], [], []>} : vector<16x32xbf16>, vector<32x8xbf16>, vector<16x8xf32> -> vector<16x8xf32>
    %216 = vector.extract_strided_slice %68 {offsets = [3, 0, 0], sizes = [1, 1, 8], strides = [1, 1, 1]} : vector<4x1x8xf32> to vector<1x1x8xf32>
    %217 = vector.shape_cast %216 : vector<1x1x8xf32> to vector<1x8xf32>
    %218 = vector.broadcast %217 : vector<1x8xf32> to vector<16x8xf32>
    %219 = arith.addf %215, %218 : vector<16x8xf32>
    %220 = vector.shape_cast %219 : vector<16x8xf32> to vector<2x8x8xf32>
    "tpu.trace_start"() <{level = 10 : i32, message = "bid,bjd->bij"}> : () -> ()
    %cst_73 = arith.constant dense<0.000000e+00> : vector<2x8x8xf32>
    %221 = tpu.matmul %204, %212, %cst_73 {dimension_numbers = #tpu.dot_dimension_numbers<[2], [2], [1], [1], [0, 0, 0, 1, 1, 1], [0], [0]>} : vector<2x8x8xf32>, vector<2x8x8xf32>, vector<2x8x8xf32> -> vector<2x8x8xf32>
    "tpu.trace_stop"() : () -> ()
    %222 = arith.addf %221, %55 : vector<2x8x8xf32>
    %cst_74 = arith.constant dense<0xFF800000> : vector<2x8xf32>
    %223 = vector.multi_reduction <maximumf>, %222, %cst_74 [2] : vector<2x8x8xf32> to vector<2x8xf32>
    %224 = vector.shape_cast %223 : vector<2x8xf32> to vector<2x8x1xf32>
    %225 = vector.broadcast %224 : vector<2x8x1xf32> to vector<2x8x8xf32>
    %226 = arith.subf %222, %225 : vector<2x8x8xf32>
    %227 = math.exp %226 : vector<2x8x8xf32>
    %cst_75 = arith.constant dense<0.000000e+00> : vector<2x8xf32>
    %228 = vector.multi_reduction <add>, %227, %cst_75 [2] : vector<2x8x8xf32> to vector<2x8xf32>
    %229 = vector.shape_cast %228 : vector<2x8xf32> to vector<2x8x1xf32>
    %230 = tpu.reciprocal %229 {approx = true} : vector<2x8x1xf32> -> vector<2x8x1xf32>
    %231 = vector.broadcast %230 : vector<2x8x1xf32> to vector<2x8x8xf32>
    %232 = arith.mulf %227, %231 : vector<2x8x8xf32>
    "tpu.trace_start"() <{level = 10 : i32, message = "bij,bjd->bid"}> : () -> ()
    %cst_76 = arith.constant dense<0.000000e+00> : vector<2x8x8xf32>
    %233 = tpu.matmul %232, %220, %cst_76 {dimension_numbers = #tpu.dot_dimension_numbers<[2], [1], [1], [2], [0, 0, 0, 1, 1, 2], [0], [0]>} : vector<2x8x8xf32>, vector<2x8x8xf32>, vector<2x8x8xf32> -> vector<2x8x8xf32>
    "tpu.trace_stop"() : () -> ()
    %234 = vector.shape_cast %233 : vector<2x8x8xf32> to vector<16x8xf32>
    %235 = arith.truncf %234 : vector<16x8xf32> to vector<16x8xbf16>
    %236 = vector.extract_strided_slice %70 {offsets = [3, 0, 0], sizes = [1, 8, 32], strides = [1, 1, 1]} : vector<4x8x32xbf16> to vector<1x8x32xbf16>
    %237 = vector.shape_cast %236 : vector<1x8x32xbf16> to vector<8x32xbf16>
    %cst_77 = arith.constant dense<0.000000e+00> : vector<16x32xf32>
    %238 = tpu.matmul %235, %237, %cst_77 {dimension_numbers = #tpu.dot_dimension_numbers<[1], [0], [0], [1], [0, 0, 1, 1], [], []>} : vector<16x8xbf16>, vector<8x32xbf16>, vector<16x32xf32> -> vector<16x32xf32>
    %239 = arith.addf %112, %154 : vector<16x32xf32>
    %240 = arith.addf %196, %238 : vector<16x32xf32>
    %241 = arith.addf %239, %240 : vector<16x32xf32>
    %c0_78 = arith.constant 0 : index
    %c0_79 = arith.constant 0 : index
    %c0_80 = arith.constant 0 : index
    %242 = vector.load %arg13[%c0_78, %c0_79, %c0_80] : memref<2x1x32xf32, #tpu.memory_space<vmem>>, vector<1x1x32xf32>
    %243 = vector.shape_cast %242 : vector<1x1x32xf32> to vector<1x32xf32>
    %244 = vector.broadcast %243 : vector<1x32xf32> to vector<16x32xf32>
    %245 = arith.addf %241, %244 : vector<16x32xf32>
    %246 = arith.addf %245, %46 : vector<16x32xf32>
    %c0_81 = arith.constant 0 : index
    %c0_82 = arith.constant 0 : index
    %c0_83 = arith.constant 0 : index
    %247 = vector.load %arg14[%c0_81, %c0_82, %c0_83] : memref<2x1x32xf32, #tpu.memory_space<vmem>>, vector<1x1x32xf32>
    %248 = vector.shape_cast %247 : vector<1x1x32xf32> to vector<1x32xf32>
    %c0_84 = arith.constant 0 : index
    %c0_85 = arith.constant 0 : index
    %c0_86 = arith.constant 0 : index
    %249 = vector.load %arg15[%c0_84, %c0_85, %c0_86] : memref<2x1x32xf32, #tpu.memory_space<vmem>>, vector<1x1x32xf32>
    %250 = vector.shape_cast %249 : vector<1x1x32xf32> to vector<1x32xf32>
    %cst_87 = arith.constant dense<0.000000e+00> : vector<16xf32>
    %251 = vector.multi_reduction <add>, %246, %cst_87 [1] : vector<16x32xf32> to vector<16xf32>
    %252 = vector.shape_cast %251 : vector<16xf32> to vector<16x1xf32>
    %cst_88 = arith.constant 3.200000e+01 : f32
    %253 = vector.broadcast %cst_88 : f32 to vector<16x1xf32>
    %254 = arith.divf %252, %253 : vector<16x1xf32>
    %255 = vector.broadcast %254 : vector<16x1xf32> to vector<16x32xf32>
    %256 = arith.subf %246, %255 : vector<16x32xf32>
    %257 = arith.mulf %256, %256 : vector<16x32xf32>
    %cst_89 = arith.constant dense<0.000000e+00> : vector<16xf32>
    %258 = vector.multi_reduction <add>, %257, %cst_89 [1] : vector<16x32xf32> to vector<16xf32>
    %259 = vector.shape_cast %258 : vector<16xf32> to vector<16x1xf32>
    %cst_90 = arith.constant 3.200000e+01 : f32
    %260 = vector.broadcast %cst_90 : f32 to vector<16x1xf32>
    %261 = arith.divf %259, %260 : vector<16x1xf32>
    %262 = vector.broadcast %254 : vector<16x1xf32> to vector<16x32xf32>
    %263 = arith.subf %246, %262 : vector<16x32xf32>
    %cst_91 = arith.constant 9.99999996E-13 : f32
    %264 = vector.broadcast %cst_91 : f32 to vector<16x1xf32>
    %265 = arith.addf %261, %264 : vector<16x1xf32>
    %266 = math.rsqrt %265 : vector<16x1xf32>
    %267 = vector.broadcast %266 : vector<16x1xf32> to vector<16x32xf32>
    %268 = arith.mulf %263, %267 : vector<16x32xf32>
    %269 = vector.broadcast %248 : vector<1x32xf32> to vector<16x32xf32>
    %270 = arith.mulf %268, %269 : vector<16x32xf32>
    %271 = vector.broadcast %250 : vector<1x32xf32> to vector<16x32xf32>
    %272 = arith.addf %270, %271 : vector<16x32xf32>
    %c0_92 = arith.constant 0 : index
    %c0_93 = arith.constant 0 : index
    %c0_94 = arith.constant 0 : index
    %273 = vector.load %arg16[%c0_92, %c0_93, %c0_94] : memref<2x32x128xbf16, #tpu.memory_space<vmem>>, vector<1x32x128xbf16>
    %274 = vector.shape_cast %273 : vector<1x32x128xbf16> to vector<32x128xbf16>
    %c0_95 = arith.constant 0 : index
    %c0_96 = arith.constant 0 : index
    %c0_97 = arith.constant 0 : index
    %275 = vector.load %arg17[%c0_95, %c0_96, %c0_97] : memref<2x1x128xf32, #tpu.memory_space<vmem>>, vector<1x1x128xf32>
    %276 = vector.shape_cast %275 : vector<1x1x128xf32> to vector<1x128xf32>
    %277 = arith.truncf %272 : vector<16x32xf32> to vector<16x32xbf16>
    %cst_98 = arith.constant dense<0.000000e+00> : vector<16x128xf32>
    %278 = tpu.matmul %277, %274, %cst_98 {dimension_numbers = #tpu.dot_dimension_numbers<[1], [0], [0], [1], [0, 0, 1, 1], [], []>} : vector<16x32xbf16>, vector<32x128xbf16>, vector<16x128xf32> -> vector<16x128xf32>
    %279 = vector.broadcast %276 : vector<1x128xf32> to vector<16x128xf32>
    %280 = arith.addf %278, %279 : vector<16x128xf32>
    %281 = arith.mulf %280, %280 : vector<16x128xf32>
    %282 = arith.mulf %280, %281 : vector<16x128xf32>
    %cst_99 = arith.constant 4.471500e-02 : f32
    %283 = vector.broadcast %cst_99 : f32 to vector<16x128xf32>
    %284 = arith.mulf %283, %282 : vector<16x128xf32>
    %285 = arith.addf %280, %284 : vector<16x128xf32>
    %cst_100 = arith.constant 0.797884583 : f32
    %286 = vector.broadcast %cst_100 : f32 to vector<16x128xf32>
    %287 = arith.mulf %286, %285 : vector<16x128xf32>
    %288 = math.tanh %287 : vector<16x128xf32>
    %cst_101 = arith.constant 1.000000e+00 : f32
    %289 = vector.broadcast %cst_101 : f32 to vector<16x128xf32>
    %290 = arith.addf %289, %288 : vector<16x128xf32>
    %cst_102 = arith.constant 5.000000e-01 : f32
    %291 = vector.broadcast %cst_102 : f32 to vector<16x128xf32>
    %292 = arith.mulf %291, %290 : vector<16x128xf32>
    %293 = arith.mulf %280, %292 : vector<16x128xf32>
    %c0_103 = arith.constant 0 : index
    %c0_104 = arith.constant 0 : index
    %c0_105 = arith.constant 0 : index
    %294 = vector.load %arg18[%c0_103, %c0_104, %c0_105] : memref<2x128x32xbf16, #tpu.memory_space<vmem>>, vector<1x128x32xbf16>
    %295 = vector.shape_cast %294 : vector<1x128x32xbf16> to vector<128x32xbf16>
    %c0_106 = arith.constant 0 : index
    %c0_107 = arith.constant 0 : index
    %c0_108 = arith.constant 0 : index
    %296 = vector.load %arg19[%c0_106, %c0_107, %c0_108] : memref<2x1x32xf32, #tpu.memory_space<vmem>>, vector<1x1x32xf32>
    %297 = vector.shape_cast %296 : vector<1x1x32xf32> to vector<1x32xf32>
    %298 = arith.truncf %293 : vector<16x128xf32> to vector<16x128xbf16>
    %cst_109 = arith.constant dense<0.000000e+00> : vector<16x32xf32>
    %299 = tpu.matmul %298, %295, %cst_109 {dimension_numbers = #tpu.dot_dimension_numbers<[1], [0], [0], [1], [0, 0, 1, 1], [], []>} : vector<16x128xbf16>, vector<128x32xbf16>, vector<16x32xf32> -> vector<16x32xf32>
    %300 = vector.broadcast %297 : vector<1x32xf32> to vector<16x32xf32>
    %301 = arith.addf %299, %300 : vector<16x32xf32>
    %302 = arith.addf %301, %272 : vector<16x32xf32>
    %c0_110 = arith.constant 0 : index
    %c0_111 = arith.constant 0 : index
    %c0_112 = arith.constant 0 : index
    %303 = vector.load %arg20[%c0_110, %c0_111, %c0_112] : memref<2x1x32xf32, #tpu.memory_space<vmem>>, vector<1x1x32xf32>
    %304 = vector.shape_cast %303 : vector<1x1x32xf32> to vector<1x32xf32>
    %c0_113 = arith.constant 0 : index
    %c0_114 = arith.constant 0 : index
    %c0_115 = arith.constant 0 : index
    %305 = vector.load %arg21[%c0_113, %c0_114, %c0_115] : memref<2x1x32xf32, #tpu.memory_space<vmem>>, vector<1x1x32xf32>
    %306 = vector.shape_cast %305 : vector<1x1x32xf32> to vector<1x32xf32>
    %cst_116 = arith.constant dense<0.000000e+00> : vector<16xf32>
    %307 = vector.multi_reduction <add>, %302, %cst_116 [1] : vector<16x32xf32> to vector<16xf32>
    %308 = vector.shape_cast %307 : vector<16xf32> to vector<16x1xf32>
    %cst_117 = arith.constant 3.200000e+01 : f32
    %309 = vector.broadcast %cst_117 : f32 to vector<16x1xf32>
    %310 = arith.divf %308, %309 : vector<16x1xf32>
    %311 = vector.broadcast %310 : vector<16x1xf32> to vector<16x32xf32>
    %312 = arith.subf %302, %311 : vector<16x32xf32>
    %313 = arith.mulf %312, %312 : vector<16x32xf32>
    %cst_118 = arith.constant dense<0.000000e+00> : vector<16xf32>
    %314 = vector.multi_reduction <add>, %313, %cst_118 [1] : vector<16x32xf32> to vector<16xf32>
    %315 = vector.shape_cast %314 : vector<16xf32> to vector<16x1xf32>
    %cst_119 = arith.constant 3.200000e+01 : f32
    %316 = vector.broadcast %cst_119 : f32 to vector<16x1xf32>
    %317 = arith.divf %315, %316 : vector<16x1xf32>
    %318 = vector.broadcast %310 : vector<16x1xf32> to vector<16x32xf32>
    %319 = arith.subf %302, %318 : vector<16x32xf32>
    %cst_120 = arith.constant 9.99999996E-13 : f32
    %320 = vector.broadcast %cst_120 : f32 to vector<16x1xf32>
    %321 = arith.addf %317, %320 : vector<16x1xf32>
    %322 = math.rsqrt %321 : vector<16x1xf32>
    %323 = vector.broadcast %322 : vector<16x1xf32> to vector<16x32xf32>
    %324 = arith.mulf %319, %323 : vector<16x32xf32>
    %325 = vector.broadcast %304 : vector<1x32xf32> to vector<16x32xf32>
    %326 = arith.mulf %324, %325 : vector<16x32xf32>
    %327 = vector.broadcast %306 : vector<1x32xf32> to vector<16x32xf32>
    %328 = arith.addf %326, %327 : vector<16x32xf32>
    %329 = arith.truncf %328 : vector<16x32xf32> to vector<16x32xbf16>
    %c1 = arith.constant 1 : index
    %c0_121 = arith.constant 0 : index
    %c0_122 = arith.constant 0 : index
    %c0_123 = arith.constant 0 : index
    %330 = vector.load %arg6[%c1, %c0_121, %c0_122, %c0_123] : memref<2x4x32x8xbf16, #tpu.memory_space<vmem>>, vector<1x4x32x8xbf16>
    %331 = vector.shape_cast %330 : vector<1x4x32x8xbf16> to vector<4x32x8xbf16>
    %c1_124 = arith.constant 1 : index
    %c0_125 = arith.constant 0 : index
    %c0_126 = arith.constant 0 : index
    %c0_127 = arith.constant 0 : index
    %332 = vector.load %arg7[%c1_124, %c0_125, %c0_126, %c0_127] : memref<2x4x32x8xbf16, #tpu.memory_space<vmem>>, vector<1x4x32x8xbf16>
    %333 = vector.shape_cast %332 : vector<1x4x32x8xbf16> to vector<4x32x8xbf16>
    %c1_128 = arith.constant 1 : index
    %c0_129 = arith.constant 0 : index
    %c0_130 = arith.constant 0 : index
    %c0_131 = arith.constant 0 : index
    %334 = vector.load %arg8[%c1_128, %c0_129, %c0_130, %c0_131] : memref<2x4x32x8xbf16, #tpu.memory_space<vmem>>, vector<1x4x32x8xbf16>
    %335 = vector.shape_cast %334 : vector<1x4x32x8xbf16> to vector<4x32x8xbf16>
    %c1_132 = arith.constant 1 : index
    %c0_133 = arith.constant 0 : index
    %c0_134 = arith.constant 0 : index
    %c0_135 = arith.constant 0 : index
    %336 = vector.load %arg9[%c1_132, %c0_133, %c0_134, %c0_135] : memref<2x4x1x8xf32, #tpu.memory_space<vmem>>, vector<1x4x1x8xf32>
    %337 = vector.shape_cast %336 : vector<1x4x1x8xf32> to vector<4x1x8xf32>
    %c1_136 = arith.constant 1 : index
    %c0_137 = arith.constant 0 : index
    %c0_138 = arith.constant 0 : index
    %c0_139 = arith.constant 0 : index
    %338 = vector.load %arg10[%c1_136, %c0_137, %c0_138, %c0_139] : memref<2x4x1x8xf32, #tpu.memory_space<vmem>>, vector<1x4x1x8xf32>
    %339 = vector.shape_cast %338 : vector<1x4x1x8xf32> to vector<4x1x8xf32>
    %c1_140 = arith.constant 1 : index
    %c0_141 = arith.constant 0 : index
    %c0_142 = arith.constant 0 : index
    %c0_143 = arith.constant 0 : index
    %340 = vector.load %arg11[%c1_140, %c0_141, %c0_142, %c0_143] : memref<2x4x1x8xf32, #tpu.memory_space<vmem>>, vector<1x4x1x8xf32>
    %341 = vector.shape_cast %340 : vector<1x4x1x8xf32> to vector<4x1x8xf32>
    %c1_144 = arith.constant 1 : index
    %c0_145 = arith.constant 0 : index
    %c0_146 = arith.constant 0 : index
    %c0_147 = arith.constant 0 : index
    %342 = vector.load %arg12[%c1_144, %c0_145, %c0_146, %c0_147] : memref<2x4x8x32xbf16, #tpu.memory_space<vmem>>, vector<1x4x8x32xbf16>
    %343 = vector.shape_cast %342 : vector<1x4x8x32xbf16> to vector<4x8x32xbf16>
    %344 = vector.extract_strided_slice %331 {offsets = [0, 0, 0], sizes = [1, 32, 8], strides = [1, 1, 1]} : vector<4x32x8xbf16> to vector<1x32x8xbf16>
    %345 = vector.shape_cast %344 : vector<1x32x8xbf16> to vector<32x8xbf16>
    %cst_148 = arith.constant dense<0.000000e+00> : vector<16x8xf32>
    %346 = tpu.matmul %329, %345, %cst_148 {dimension_numbers = #tpu.dot_dimension_numbers<[1], [0], [0], [1], [0, 0, 1, 1], [], []>} : vector<16x32xbf16>, vector<32x8xbf16>, vector<16x8xf32> -> vector<16x8xf32>
    %347 = vector.extract_strided_slice %337 {offsets = [0, 0, 0], sizes = [1, 1, 8], strides = [1, 1, 1]} : vector<4x1x8xf32> to vector<1x1x8xf32>
    %348 = vector.shape_cast %347 : vector<1x1x8xf32> to vector<1x8xf32>
    %349 = vector.broadcast %348 : vector<1x8xf32> to vector<16x8xf32>
    %350 = arith.addf %346, %349 : vector<16x8xf32>
    %351 = vector.shape_cast %350 : vector<16x8xf32> to vector<2x8x8xf32>
    %352 = vector.extract_strided_slice %333 {offsets = [0, 0, 0], sizes = [1, 32, 8], strides = [1, 1, 1]} : vector<4x32x8xbf16> to vector<1x32x8xbf16>
    %353 = vector.shape_cast %352 : vector<1x32x8xbf16> to vector<32x8xbf16>
    %cst_149 = arith.constant dense<0.000000e+00> : vector<16x8xf32>
    %354 = tpu.matmul %329, %353, %cst_149 {dimension_numbers = #tpu.dot_dimension_numbers<[1], [0], [0], [1], [0, 0, 1, 1], [], []>} : vector<16x32xbf16>, vector<32x8xbf16>, vector<16x8xf32> -> vector<16x8xf32>
    %355 = vector.extract_strided_slice %339 {offsets = [0, 0, 0], sizes = [1, 1, 8], strides = [1, 1, 1]} : vector<4x1x8xf32> to vector<1x1x8xf32>
    %356 = vector.shape_cast %355 : vector<1x1x8xf32> to vector<1x8xf32>
    %357 = vector.broadcast %356 : vector<1x8xf32> to vector<16x8xf32>
    %358 = arith.addf %354, %357 : vector<16x8xf32>
    %359 = vector.shape_cast %358 : vector<16x8xf32> to vector<2x8x8xf32>
    %360 = vector.extract_strided_slice %335 {offsets = [0, 0, 0], sizes = [1, 32, 8], strides = [1, 1, 1]} : vector<4x32x8xbf16> to vector<1x32x8xbf16>
    %361 = vector.shape_cast %360 : vector<1x32x8xbf16> to vector<32x8xbf16>
    %cst_150 = arith.constant dense<0.000000e+00> : vector<16x8xf32>
    %362 = tpu.matmul %329, %361, %cst_150 {dimension_numbers = #tpu.dot_dimension_numbers<[1], [0], [0], [1], [0, 0, 1, 1], [], []>} : vector<16x32xbf16>, vector<32x8xbf16>, vector<16x8xf32> -> vector<16x8xf32>
    %363 = vector.extract_strided_slice %341 {offsets = [0, 0, 0], sizes = [1, 1, 8], strides = [1, 1, 1]} : vector<4x1x8xf32> to vector<1x1x8xf32>
    %364 = vector.shape_cast %363 : vector<1x1x8xf32> to vector<1x8xf32>
    %365 = vector.broadcast %364 : vector<1x8xf32> to vector<16x8xf32>
    %366 = arith.addf %362, %365 : vector<16x8xf32>
    %367 = vector.shape_cast %366 : vector<16x8xf32> to vector<2x8x8xf32>
    "tpu.trace_start"() <{level = 10 : i32, message = "bid,bjd->bij"}> : () -> ()
    %cst_151 = arith.constant dense<0.000000e+00> : vector<2x8x8xf32>
    %368 = tpu.matmul %351, %359, %cst_151 {dimension_numbers = #tpu.dot_dimension_numbers<[2], [2], [1], [1], [0, 0, 0, 1, 1, 1], [0], [0]>} : vector<2x8x8xf32>, vector<2x8x8xf32>, vector<2x8x8xf32> -> vector<2x8x8xf32>
    "tpu.trace_stop"() : () -> ()
    %369 = arith.addf %368, %55 : vector<2x8x8xf32>
    %cst_152 = arith.constant dense<0xFF800000> : vector<2x8xf32>
    %370 = vector.multi_reduction <maximumf>, %369, %cst_152 [2] : vector<2x8x8xf32> to vector<2x8xf32>
    %371 = vector.shape_cast %370 : vector<2x8xf32> to vector<2x8x1xf32>
    %372 = vector.broadcast %371 : vector<2x8x1xf32> to vector<2x8x8xf32>
    %373 = arith.subf %369, %372 : vector<2x8x8xf32>
    %374 = math.exp %373 : vector<2x8x8xf32>
    %cst_153 = arith.constant dense<0.000000e+00> : vector<2x8xf32>
    %375 = vector.multi_reduction <add>, %374, %cst_153 [2] : vector<2x8x8xf32> to vector<2x8xf32>
    %376 = vector.shape_cast %375 : vector<2x8xf32> to vector<2x8x1xf32>
    %377 = tpu.reciprocal %376 {approx = true} : vector<2x8x1xf32> -> vector<2x8x1xf32>
    %378 = vector.broadcast %377 : vector<2x8x1xf32> to vector<2x8x8xf32>
    %379 = arith.mulf %374, %378 : vector<2x8x8xf32>
    "tpu.trace_start"() <{level = 10 : i32, message = "bij,bjd->bid"}> : () -> ()
    %cst_154 = arith.constant dense<0.000000e+00> : vector<2x8x8xf32>
    %380 = tpu.matmul %379, %367, %cst_154 {dimension_numbers = #tpu.dot_dimension_numbers<[2], [1], [1], [2], [0, 0, 0, 1, 1, 2], [0], [0]>} : vector<2x8x8xf32>, vector<2x8x8xf32>, vector<2x8x8xf32> -> vector<2x8x8xf32>
    "tpu.trace_stop"() : () -> ()
    %381 = vector.shape_cast %380 : vector<2x8x8xf32> to vector<16x8xf32>
    %382 = arith.truncf %381 : vector<16x8xf32> to vector<16x8xbf16>
    %383 = vector.extract_strided_slice %343 {offsets = [0, 0, 0], sizes = [1, 8, 32], strides = [1, 1, 1]} : vector<4x8x32xbf16> to vector<1x8x32xbf16>
    %384 = vector.shape_cast %383 : vector<1x8x32xbf16> to vector<8x32xbf16>
    %cst_155 = arith.constant dense<0.000000e+00> : vector<16x32xf32>
    %385 = tpu.matmul %382, %384, %cst_155 {dimension_numbers = #tpu.dot_dimension_numbers<[1], [0], [0], [1], [0, 0, 1, 1], [], []>} : vector<16x8xbf16>, vector<8x32xbf16>, vector<16x32xf32> -> vector<16x32xf32>
    %386 = vector.extract_strided_slice %331 {offsets = [1, 0, 0], sizes = [1, 32, 8], strides = [1, 1, 1]} : vector<4x32x8xbf16> to vector<1x32x8xbf16>
    %387 = vector.shape_cast %386 : vector<1x32x8xbf16> to vector<32x8xbf16>
    %cst_156 = arith.constant dense<0.000000e+00> : vector<16x8xf32>
    %388 = tpu.matmul %329, %387, %cst_156 {dimension_numbers = #tpu.dot_dimension_numbers<[1], [0], [0], [1], [0, 0, 1, 1], [], []>} : vector<16x32xbf16>, vector<32x8xbf16>, vector<16x8xf32> -> vector<16x8xf32>
    %389 = vector.extract_strided_slice %337 {offsets = [1, 0, 0], sizes = [1, 1, 8], strides = [1, 1, 1]} : vector<4x1x8xf32> to vector<1x1x8xf32>
    %390 = vector.shape_cast %389 : vector<1x1x8xf32> to vector<1x8xf32>
    %391 = vector.broadcast %390 : vector<1x8xf32> to vector<16x8xf32>
    %392 = arith.addf %388, %391 : vector<16x8xf32>
    %393 = vector.shape_cast %392 : vector<16x8xf32> to vector<2x8x8xf32>
    %394 = vector.extract_strided_slice %333 {offsets = [1, 0, 0], sizes = [1, 32, 8], strides = [1, 1, 1]} : vector<4x32x8xbf16> to vector<1x32x8xbf16>
    %395 = vector.shape_cast %394 : vector<1x32x8xbf16> to vector<32x8xbf16>
    %cst_157 = arith.constant dense<0.000000e+00> : vector<16x8xf32>
    %396 = tpu.matmul %329, %395, %cst_157 {dimension_numbers = #tpu.dot_dimension_numbers<[1], [0], [0], [1], [0, 0, 1, 1], [], []>} : vector<16x32xbf16>, vector<32x8xbf16>, vector<16x8xf32> -> vector<16x8xf32>
    %397 = vector.extract_strided_slice %339 {offsets = [1, 0, 0], sizes = [1, 1, 8], strides = [1, 1, 1]} : vector<4x1x8xf32> to vector<1x1x8xf32>
    %398 = vector.shape_cast %397 : vector<1x1x8xf32> to vector<1x8xf32>
    %399 = vector.broadcast %398 : vector<1x8xf32> to vector<16x8xf32>
    %400 = arith.addf %396, %399 : vector<16x8xf32>
    %401 = vector.shape_cast %400 : vector<16x8xf32> to vector<2x8x8xf32>
    %402 = vector.extract_strided_slice %335 {offsets = [1, 0, 0], sizes = [1, 32, 8], strides = [1, 1, 1]} : vector<4x32x8xbf16> to vector<1x32x8xbf16>
    %403 = vector.shape_cast %402 : vector<1x32x8xbf16> to vector<32x8xbf16>
    %cst_158 = arith.constant dense<0.000000e+00> : vector<16x8xf32>
    %404 = tpu.matmul %329, %403, %cst_158 {dimension_numbers = #tpu.dot_dimension_numbers<[1], [0], [0], [1], [0, 0, 1, 1], [], []>} : vector<16x32xbf16>, vector<32x8xbf16>, vector<16x8xf32> -> vector<16x8xf32>
    %405 = vector.extract_strided_slice %341 {offsets = [1, 0, 0], sizes = [1, 1, 8], strides = [1, 1, 1]} : vector<4x1x8xf32> to vector<1x1x8xf32>
    %406 = vector.shape_cast %405 : vector<1x1x8xf32> to vector<1x8xf32>
    %407 = vector.broadcast %406 : vector<1x8xf32> to vector<16x8xf32>
    %408 = arith.addf %404, %407 : vector<16x8xf32>
    %409 = vector.shape_cast %408 : vector<16x8xf32> to vector<2x8x8xf32>
    "tpu.trace_start"() <{level = 10 : i32, message = "bid,bjd->bij"}> : () -> ()
    %cst_159 = arith.constant dense<0.000000e+00> : vector<2x8x8xf32>
    %410 = tpu.matmul %393, %401, %cst_159 {dimension_numbers = #tpu.dot_dimension_numbers<[2], [2], [1], [1], [0, 0, 0, 1, 1, 1], [0], [0]>} : vector<2x8x8xf32>, vector<2x8x8xf32>, vector<2x8x8xf32> -> vector<2x8x8xf32>
    "tpu.trace_stop"() : () -> ()
    %411 = arith.addf %410, %55 : vector<2x8x8xf32>
    %cst_160 = arith.constant dense<0xFF800000> : vector<2x8xf32>
    %412 = vector.multi_reduction <maximumf>, %411, %cst_160 [2] : vector<2x8x8xf32> to vector<2x8xf32>
    %413 = vector.shape_cast %412 : vector<2x8xf32> to vector<2x8x1xf32>
    %414 = vector.broadcast %413 : vector<2x8x1xf32> to vector<2x8x8xf32>
    %415 = arith.subf %411, %414 : vector<2x8x8xf32>
    %416 = math.exp %415 : vector<2x8x8xf32>
    %cst_161 = arith.constant dense<0.000000e+00> : vector<2x8xf32>
    %417 = vector.multi_reduction <add>, %416, %cst_161 [2] : vector<2x8x8xf32> to vector<2x8xf32>
    %418 = vector.shape_cast %417 : vector<2x8xf32> to vector<2x8x1xf32>
    %419 = tpu.reciprocal %418 {approx = true} : vector<2x8x1xf32> -> vector<2x8x1xf32>
    %420 = vector.broadcast %419 : vector<2x8x1xf32> to vector<2x8x8xf32>
    %421 = arith.mulf %416, %420 : vector<2x8x8xf32>
    "tpu.trace_start"() <{level = 10 : i32, message = "bij,bjd->bid"}> : () -> ()
    %cst_162 = arith.constant dense<0.000000e+00> : vector<2x8x8xf32>
    %422 = tpu.matmul %421, %409, %cst_162 {dimension_numbers = #tpu.dot_dimension_numbers<[2], [1], [1], [2], [0, 0, 0, 1, 1, 2], [0], [0]>} : vector<2x8x8xf32>, vector<2x8x8xf32>, vector<2x8x8xf32> -> vector<2x8x8xf32>
    "tpu.trace_stop"() : () -> ()
    %423 = vector.shape_cast %422 : vector<2x8x8xf32> to vector<16x8xf32>
    %424 = arith.truncf %423 : vector<16x8xf32> to vector<16x8xbf16>
    %425 = vector.extract_strided_slice %343 {offsets = [1, 0, 0], sizes = [1, 8, 32], strides = [1, 1, 1]} : vector<4x8x32xbf16> to vector<1x8x32xbf16>
    %426 = vector.shape_cast %425 : vector<1x8x32xbf16> to vector<8x32xbf16>
    %cst_163 = arith.constant dense<0.000000e+00> : vector<16x32xf32>
    %427 = tpu.matmul %424, %426, %cst_163 {dimension_numbers = #tpu.dot_dimension_numbers<[1], [0], [0], [1], [0, 0, 1, 1], [], []>} : vector<16x8xbf16>, vector<8x32xbf16>, vector<16x32xf32> -> vector<16x32xf32>
    %428 = vector.extract_strided_slice %331 {offsets = [2, 0, 0], sizes = [1, 32, 8], strides = [1, 1, 1]} : vector<4x32x8xbf16> to vector<1x32x8xbf16>
    %429 = vector.shape_cast %428 : vector<1x32x8xbf16> to vector<32x8xbf16>
    %cst_164 = arith.constant dense<0.000000e+00> : vector<16x8xf32>
    %430 = tpu.matmul %329, %429, %cst_164 {dimension_numbers = #tpu.dot_dimension_numbers<[1], [0], [0], [1], [0, 0, 1, 1], [], []>} : vector<16x32xbf16>, vector<32x8xbf16>, vector<16x8xf32> -> vector<16x8xf32>
    %431 = vector.extract_strided_slice %337 {offsets = [2, 0, 0], sizes = [1, 1, 8], strides = [1, 1, 1]} : vector<4x1x8xf32> to vector<1x1x8xf32>
    %432 = vector.shape_cast %431 : vector<1x1x8xf32> to vector<1x8xf32>
    %433 = vector.broadcast %432 : vector<1x8xf32> to vector<16x8xf32>
    %434 = arith.addf %430, %433 : vector<16x8xf32>
    %435 = vector.shape_cast %434 : vector<16x8xf32> to vector<2x8x8xf32>
    %436 = vector.extract_strided_slice %333 {offsets = [2, 0, 0], sizes = [1, 32, 8], strides = [1, 1, 1]} : vector<4x32x8xbf16> to vector<1x32x8xbf16>
    %437 = vector.shape_cast %436 : vector<1x32x8xbf16> to vector<32x8xbf16>
    %cst_165 = arith.constant dense<0.000000e+00> : vector<16x8xf32>
    %438 = tpu.matmul %329, %437, %cst_165 {dimension_numbers = #tpu.dot_dimension_numbers<[1], [0], [0], [1], [0, 0, 1, 1], [], []>} : vector<16x32xbf16>, vector<32x8xbf16>, vector<16x8xf32> -> vector<16x8xf32>
    %439 = vector.extract_strided_slice %339 {offsets = [2, 0, 0], sizes = [1, 1, 8], strides = [1, 1, 1]} : vector<4x1x8xf32> to vector<1x1x8xf32>
    %440 = vector.shape_cast %439 : vector<1x1x8xf32> to vector<1x8xf32>
    %441 = vector.broadcast %440 : vector<1x8xf32> to vector<16x8xf32>
    %442 = arith.addf %438, %441 : vector<16x8xf32>
    %443 = vector.shape_cast %442 : vector<16x8xf32> to vector<2x8x8xf32>
    %444 = vector.extract_strided_slice %335 {offsets = [2, 0, 0], sizes = [1, 32, 8], strides = [1, 1, 1]} : vector<4x32x8xbf16> to vector<1x32x8xbf16>
    %445 = vector.shape_cast %444 : vector<1x32x8xbf16> to vector<32x8xbf16>
    %cst_166 = arith.constant dense<0.000000e+00> : vector<16x8xf32>
    %446 = tpu.matmul %329, %445, %cst_166 {dimension_numbers = #tpu.dot_dimension_numbers<[1], [0], [0], [1], [0, 0, 1, 1], [], []>} : vector<16x32xbf16>, vector<32x8xbf16>, vector<16x8xf32> -> vector<16x8xf32>
    %447 = vector.extract_strided_slice %341 {offsets = [2, 0, 0], sizes = [1, 1, 8], strides = [1, 1, 1]} : vector<4x1x8xf32> to vector<1x1x8xf32>
    %448 = vector.shape_cast %447 : vector<1x1x8xf32> to vector<1x8xf32>
    %449 = vector.broadcast %448 : vector<1x8xf32> to vector<16x8xf32>
    %450 = arith.addf %446, %449 : vector<16x8xf32>
    %451 = vector.shape_cast %450 : vector<16x8xf32> to vector<2x8x8xf32>
    "tpu.trace_start"() <{level = 10 : i32, message = "bid,bjd->bij"}> : () -> ()
    %cst_167 = arith.constant dense<0.000000e+00> : vector<2x8x8xf32>
    %452 = tpu.matmul %435, %443, %cst_167 {dimension_numbers = #tpu.dot_dimension_numbers<[2], [2], [1], [1], [0, 0, 0, 1, 1, 1], [0], [0]>} : vector<2x8x8xf32>, vector<2x8x8xf32>, vector<2x8x8xf32> -> vector<2x8x8xf32>
    "tpu.trace_stop"() : () -> ()
    %453 = arith.addf %452, %55 : vector<2x8x8xf32>
    %cst_168 = arith.constant dense<0xFF800000> : vector<2x8xf32>
    %454 = vector.multi_reduction <maximumf>, %453, %cst_168 [2] : vector<2x8x8xf32> to vector<2x8xf32>
    %455 = vector.shape_cast %454 : vector<2x8xf32> to vector<2x8x1xf32>
    %456 = vector.broadcast %455 : vector<2x8x1xf32> to vector<2x8x8xf32>
    %457 = arith.subf %453, %456 : vector<2x8x8xf32>
    %458 = math.exp %457 : vector<2x8x8xf32>
    %cst_169 = arith.constant dense<0.000000e+00> : vector<2x8xf32>
    %459 = vector.multi_reduction <add>, %458, %cst_169 [2] : vector<2x8x8xf32> to vector<2x8xf32>
    %460 = vector.shape_cast %459 : vector<2x8xf32> to vector<2x8x1xf32>
    %461 = tpu.reciprocal %460 {approx = true} : vector<2x8x1xf32> -> vector<2x8x1xf32>
    %462 = vector.broadcast %461 : vector<2x8x1xf32> to vector<2x8x8xf32>
    %463 = arith.mulf %458, %462 : vector<2x8x8xf32>
    "tpu.trace_start"() <{level = 10 : i32, message = "bij,bjd->bid"}> : () -> ()
    %cst_170 = arith.constant dense<0.000000e+00> : vector<2x8x8xf32>
    %464 = tpu.matmul %463, %451, %cst_170 {dimension_numbers = #tpu.dot_dimension_numbers<[2], [1], [1], [2], [0, 0, 0, 1, 1, 2], [0], [0]>} : vector<2x8x8xf32>, vector<2x8x8xf32>, vector<2x8x8xf32> -> vector<2x8x8xf32>
    "tpu.trace_stop"() : () -> ()
    %465 = vector.shape_cast %464 : vector<2x8x8xf32> to vector<16x8xf32>
    %466 = arith.truncf %465 : vector<16x8xf32> to vector<16x8xbf16>
    %467 = vector.extract_strided_slice %343 {offsets = [2, 0, 0], sizes = [1, 8, 32], strides = [1, 1, 1]} : vector<4x8x32xbf16> to vector<1x8x32xbf16>
    %468 = vector.shape_cast %467 : vector<1x8x32xbf16> to vector<8x32xbf16>
    %cst_171 = arith.constant dense<0.000000e+00> : vector<16x32xf32>
    %469 = tpu.matmul %466, %468, %cst_171 {dimension_numbers = #tpu.dot_dimension_numbers<[1], [0], [0], [1], [0, 0, 1, 1], [], []>} : vector<16x8xbf16>, vector<8x32xbf16>, vector<16x32xf32> -> vector<16x32xf32>
    %470 = vector.extract_strided_slice %331 {offsets = [3, 0, 0], sizes = [1, 32, 8], strides = [1, 1, 1]} : vector<4x32x8xbf16> to vector<1x32x8xbf16>
    %471 = vector.shape_cast %470 : vector<1x32x8xbf16> to vector<32x8xbf16>
    %cst_172 = arith.constant dense<0.000000e+00> : vector<16x8xf32>
    %472 = tpu.matmul %329, %471, %cst_172 {dimension_numbers = #tpu.dot_dimension_numbers<[1], [0], [0], [1], [0, 0, 1, 1], [], []>} : vector<16x32xbf16>, vector<32x8xbf16>, vector<16x8xf32> -> vector<16x8xf32>
    %473 = vector.extract_strided_slice %337 {offsets = [3, 0, 0], sizes = [1, 1, 8], strides = [1, 1, 1]} : vector<4x1x8xf32> to vector<1x1x8xf32>
    %474 = vector.shape_cast %473 : vector<1x1x8xf32> to vector<1x8xf32>
    %475 = vector.broadcast %474 : vector<1x8xf32> to vector<16x8xf32>
    %476 = arith.addf %472, %475 : vector<16x8xf32>
    %477 = vector.shape_cast %476 : vector<16x8xf32> to vector<2x8x8xf32>
    %478 = vector.extract_strided_slice %333 {offsets = [3, 0, 0], sizes = [1, 32, 8], strides = [1, 1, 1]} : vector<4x32x8xbf16> to vector<1x32x8xbf16>
    %479 = vector.shape_cast %478 : vector<1x32x8xbf16> to vector<32x8xbf16>
    %cst_173 = arith.constant dense<0.000000e+00> : vector<16x8xf32>
    %480 = tpu.matmul %329, %479, %cst_173 {dimension_numbers = #tpu.dot_dimension_numbers<[1], [0], [0], [1], [0, 0, 1, 1], [], []>} : vector<16x32xbf16>, vector<32x8xbf16>, vector<16x8xf32> -> vector<16x8xf32>
    %481 = vector.extract_strided_slice %339 {offsets = [3, 0, 0], sizes = [1, 1, 8], strides = [1, 1, 1]} : vector<4x1x8xf32> to vector<1x1x8xf32>
    %482 = vector.shape_cast %481 : vector<1x1x8xf32> to vector<1x8xf32>
    %483 = vector.broadcast %482 : vector<1x8xf32> to vector<16x8xf32>
    %484 = arith.addf %480, %483 : vector<16x8xf32>
    %485 = vector.shape_cast %484 : vector<16x8xf32> to vector<2x8x8xf32>
    %486 = vector.extract_strided_slice %335 {offsets = [3, 0, 0], sizes = [1, 32, 8], strides = [1, 1, 1]} : vector<4x32x8xbf16> to vector<1x32x8xbf16>
    %487 = vector.shape_cast %486 : vector<1x32x8xbf16> to vector<32x8xbf16>
    %cst_174 = arith.constant dense<0.000000e+00> : vector<16x8xf32>
    %488 = tpu.matmul %329, %487, %cst_174 {dimension_numbers = #tpu.dot_dimension_numbers<[1], [0], [0], [1], [0, 0, 1, 1], [], []>} : vector<16x32xbf16>, vector<32x8xbf16>, vector<16x8xf32> -> vector<16x8xf32>
    %489 = vector.extract_strided_slice %341 {offsets = [3, 0, 0], sizes = [1, 1, 8], strides = [1, 1, 1]} : vector<4x1x8xf32> to vector<1x1x8xf32>
    %490 = vector.shape_cast %489 : vector<1x1x8xf32> to vector<1x8xf32>
    %491 = vector.broadcast %490 : vector<1x8xf32> to vector<16x8xf32>
    %492 = arith.addf %488, %491 : vector<16x8xf32>
    %493 = vector.shape_cast %492 : vector<16x8xf32> to vector<2x8x8xf32>
    "tpu.trace_start"() <{level = 10 : i32, message = "bid,bjd->bij"}> : () -> ()
    %cst_175 = arith.constant dense<0.000000e+00> : vector<2x8x8xf32>
    %494 = tpu.matmul %477, %485, %cst_175 {dimension_numbers = #tpu.dot_dimension_numbers<[2], [2], [1], [1], [0, 0, 0, 1, 1, 1], [0], [0]>} : vector<2x8x8xf32>, vector<2x8x8xf32>, vector<2x8x8xf32> -> vector<2x8x8xf32>
    "tpu.trace_stop"() : () -> ()
    %495 = arith.addf %494, %55 : vector<2x8x8xf32>
    %cst_176 = arith.constant dense<0xFF800000> : vector<2x8xf32>
    %496 = vector.multi_reduction <maximumf>, %495, %cst_176 [2] : vector<2x8x8xf32> to vector<2x8xf32>
    %497 = vector.shape_cast %496 : vector<2x8xf32> to vector<2x8x1xf32>
    %498 = vector.broadcast %497 : vector<2x8x1xf32> to vector<2x8x8xf32>
    %499 = arith.subf %495, %498 : vector<2x8x8xf32>
    %500 = math.exp %499 : vector<2x8x8xf32>
    %cst_177 = arith.constant dense<0.000000e+00> : vector<2x8xf32>
    %501 = vector.multi_reduction <add>, %500, %cst_177 [2] : vector<2x8x8xf32> to vector<2x8xf32>
    %502 = vector.shape_cast %501 : vector<2x8xf32> to vector<2x8x1xf32>
    %503 = tpu.reciprocal %502 {approx = true} : vector<2x8x1xf32> -> vector<2x8x1xf32>
    %504 = vector.broadcast %503 : vector<2x8x1xf32> to vector<2x8x8xf32>
    %505 = arith.mulf %500, %504 : vector<2x8x8xf32>
    "tpu.trace_start"() <{level = 10 : i32, message = "bij,bjd->bid"}> : () -> ()
    %cst_178 = arith.constant dense<0.000000e+00> : vector<2x8x8xf32>
    %506 = tpu.matmul %505, %493, %cst_178 {dimension_numbers = #tpu.dot_dimension_numbers<[2], [1], [1], [2], [0, 0, 0, 1, 1, 2], [0], [0]>} : vector<2x8x8xf32>, vector<2x8x8xf32>, vector<2x8x8xf32> -> vector<2x8x8xf32>
    "tpu.trace_stop"() : () -> ()
    %507 = vector.shape_cast %506 : vector<2x8x8xf32> to vector<16x8xf32>
    %508 = arith.truncf %507 : vector<16x8xf32> to vector<16x8xbf16>
    %509 = vector.extract_strided_slice %343 {offsets = [3, 0, 0], sizes = [1, 8, 32], strides = [1, 1, 1]} : vector<4x8x32xbf16> to vector<1x8x32xbf16>
    %510 = vector.shape_cast %509 : vector<1x8x32xbf16> to vector<8x32xbf16>
    %cst_179 = arith.constant dense<0.000000e+00> : vector<16x32xf32>
    %511 = tpu.matmul %508, %510, %cst_179 {dimension_numbers = #tpu.dot_dimension_numbers<[1], [0], [0], [1], [0, 0, 1, 1], [], []>} : vector<16x8xbf16>, vector<8x32xbf16>, vector<16x32xf32> -> vector<16x32xf32>
    %512 = arith.addf %385, %427 : vector<16x32xf32>
    %513 = arith.addf %469, %511 : vector<16x32xf32>
    %514 = arith.addf %512, %513 : vector<16x32xf32>
    %c1_180 = arith.constant 1 : index
    %c0_181 = arith.constant 0 : index
    %c0_182 = arith.constant 0 : index
    %515 = vector.load %arg13[%c1_180, %c0_181, %c0_182] : memref<2x1x32xf32, #tpu.memory_space<vmem>>, vector<1x1x32xf32>
    %516 = vector.shape_cast %515 : vector<1x1x32xf32> to vector<1x32xf32>
    %517 = vector.broadcast %516 : vector<1x32xf32> to vector<16x32xf32>
    %518 = arith.addf %514, %517 : vector<16x32xf32>
    %519 = arith.addf %518, %328 : vector<16x32xf32>
    %c1_183 = arith.constant 1 : index
    %c0_184 = arith.constant 0 : index
    %c0_185 = arith.constant 0 : index
    %520 = vector.load %arg14[%c1_183, %c0_184, %c0_185] : memref<2x1x32xf32, #tpu.memory_space<vmem>>, vector<1x1x32xf32>
    %521 = vector.shape_cast %520 : vector<1x1x32xf32> to vector<1x32xf32>
    %c1_186 = arith.constant 1 : index
    %c0_187 = arith.constant 0 : index
    %c0_188 = arith.constant 0 : index
    %522 = vector.load %arg15[%c1_186, %c0_187, %c0_188] : memref<2x1x32xf32, #tpu.memory_space<vmem>>, vector<1x1x32xf32>
    %523 = vector.shape_cast %522 : vector<1x1x32xf32> to vector<1x32xf32>
    %cst_189 = arith.constant dense<0.000000e+00> : vector<16xf32>
    %524 = vector.multi_reduction <add>, %519, %cst_189 [1] : vector<16x32xf32> to vector<16xf32>
    %525 = vector.shape_cast %524 : vector<16xf32> to vector<16x1xf32>
    %cst_190 = arith.constant 3.200000e+01 : f32
    %526 = vector.broadcast %cst_190 : f32 to vector<16x1xf32>
    %527 = arith.divf %525, %526 : vector<16x1xf32>
    %528 = vector.broadcast %527 : vector<16x1xf32> to vector<16x32xf32>
    %529 = arith.subf %519, %528 : vector<16x32xf32>
    %530 = arith.mulf %529, %529 : vector<16x32xf32>
    %cst_191 = arith.constant dense<0.000000e+00> : vector<16xf32>
    %531 = vector.multi_reduction <add>, %530, %cst_191 [1] : vector<16x32xf32> to vector<16xf32>
    %532 = vector.shape_cast %531 : vector<16xf32> to vector<16x1xf32>
    %cst_192 = arith.constant 3.200000e+01 : f32
    %533 = vector.broadcast %cst_192 : f32 to vector<16x1xf32>
    %534 = arith.divf %532, %533 : vector<16x1xf32>
    %535 = vector.broadcast %527 : vector<16x1xf32> to vector<16x32xf32>
    %536 = arith.subf %519, %535 : vector<16x32xf32>
    %cst_193 = arith.constant 9.99999996E-13 : f32
    %537 = vector.broadcast %cst_193 : f32 to vector<16x1xf32>
    %538 = arith.addf %534, %537 : vector<16x1xf32>
    %539 = math.rsqrt %538 : vector<16x1xf32>
    %540 = vector.broadcast %539 : vector<16x1xf32> to vector<16x32xf32>
    %541 = arith.mulf %536, %540 : vector<16x32xf32>
    %542 = vector.broadcast %521 : vector<1x32xf32> to vector<16x32xf32>
    %543 = arith.mulf %541, %542 : vector<16x32xf32>
    %544 = vector.broadcast %523 : vector<1x32xf32> to vector<16x32xf32>
    %545 = arith.addf %543, %544 : vector<16x32xf32>
    %c1_194 = arith.constant 1 : index
    %c0_195 = arith.constant 0 : index
    %c0_196 = arith.constant 0 : index
    %546 = vector.load %arg16[%c1_194, %c0_195, %c0_196] : memref<2x32x128xbf16, #tpu.memory_space<vmem>>, vector<1x32x128xbf16>
    %547 = vector.shape_cast %546 : vector<1x32x128xbf16> to vector<32x128xbf16>
    %c1_197 = arith.constant 1 : index
    %c0_198 = arith.constant 0 : index
    %c0_199 = arith.constant 0 : index
    %548 = vector.load %arg17[%c1_197, %c0_198, %c0_199] : memref<2x1x128xf32, #tpu.memory_space<vmem>>, vector<1x1x128xf32>
    %549 = vector.shape_cast %548 : vector<1x1x128xf32> to vector<1x128xf32>
    %550 = arith.truncf %545 : vector<16x32xf32> to vector<16x32xbf16>
    %cst_200 = arith.constant dense<0.000000e+00> : vector<16x128xf32>
    %551 = tpu.matmul %550, %547, %cst_200 {dimension_numbers = #tpu.dot_dimension_numbers<[1], [0], [0], [1], [0, 0, 1, 1], [], []>} : vector<16x32xbf16>, vector<32x128xbf16>, vector<16x128xf32> -> vector<16x128xf32>
    %552 = vector.broadcast %549 : vector<1x128xf32> to vector<16x128xf32>
    %553 = arith.addf %551, %552 : vector<16x128xf32>
    %554 = arith.mulf %553, %553 : vector<16x128xf32>
    %555 = arith.mulf %553, %554 : vector<16x128xf32>
    %cst_201 = arith.constant 4.471500e-02 : f32
    %556 = vector.broadcast %cst_201 : f32 to vector<16x128xf32>
    %557 = arith.mulf %556, %555 : vector<16x128xf32>
    %558 = arith.addf %553, %557 : vector<16x128xf32>
    %cst_202 = arith.constant 0.797884583 : f32
    %559 = vector.broadcast %cst_202 : f32 to vector<16x128xf32>
    %560 = arith.mulf %559, %558 : vector<16x128xf32>
    %561 = math.tanh %560 : vector<16x128xf32>
    %cst_203 = arith.constant 1.000000e+00 : f32
    %562 = vector.broadcast %cst_203 : f32 to vector<16x128xf32>
    %563 = arith.addf %562, %561 : vector<16x128xf32>
    %cst_204 = arith.constant 5.000000e-01 : f32
    %564 = vector.broadcast %cst_204 : f32 to vector<16x128xf32>
    %565 = arith.mulf %564, %563 : vector<16x128xf32>
    %566 = arith.mulf %553, %565 : vector<16x128xf32>
    %c1_205 = arith.constant 1 : index
    %c0_206 = arith.constant 0 : index
    %c0_207 = arith.constant 0 : index
    %567 = vector.load %arg18[%c1_205, %c0_206, %c0_207] : memref<2x128x32xbf16, #tpu.memory_space<vmem>>, vector<1x128x32xbf16>
    %568 = vector.shape_cast %567 : vector<1x128x32xbf16> to vector<128x32xbf16>
    %c1_208 = arith.constant 1 : index
    %c0_209 = arith.constant 0 : index
    %c0_210 = arith.constant 0 : index
    %569 = vector.load %arg19[%c1_208, %c0_209, %c0_210] : memref<2x1x32xf32, #tpu.memory_space<vmem>>, vector<1x1x32xf32>
    %570 = vector.shape_cast %569 : vector<1x1x32xf32> to vector<1x32xf32>
    %571 = arith.truncf %566 : vector<16x128xf32> to vector<16x128xbf16>
    %cst_211 = arith.constant dense<0.000000e+00> : vector<16x32xf32>
    %572 = tpu.matmul %571, %568, %cst_211 {dimension_numbers = #tpu.dot_dimension_numbers<[1], [0], [0], [1], [0, 0, 1, 1], [], []>} : vector<16x128xbf16>, vector<128x32xbf16>, vector<16x32xf32> -> vector<16x32xf32>
    %573 = vector.broadcast %570 : vector<1x32xf32> to vector<16x32xf32>
    %574 = arith.addf %572, %573 : vector<16x32xf32>
    %575 = arith.addf %574, %545 : vector<16x32xf32>
    %c1_212 = arith.constant 1 : index
    %c0_213 = arith.constant 0 : index
    %c0_214 = arith.constant 0 : index
    %576 = vector.load %arg20[%c1_212, %c0_213, %c0_214] : memref<2x1x32xf32, #tpu.memory_space<vmem>>, vector<1x1x32xf32>
    %577 = vector.shape_cast %576 : vector<1x1x32xf32> to vector<1x32xf32>
    %c1_215 = arith.constant 1 : index
    %c0_216 = arith.constant 0 : index
    %c0_217 = arith.constant 0 : index
    %578 = vector.load %arg21[%c1_215, %c0_216, %c0_217] : memref<2x1x32xf32, #tpu.memory_space<vmem>>, vector<1x1x32xf32>
    %579 = vector.shape_cast %578 : vector<1x1x32xf32> to vector<1x32xf32>
    %cst_218 = arith.constant dense<0.000000e+00> : vector<16xf32>
    %580 = vector.multi_reduction <add>, %575, %cst_218 [1] : vector<16x32xf32> to vector<16xf32>
    %581 = vector.shape_cast %580 : vector<16xf32> to vector<16x1xf32>
    %cst_219 = arith.constant 3.200000e+01 : f32
    %582 = vector.broadcast %cst_219 : f32 to vector<16x1xf32>
    %583 = arith.divf %581, %582 : vector<16x1xf32>
    %584 = vector.broadcast %583 : vector<16x1xf32> to vector<16x32xf32>
    %585 = arith.subf %575, %584 : vector<16x32xf32>
    %586 = arith.mulf %585, %585 : vector<16x32xf32>
    %cst_220 = arith.constant dense<0.000000e+00> : vector<16xf32>
    %587 = vector.multi_reduction <add>, %586, %cst_220 [1] : vector<16x32xf32> to vector<16xf32>
    %588 = vector.shape_cast %587 : vector<16xf32> to vector<16x1xf32>
    %cst_221 = arith.constant 3.200000e+01 : f32
    %589 = vector.broadcast %cst_221 : f32 to vector<16x1xf32>
    %590 = arith.divf %588, %589 : vector<16x1xf32>
    %591 = vector.broadcast %583 : vector<16x1xf32> to vector<16x32xf32>
    %592 = arith.subf %575, %591 : vector<16x32xf32>
    %cst_222 = arith.constant 9.99999996E-13 : f32
    %593 = vector.broadcast %cst_222 : f32 to vector<16x1xf32>
    %594 = arith.addf %590, %593 : vector<16x1xf32>
    %595 = math.rsqrt %594 : vector<16x1xf32>
    %596 = vector.broadcast %595 : vector<16x1xf32> to vector<16x32xf32>
    %597 = arith.mulf %592, %596 : vector<16x32xf32>
    %598 = vector.broadcast %577 : vector<1x32xf32> to vector<16x32xf32>
    %599 = arith.mulf %597, %598 : vector<16x32xf32>
    %600 = vector.broadcast %579 : vector<1x32xf32> to vector<16x32xf32>
    %601 = arith.addf %599, %600 : vector<16x32xf32>
    %602 = vector.shape_cast %601 : vector<16x32xf32> to vector<2x8x32xf32>
    %603 = vector.extract_strided_slice %602 {offsets = [0, 0, 0], sizes = [2, 1, 32], strides = [1, 1, 1]} : vector<2x8x32xf32> to vector<2x1x32xf32>
    %604 = vector.shape_cast %603 : vector<2x1x32xf32> to vector<2x32xf32>
    %605 = arith.truncf %604 : vector<2x32xf32> to vector<2x32xbf16>
    %c0_223 = arith.constant 0 : index
    %c0_224 = arith.constant 0 : index
    %606 = vector.load %arg22[%c0_223, %c0_224] : memref<32x32xbf16, #tpu.memory_space<vmem>>, vector<32x32xbf16>
    %cst_225 = arith.constant dense<0.000000e+00> : vector<2x32xf32>
    %607 = tpu.matmul %605, %606, %cst_225 {dimension_numbers = #tpu.dot_dimension_numbers<[1], [0], [0], [1], [0, 0, 1, 1], [], []>} : vector<2x32xbf16>, vector<32x32xbf16>, vector<2x32xf32> -> vector<2x32xf32>
    %c0_226 = arith.constant 0 : index
    %c0_227 = arith.constant 0 : index
    %608 = vector.load %arg23[%c0_226, %c0_227] : memref<1x32xf32, #tpu.memory_space<vmem>>, vector<1x32xf32>
    %609 = vector.broadcast %608 : vector<1x32xf32> to vector<2x32xf32>
    %610 = arith.addf %607, %609 : vector<2x32xf32>
    %611 = math.tanh %610 : vector<2x32xf32>
    %c0_i32_228 = arith.constant 0 : i32
    %612 = tpu.memref_slice %arg39[%c0_i32_228] : memref<4x!tpu.dma_semaphore, #tpu.memory_space<semaphore_mem>> -> memref<1x!tpu.dma_semaphore, #tpu.memory_space<semaphore_mem>>
    %613 = tpu.memref_squeeze %612 : memref<1x!tpu.dma_semaphore, #tpu.memory_space<semaphore_mem>> -> memref<!tpu.dma_semaphore, #tpu.memory_space<semaphore_mem>>
    tpu.wait_dma2 semaphore(%613 : memref<!tpu.dma_semaphore, #tpu.memory_space<semaphore_mem>>) src(%arg24 : memref<32x512xbf16, #tpu.memory_space<any>>) dst(%arg35 : memref<32x512xbf16, #tpu.memory_space<vmem>>)
    %c1_i32_229 = arith.constant 1 : i32
    %614 = tpu.memref_slice %arg39[%c1_i32_229] : memref<4x!tpu.dma_semaphore, #tpu.memory_space<semaphore_mem>> -> memref<1x!tpu.dma_semaphore, #tpu.memory_space<semaphore_mem>>
    %615 = tpu.memref_squeeze %614 : memref<1x!tpu.dma_semaphore, #tpu.memory_space<semaphore_mem>> -> memref<!tpu.dma_semaphore, #tpu.memory_space<semaphore_mem>>
    tpu.wait_dma2 semaphore(%615 : memref<!tpu.dma_semaphore, #tpu.memory_space<semaphore_mem>>) src(%arg25 : memref<128x512xbf16, #tpu.memory_space<any>>) dst(%arg36 : memref<128x512xbf16, #tpu.memory_space<vmem>>)
    %c2_i32_230 = arith.constant 2 : i32
    %616 = tpu.memref_slice %arg39[%c2_i32_230] : memref<4x!tpu.dma_semaphore, #tpu.memory_space<semaphore_mem>> -> memref<1x!tpu.dma_semaphore, #tpu.memory_space<semaphore_mem>>
    %617 = tpu.memref_squeeze %616 : memref<1x!tpu.dma_semaphore, #tpu.memory_space<semaphore_mem>> -> memref<!tpu.dma_semaphore, #tpu.memory_space<semaphore_mem>>
    tpu.wait_dma2 semaphore(%617 : memref<!tpu.dma_semaphore, #tpu.memory_space<semaphore_mem>>) src(%arg27 : memref<256x512xbf16, #tpu.memory_space<any>>) dst(%arg37 : memref<256x512xbf16, #tpu.memory_space<vmem>>)
    %c3_i32_231 = arith.constant 3 : i32
    %618 = tpu.memref_slice %arg39[%c3_i32_231] : memref<4x!tpu.dma_semaphore, #tpu.memory_space<semaphore_mem>> -> memref<1x!tpu.dma_semaphore, #tpu.memory_space<semaphore_mem>>
    %619 = tpu.memref_squeeze %618 : memref<1x!tpu.dma_semaphore, #tpu.memory_space<semaphore_mem>> -> memref<!tpu.dma_semaphore, #tpu.memory_space<semaphore_mem>>
    tpu.wait_dma2 semaphore(%619 : memref<!tpu.dma_semaphore, #tpu.memory_space<semaphore_mem>>) src(%arg30 : memref<3x128x128xbf16, #tpu.memory_space<any>>) dst(%arg38 : memref<3x128x128xbf16, #tpu.memory_space<vmem>>)
    %620 = arith.truncf %611 : vector<2x32xf32> to vector<2x32xbf16>
    %c0_232 = arith.constant 0 : index
    %c0_233 = arith.constant 0 : index
    %621 = vector.load %arg35[%c0_232, %c0_233] : memref<32x512xbf16, #tpu.memory_space<vmem>>, vector<32x512xbf16>
    %cst_234 = arith.constant dense<0.000000e+00> : vector<2x512xf32>
    %622 = tpu.matmul %620, %621, %cst_234 {dimension_numbers = #tpu.dot_dimension_numbers<[1], [0], [0], [1], [0, 0, 1, 1], [], []>} : vector<2x32xbf16>, vector<32x512xbf16>, vector<2x512xf32> -> vector<2x512xf32>
    %c0_235 = arith.constant 0 : index
    %c0_236 = arith.constant 0 : index
    %623 = vector.load %arg26[%c0_235, %c0_236] : memref<1x512xf32, #tpu.memory_space<vmem>>, vector<1x512xf32>
    %624 = vector.broadcast %623 : vector<1x512xf32> to vector<2x512xf32>
    %625 = arith.addf %622, %624 : vector<2x512xf32>
    %c0_237 = arith.constant 0 : index
    %c0_238 = arith.constant 0 : index
    %626 = vector.load %arg36[%c0_237, %c0_238] : memref<128x512xbf16, #tpu.memory_space<vmem>>, vector<128x512xbf16>
    %c0_239 = arith.constant 0 : index
    %c0_240 = arith.constant 0 : index
    %627 = vector.load %arg37[%c0_239, %c0_240] : memref<256x512xbf16, #tpu.memory_space<vmem>>, vector<256x512xbf16>
    %c0_241 = arith.constant 0 : index
    %c0_242 = arith.constant 0 : index
    %628 = vector.load %arg28[%c0_241, %c0_242] : memref<1x512xf32, #tpu.memory_space<vmem>>, vector<1x512xf32>
    %cst_243 = arith.constant 0.000000e+00 : f32
    %629 = vector.broadcast %cst_243 : f32 to vector<1x128xf32>
    %cst_244 = arith.constant 0.000000e+00 : f32
    %630 = vector.broadcast %cst_244 : f32 to vector<1x128xf32>
    %cst_245 = arith.constant 0.000000e+00 : f32
    %631 = vector.broadcast %cst_245 : f32 to vector<1x128xf32>
    %cst_246 = arith.constant 0.000000e+00 : f32
    %632 = vector.broadcast %cst_246 : f32 to vector<1x128xf32>
    %633 = vector.extract_strided_slice %625 {offsets = [0, 0], sizes = [1, 512], strides = [1, 1]} : vector<2x512xf32> to vector<1x512xf32>
    %634 = arith.truncf %629 : vector<1x128xf32> to vector<1x128xbf16>
    %cst_247 = arith.constant dense<0.000000e+00> : vector<1x512xf32>
    %635 = tpu.matmul %634, %626, %cst_247 {dimension_numbers = #tpu.dot_dimension_numbers<[1], [0], [0], [1], [0, 0, 1, 1], [], []>} : vector<1x128xbf16>, vector<128x512xbf16>, vector<1x512xf32> -> vector<1x512xf32>
    %636 = arith.addf %633, %635 : vector<1x512xf32>
    %637 = vector.extract_strided_slice %636 {offsets = [0, 0], sizes = [1, 128], strides = [1, 1]} : vector<1x512xf32> to vector<1x128xf32>
    %638 = arith.negf %637 : vector<1x128xf32>
    %639 = math.exp %638 : vector<1x128xf32>
    %cst_248 = arith.constant 1.000000e+00 : f32
    %640 = vector.broadcast %cst_248 : f32 to vector<1x128xf32>
    %641 = arith.addf %640, %639 : vector<1x128xf32>
    %642 = arith.divf %640, %641 : vector<1x128xf32>
    %643 = vector.extract_strided_slice %636 {offsets = [0, 128], sizes = [1, 128], strides = [1, 1]} : vector<1x512xf32> to vector<1x128xf32>
    %644 = arith.negf %643 : vector<1x128xf32>
    %645 = math.exp %644 : vector<1x128xf32>
    %cst_249 = arith.constant 1.000000e+00 : f32
    %646 = vector.broadcast %cst_249 : f32 to vector<1x128xf32>
    %647 = arith.addf %646, %645 : vector<1x128xf32>
    %648 = arith.divf %646, %647 : vector<1x128xf32>
    %649 = vector.extract_strided_slice %636 {offsets = [0, 256], sizes = [1, 128], strides = [1, 1]} : vector<1x512xf32> to vector<1x128xf32>
    %650 = math.tanh %649 : vector<1x128xf32>
    %651 = vector.extract_strided_slice %636 {offsets = [0, 384], sizes = [1, 128], strides = [1, 1]} : vector<1x512xf32> to vector<1x128xf32>
    %652 = arith.negf %651 : vector<1x128xf32>
    %653 = math.exp %652 : vector<1x128xf32>
    %cst_250 = arith.constant 1.000000e+00 : f32
    %654 = vector.broadcast %cst_250 : f32 to vector<1x128xf32>
    %655 = arith.addf %654, %653 : vector<1x128xf32>
    %656 = arith.divf %654, %655 : vector<1x128xf32>
    %657 = arith.mulf %648, %630 : vector<1x128xf32>
    %658 = arith.mulf %642, %650 : vector<1x128xf32>
    %659 = arith.addf %657, %658 : vector<1x128xf32>
    %660 = math.tanh %659 : vector<1x128xf32>
    %661 = arith.mulf %656, %660 : vector<1x128xf32>
    %662 = tpu.concatenate %661, %631 in 1 : vector<1x128xf32>, vector<1x128xf32> -> vector<1x256xf32>
    %663 = arith.truncf %662 : vector<1x256xf32> to vector<1x256xbf16>
    %cst_251 = arith.constant dense<0.000000e+00> : vector<1x512xf32>
    %664 = tpu.matmul %663, %627, %cst_251 {dimension_numbers = #tpu.dot_dimension_numbers<[1], [0], [0], [1], [0, 0, 1, 1], [], []>} : vector<1x256xbf16>, vector<256x512xbf16>, vector<1x512xf32> -> vector<1x512xf32>
    %665 = arith.addf %664, %628 : vector<1x512xf32>
    %666 = vector.extract_strided_slice %665 {offsets = [0, 0], sizes = [1, 128], strides = [1, 1]} : vector<1x512xf32> to vector<1x128xf32>
    %667 = arith.negf %666 : vector<1x128xf32>
    %668 = math.exp %667 : vector<1x128xf32>
    %cst_252 = arith.constant 1.000000e+00 : f32
    %669 = vector.broadcast %cst_252 : f32 to vector<1x128xf32>
    %670 = arith.addf %669, %668 : vector<1x128xf32>
    %671 = arith.divf %669, %670 : vector<1x128xf32>
    %672 = vector.extract_strided_slice %665 {offsets = [0, 128], sizes = [1, 128], strides = [1, 1]} : vector<1x512xf32> to vector<1x128xf32>
    %673 = arith.negf %672 : vector<1x128xf32>
    %674 = math.exp %673 : vector<1x128xf32>
    %cst_253 = arith.constant 1.000000e+00 : f32
    %675 = vector.broadcast %cst_253 : f32 to vector<1x128xf32>
    %676 = arith.addf %675, %674 : vector<1x128xf32>
    %677 = arith.divf %675, %676 : vector<1x128xf32>
    %678 = vector.extract_strided_slice %665 {offsets = [0, 256], sizes = [1, 128], strides = [1, 1]} : vector<1x512xf32> to vector<1x128xf32>
    %679 = math.tanh %678 : vector<1x128xf32>
    %680 = vector.extract_strided_slice %665 {offsets = [0, 384], sizes = [1, 128], strides = [1, 1]} : vector<1x512xf32> to vector<1x128xf32>
    %681 = arith.negf %680 : vector<1x128xf32>
    %682 = math.exp %681 : vector<1x128xf32>
    %cst_254 = arith.constant 1.000000e+00 : f32
    %683 = vector.broadcast %cst_254 : f32 to vector<1x128xf32>
    %684 = arith.addf %683, %682 : vector<1x128xf32>
    %685 = arith.divf %683, %684 : vector<1x128xf32>
    %686 = arith.mulf %677, %632 : vector<1x128xf32>
    %687 = arith.mulf %671, %679 : vector<1x128xf32>
    %688 = arith.addf %686, %687 : vector<1x128xf32>
    %689 = math.tanh %688 : vector<1x128xf32>
    %690 = arith.mulf %685, %689 : vector<1x128xf32>
    %691 = vector.extract_strided_slice %625 {offsets = [1, 0], sizes = [1, 512], strides = [1, 1]} : vector<2x512xf32> to vector<1x512xf32>
    %692 = arith.truncf %661 : vector<1x128xf32> to vector<1x128xbf16>
    %cst_255 = arith.constant dense<0.000000e+00> : vector<1x512xf32>
    %693 = tpu.matmul %692, %626, %cst_255 {dimension_numbers = #tpu.dot_dimension_numbers<[1], [0], [0], [1], [0, 0, 1, 1], [], []>} : vector<1x128xbf16>, vector<128x512xbf16>, vector<1x512xf32> -> vector<1x512xf32>
    %694 = arith.addf %691, %693 : vector<1x512xf32>
    %695 = vector.extract_strided_slice %694 {offsets = [0, 0], sizes = [1, 128], strides = [1, 1]} : vector<1x512xf32> to vector<1x128xf32>
    %696 = arith.negf %695 : vector<1x128xf32>
    %697 = math.exp %696 : vector<1x128xf32>
    %cst_256 = arith.constant 1.000000e+00 : f32
    %698 = vector.broadcast %cst_256 : f32 to vector<1x128xf32>
    %699 = arith.addf %698, %697 : vector<1x128xf32>
    %700 = arith.divf %698, %699 : vector<1x128xf32>
    %701 = vector.extract_strided_slice %694 {offsets = [0, 128], sizes = [1, 128], strides = [1, 1]} : vector<1x512xf32> to vector<1x128xf32>
    %702 = arith.negf %701 : vector<1x128xf32>
    %703 = math.exp %702 : vector<1x128xf32>
    %cst_257 = arith.constant 1.000000e+00 : f32
    %704 = vector.broadcast %cst_257 : f32 to vector<1x128xf32>
    %705 = arith.addf %704, %703 : vector<1x128xf32>
    %706 = arith.divf %704, %705 : vector<1x128xf32>
    %707 = vector.extract_strided_slice %694 {offsets = [0, 256], sizes = [1, 128], strides = [1, 1]} : vector<1x512xf32> to vector<1x128xf32>
    %708 = math.tanh %707 : vector<1x128xf32>
    %709 = vector.extract_strided_slice %694 {offsets = [0, 384], sizes = [1, 128], strides = [1, 1]} : vector<1x512xf32> to vector<1x128xf32>
    %710 = arith.negf %709 : vector<1x128xf32>
    %711 = math.exp %710 : vector<1x128xf32>
    %cst_258 = arith.constant 1.000000e+00 : f32
    %712 = vector.broadcast %cst_258 : f32 to vector<1x128xf32>
    %713 = arith.addf %712, %711 : vector<1x128xf32>
    %714 = arith.divf %712, %713 : vector<1x128xf32>
    %715 = arith.mulf %706, %659 : vector<1x128xf32>
    %716 = arith.mulf %700, %708 : vector<1x128xf32>
    %717 = arith.addf %715, %716 : vector<1x128xf32>
    %718 = math.tanh %717 : vector<1x128xf32>
    %719 = arith.mulf %714, %718 : vector<1x128xf32>
    %720 = tpu.concatenate %719, %690 in 1 : vector<1x128xf32>, vector<1x128xf32> -> vector<1x256xf32>
    %721 = arith.truncf %720 : vector<1x256xf32> to vector<1x256xbf16>
    %cst_259 = arith.constant dense<0.000000e+00> : vector<1x512xf32>
    %722 = tpu.matmul %721, %627, %cst_259 {dimension_numbers = #tpu.dot_dimension_numbers<[1], [0], [0], [1], [0, 0, 1, 1], [], []>} : vector<1x256xbf16>, vector<256x512xbf16>, vector<1x512xf32> -> vector<1x512xf32>
    %723 = arith.addf %722, %628 : vector<1x512xf32>
    %724 = vector.extract_strided_slice %723 {offsets = [0, 0], sizes = [1, 128], strides = [1, 1]} : vector<1x512xf32> to vector<1x128xf32>
    %725 = arith.negf %724 : vector<1x128xf32>
    %726 = math.exp %725 : vector<1x128xf32>
    %cst_260 = arith.constant 1.000000e+00 : f32
    %727 = vector.broadcast %cst_260 : f32 to vector<1x128xf32>
    %728 = arith.addf %727, %726 : vector<1x128xf32>
    %729 = arith.divf %727, %728 : vector<1x128xf32>
    %730 = vector.extract_strided_slice %723 {offsets = [0, 128], sizes = [1, 128], strides = [1, 1]} : vector<1x512xf32> to vector<1x128xf32>
    %731 = arith.negf %730 : vector<1x128xf32>
    %732 = math.exp %731 : vector<1x128xf32>
    %cst_261 = arith.constant 1.000000e+00 : f32
    %733 = vector.broadcast %cst_261 : f32 to vector<1x128xf32>
    %734 = arith.addf %733, %732 : vector<1x128xf32>
    %735 = arith.divf %733, %734 : vector<1x128xf32>
    %736 = vector.extract_strided_slice %723 {offsets = [0, 256], sizes = [1, 128], strides = [1, 1]} : vector<1x512xf32> to vector<1x128xf32>
    %737 = math.tanh %736 : vector<1x128xf32>
    %738 = vector.extract_strided_slice %723 {offsets = [0, 384], sizes = [1, 128], strides = [1, 1]} : vector<1x512xf32> to vector<1x128xf32>
    %739 = arith.negf %738 : vector<1x128xf32>
    %740 = math.exp %739 : vector<1x128xf32>
    %cst_262 = arith.constant 1.000000e+00 : f32
    %741 = vector.broadcast %cst_262 : f32 to vector<1x128xf32>
    %742 = arith.addf %741, %740 : vector<1x128xf32>
    %743 = arith.divf %741, %742 : vector<1x128xf32>
    %744 = arith.mulf %735, %688 : vector<1x128xf32>
    %745 = arith.mulf %729, %737 : vector<1x128xf32>
    %746 = arith.addf %744, %745 : vector<1x128xf32>
    %747 = math.tanh %746 : vector<1x128xf32>
    %748 = arith.mulf %743, %747 : vector<1x128xf32>
    %749 = tpu.concatenate %690, %748 in 0 : vector<1x128xf32>, vector<1x128xf32> -> vector<2x128xf32>
    %750 = tpu.iota {dimensions = array<i32: 0>} : vector<11x128xi32>
    %751 = tpu.iota {dimensions = array<i32: 1>} : vector<11x128xi32>
    %752 = arith.cmpi eq, %750, %751 : vector<11x128xi32>
    %753 = arith.extui %752 : vector<11x128xi1> to vector<11x128xi32>
    %754 = arith.sitofp %753 : vector<11x128xi32> to vector<11x128xf32>
    %c0_263 = arith.constant 0 : index
    %c0_264 = arith.constant 0 : index
    %755 = vector.load %arg29[%c0_263, %c0_264] : memref<2x11xf32, #tpu.memory_space<vmem>>, vector<2x11xf32>
    %cst_265 = arith.constant dense<0.000000e+00> : vector<2x128xf32>
    %756 = tpu.matmul %755, %754, %cst_265 {dimension_numbers = #tpu.dot_dimension_numbers<[1], [0], [0], [1], [0, 0, 1, 1], [], []>} : vector<2x11xf32>, vector<11x128xf32>, vector<2x128xf32> -> vector<2x128xf32>
    %757 = arith.addf %749, %756 : vector<2x128xf32>
    %758 = tpu.iota {dimensions = array<i32: 1>} : vector<1x128xi32>
    %c11_i32 = arith.constant 11 : i32
    %759 = vector.broadcast %c11_i32 : i32 to vector<1x128xi32>
    %760 = arith.cmpi slt, %758, %759 : vector<1x128xi32>
    %761 = arith.extui %760 : vector<1x128xi1> to vector<1x128xi32>
    %762 = arith.sitofp %761 : vector<1x128xi32> to vector<1x128xf32>
    %763 = arith.truncf %757 : vector<2x128xf32> to vector<2x128xbf16>
    %c0_266 = arith.constant 0 : index
    %c0_267 = arith.constant 0 : index
    %c0_268 = arith.constant 0 : index
    %764 = vector.load %arg38[%c0_266, %c0_267, %c0_268] : memref<3x128x128xbf16, #tpu.memory_space<vmem>>, vector<1x128x128xbf16>
    %765 = vector.shape_cast %764 : vector<1x128x128xbf16> to vector<128x128xbf16>
    %cst_269 = arith.constant dense<0.000000e+00> : vector<2x128xf32>
    %766 = tpu.matmul %763, %765, %cst_269 {dimension_numbers = #tpu.dot_dimension_numbers<[1], [0], [0], [1], [0, 0, 1, 1], [], []>} : vector<2x128xbf16>, vector<128x128xbf16>, vector<2x128xf32> -> vector<2x128xf32>
    %c0_270 = arith.constant 0 : index
    %c0_271 = arith.constant 0 : index
    %c0_272 = arith.constant 0 : index
    %767 = vector.load %arg31[%c0_270, %c0_271, %c0_272] : memref<3x1x128xf32, #tpu.memory_space<vmem>>, vector<1x1x128xf32>
    %768 = vector.shape_cast %767 : vector<1x1x128xf32> to vector<1x128xf32>
    %769 = vector.broadcast %768 : vector<1x128xf32> to vector<2x128xf32>
    %770 = arith.addf %766, %769 : vector<2x128xf32>
    %c0_273 = arith.constant 0 : index
    %c0_274 = arith.constant 0 : index
    %c0_275 = arith.constant 0 : index
    %771 = vector.load %arg32[%c0_273, %c0_274, %c0_275] : memref<3x1x128xf32, #tpu.memory_space<vmem>>, vector<1x1x128xf32>
    %772 = vector.shape_cast %771 : vector<1x1x128xf32> to vector<1x128xf32>
    %c0_276 = arith.constant 0 : index
    %c0_277 = arith.constant 0 : index
    %c0_278 = arith.constant 0 : index
    %773 = vector.load %arg33[%c0_276, %c0_277, %c0_278] : memref<3x1x128xf32, #tpu.memory_space<vmem>>, vector<1x1x128xf32>
    %774 = vector.shape_cast %773 : vector<1x1x128xf32> to vector<1x128xf32>
    %775 = vector.broadcast %762 : vector<1x128xf32> to vector<2x128xf32>
    %776 = arith.mulf %770, %775 : vector<2x128xf32>
    %cst_279 = arith.constant dense<0.000000e+00> : vector<2xf32>
    %777 = vector.multi_reduction <add>, %776, %cst_279 [1] : vector<2x128xf32> to vector<2xf32>
    %778 = vector.shape_cast %777 : vector<2xf32> to vector<2x1xf32>
    %cst_280 = arith.constant 0.0909090936 : f32
    %779 = vector.broadcast %cst_280 : f32 to vector<2x1xf32>
    %780 = arith.mulf %778, %779 : vector<2x1xf32>
    %781 = vector.broadcast %780 : vector<2x1xf32> to vector<2x128xf32>
    %782 = arith.subf %770, %781 : vector<2x128xf32>
    %783 = vector.broadcast %762 : vector<1x128xf32> to vector<2x128xf32>
    %784 = arith.mulf %782, %783 : vector<2x128xf32>
    %785 = arith.mulf %784, %784 : vector<2x128xf32>
    %cst_281 = arith.constant dense<0.000000e+00> : vector<2xf32>
    %786 = vector.multi_reduction <add>, %785, %cst_281 [1] : vector<2x128xf32> to vector<2xf32>
    %787 = vector.shape_cast %786 : vector<2xf32> to vector<2x1xf32>
    %cst_282 = arith.constant 0.0909090936 : f32
    %788 = vector.broadcast %cst_282 : f32 to vector<2x1xf32>
    %789 = arith.mulf %787, %788 : vector<2x1xf32>
    %cst_283 = arith.constant 9.99999974E-6 : f32
    %790 = vector.broadcast %cst_283 : f32 to vector<2x1xf32>
    %791 = arith.addf %789, %790 : vector<2x1xf32>
    %792 = math.rsqrt %791 : vector<2x1xf32>
    %793 = vector.broadcast %792 : vector<2x1xf32> to vector<2x128xf32>
    %794 = arith.mulf %784, %793 : vector<2x128xf32>
    %795 = vector.broadcast %772 : vector<1x128xf32> to vector<2x128xf32>
    %796 = arith.mulf %794, %795 : vector<2x128xf32>
    %797 = vector.broadcast %774 : vector<1x128xf32> to vector<2x128xf32>
    %798 = arith.addf %796, %797 : vector<2x128xf32>
    %cst_284 = arith.constant 0.000000e+00 : f32
    %799 = vector.broadcast %cst_284 : f32 to vector<2x128xf32>
    %800 = arith.cmpf oge, %798, %799 : vector<2x128xf32>
    %cst_285 = arith.constant 0.00999999977 : f32
    %801 = vector.broadcast %cst_285 : f32 to vector<2x128xf32>
    %802 = arith.mulf %801, %798 : vector<2x128xf32>
    %803 = arith.select %800, %798, %802 : vector<2x128xi1>, vector<2x128xf32>
    %804 = arith.truncf %803 : vector<2x128xf32> to vector<2x128xbf16>
    %c1_286 = arith.constant 1 : index
    %c0_287 = arith.constant 0 : index
    %c0_288 = arith.constant 0 : index
    %805 = vector.load %arg38[%c1_286, %c0_287, %c0_288] : memref<3x128x128xbf16, #tpu.memory_space<vmem>>, vector<1x128x128xbf16>
    %806 = vector.shape_cast %805 : vector<1x128x128xbf16> to vector<128x128xbf16>
    %cst_289 = arith.constant dense<0.000000e+00> : vector<2x128xf32>
    %807 = tpu.matmul %804, %806, %cst_289 {dimension_numbers = #tpu.dot_dimension_numbers<[1], [0], [0], [1], [0, 0, 1, 1], [], []>} : vector<2x128xbf16>, vector<128x128xbf16>, vector<2x128xf32> -> vector<2x128xf32>
    %c1_290 = arith.constant 1 : index
    %c0_291 = arith.constant 0 : index
    %c0_292 = arith.constant 0 : index
    %808 = vector.load %arg31[%c1_290, %c0_291, %c0_292] : memref<3x1x128xf32, #tpu.memory_space<vmem>>, vector<1x1x128xf32>
    %809 = vector.shape_cast %808 : vector<1x1x128xf32> to vector<1x128xf32>
    %810 = vector.broadcast %809 : vector<1x128xf32> to vector<2x128xf32>
    %811 = arith.addf %807, %810 : vector<2x128xf32>
    %c1_293 = arith.constant 1 : index
    %c0_294 = arith.constant 0 : index
    %c0_295 = arith.constant 0 : index
    %812 = vector.load %arg32[%c1_293, %c0_294, %c0_295] : memref<3x1x128xf32, #tpu.memory_space<vmem>>, vector<1x1x128xf32>
    %813 = vector.shape_cast %812 : vector<1x1x128xf32> to vector<1x128xf32>
    %c1_296 = arith.constant 1 : index
    %c0_297 = arith.constant 0 : index
    %c0_298 = arith.constant 0 : index
    %814 = vector.load %arg33[%c1_296, %c0_297, %c0_298] : memref<3x1x128xf32, #tpu.memory_space<vmem>>, vector<1x1x128xf32>
    %815 = vector.shape_cast %814 : vector<1x1x128xf32> to vector<1x128xf32>
    %816 = vector.broadcast %762 : vector<1x128xf32> to vector<2x128xf32>
    %817 = arith.mulf %811, %816 : vector<2x128xf32>
    %cst_299 = arith.constant dense<0.000000e+00> : vector<2xf32>
    %818 = vector.multi_reduction <add>, %817, %cst_299 [1] : vector<2x128xf32> to vector<2xf32>
    %819 = vector.shape_cast %818 : vector<2xf32> to vector<2x1xf32>
    %cst_300 = arith.constant 0.0909090936 : f32
    %820 = vector.broadcast %cst_300 : f32 to vector<2x1xf32>
    %821 = arith.mulf %819, %820 : vector<2x1xf32>
    %822 = vector.broadcast %821 : vector<2x1xf32> to vector<2x128xf32>
    %823 = arith.subf %811, %822 : vector<2x128xf32>
    %824 = vector.broadcast %762 : vector<1x128xf32> to vector<2x128xf32>
    %825 = arith.mulf %823, %824 : vector<2x128xf32>
    %826 = arith.mulf %825, %825 : vector<2x128xf32>
    %cst_301 = arith.constant dense<0.000000e+00> : vector<2xf32>
    %827 = vector.multi_reduction <add>, %826, %cst_301 [1] : vector<2x128xf32> to vector<2xf32>
    %828 = vector.shape_cast %827 : vector<2xf32> to vector<2x1xf32>
    %cst_302 = arith.constant 0.0909090936 : f32
    %829 = vector.broadcast %cst_302 : f32 to vector<2x1xf32>
    %830 = arith.mulf %828, %829 : vector<2x1xf32>
    %cst_303 = arith.constant 9.99999974E-6 : f32
    %831 = vector.broadcast %cst_303 : f32 to vector<2x1xf32>
    %832 = arith.addf %830, %831 : vector<2x1xf32>
    %833 = math.rsqrt %832 : vector<2x1xf32>
    %834 = vector.broadcast %833 : vector<2x1xf32> to vector<2x128xf32>
    %835 = arith.mulf %825, %834 : vector<2x128xf32>
    %836 = vector.broadcast %813 : vector<1x128xf32> to vector<2x128xf32>
    %837 = arith.mulf %835, %836 : vector<2x128xf32>
    %838 = vector.broadcast %815 : vector<1x128xf32> to vector<2x128xf32>
    %839 = arith.addf %837, %838 : vector<2x128xf32>
    %cst_304 = arith.constant 0.000000e+00 : f32
    %840 = vector.broadcast %cst_304 : f32 to vector<2x128xf32>
    %841 = arith.cmpf oge, %839, %840 : vector<2x128xf32>
    %cst_305 = arith.constant 0.00999999977 : f32
    %842 = vector.broadcast %cst_305 : f32 to vector<2x128xf32>
    %843 = arith.mulf %842, %839 : vector<2x128xf32>
    %844 = arith.select %841, %839, %843 : vector<2x128xi1>, vector<2x128xf32>
    %845 = arith.truncf %844 : vector<2x128xf32> to vector<2x128xbf16>
    %c2 = arith.constant 2 : index
    %c0_306 = arith.constant 0 : index
    %c0_307 = arith.constant 0 : index
    %846 = vector.load %arg38[%c2, %c0_306, %c0_307] : memref<3x128x128xbf16, #tpu.memory_space<vmem>>, vector<1x128x128xbf16>
    %847 = vector.shape_cast %846 : vector<1x128x128xbf16> to vector<128x128xbf16>
    %cst_308 = arith.constant dense<0.000000e+00> : vector<2x128xf32>
    %848 = tpu.matmul %845, %847, %cst_308 {dimension_numbers = #tpu.dot_dimension_numbers<[1], [0], [0], [1], [0, 0, 1, 1], [], []>} : vector<2x128xbf16>, vector<128x128xbf16>, vector<2x128xf32> -> vector<2x128xf32>
    %c2_309 = arith.constant 2 : index
    %c0_310 = arith.constant 0 : index
    %c0_311 = arith.constant 0 : index
    %849 = vector.load %arg31[%c2_309, %c0_310, %c0_311] : memref<3x1x128xf32, #tpu.memory_space<vmem>>, vector<1x1x128xf32>
    %850 = vector.shape_cast %849 : vector<1x1x128xf32> to vector<1x128xf32>
    %851 = vector.broadcast %850 : vector<1x128xf32> to vector<2x128xf32>
    %852 = arith.addf %848, %851 : vector<2x128xf32>
    %c2_312 = arith.constant 2 : index
    %c0_313 = arith.constant 0 : index
    %c0_314 = arith.constant 0 : index
    %853 = vector.load %arg32[%c2_312, %c0_313, %c0_314] : memref<3x1x128xf32, #tpu.memory_space<vmem>>, vector<1x1x128xf32>
    %854 = vector.shape_cast %853 : vector<1x1x128xf32> to vector<1x128xf32>
    %c2_315 = arith.constant 2 : index
    %c0_316 = arith.constant 0 : index
    %c0_317 = arith.constant 0 : index
    %855 = vector.load %arg33[%c2_315, %c0_316, %c0_317] : memref<3x1x128xf32, #tpu.memory_space<vmem>>, vector<1x1x128xf32>
    %856 = vector.shape_cast %855 : vector<1x1x128xf32> to vector<1x128xf32>
    %857 = vector.broadcast %762 : vector<1x128xf32> to vector<2x128xf32>
    %858 = arith.mulf %852, %857 : vector<2x128xf32>
    %cst_318 = arith.constant dense<0.000000e+00> : vector<2xf32>
    %859 = vector.multi_reduction <add>, %858, %cst_318 [1] : vector<2x128xf32> to vector<2xf32>
    %860 = vector.shape_cast %859 : vector<2xf32> to vector<2x1xf32>
    %cst_319 = arith.constant 0.0909090936 : f32
    %861 = vector.broadcast %cst_319 : f32 to vector<2x1xf32>
    %862 = arith.mulf %860, %861 : vector<2x1xf32>
    %863 = vector.broadcast %862 : vector<2x1xf32> to vector<2x128xf32>
    %864 = arith.subf %852, %863 : vector<2x128xf32>
    %865 = vector.broadcast %762 : vector<1x128xf32> to vector<2x128xf32>
    %866 = arith.mulf %864, %865 : vector<2x128xf32>
    %867 = arith.mulf %866, %866 : vector<2x128xf32>
    %cst_320 = arith.constant dense<0.000000e+00> : vector<2xf32>
    %868 = vector.multi_reduction <add>, %867, %cst_320 [1] : vector<2x128xf32> to vector<2xf32>
    %869 = vector.shape_cast %868 : vector<2xf32> to vector<2x1xf32>
    %cst_321 = arith.constant 0.0909090936 : f32
    %870 = vector.broadcast %cst_321 : f32 to vector<2x1xf32>
    %871 = arith.mulf %869, %870 : vector<2x1xf32>
    %cst_322 = arith.constant 9.99999974E-6 : f32
    %872 = vector.broadcast %cst_322 : f32 to vector<2x1xf32>
    %873 = arith.addf %871, %872 : vector<2x1xf32>
    %874 = math.rsqrt %873 : vector<2x1xf32>
    %875 = vector.broadcast %874 : vector<2x1xf32> to vector<2x128xf32>
    %876 = arith.mulf %866, %875 : vector<2x128xf32>
    %877 = vector.broadcast %854 : vector<1x128xf32> to vector<2x128xf32>
    %878 = arith.mulf %876, %877 : vector<2x128xf32>
    %879 = vector.broadcast %856 : vector<1x128xf32> to vector<2x128xf32>
    %880 = arith.addf %878, %879 : vector<2x128xf32>
    %cst_323 = arith.constant 0.000000e+00 : f32
    %881 = vector.broadcast %cst_323 : f32 to vector<2x128xf32>
    %882 = arith.cmpf oge, %880, %881 : vector<2x128xf32>
    %cst_324 = arith.constant 0.00999999977 : f32
    %883 = vector.broadcast %cst_324 : f32 to vector<2x128xf32>
    %884 = arith.mulf %883, %880 : vector<2x128xf32>
    %885 = arith.select %882, %880, %884 : vector<2x128xi1>, vector<2x128xf32>
    %886 = vector.extract_strided_slice %885 {offsets = [0, 0], sizes = [2, 11], strides = [1, 1]} : vector<2x128xf32> to vector<2x11xf32>
    %c0_325 = arith.constant 0 : index
    %c0_326 = arith.constant 0 : index
    %887 = vector.load %arg34[%c0_325, %c0_326] : memref<2x11xf32, #tpu.memory_space<vmem>>, vector<2x11xf32>
    tpu.vector_store %arg34[%c0_325, %c0_326], %886 {strides = array<i32>} : memref<2x11xf32, #tpu.memory_space<vmem>>, vector<2x11xf32>,
    return
  }
}

</mosaic_0001>

<llo_original>
// kernel: bert_classifier_em_forward.1
$region0: #{bert_classifier_em_forward.1}
  #allocation0 [shape = 'u32[]', space=smem, size = 0x4, offset = 0x4, fixed_abs, tag = 'smem constant byte address 0x4 - core index']
  #allocation1 [shape = 'u32[144,128]{1,0:T(1,128)}', space=vmem, size = 0x12000, scoped, tag = 'internal scratch']
  #allocation2 [shape = 'bf16[32,512]{1,0:T(16,128)(2,1)}', space=vmem, size = 0x8000, scoped, tag = 'scratch operand']
  #allocation3 [shape = 'bf16[128,512]{1,0:T(16,128)(2,1)}', space=vmem, size = 0x20000, scoped, tag = 'scratch operand']
  #allocation4 [shape = 'bf16[256,512]{1,0:T(16,128)(2,1)}', space=vmem, size = 0x40000, scoped, tag = 'scratch operand']
  #allocation5 [shape = 'bf16[3,128,128]{2,1,0:T(16,128)(2,1)}', space=vmem, size = 0x18000, scoped, tag = 'scratch operand']
  #allocation6 [shape = 's32[4]{0}', space=sflag, size = 0x10, scoped, tag = 'scratch operand']
  #allocation41 [shape = 's32[]', space=sflag, size = 0x4, offset = 0, fixed_abs, tag = 'sflag constant byte address 0x0 - dummy sync flag']
  #allocation42 [shape = 's32[]', space=sflag, size = 0x4, offset = 0, fixed_abs, tag = 'sflag constant byte address 0x0 - dummy sync flag']
  #allocation43 [shape = 's32[]', space=sflag, size = 0x4, offset = 0, fixed_abs, tag = 'sflag constant byte address 0x0 - dummy sync flag']
  #allocation44 [shape = 's32[]', space=sflag, size = 0x4, offset = 0, fixed_abs, tag = 'sflag constant byte address 0x0 - dummy sync flag']
  #allocation45 [shape = 's32[]', space=sflag, size = 0x4, offset = 0, fixed_abs, tag = 'sflag constant byte address 0x0 - dummy sync flag']
  #allocation46 [shape = 'u32[]', space=smem, size = 0x4, offset = 0x44, fixed_abs, tag = 'smem constant byte address 0x44 - assertion arg 0']
  #allocation47 [shape = 'u32[]', space=smem, size = 0x4, offset = 0x48, fixed_abs, tag = 'smem constant byte address 0x48 - assertion arg 1']
  %s0 = inlined_call_operand.smem [shape: u32[35], index: -1, kind: input, shape index: {}]
  %s1 = sld [smem:[%s0]]
  %s2 = scalar_lea.smem %s0, 1
  %s3 = sld [smem:[%s2]]
  %s4 = scalar_lea.smem %s0, 2
  %s5 = sld [smem:[%s4]]
  %s6 = scalar_lea.smem %s0, 3
  %s7 = sld [smem:[%s6]]
  %s8 = scalar_lea.smem %s0, 4
  %s9 = sld [smem:[%s8]]
  %s10 = scalar_lea.smem %s0, 5
  %s11 = sld [smem:[%s10]]
  %s12 = scalar_lea.smem %s0, 6
  %s13 = sld [smem:[%s12]]
  %s14 = scalar_lea.smem %s0, 7
  %s15 = sld [smem:[%s14]]
  %s16 = scalar_lea.smem %s0, 8
  %s17 = sld [smem:[%s16]]
  %s18 = scalar_lea.smem %s0, 9
  %s19 = sld [smem:[%s18]]
  %s20 = scalar_lea.smem %s0, 10
  %s21 = sld [smem:[%s20]]
  %s22 = scalar_lea.smem %s0, 11
  %s23 = sld [smem:[%s22]]
  %s24 = scalar_lea.smem %s0, 12
  %s25 = sld [smem:[%s24]]
  %s26 = scalar_lea.smem %s0, 13
  %s27 = sld [smem:[%s26]]
  %s28 = scalar_lea.smem %s0, 14
  %s29 = sld [smem:[%s28]]
  %s30 = scalar_lea.smem %s0, 15
  %s31 = sld [smem:[%s30]]
  %s32 = scalar_lea.smem %s0, 16
  %s33 = sld [smem:[%s32]]
  %s34 = scalar_lea.smem %s0, 17
  %s35 = sld [smem:[%s34]]
  %s36 = scalar_lea.smem %s0, 18
  %s37 = sld [smem:[%s36]]
  %s38 = scalar_lea.smem %s0, 19
  %s39 = sld [smem:[%s38]]
  %s40 = scalar_lea.smem %s0, 20
  %s41 = sld [smem:[%s40]]
  %s42 = scalar_lea.smem %s0, 21
  %s43 = sld [smem:[%s42]]
  %s44 = scalar_lea.smem %s0, 22
  %s45 = sld [smem:[%s44]]
  %s46 = scalar_lea.smem %s0, 23
  %s47 = sld [smem:[%s46]]
  %s48 = scalar_lea.smem %s0, 24
  %s49 = sld [smem:[%s48]]
  %s50 = scalar_lea.smem %s0, 25
  %s51 = sld [smem:[%s50]]
  %s52 = scalar_lea.smem %s0, 26
  %s53 = sld [smem:[%s52]]
  %s54 = scalar_lea.smem %s0, 27
  %s55 = sld [smem:[%s54]]
  %s56 = scalar_lea.smem %s0, 28
  %s57 = sld [smem:[%s56]]
  %s58 = scalar_lea.smem %s0, 29
  %s59 = sld [smem:[%s58]]
  %s60 = scalar_lea.smem %s0, 30
  %s61 = sld [smem:[%s60]]
  %s62 = scalar_lea.smem %s0, 31
  %s63 = sld [smem:[%s62]]
  %s64 = scalar_lea.smem %s0, 32
  %s65 = sld [smem:[%s64]]
  %s66 = scalar_lea.smem %s0, 33
  %s67 = sld [smem:[%s66]]
  %s68 = scalar_lea.smem %s0, 34
  %s69 = sld [smem:[%s68]]
  %s70 = sld [smem:[#allocation0]]
  $region329: #{bert_classifier_em_forward.1} parent=0
    _
  %s72 = ssub.s32 1, %s70
  %s73 = scalar_select 0, %s72, %s70
  $region1: #{bert_classifier_em_forward.1} parent=0
    #allocation7 [shape = 'u8[8192]{0}', space=vmem, size = 0x2000, scoped, tag = 'input window, operand 3, single buffered']
    #allocation8 [shape = 's32[1]{0}', space=sflag, size = 0x4, scoped, tag = 'scoped memory for bert_classifier_em_forward.1']
    #allocation9 [shape = 's32[1]{0}', space=sflag, size = 0x4, scoped, tag = 'scoped memory for bert_classifier_em_forward.1']
    #allocation10 [shape = 'u8[512]{0}', space=vmem, size = 0x400, scoped, tag = 'input window, operand 4, single buffered']
    #allocation11 [shape = 's32[1]{0}', space=sflag, size = 0x4, scoped, tag = 'scoped memory for bert_classifier_em_forward.1']
    #allocation12 [shape = 'u8[512]{0}', space=vmem, size = 0x400, scoped, tag = 'input window, operand 5, single buffered']
    #allocation13 [shape = 'u8[4096]{0}', space=vmem, size = 0x1000, scoped, tag = 'input window, operand 9, single buffered']
    #allocation14 [shape = 's32[1]{0}', space=sflag, size = 0x4, scoped, tag = 'scoped memory for bert_classifier_em_forward.1']
    #allocation15 [shape = 'u8[4096]{0}', space=vmem, size = 0x1000, scoped, tag = 'input window, operand 10, single buffered']
    #allocation16 [shape = 'u8[4096]{0}', space=vmem, size = 0x1000, scoped, tag = 'input window, operand 11, single buffered']
    #allocation17 [shape = 's32[1]{0}', space=sflag, size = 0x4, scoped, tag = 'scoped memory for bert_classifier_em_forward.1']
    #allocation18 [shape = 'u8[1024]{0}', space=vmem, size = 0x400, scoped, tag = 'input window, operand 13, single buffered']
    #allocation19 [shape = 'u8[1024]{0}', space=vmem, size = 0x400, scoped, tag = 'input window, operand 14, single buffered']
    #allocation20 [shape = 's32[1]{0}', space=sflag, size = 0x4, scoped, tag = 'scoped memory for bert_classifier_em_forward.1']
    #allocation21 [shape = 'u8[1024]{0}', space=vmem, size = 0x400, scoped, tag = 'input window, operand 15, single buffered']
    #allocation22 [shape = 'u8[16384]{0}', space=vmem, size = 0x4000, scoped, tag = 'input window, operand 16, single buffered']
    #allocation23 [shape = 's32[1]{0}', space=sflag, size = 0x4, scoped, tag = 'scoped memory for bert_classifier_em_forward.1']
    #allocation24 [shape = 'u8[1024]{0}', space=vmem, size = 0x400, scoped, tag = 'input window, operand 17, single buffered']
    #allocation25 [shape = 'u8[1024]{0}', space=vmem, size = 0x400, scoped, tag = 'input window, operand 19, single buffered']
    #allocation26 [shape = 's32[1]{0}', space=sflag, size = 0x4, scoped, tag = 'scoped memory for bert_classifier_em_forward.1']
    #allocation27 [shape = 'u8[1024]{0}', space=vmem, size = 0x400, scoped, tag = 'input window, operand 20, single buffered']
    #allocation28 [shape = 'u8[1024]{0}', space=vmem, size = 0x400, scoped, tag = 'input window, operand 21, single buffered']
    #allocation29 [shape = 's32[1]{0}', space=sflag, size = 0x4, scoped, tag = 'scoped memory for bert_classifier_em_forward.1']
    #allocation30 [shape = 'u8[8192]{0}', space=vmem, size = 0x2000, scoped, tag = 'input window, operand 22, single buffered']
    #allocation31 [shape = 'u8[512]{0}', space=vmem, size = 0x400, scoped, tag = 'input window, operand 23, single buffered']
    #allocation32 [shape = 's32[1]{0}', space=sflag, size = 0x4, scoped, tag = 'scoped memory for bert_classifier_em_forward.1']
    #allocation33 [shape = 'u8[2048]{0}', space=vmem, size = 0x800, scoped, tag = 'input window, operand 26, single buffered']
    #allocation34 [shape = 'u8[2048]{0}', space=vmem, size = 0x800, scoped, tag = 'input window, operand 28, single buffered']
    #allocation35 [shape = 's32[1]{0}', space=sflag, size = 0x4, scoped, tag = 'scoped memory for bert_classifier_em_forward.1']
    #allocation36 [shape = 'u8[1536]{0}', space=vmem, size = 0x800, scoped, tag = 'input window, operand 31, single buffered']
    #allocation37 [shape = 'u8[1536]{0}', space=vmem, size = 0x800, scoped, tag = 'input window, operand 32, single buffered']
    #allocation38 [shape = 's32[1]{0}', space=sflag, size = 0x4, scoped, tag = 'scoped memory for bert_classifier_em_forward.1']
    #allocation39 [shape = 'u8[1536]{0}', space=vmem, size = 0x800, scoped, tag = 'input window, operand 33, single buffered']
    #allocation40 [shape = 'u8[1024]{0}', space=vmem, size = 0x400, scoped, tag = 'output window, operand 0, single buffered']
    %74 = vsyncpa [#allocation8], 0
    %75 = vsyncpa [#allocation11], 0
    %76 = vsyncpa [#allocation14], 0
    %77 = vsyncpa [#allocation17], 0
    %78 = vsyncpa [#allocation20], 0
    %79 = vsyncpa [#allocation23], 0
    %80 = vsyncpa [#allocation26], 0
    %81 = vsyncpa [#allocation29], 0
    %82 = vsyncpa [#allocation32], 0
    %83 = vsyncpa [#allocation35], 0
    %84 = vsyncpa [#allocation38], 0
    %85 = vsyncpa [#allocation9], 0
    // Predicated region
    $region2: #{bert_classifier_em_forward.1} parent=1 // pred_check
      _
    $region3: #{bert_classifier_em_forward.1} parent=1 // pred_check_branch
      %87 = sbr.rel (0) target = $region5
    $region4: #{bert_classifier_em_forward.1} parent=1 // pred_region
      _
    $region5: #{bert_classifier_em_forward.1} parent=1 // pred_fallthru
      _
    // Predicated region
    $region6: #{bert_classifier_em_forward.1} parent=1 // pred_check
      _
    $region7: #{bert_classifier_em_forward.1} parent=1 // pred_check_branch
      %89 = sbr.rel (0) target = $region9
    $region8: #{bert_classifier_em_forward.1} parent=1 // pred_region
      _
    $region9: #{bert_classifier_em_forward.1} parent=1 // pred_fallthru
      _
    // Predicated region
    $region10: #{bert_classifier_em_forward.1} parent=1 // pred_check
      _
    $region11: #{bert_classifier_em_forward.1} parent=1 // pred_check_branch
      %91 = sbr.rel (0) target = $region13
    $region12: #{bert_classifier_em_forward.1} parent=1 // pred_region
      _
    $region13: #{bert_classifier_em_forward.1} parent=1 // pred_fallthru
      _
    // Predicated region
    $region14: #{bert_classifier_em_forward.1} parent=1 // pred_check
      _
    $region15: #{bert_classifier_em_forward.1} parent=1 // pred_check_branch
      %93 = sbr.rel (0) target = $region17
    $region16: #{bert_classifier_em_forward.1} parent=1 // pred_region
      %s95 = ssub.s32 256, 256
      %96 = vsyncadd [#allocation8], %s95
      %s97 = sshll.u32 [#allocation7], 4
      %s98 = int_to_ptr.vmem [resolvable:$true] %s97
      %103 = dma.hbm_to_vmem [thread:$0]  %s7, 256, %s98, [#allocation8], 128, 128, 8
    $region17: #{bert_classifier_em_forward.1} parent=1 // pred_fallthru
      _
    // Predicated region
    $region18: #{bert_classifier_em_forward.1} parent=1 // pred_check
      _
    $region19: #{bert_classifier_em_forward.1} parent=1 // pred_check_branch
      %105 = sbr.rel (0) target = $region21
    $region20: #{bert_classifier_em_forward.1} parent=1 // pred_region
      %s107 = ssub.s32 16, 16
      %108 = vsyncadd [#allocation11], %s107
      %s110 = sshll.u32 [#allocation10], 4
      %s111 = int_to_ptr.vmem [resolvable:$true] %s110
      %113 = dma.hbm_to_vmem [thread:$0]  %s9, 16, %s111, [#allocation11]
    $region21: #{bert_classifier_em_forward.1} parent=1 // pred_fallthru
      _
    // Predicated region
    $region22: #{bert_classifier_em_forward.1} parent=1 // pred_check
      _
    $region23: #{bert_classifier_em_forward.1} parent=1 // pred_check_branch
      %115 = sbr.rel (0) target = $region25
    $region24: #{bert_classifier_em_forward.1} parent=1 // pred_region
      %s117 = ssub.s32 16, 16
      %118 = vsyncadd [#allocation11], %s117
      %s120 = sshll.u32 [#allocation12], 4
      %s121 = int_to_ptr.vmem [resolvable:$true] %s120
      %123 = dma.hbm_to_vmem [thread:$0]  %s11, 16, %s121, [#allocation11]
    $region25: #{bert_classifier_em_forward.1} parent=1 // pred_fallthru
      _
    // Predicated region
    $region26: #{bert_classifier_em_forward.1} parent=1 // pred_check
      _
    $region27: #{bert_classifier_em_forward.1} parent=1 // pred_check_branch
      %125 = sbr.rel (0) target = $region29
    $region28: #{bert_classifier_em_forward.1} parent=1 // pred_region
      _
    $region29: #{bert_classifier_em_forward.1} parent=1 // pred_fallthru
      _
    // Predicated region
    $region30: #{bert_classifier_em_forward.1} parent=1 // pred_check
      _
    $region31: #{bert_classifier_em_forward.1} parent=1 // pred_check_branch
      %127 = sbr.rel (0) target = $region33
    $region32: #{bert_classifier_em_forward.1} parent=1 // pred_region
      _
    $region33: #{bert_classifier_em_forward.1} parent=1 // pred_fallthru
      _
    // Predicated region
    $region34: #{bert_classifier_em_forward.1} parent=1 // pred_check
      _
    $region35: #{bert_classifier_em_forward.1} parent=1 // pred_check_branch
      %129 = sbr.rel (0) target = $region37
    $region36: #{bert_classifier_em_forward.1} parent=1 // pred_region
      _
    $region37: #{bert_classifier_em_forward.1} parent=1 // pred_fallthru
      _
    // Predicated region
    $region38: #{bert_classifier_em_forward.1} parent=1 // pred_check
      _
    $region39: #{bert_classifier_em_forward.1} parent=1 // pred_check_branch
      %131 = sbr.rel (0) target = $region41
    $region40: #{bert_classifier_em_forward.1} parent=1 // pred_region
      %s133 = ssub.s32 128, 128
      %134 = vsyncadd [#allocation14], %s133
      %s135 = sshll.u32 [#allocation13], 4
      %s136 = int_to_ptr.vmem [resolvable:$true] %s135
      %141 = dma.hbm_to_vmem [thread:$0]  %s19, 128, %s136, [#allocation14], 16, 16, 1
    $region41: #{bert_classifier_em_forward.1} parent=1 // pred_fallthru
      _
    // Predicated region
    $region42: #{bert_classifier_em_forward.1} parent=1 // pred_check
      _
    $region43: #{bert_classifier_em_forward.1} parent=1 // pred_check_branch
      %143 = sbr.rel (0) target = $region45
    $region44: #{bert_classifier_em_forward.1} parent=1 // pred_region
      %s145 = ssub.s32 128, 128
      %146 = vsyncadd [#allocation14], %s145
      %s147 = sshll.u32 [#allocation15], 4
      %s148 = int_to_ptr.vmem [resolvable:$true] %s147
      %153 = dma.hbm_to_vmem [thread:$0]  %s21, 128, %s148, [#allocation14], 16, 16, 1
    $region45: #{bert_classifier_em_forward.1} parent=1 // pred_fallthru
      _
    // Predicated region
    $region46: #{bert_classifier_em_forward.1} parent=1 // pred_check
      _
    $region47: #{bert_classifier_em_forward.1} parent=1 // pred_check_branch
      %155 = sbr.rel (0) target = $region49
    $region48: #{bert_classifier_em_forward.1} parent=1 // pred_region
      %s157 = ssub.s32 128, 128
      %158 = vsyncadd [#allocation17], %s157
      %s159 = sshll.u32 [#allocation16], 4
      %s160 = int_to_ptr.vmem [resolvable:$true] %s159
      %165 = dma.hbm_to_vmem [thread:$0]  %s23, 128, %s160, [#allocation17], 16, 16, 1
    $region49: #{bert_classifier_em_forward.1} parent=1 // pred_fallthru
      _
    // Predicated region
    $region50: #{bert_classifier_em_forward.1} parent=1 // pred_check
      _
    $region51: #{bert_classifier_em_forward.1} parent=1 // pred_check_branch
      %167 = sbr.rel (0) target = $region53
    $region52: #{bert_classifier_em_forward.1} parent=1 // pred_region
      _
    $region53: #{bert_classifier_em_forward.1} parent=1 // pred_fallthru
      _
    // Predicated region
    $region54: #{bert_classifier_em_forward.1} parent=1 // pred_check
      _
    $region55: #{bert_classifier_em_forward.1} parent=1 // pred_check_branch
      %169 = sbr.rel (0) target = $region57
    $region56: #{bert_classifier_em_forward.1} parent=1 // pred_region
      %s171 = ssub.s32 32, 32
      %172 = vsyncadd [#allocation17], %s171
      %s173 = sshll.u32 [#allocation18], 4
      %s174 = int_to_ptr.vmem [resolvable:$true] %s173
      %179 = dma.hbm_to_vmem [thread:$0]  %s27, 32, %s174, [#allocation17], 16, 16, 1
    $region57: #{bert_classifier_em_forward.1} parent=1 // pred_fallthru
      _
    // Predicated region
    $region58: #{bert_classifier_em_forward.1} parent=1 // pred_check
      _
    $region59: #{bert_classifier_em_forward.1} parent=1 // pred_check_branch
      %181 = sbr.rel (0) target = $region61
    $region60: #{bert_classifier_em_forward.1} parent=1 // pred_region
      %s183 = ssub.s32 32, 32
      %184 = vsyncadd [#allocation20], %s183
      %s185 = sshll.u32 [#allocation19], 4
      %s186 = int_to_ptr.vmem [resolvable:$true] %s185
      %191 = dma.hbm_to_vmem [thread:$0]  %s29, 32, %s186, [#allocation20], 16, 16, 1
    $region61: #{bert_classifier_em_forward.1} parent=1 // pred_fallthru
      _
    // Predicated region
    $region62: #{bert_classifier_em_forward.1} parent=1 // pred_check
      _
    $region63: #{bert_classifier_em_forward.1} parent=1 // pred_check_branch
      %193 = sbr.rel (0) target = $region65
    $region64: #{bert_classifier_em_forward.1} parent=1 // pred_region
      %s195 = ssub.s32 32, 32
      %196 = vsyncadd [#allocation20], %s195
      %s197 = sshll.u32 [#allocation21], 4
      %s198 = int_to_ptr.vmem [resolvable:$true] %s197
      %203 = dma.hbm_to_vmem [thread:$0]  %s31, 32, %s198, [#allocation20], 16, 16, 1
    $region65: #{bert_classifier_em_forward.1} parent=1 // pred_fallthru
      _
    // Predicated region
    $region66: #{bert_classifier_em_forward.1} parent=1 // pred_check
      _
    $region67: #{bert_classifier_em_forward.1} parent=1 // pred_check_branch
      %205 = sbr.rel (0) target = $region69
    $region68: #{bert_classifier_em_forward.1} parent=1 // pred_region
      %s207 = ssub.s32 512, 512
      %208 = vsyncadd [#allocation23], %s207
      %s209 = sshll.u32 [#allocation22], 4
      %s210 = int_to_ptr.vmem [resolvable:$true] %s209
      %215 = dma.hbm_to_vmem [thread:$0]  %s33, 512, %s210, [#allocation23], 64, 64, 4
    $region69: #{bert_classifier_em_forward.1} parent=1 // pred_fallthru
      _
    // Predicated region
    $region70: #{bert_classifier_em_forward.1} parent=1 // pred_check
      _
    $region71: #{bert_classifier_em_forward.1} parent=1 // pred_check_branch
      %217 = sbr.rel (0) target = $region73
    $region72: #{bert_classifier_em_forward.1} parent=1 // pred_region
      %s219 = ssub.s32 32, 32
      %220 = vsyncadd [#allocation23], %s219
      %s221 = sshll.u32 [#allocation24], 4
      %s222 = int_to_ptr.vmem [resolvable:$true] %s221
      %227 = dma.hbm_to_vmem [thread:$0]  %s35, 32, %s222, [#allocation23], 16, 16, 1
    $region73: #{bert_classifier_em_forward.1} parent=1 // pred_fallthru
      _
    // Predicated region
    $region74: #{bert_classifier_em_forward.1} parent=1 // pred_check
      _
    $region75: #{bert_classifier_em_forward.1} parent=1 // pred_check_branch
      %229 = sbr.rel (0) target = $region77
    $region76: #{bert_classifier_em_forward.1} parent=1 // pred_region
      _
    $region77: #{bert_classifier_em_forward.1} parent=1 // pred_fallthru
      _
    // Predicated region
    $region78: #{bert_classifier_em_forward.1} parent=1 // pred_check
      _
    $region79: #{bert_classifier_em_forward.1} parent=1 // pred_check_branch
      %231 = sbr.rel (0) target = $region81
    $region80: #{bert_classifier_em_forward.1} parent=1 // pred_region
      %s233 = ssub.s32 32, 32
      %234 = vsyncadd [#allocation26], %s233
      %s235 = sshll.u32 [#allocation25], 4
      %s236 = int_to_ptr.vmem [resolvable:$true] %s235
      %241 = dma.hbm_to_vmem [thread:$0]  %s39, 32, %s236, [#allocation26], 16, 16, 1
    $region81: #{bert_classifier_em_forward.1} parent=1 // pred_fallthru
      _
    // Predicated region
    $region82: #{bert_classifier_em_forward.1} parent=1 // pred_check
      _
    $region83: #{bert_classifier_em_forward.1} parent=1 // pred_check_branch
      %243 = sbr.rel (0) target = $region85
    $region84: #{bert_classifier_em_forward.1} parent=1 // pred_region
      %s245 = ssub.s32 32, 32
      %246 = vsyncadd [#allocation26], %s245
      %s247 = sshll.u32 [#allocation27], 4
      %s248 = int_to_ptr.vmem [resolvable:$true] %s247
      %253 = dma.hbm_to_vmem [thread:$0]  %s41, 32, %s248, [#allocation26], 16, 16, 1
    $region85: #{bert_classifier_em_forward.1} parent=1 // pred_fallthru
      _
    // Predicated region
    $region86: #{bert_classifier_em_forward.1} parent=1 // pred_check
      _
    $region87: #{bert_classifier_em_forward.1} parent=1 // pred_check_branch
      %255 = sbr.rel (0) target = $region89
    $region88: #{bert_classifier_em_forward.1} parent=1 // pred_region
      %s257 = ssub.s32 32, 32
      %258 = vsyncadd [#allocation29], %s257
      %s259 = sshll.u32 [#allocation28], 4
      %s260 = int_to_ptr.vmem [resolvable:$true] %s259
      %265 = dma.hbm_to_vmem [thread:$0]  %s43, 32, %s260, [#allocation29], 16, 16, 1
    $region89: #{bert_classifier_em_forward.1} parent=1 // pred_fallthru
      _
    // Predicated region
    $region90: #{bert_classifier_em_forward.1} parent=1 // pred_check
      _
    $region91: #{bert_classifier_em_forward.1} parent=1 // pred_check_branch
      %267 = sbr.rel (0) target = $region93
    $region92: #{bert_classifier_em_forward.1} parent=1 // pred_region
      %s269 = ssub.s32 256, 256
      %270 = vsyncadd [#allocation29], %s269
      %s271 = sshll.u32 [#allocation30], 4
      %s272 = int_to_ptr.vmem [resolvable:$true] %s271
      %277 = dma.hbm_to_vmem [thread:$0]  %s45, 256, %s272, [#allocation29], 64, 64, 4
    $region93: #{bert_classifier_em_forward.1} parent=1 // pred_fallthru
      _
    // Predicated region
    $region94: #{bert_classifier_em_forward.1} parent=1 // pred_check
      _
    $region95: #{bert_classifier_em_forward.1} parent=1 // pred_check_branch
      %279 = sbr.rel (0) target = $region97
    $region96: #{bert_classifier_em_forward.1} parent=1 // pred_region
      %s281 = ssub.s32 16, 16
      %282 = vsyncadd [#allocation32], %s281
      %s284 = sshll.u32 [#allocation31], 4
      %s285 = int_to_ptr.vmem [resolvable:$true] %s284
      %287 = dma.hbm_to_vmem [thread:$0]  %s47, 16, %s285, [#allocation32]
    $region97: #{bert_classifier_em_forward.1} parent=1 // pred_fallthru
      _
    // Predicated region
    $region98: #{bert_classifier_em_forward.1} parent=1 // pred_check
      _
    $region99: #{bert_classifier_em_forward.1} parent=1 // pred_check_branch
      %289 = sbr.rel (0) target = $region101
    $region100: #{bert_classifier_em_forward.1} parent=1 // pred_region
      %s291 = ssub.s32 64, 64
      %292 = vsyncadd [#allocation32], %s291
      %s294 = sshll.u32 [#allocation33], 4
      %s295 = int_to_ptr.vmem [resolvable:$true] %s294
      %297 = dma.hbm_to_vmem [thread:$0]  %s53, 64, %s295, [#allocation32]
    $region101: #{bert_classifier_em_forward.1} parent=1 // pred_fallthru
      _
    // Predicated region
    $region102: #{bert_classifier_em_forward.1} parent=1 // pred_check
      _
    $region103: #{bert_classifier_em_forward.1} parent=1 // pred_check_branch
      %299 = sbr.rel (0) target = $region105
    $region104: #{bert_classifier_em_forward.1} parent=1 // pred_region
      %s301 = ssub.s32 64, 64
      %302 = vsyncadd [#allocation35], %s301
      %s304 = sshll.u32 [#allocation34], 4
      %s305 = int_to_ptr.vmem [resolvable:$true] %s304
      %307 = dma.hbm_to_vmem [thread:$0]  %s57, 64, %s305, [#allocation35]
    $region105: #{bert_classifier_em_forward.1} parent=1 // pred_fallthru
      _
    // Predicated region
    $region106: #{bert_classifier_em_forward.1} parent=1 // pred_check
      _
    $region107: #{bert_classifier_em_forward.1} parent=1 // pred_check_branch
      %309 = sbr.rel (0) target = $region109
    $region108: #{bert_classifier_em_forward.1} parent=1 // pred_region
      _
    $region109: #{bert_classifier_em_forward.1} parent=1 // pred_fallthru
      _
    // Predicated region
    $region110: #{bert_classifier_em_forward.1} parent=1 // pred_check
      _
    $region111: #{bert_classifier_em_forward.1} parent=1 // pred_check_branch
      %311 = sbr.rel (0) target = $region113
    $region112: #{bert_classifier_em_forward.1} parent=1 // pred_region
      %s313 = ssub.s32 48, 48
      %314 = vsyncadd [#allocation35], %s313
      %s315 = sshll.u32 [#allocation36], 4
      %s316 = int_to_ptr.vmem [resolvable:$true] %s315
      %321 = dma.hbm_to_vmem [thread:$0]  %s63, 48, %s316, [#allocation35], 16, 16, 1
    $region113: #{bert_classifier_em_forward.1} parent=1 // pred_fallthru
      _
    // Predicated region
    $region114: #{bert_classifier_em_forward.1} parent=1 // pred_check
      _
    $region115: #{bert_classifier_em_forward.1} parent=1 // pred_check_branch
      %323 = sbr.rel (0) target = $region117
    $region116: #{bert_classifier_em_forward.1} parent=1 // pred_region
      %s325 = ssub.s32 48, 48
      %326 = vsyncadd [#allocation38], %s325
      %s327 = sshll.u32 [#allocation37], 4
      %s328 = int_to_ptr.vmem [resolvable:$true] %s327
      %333 = dma.hbm_to_vmem [thread:$0]  %s65, 48, %s328, [#allocation38], 16, 16, 1
    $region117: #{bert_classifier_em_forward.1} parent=1 // pred_fallthru
      _
    // Predicated region
    $region118: #{bert_classifier_em_forward.1} parent=1 // pred_check
      _
    $region119: #{bert_classifier_em_forward.1} parent=1 // pred_check_branch
      %335 = sbr.rel (0) target = $region121
    $region120: #{bert_classifier_em_forward.1} parent=1 // pred_region
      %s337 = ssub.s32 48, 48
      %338 = vsyncadd [#allocation38], %s337
      %s339 = sshll.u32 [#allocation39], 4
      %s340 = int_to_ptr.vmem [resolvable:$true] %s339
      %345 = dma.hbm_to_vmem [thread:$0]  %s67, 48, %s340, [#allocation38], 16, 16, 1
    $region121: #{bert_classifier_em_forward.1} parent=1 // pred_fallthru
      _
    // Predicated region
    $region122: #{bert_classifier_em_forward.1} parent=1 // pred_check
      _
    $region123: #{bert_classifier_em_forward.1} parent=1 // pred_check_branch
      %347 = sbr.rel (0) target = $region125
    $region124: #{bert_classifier_em_forward.1} parent=1 // pred_region
      %348 = dma.done [#allocation8], 256
    $region125: #{bert_classifier_em_forward.1} parent=1 // pred_fallthru
      _
    // Predicated region
    $region126: #{bert_classifier_em_forward.1} parent=1 // pred_check
      _
    $region127: #{bert_classifier_em_forward.1} parent=1 // pred_check_branch
      %350 = sbr.rel (0) target = $region129
    $region128: #{bert_classifier_em_forward.1} parent=1 // pred_region
      %351 = dma.done [#allocation11], 16
    $region129: #{bert_classifier_em_forward.1} parent=1 // pred_fallthru
      _
    // Predicated region
    $region130: #{bert_classifier_em_forward.1} parent=1 // pred_check
      _
    $region131: #{bert_classifier_em_forward.1} parent=1 // pred_check_branch
      %353 = sbr.rel (0) target = $region133
    $region132: #{bert_classifier_em_forward.1} parent=1 // pred_region
      %354 = dma.done [#allocation11], 16
    $region133: #{bert_classifier_em_forward.1} parent=1 // pred_fallthru
      _
    // Predicated region
    $region134: #{bert_classifier_em_forward.1} parent=1 // pred_check
      _
    $region135: #{bert_classifier_em_forward.1} parent=1 // pred_check_branch
      %356 = sbr.rel (0) target = $region137
    $region136: #{bert_classifier_em_forward.1} parent=1 // pred_region
      %357 = dma.done [#allocation14], 128
    $region137: #{bert_classifier_em_forward.1} parent=1 // pred_fallthru
      _
    // Predicated region
    $region138: #{bert_classifier_em_forward.1} parent=1 // pred_check
      _
    $region139: #{bert_classifier_em_forward.1} parent=1 // pred_check_branch
      %359 = sbr.rel (0) target = $region141
    $region140: #{bert_classifier_em_forward.1} parent=1 // pred_region
      %360 = dma.done [#allocation14], 128
    $region141: #{bert_classifier_em_forward.1} parent=1 // pred_fallthru
      _
    // Predicated region
    $region142: #{bert_classifier_em_forward.1} parent=1 // pred_check
      _
    $region143: #{bert_classifier_em_forward.1} parent=1 // pred_check_branch
      %362 = sbr.rel (0) target = $region145
    $region144: #{bert_classifier_em_forward.1} parent=1 // pred_region
      %363 = dma.done [#allocation17], 128
    $region145: #{bert_classifier_em_forward.1} parent=1 // pred_fallthru
      _
    // Predicated region
    $region146: #{bert_classifier_em_forward.1} parent=1 // pred_check
      _
    $region147: #{bert_classifier_em_forward.1} parent=1 // pred_check_branch
      %365 = sbr.rel (0) target = $region149
    $region148: #{bert_classifier_em_forward.1} parent=1 // pred_region
      %366 = dma.done [#allocation17], 32
    $region149: #{bert_classifier_em_forward.1} parent=1 // pred_fallthru
      _
    // Predicated region
    $region150: #{bert_classifier_em_forward.1} parent=1 // pred_check
      _
    $region151: #{bert_classifier_em_forward.1} parent=1 // pred_check_branch
      %368 = sbr.rel (0) target = $region153
    $region152: #{bert_classifier_em_forward.1} parent=1 // pred_region
      %369 = dma.done [#allocation20], 32
    $region153: #{bert_classifier_em_forward.1} parent=1 // pred_fallthru
      _
    // Predicated region
    $region154: #{bert_classifier_em_forward.1} parent=1 // pred_check
      _
    $region155: #{bert_classifier_em_forward.1} parent=1 // pred_check_branch
      %371 = sbr.rel (0) target = $region157
    $region156: #{bert_classifier_em_forward.1} parent=1 // pred_region
      %372 = dma.done [#allocation20], 32
    $region157: #{bert_classifier_em_forward.1} parent=1 // pred_fallthru
      _
    // Predicated region
    $region158: #{bert_classifier_em_forward.1} parent=1 // pred_check
      _
    $region159: #{bert_classifier_em_forward.1} parent=1 // pred_check_branch
      %374 = sbr.rel (0) target = $region161
    $region160: #{bert_classifier_em_forward.1} parent=1 // pred_region
      %375 = dma.done [#allocation23], 512
    $region161: #{bert_classifier_em_forward.1} parent=1 // pred_fallthru
      _
    // Predicated region
    $region162: #{bert_classifier_em_forward.1} parent=1 // pred_check
      _
    $region163: #{bert_classifier_em_forward.1} parent=1 // pred_check_branch
      %377 = sbr.rel (0) target = $region165
    $region164: #{bert_classifier_em_forward.1} parent=1 // pred_region
      %378 = dma.done [#allocation23], 32
    $region165: #{bert_classifier_em_forward.1} parent=1 // pred_fallthru
      _
    // Predicated region
    $region166: #{bert_classifier_em_forward.1} parent=1 // pred_check
      _
    $region167: #{bert_classifier_em_forward.1} parent=1 // pred_check_branch
      %380 = sbr.rel (0) target = $region169
    $region168: #{bert_classifier_em_forward.1} parent=1 // pred_region
      %381 = dma.done [#allocation26], 32
    $region169: #{bert_classifier_em_forward.1} parent=1 // pred_fallthru
      _
    // Predicated region
    $region170: #{bert_classifier_em_forward.1} parent=1 // pred_check
      _
    $region171: #{bert_classifier_em_forward.1} parent=1 // pred_check_branch
      %383 = sbr.rel (0) target = $region173
    $region172: #{bert_classifier_em_forward.1} parent=1 // pred_region
      %384 = dma.done [#allocation26], 32
    $region173: #{bert_classifier_em_forward.1} parent=1 // pred_fallthru
      _
    // Predicated region
    $region174: #{bert_classifier_em_forward.1} parent=1 // pred_check
      _
    $region175: #{bert_classifier_em_forward.1} parent=1 // pred_check_branch
      %386 = sbr.rel (0) target = $region177
    $region176: #{bert_classifier_em_forward.1} parent=1 // pred_region
      %387 = dma.done [#allocation29], 32
    $region177: #{bert_classifier_em_forward.1} parent=1 // pred_fallthru
      _
    // Predicated region
    $region178: #{bert_classifier_em_forward.1} parent=1 // pred_check
      _
    $region179: #{bert_classifier_em_forward.1} parent=1 // pred_check_branch
      %389 = sbr.rel (0) target = $region181
    $region180: #{bert_classifier_em_forward.1} parent=1 // pred_region
      %390 = dma.done [#allocation29], 256
    $region181: #{bert_classifier_em_forward.1} parent=1 // pred_fallthru
      _
    // Predicated region
    $region182: #{bert_classifier_em_forward.1} parent=1 // pred_check
      _
    $region183: #{bert_classifier_em_forward.1} parent=1 // pred_check_branch
      %392 = sbr.rel (0) target = $region185
    $region184: #{bert_classifier_em_forward.1} parent=1 // pred_region
      %393 = dma.done [#allocation32], 16
    $region185: #{bert_classifier_em_forward.1} parent=1 // pred_fallthru
      _
    // Predicated region
    $region186: #{bert_classifier_em_forward.1} parent=1 // pred_check
      _
    $region187: #{bert_classifier_em_forward.1} parent=1 // pred_check_branch
      %395 = sbr.rel (0) target = $region189
    $region188: #{bert_classifier_em_forward.1} parent=1 // pred_region
      %396 = dma.done [#allocation32], 64
    $region189: #{bert_classifier_em_forward.1} parent=1 // pred_fallthru
      _
    // Predicated region
    $region190: #{bert_classifier_em_forward.1} parent=1 // pred_check
      _
    $region191: #{bert_classifier_em_forward.1} parent=1 // pred_check_branch
      %398 = sbr.rel (0) target = $region193
    $region192: #{bert_classifier_em_forward.1} parent=1 // pred_region
      %399 = dma.done [#allocation35], 64
    $region193: #{bert_classifier_em_forward.1} parent=1 // pred_fallthru
      _
    // Predicated region
    $region194: #{bert_classifier_em_forward.1} parent=1 // pred_check
      _
    $region195: #{bert_classifier_em_forward.1} parent=1 // pred_check_branch
      %401 = sbr.rel (0) target = $region197
    $region196: #{bert_classifier_em_forward.1} parent=1 // pred_region
      %402 = dma.done [#allocation35], 48
    $region197: #{bert_classifier_em_forward.1} parent=1 // pred_fallthru
      _
    // Predicated region
    $region198: #{bert_classifier_em_forward.1} parent=1 // pred_check
      _
    $region199: #{bert_classifier_em_forward.1} parent=1 // pred_check_branch
      %404 = sbr.rel (0) target = $region201
    $region200: #{bert_classifier_em_forward.1} parent=1 // pred_region
      %405 = dma.done [#allocation38], 48
    $region201: #{bert_classifier_em_forward.1} parent=1 // pred_fallthru
      _
    // Predicated region
    $region202: #{bert_classifier_em_forward.1} parent=1 // pred_check
      _
    $region203: #{bert_classifier_em_forward.1} parent=1 // pred_check_branch
      %407 = sbr.rel (0) target = $region205
    $region204: #{bert_classifier_em_forward.1} parent=1 // pred_region
      %408 = dma.done [#allocation38], 48
    $region205: #{bert_classifier_em_forward.1} parent=1 // pred_fallthru
      _
    %p411 = scmp.lt.u32.totalorder 4, 8
    %p412 = pneg %p411
    // Predicated region
    $region206: #{bert_classifier_em_forward.1} parent=1 // pred_check
      _
    $region207: #{bert_classifier_em_forward.1} parent=1 // pred_check_branch
      %414 = sbr.rel (%p411) target = $region209
    $region208: #{bert_classifier_em_forward.1} parent=1 // pred_region
      %s459 = sand.u32 4, 7
      %p460 = scmp.eq.s32.totalorder %s459, 0
      %p461 = pneg %p460
      // Predicated region
      $region221: #{bert_classifier_em_forward.1} parent=208 // pred_check
        _
      $region222: #{bert_classifier_em_forward.1} parent=208 // pred_check_branch
        %463 = sbr.rel (%p460) target = $region224
      $region223: #{bert_classifier_em_forward.1} parent=208 // pred_region
        %s464 = sand.u32 4, 7
        %s465 = ssub.s32 4, %s464
        %s466 = scalar_lea.vmem %s49, %s465
        %s467 = ssub.s32 4, %s464
        %s468 = scalar_lea.vmem [#allocation2], %s467
        loop: start=0, step=1, limit=1
        $region225: #{bert_classifier_em_forward.1} parent=223 // loop_pre_header
          _
        $region226: #{bert_classifier_em_forward.1} parent=223 // loop_header
          %s470 = sphi 0, %s474
          %p471 = scmp.ge.s32.totalorder %s470, 1
          %s475 = sphi %s49, %s49
          %s476 = sphi [#allocation2], [#allocation2]
        $region227: #{bert_classifier_em_forward.1} parent=223 // loop_header_branch
          %473 = sbr.rel (%p471) target = $region231
        $region228: #{bert_classifier_em_forward.1} parent=223 // loop_body
          _
        $region229: #{bert_classifier_em_forward.1} parent=223 // loop_footer
          %s474 = sadd.s32 1, %s470
        $region230: #{bert_classifier_em_forward.1} parent=223 // loop_footer_branch
          %469 = sbr.rel target = $region226
        $region231: #{bert_classifier_em_forward.1} parent=223 // loop_exit
          _
        %s477 = sshllo.u32 0, %s464
        loop: start=0, step=1, limit=1
        $region232: #{bert_classifier_em_forward.1} parent=223 // loop_pre_header
          _
        $region233: #{bert_classifier_em_forward.1} parent=223 // loop_header
          %s479 = sphi 0, %s483
          %p480 = scmp.ge.s32.totalorder %s479, 1
          %s484 = sphi %s466, %s466
          %s485 = sphi %s468, %s468
        $region234: #{bert_classifier_em_forward.1} parent=223 // loop_header_branch
          %482 = sbr.rel (%p480) target = $region238
        $region235: #{bert_classifier_em_forward.1} parent=223 // loop_body
          %v486 = vld [vmem:[%s484] sm:%s477]
          %487 = vst [vmem:[%s485] sm:%s477] %v486
          %v488 = vld [vmem:[%s484 + $0x10] sm:%s477]
          %489 = vst [vmem:[%s485 + $0x4] sm:%s477] %v488
          %v490 = vld [vmem:[%s484 + $0x4] sm:%s477]
          %491 = vst [vmem:[%s485 + $0x8] sm:%s477] %v490
          %v492 = vld [vmem:[%s484 + $0x14] sm:%s477]
          %493 = vst [vmem:[%s485 + $0xc] sm:%s477] %v492
          %v494 = vld [vmem:[%s484 + $0x8] sm:%s477]
          %495 = vst [vmem:[%s485 + $0x10] sm:%s477] %v494
          %v496 = vld [vmem:[%s484 + $0x18] sm:%s477]
          %497 = vst [vmem:[%s485 + $0x14] sm:%s477] %v496
          %v498 = vld [vmem:[%s484 + $0xc] sm:%s477]
          %499 = vst [vmem:[%s485 + $0x18] sm:%s477] %v498
          %v500 = vld [vmem:[%s484 + $0x1c] sm:%s477]
          %501 = vst [vmem:[%s485 + $0x1c] sm:%s477] %v500
          %v502 = vld [vmem:[%s484 + $0x20] sm:%s477]
          %503 = vst [vmem:[%s485 + $0x20] sm:%s477] %v502
          %v504 = vld [vmem:[%s484 + $0x30] sm:%s477]
          %505 = vst [vmem:[%s485 + $0x24] sm:%s477] %v504
          %v506 = vld [vmem:[%s484 + $0x24] sm:%s477]
          %507 = vst [vmem:[%s485 + $0x28] sm:%s477] %v506
          %v508 = vld [vmem:[%s484 + $0x34] sm:%s477]
          %509 = vst [vmem:[%s485 + $0x2c] sm:%s477] %v508
          %v510 = vld [vmem:[%s484 + $0x28] sm:%s477]
          %511 = vst [vmem:[%s485 + $0x30] sm:%s477] %v510
          %v512 = vld [vmem:[%s484 + $0x38] sm:%s477]
          %513 = vst [vmem:[%s485 + $0x34] sm:%s477] %v512
          %v514 = vld [vmem:[%s484 + $0x2c] sm:%s477]
          %515 = vst [vmem:[%s485 + $0x38] sm:%s477] %v514
          %v516 = vld [vmem:[%s484 + $0x3c] sm:%s477]
          %517 = vst [vmem:[%s485 + $0x3c] sm:%s477] %v516
        $region236: #{bert_classifier_em_forward.1} parent=223 // loop_footer
          %s483 = sadd.s32 1, %s479
        $region237: #{bert_classifier_em_forward.1} parent=223 // loop_footer_branch
          %478 = sbr.rel target = $region233
        $region238: #{bert_classifier_em_forward.1} parent=223 // loop_exit
          _
      $region224: #{bert_classifier_em_forward.1} parent=208 // pred_fallthru
        _
    $region209: #{bert_classifier_em_forward.1} parent=1 // pred_fallthru
      _
    // Predicated region
    $region210: #{bert_classifier_em_forward.1} parent=1 // pred_check
      %p415 = pneg %p411
    $region211: #{bert_classifier_em_forward.1} parent=1 // pred_check_branch
      %417 = sbr.rel (%p415) target = $region213
    $region212: #{bert_classifier_em_forward.1} parent=1 // pred_region
      %s418 = sshllo.u32 0, 4
      loop: start=0, step=1, limit=1
      $region214: #{bert_classifier_em_forward.1} parent=212 // loop_pre_header
        _
      $region215: #{bert_classifier_em_forward.1} parent=212 // loop_header
        %s420 = sphi 0, %s424
        %p421 = scmp.ge.s32.totalorder %s420, 1
        %s425 = sphi %s49, %s49
        %s426 = sphi [#allocation2], [#allocation2]
      $region216: #{bert_classifier_em_forward.1} parent=212 // loop_header_branch
        %423 = sbr.rel (%p421) target = $region220
      $region217: #{bert_classifier_em_forward.1} parent=212 // loop_body
        %v427 = vld [vmem:[%s425] sm:%s418]
        %428 = vst [vmem:[%s426] sm:%s418] %v427
        %v429 = vld [vmem:[%s425 + $0x10] sm:%s418]
        %430 = vst [vmem:[%s426 + $0x4] sm:%s418] %v429
        %v431 = vld [vmem:[%s425 + $0x4] sm:%s418]
        %432 = vst [vmem:[%s426 + $0x8] sm:%s418] %v431
        %v433 = vld [vmem:[%s425 + $0x14] sm:%s418]
        %434 = vst [vmem:[%s426 + $0xc] sm:%s418] %v433
        %v435 = vld [vmem:[%s425 + $0x8] sm:%s418]
        %436 = vst [vmem:[%s426 + $0x10] sm:%s418] %v435
        %v437 = vld [vmem:[%s425 + $0x18] sm:%s418]
        %438 = vst [vmem:[%s426 + $0x14] sm:%s418] %v437
        %v439 = vld [vmem:[%s425 + $0xc] sm:%s418]
        %440 = vst [vmem:[%s426 + $0x18] sm:%s418] %v439
        %v441 = vld [vmem:[%s425 + $0x1c] sm:%s418]
        %442 = vst [vmem:[%s426 + $0x1c] sm:%s418] %v441
        %v443 = vld [vmem:[%s425 + $0x20] sm:%s418]
        %444 = vst [vmem:[%s426 + $0x20] sm:%s418] %v443
        %v445 = vld [vmem:[%s425 + $0x30] sm:%s418]
        %446 = vst [vmem:[%s426 + $0x24] sm:%s418] %v445
        %v447 = vld [vmem:[%s425 + $0x24] sm:%s418]
        %448 = vst [vmem:[%s426 + $0x28] sm:%s418] %v447
        %v449 = vld [vmem:[%s425 + $0x34] sm:%s418]
        %450 = vst [vmem:[%s426 + $0x2c] sm:%s418] %v449
        %v451 = vld [vmem:[%s425 + $0x28] sm:%s418]
        %452 = vst [vmem:[%s426 + $0x30] sm:%s418] %v451
        %v453 = vld [vmem:[%s425 + $0x38] sm:%s418]
        %454 = vst [vmem:[%s426 + $0x34] sm:%s418] %v453
        %v455 = vld [vmem:[%s425 + $0x2c] sm:%s418]
        %456 = vst [vmem:[%s426 + $0x38] sm:%s418] %v455
        %v457 = vld [vmem:[%s425 + $0x3c] sm:%s418]
        %458 = vst [vmem:[%s426 + $0x3c] sm:%s418] %v457
      $region218: #{bert_classifier_em_forward.1} parent=212 // loop_footer
        %s424 = sadd.s32 1, %s420
      $region219: #{bert_classifier_em_forward.1} parent=212 // loop_footer_branch
        %419 = sbr.rel target = $region215
      $region220: #{bert_classifier_em_forward.1} parent=212 // loop_exit
        _
    $region213: #{bert_classifier_em_forward.1} parent=1 // pred_fallthru
      _
    // Predicated region
    $region239: #{bert_classifier_em_forward.1} parent=1 // pred_check
      _
    $region240: #{bert_classifier_em_forward.1} parent=1 // pred_check_branch
      %520 = sbr.rel (0) target = $region242
    $region241: #{bert_classifier_em_forward.1} parent=1 // pred_region
      %521 = vsyncadd [#allocation6], 1024
    $region242: #{bert_classifier_em_forward.1} parent=1 // pred_fallthru
      _
    %s522 = scalar_lea.sflag [#allocation6], 1
    %p524 = scmp.lt.u32.totalorder 4, 8
    %p525 = pneg %p524
    // Predicated region
    $region243: #{bert_classifier_em_forward.1} parent=1 // pred_check
      _
    $region244: #{bert_classifier_em_forward.1} parent=1 // pred_check_branch
      %527 = sbr.rel (%p524) target = $region246
    $region245: #{bert_classifier_em_forward.1} parent=1 // pred_region
      %s668 = sand.u32 4, 7
      %p669 = scmp.eq.s32.totalorder %s668, 0
      %p670 = pneg %p669
      // Predicated region
      $region258: #{bert_classifier_em_forward.1} parent=245 // pred_check
        _
      $region259: #{bert_classifier_em_forward.1} parent=245 // pred_check_branch
        %672 = sbr.rel (%p669) target = $region261
      $region260: #{bert_classifier_em_forward.1} parent=245 // pred_region
        %s673 = sand.u32 4, 7
        %s674 = ssub.s32 4, %s673
        %s675 = scalar_lea.vmem %s51, %s674
        %s676 = ssub.s32 4, %s673
        %s677 = scalar_lea.vmem [#allocation3], %s676
        loop: start=0, step=1, limit=1
        $region262: #{bert_classifier_em_forward.1} parent=260 // loop_pre_header
          _
        $region263: #{bert_classifier_em_forward.1} parent=260 // loop_header
          %s679 = sphi 0, %s683
          %p680 = scmp.ge.s32.totalorder %s679, 1
          %s684 = sphi %s51, %s51
          %s685 = sphi [#allocation3], [#allocation3]
        $region264: #{bert_classifier_em_forward.1} parent=260 // loop_header_branch
          %682 = sbr.rel (%p680) target = $region268
        $region265: #{bert_classifier_em_forward.1} parent=260 // loop_body
          _
        $region266: #{bert_classifier_em_forward.1} parent=260 // loop_footer
          %s683 = sadd.s32 1, %s679
        $region267: #{bert_classifier_em_forward.1} parent=260 // loop_footer_branch
          %678 = sbr.rel target = $region263
        $region268: #{bert_classifier_em_forward.1} parent=260 // loop_exit
          _
        %s686 = sshllo.u32 0, %s673
        loop: start=0, step=1, limit=1
        $region269: #{bert_classifier_em_forward.1} parent=260 // loop_pre_header
          _
        $region270: #{bert_classifier_em_forward.1} parent=260 // loop_header
          %s688 = sphi 0, %s692
          %p689 = scmp.ge.s32.totalorder %s688, 1
          %s693 = sphi %s675, %s675
          %s694 = sphi %s677, %s677
        $region271: #{bert_classifier_em_forward.1} parent=260 // loop_header_branch
          %691 = sbr.rel (%p689) target = $region275
        $region272: #{bert_classifier_em_forward.1} parent=260 // loop_body
          %v695 = vld [vmem:[%s693] sm:%s686]
          %696 = vst [vmem:[%s694] sm:%s686] %v695
          %v697 = vld [vmem:[%s693 + $0x10] sm:%s686]
          %698 = vst [vmem:[%s694 + $0x4] sm:%s686] %v697
          %v699 = vld [vmem:[%s693 + $0x4] sm:%s686]
          %700 = vst [vmem:[%s694 + $0x8] sm:%s686] %v699
          %v701 = vld [vmem:[%s693 + $0x14] sm:%s686]
          %702 = vst [vmem:[%s694 + $0xc] sm:%s686] %v701
          %v703 = vld [vmem:[%s693 + $0x8] sm:%s686]
          %704 = vst [vmem:[%s694 + $0x10] sm:%s686] %v703
          %v705 = vld [vmem:[%s693 + $0x18] sm:%s686]
          %706 = vst [vmem:[%s694 + $0x14] sm:%s686] %v705
          %v707 = vld [vmem:[%s693 + $0xc] sm:%s686]
          %708 = vst [vmem:[%s694 + $0x18] sm:%s686] %v707
          %v709 = vld [vmem:[%s693 + $0x1c] sm:%s686]
          %710 = vst [vmem:[%s694 + $0x1c] sm:%s686] %v709
          %v711 = vld [vmem:[%s693 + $0x20] sm:%s686]
          %712 = vst [vmem:[%s694 + $0x20] sm:%s686] %v711
          %v713 = vld [vmem:[%s693 + $0x30] sm:%s686]
          %714 = vst [vmem:[%s694 + $0x24] sm:%s686] %v713
          %v715 = vld [vmem:[%s693 + $0x24] sm:%s686]
          %716 = vst [vmem:[%s694 + $0x28] sm:%s686] %v715
          %v717 = vld [vmem:[%s693 + $0x34] sm:%s686]
          %718 = vst [vmem:[%s694 + $0x2c] sm:%s686] %v717
          %v719 = vld [vmem:[%s693 + $0x28] sm:%s686]
          %720 = vst [vmem:[%s694 + $0x30] sm:%s686] %v719
          %v721 = vld [vmem:[%s693 + $0x38] sm:%s686]
          %722 = vst [vmem:[%s694 + $0x34] sm:%s686] %v721
          %v723 = vld [vmem:[%s693 + $0x2c] sm:%s686]
          %724 = vst [vmem:[%s694 + $0x38] sm:%s686] %v723
          %v725 = vld [vmem:[%s693 + $0x3c] sm:%s686]
          %726 = vst [vmem:[%s694 + $0x3c] sm:%s686] %v725
          %v727 = vld [vmem:[%s693 + $0x40] sm:%s686]
          %728 = vst [vmem:[%s694 + $0x40] sm:%s686] %v727
          %v729 = vld [vmem:[%s693 + $0x50] sm:%s686]
          %730 = vst [vmem:[%s694 + $0x44] sm:%s686] %v729
          %v731 = vld [vmem:[%s693 + $0x44] sm:%s686]
          %732 = vst [vmem:[%s694 + $0x48] sm:%s686] %v731
          %v733 = vld [vmem:[%s693 + $0x54] sm:%s686]
          %734 = vst [vmem:[%s694 + $0x4c] sm:%s686] %v733
          %v735 = vld [vmem:[%s693 + $0x48] sm:%s686]
          %736 = vst [vmem:[%s694 + $0x50] sm:%s686] %v735
          %v737 = vld [vmem:[%s693 + $0x58] sm:%s686]
          %738 = vst [vmem:[%s694 + $0x54] sm:%s686] %v737
          %v739 = vld [vmem:[%s693 + $0x4c] sm:%s686]
          %740 = vst [vmem:[%s694 + $0x58] sm:%s686] %v739
          %v741 = vld [vmem:[%s693 + $0x5c] sm:%s686]
          %742 = vst [vmem:[%s694 + $0x5c] sm:%s686] %v741
          %v743 = vld [vmem:[%s693 + $0x60] sm:%s686]
          %744 = vst [vmem:[%s694 + $0x60] sm:%s686] %v743
          %v745 = vld [vmem:[%s693 + $0x70] sm:%s686]
          %746 = vst [vmem:[%s694 + $0x64] sm:%s686] %v745
          %v747 = vld [vmem:[%s693 + $0x64] sm:%s686]
          %748 = vst [vmem:[%s694 + $0x68] sm:%s686] %v747
          %v749 = vld [vmem:[%s693 + $0x74] sm:%s686]
          %750 = vst [vmem:[%s694 + $0x6c] sm:%s686] %v749
          %v751 = vld [vmem:[%s693 + $0x68] sm:%s686]
          %752 = vst [vmem:[%s694 + $0x70] sm:%s686] %v751
          %v753 = vld [vmem:[%s693 + $0x78] sm:%s686]
          %754 = vst [vmem:[%s694 + $0x74] sm:%s686] %v753
          %v755 = vld [vmem:[%s693 + $0x6c] sm:%s686]
          %756 = vst [vmem:[%s694 + $0x78] sm:%s686] %v755
          %v757 = vld [vmem:[%s693 + $0x7c] sm:%s686]
          %758 = vst [vmem:[%s694 + $0x7c] sm:%s686] %v757
          %v759 = vld [vmem:[%s693 + $0x80] sm:%s686]
          %760 = vst [vmem:[%s694 + $0x80] sm:%s686] %v759
          %v761 = vld [vmem:[%s693 + $0x90] sm:%s686]
          %762 = vst [vmem:[%s694 + $0x84] sm:%s686] %v761
          %v763 = vld [vmem:[%s693 + $0x84] sm:%s686]
          %764 = vst [vmem:[%s694 + $0x88] sm:%s686] %v763
          %v765 = vld [vmem:[%s693 + $0x94] sm:%s686]
          %766 = vst [vmem:[%s694 + $0x8c] sm:%s686] %v765
          %v767 = vld [vmem:[%s693 + $0x88] sm:%s686]
          %768 = vst [vmem:[%s694 + $0x90] sm:%s686] %v767
          %v769 = vld [vmem:[%s693 + $0x98] sm:%s686]
          %770 = vst [vmem:[%s694 + $0x94] sm:%s686] %v769
          %v771 = vld [vmem:[%s693 + $0x8c] sm:%s686]
          %772 = vst [vmem:[%s694 + $0x98] sm:%s686] %v771
          %v773 = vld [vmem:[%s693 + $0x9c] sm:%s686]
          %774 = vst [vmem:[%s694 + $0x9c] sm:%s686] %v773
          %v775 = vld [vmem:[%s693 + $0xa0] sm:%s686]
          %776 = vst [vmem:[%s694 + $0xa0] sm:%s686] %v775
          %v777 = vld [vmem:[%s693 + $0xb0] sm:%s686]
          %778 = vst [vmem:[%s694 + $0xa4] sm:%s686] %v777
          %v779 = vld [vmem:[%s693 + $0xa4] sm:%s686]
          %780 = vst [vmem:[%s694 + $0xa8] sm:%s686] %v779
          %v781 = vld [vmem:[%s693 + $0xb4] sm:%s686]
          %782 = vst [vmem:[%s694 + $0xac] sm:%s686] %v781
          %v783 = vld [vmem:[%s693 + $0xa8] sm:%s686]
          %784 = vst [vmem:[%s694 + $0xb0] sm:%s686] %v783
          %v785 = vld [vmem:[%s693 + $0xb8] sm:%s686]
          %786 = vst [vmem:[%s694 + $0xb4] sm:%s686] %v785
          %v787 = vld [vmem:[%s693 + $0xac] sm:%s686]
          %788 = vst [vmem:[%s694 + $0xb8] sm:%s686] %v787
          %v789 = vld [vmem:[%s693 + $0xbc] sm:%s686]
          %790 = vst [vmem:[%s694 + $0xbc] sm:%s686] %v789
          %v791 = vld [vmem:[%s693 + $0xc0] sm:%s686]
          %792 = vst [vmem:[%s694 + $0xc0] sm:%s686] %v791
          %v793 = vld [vmem:[%s693 + $0xd0] sm:%s686]
          %794 = vst [vmem:[%s694 + $0xc4] sm:%s686] %v793
          %v795 = vld [vmem:[%s693 + $0xc4] sm:%s686]
          %796 = vst [vmem:[%s694 + $0xc8] sm:%s686] %v795
          %v797 = vld [vmem:[%s693 + $0xd4] sm:%s686]
          %798 = vst [vmem:[%s694 + $0xcc] sm:%s686] %v797
          %v799 = vld [vmem:[%s693 + $0xc8] sm:%s686]
          %800 = vst [vmem:[%s694 + $0xd0] sm:%s686] %v799
          %v801 = vld [vmem:[%s693 + $0xd8] sm:%s686]
          %802 = vst [vmem:[%s694 + $0xd4] sm:%s686] %v801
          %v803 = vld [vmem:[%s693 + $0xcc] sm:%s686]
          %804 = vst [vmem:[%s694 + $0xd8] sm:%s686] %v803
          %v805 = vld [vmem:[%s693 + $0xdc] sm:%s686]
          %806 = vst [vmem:[%s694 + $0xdc] sm:%s686] %v805
          %v807 = vld [vmem:[%s693 + $0xe0] sm:%s686]
          %808 = vst [vmem:[%s694 + $0xe0] sm:%s686] %v807
          %v809 = vld [vmem:[%s693 + $0xf0] sm:%s686]
          %810 = vst [vmem:[%s694 + $0xe4] sm:%s686] %v809
          %v811 = vld [vmem:[%s693 + $0xe4] sm:%s686]
          %812 = vst [vmem:[%s694 + $0xe8] sm:%s686] %v811
          %v813 = vld [vmem:[%s693 + $0xf4] sm:%s686]
          %814 = vst [vmem:[%s694 + $0xec] sm:%s686] %v813
          %v815 = vld [vmem:[%s693 + $0xe8] sm:%s686]
          %816 = vst [vmem:[%s694 + $0xf0] sm:%s686] %v815
          %v817 = vld [vmem:[%s693 + $0xf8] sm:%s686]
          %818 = vst [vmem:[%s694 + $0xf4] sm:%s686] %v817
          %v819 = vld [vmem:[%s693 + $0xec] sm:%s686]
          %820 = vst [vmem:[%s694 + $0xf8] sm:%s686] %v819
          %v821 = vld [vmem:[%s693 + $0xfc] sm:%s686]
          %822 = vst [vmem:[%s694 + $0xfc] sm:%s686] %v821
        $region273: #{bert_classifier_em_forward.1} parent=260 // loop_footer
          %s692 = sadd.s32 1, %s688
        $region274: #{bert_classifier_em_forward.1} parent=260 // loop_footer_branch
          %687 = sbr.rel target = $region270
        $region275: #{bert_classifier_em_forward.1} parent=260 // loop_exit
          _
      $region261: #{bert_classifier_em_forward.1} parent=245 // pred_fallthru
        _
    $region246: #{bert_classifier_em_forward.1} parent=1 // pred_fallthru
      _
    // Predicated region
    $region247: #{bert_classifier_em_forward.1} parent=1 // pred_check
      %p528 = pneg %p524
    $region248: #{bert_classifier_em_forward.1} parent=1 // pred_check_branch
      %530 = sbr.rel (%p528) target = $region250
    $region249: #{bert_classifier_em_forward.1} parent=1 // pred_region
      %s531 = sshllo.u32 0, 4
      loop: start=0, step=1, limit=1
      $region251: #{bert_classifier_em_forward.1} parent=249 // loop_pre_header
        _
      $region252: #{bert_classifier_em_forward.1} parent=249 // loop_header
        %s533 = sphi 0, %s537
        %p534 = scmp.ge.s32.totalorder %s533, 1
        %s538 = sphi %s51, %s51
        %s539 = sphi [#allocation3], [#allocation3]
      $region253: #{bert_classifier_em_forward.1} parent=249 // loop_header_branch
        %536 = sbr.rel (%p534) target = $region257
      $region254: #{bert_classifier_em_forward.1} parent=249 // loop_body
        %v540 = vld [vmem:[%s538] sm:%s531]
        %541 = vst [vmem:[%s539] sm:%s531] %v540
        %v542 = vld [vmem:[%s538 + $0x10] sm:%s531]
        %543 = vst [vmem:[%s539 + $0x4] sm:%s531] %v542
        %v544 = vld [vmem:[%s538 + $0x4] sm:%s531]
        %545 = vst [vmem:[%s539 + $0x8] sm:%s531] %v544
        %v546 = vld [vmem:[%s538 + $0x14] sm:%s531]
        %547 = vst [vmem:[%s539 + $0xc] sm:%s531] %v546
        %v548 = vld [vmem:[%s538 + $0x8] sm:%s531]
        %549 = vst [vmem:[%s539 + $0x10] sm:%s531] %v548
        %v550 = vld [vmem:[%s538 + $0x18] sm:%s531]
        %551 = vst [vmem:[%s539 + $0x14] sm:%s531] %v550
        %v552 = vld [vmem:[%s538 + $0xc] sm:%s531]
        %553 = vst [vmem:[%s539 + $0x18] sm:%s531] %v552
        %v554 = vld [vmem:[%s538 + $0x1c] sm:%s531]
        %555 = vst [vmem:[%s539 + $0x1c] sm:%s531] %v554
        %v556 = vld [vmem:[%s538 + $0x20] sm:%s531]
        %557 = vst [vmem:[%s539 + $0x20] sm:%s531] %v556
        %v558 = vld [vmem:[%s538 + $0x30] sm:%s531]
        %559 = vst [vmem:[%s539 + $0x24] sm:%s531] %v558
        %v560 = vld [vmem:[%s538 + $0x24] sm:%s531]
        %561 = vst [vmem:[%s539 + $0x28] sm:%s531] %v560
        %v562 = vld [vmem:[%s538 + $0x34] sm:%s531]
        %563 = vst [vmem:[%s539 + $0x2c] sm:%s531] %v562
        %v564 = vld [vmem:[%s538 + $0x28] sm:%s531]
        %565 = vst [vmem:[%s539 + $0x30] sm:%s531] %v564
        %v566 = vld [vmem:[%s538 + $0x38] sm:%s531]
        %567 = vst [vmem:[%s539 + $0x34] sm:%s531] %v566
        %v568 = vld [vmem:[%s538 + $0x2c] sm:%s531]
        %569 = vst [vmem:[%s539 + $0x38] sm:%s531] %v568
        %v570 = vld [vmem:[%s538 + $0x3c] sm:%s531]
        %571 = vst [vmem:[%s539 + $0x3c] sm:%s531] %v570
        %v572 = vld [vmem:[%s538 + $0x40] sm:%s531]
        %573 = vst [vmem:[%s539 + $0x40] sm:%s531] %v572
        %v574 = vld [vmem:[%s538 + $0x50] sm:%s531]
        %575 = vst [vmem:[%s539 + $0x44] sm:%s531] %v574
        %v576 = vld [vmem:[%s538 + $0x44] sm:%s531]
        %577 = vst [vmem:[%s539 + $0x48] sm:%s531] %v576
        %v578 = vld [vmem:[%s538 + $0x54] sm:%s531]
        %579 = vst [vmem:[%s539 + $0x4c] sm:%s531] %v578
        %v580 = vld [vmem:[%s538 + $0x48] sm:%s531]
        %581 = vst [vmem:[%s539 + $0x50] sm:%s531] %v580
        %v582 = vld [vmem:[%s538 + $0x58] sm:%s531]
        %583 = vst [vmem:[%s539 + $0x54] sm:%s531] %v582
        %v584 = vld [vmem:[%s538 + $0x4c] sm:%s531]
        %585 = vst [vmem:[%s539 + $0x58] sm:%s531] %v584
        %v586 = vld [vmem:[%s538 + $0x5c] sm:%s531]
        %587 = vst [vmem:[%s539 + $0x5c] sm:%s531] %v586
        %v588 = vld [vmem:[%s538 + $0x60] sm:%s531]
        %589 = vst [vmem:[%s539 + $0x60] sm:%s531] %v588
        %v590 = vld [vmem:[%s538 + $0x70] sm:%s531]
        %591 = vst [vmem:[%s539 + $0x64] sm:%s531] %v590
        %v592 = vld [vmem:[%s538 + $0x64] sm:%s531]
        %593 = vst [vmem:[%s539 + $0x68] sm:%s531] %v592
        %v594 = vld [vmem:[%s538 + $0x74] sm:%s531]
        %595 = vst [vmem:[%s539 + $0x6c] sm:%s531] %v594
        %v596 = vld [vmem:[%s538 + $0x68] sm:%s531]
        %597 = vst [vmem:[%s539 + $0x70] sm:%s531] %v596
        %v598 = vld [vmem:[%s538 + $0x78] sm:%s531]
        %599 = vst [vmem:[%s539 + $0x74] sm:%s531] %v598
        %v600 = vld [vmem:[%s538 + $0x6c] sm:%s531]
        %601 = vst [vmem:[%s539 + $0x78] sm:%s531] %v600
        %v602 = vld [vmem:[%s538 + $0x7c] sm:%s531]
        %603 = vst [vmem:[%s539 + $0x7c] sm:%s531] %v602
        %v604 = vld [vmem:[%s538 + $0x80] sm:%s531]
        %605 = vst [vmem:[%s539 + $0x80] sm:%s531] %v604
        %v606 = vld [vmem:[%s538 + $0x90] sm:%s531]
        %607 = vst [vmem:[%s539 + $0x84] sm:%s531] %v606
        %v608 = vld [vmem:[%s538 + $0x84] sm:%s531]
        %609 = vst [vmem:[%s539 + $0x88] sm:%s531] %v608
        %v610 = vld [vmem:[%s538 + $0x94] sm:%s531]
        %611 = vst [vmem:[%s539 + $0x8c] sm:%s531] %v610
        %v612 = vld [vmem:[%s538 + $0x88] sm:%s531]
        %613 = vst [vmem:[%s539 + $0x90] sm:%s531] %v612
        %v614 = vld [vmem:[%s538 + $0x98] sm:%s531]
        %615 = vst [vmem:[%s539 + $0x94] sm:%s531] %v614
        %v616 = vld [vmem:[%s538 + $0x8c] sm:%s531]
        %617 = vst [vmem:[%s539 + $0x98] sm:%s531] %v616
        %v618 = vld [vmem:[%s538 + $0x9c] sm:%s531]
        %619 = vst [vmem:[%s539 + $0x9c] sm:%s531] %v618
        %v620 = vld [vmem:[%s538 + $0xa0] sm:%s531]
        %621 = vst [vmem:[%s539 + $0xa0] sm:%s531] %v620
        %v622 = vld [vmem:[%s538 + $0xb0] sm:%s531]
        %623 = vst [vmem:[%s539 + $0xa4] sm:%s531] %v622
        %v624 = vld [vmem:[%s538 + $0xa4] sm:%s531]
        %625 = vst [vmem:[%s539 + $0xa8] sm:%s531] %v624
        %v626 = vld [vmem:[%s538 + $0xb4] sm:%s531]
        %627 = vst [vmem:[%s539 + $0xac] sm:%s531] %v626
        %v628 = vld [vmem:[%s538 + $0xa8] sm:%s531]
        %629 = vst [vmem:[%s539 + $0xb0] sm:%s531] %v628
        %v630 = vld [vmem:[%s538 + $0xb8] sm:%s531]
        %631 = vst [vmem:[%s539 + $0xb4] sm:%s531] %v630
        %v632 = vld [vmem:[%s538 + $0xac] sm:%s531]
        %633 = vst [vmem:[%s539 + $0xb8] sm:%s531] %v632
        %v634 = vld [vmem:[%s538 + $0xbc] sm:%s531]
        %635 = vst [vmem:[%s539 + $0xbc] sm:%s531] %v634
        %v636 = vld [vmem:[%s538 + $0xc0] sm:%s531]
        %637 = vst [vmem:[%s539 + $0xc0] sm:%s531] %v636
        %v638 = vld [vmem:[%s538 + $0xd0] sm:%s531]
        %639 = vst [vmem:[%s539 + $0xc4] sm:%s531] %v638
        %v640 = vld [vmem:[%s538 + $0xc4] sm:%s531]
        %641 = vst [vmem:[%s539 + $0xc8] sm:%s531] %v640
        %v642 = vld [vmem:[%s538 + $0xd4] sm:%s531]
        %643 = vst [vmem:[%s539 + $0xcc] sm:%s531] %v642
        %v644 = vld [vmem:[%s538 + $0xc8] sm:%s531]
        %645 = vst [vmem:[%s539 + $0xd0] sm:%s531] %v644
        %v646 = vld [vmem:[%s538 + $0xd8] sm:%s531]
        %647 = vst [vmem:[%s539 + $0xd4] sm:%s531] %v646
        %v648 = vld [vmem:[%s538 + $0xcc] sm:%s531]
        %649 = vst [vmem:[%s539 + $0xd8] sm:%s531] %v648
        %v650 = vld [vmem:[%s538 + $0xdc] sm:%s531]
        %651 = vst [vmem:[%s539 + $0xdc] sm:%s531] %v650
        %v652 = vld [vmem:[%s538 + $0xe0] sm:%s531]
        %653 = vst [vmem:[%s539 + $0xe0] sm:%s531] %v652
        %v654 = vld [vmem:[%s538 + $0xf0] sm:%s531]
        %655 = vst [vmem:[%s539 + $0xe4] sm:%s531] %v654
        %v656 = vld [vmem:[%s538 + $0xe4] sm:%s531]
        %657 = vst [vmem:[%s539 + $0xe8] sm:%s531] %v656
        %v658 = vld [vmem:[%s538 + $0xf4] sm:%s531]
        %659 = vst [vmem:[%s539 + $0xec] sm:%s531] %v658
        %v660 = vld [vmem:[%s538 + $0xe8] sm:%s531]
        %661 = vst [vmem:[%s539 + $0xf0] sm:%s531] %v660
        %v662 = vld [vmem:[%s538 + $0xf8] sm:%s531]
        %663 = vst [vmem:[%s539 + $0xf4] sm:%s531] %v662
        %v664 = vld [vmem:[%s538 + $0xec] sm:%s531]
        %665 = vst [vmem:[%s539 + $0xf8] sm:%s531] %v664
        %v666 = vld [vmem:[%s538 + $0xfc] sm:%s531]
        %667 = vst [vmem:[%s539 + $0xfc] sm:%s531] %v666
      $region255: #{bert_classifier_em_forward.1} parent=249 // loop_footer
        %s537 = sadd.s32 1, %s533
      $region256: #{bert_classifier_em_forward.1} parent=249 // loop_footer_branch
        %532 = sbr.rel target = $region252
      $region257: #{bert_classifier_em_forward.1} parent=249 // loop_exit
        _
    $region250: #{bert_classifier_em_forward.1} parent=1 // pred_fallthru
      _
    // Predicated region
    $region276: #{bert_classifier_em_forward.1} parent=1 // pred_check
      _
    $region277: #{bert_classifier_em_forward.1} parent=1 // pred_check_branch
      %825 = sbr.rel (0) target = $region279
    $region278: #{bert_classifier_em_forward.1} parent=1 // pred_region
      %826 = vsyncadd %s522, 4096
    $region279: #{bert_classifier_em_forward.1} parent=1 // pred_fallthru
      _
    %s827 = scalar_lea.sflag [#allocation6], 2
    %p829 = scmp.lt.u32.totalorder 4, 8
    %p830 = pneg %p829
    // Predicated region
    $region280: #{bert_classifier_em_forward.1} parent=1 // pred_check
      _
    $region281: #{bert_classifier_em_forward.1} parent=1 // pred_check_branch
      %832 = sbr.rel (%p829) target = $region283
    $region282: #{bert_classifier_em_forward.1} parent=1 // pred_region
      %s1101 = sand.u32 4, 7
      %p1102 = scmp.eq.s32.totalorder %s1101, 0
      %p1103 = pneg %p1102
      // Predicated region
      $region295: #{bert_classifier_em_forward.1} parent=282 // pred_check
        _
      $region296: #{bert_classifier_em_forward.1} parent=282 // pred_check_branch
        %1105 = sbr.rel (%p1102) target = $region298
      $region297: #{bert_classifier_em_forward.1} parent=282 // pred_region
        %s1106 = sand.u32 4, 7
        %s1107 = ssub.s32 4, %s1106
        %s1108 = scalar_lea.vmem %s55, %s1107
        %s1109 = ssub.s32 4, %s1106
        %s1110 = scalar_lea.vmem [#allocation4], %s1109
        loop: start=0, step=1, limit=1
        $region299: #{bert_classifier_em_forward.1} parent=297 // loop_pre_header
          _
        $region300: #{bert_classifier_em_forward.1} parent=297 // loop_header
          %s1112 = sphi 0, %s1116
          %p1113 = scmp.ge.s32.totalorder %s1112, 1
          %s1117 = sphi %s55, %s55
          %s1118 = sphi [#allocation4], [#allocation4]
        $region301: #{bert_classifier_em_forward.1} parent=297 // loop_header_branch
          %1115 = sbr.rel (%p1113) target = $region305
        $region302: #{bert_classifier_em_forward.1} parent=297 // loop_body
          _
        $region303: #{bert_classifier_em_forward.1} parent=297 // loop_footer
          %s1116 = sadd.s32 1, %s1112
        $region304: #{bert_classifier_em_forward.1} parent=297 // loop_footer_branch
          %1111 = sbr.rel target = $region300
        $region305: #{bert_classifier_em_forward.1} parent=297 // loop_exit
          _
        %s1119 = sshllo.u32 0, %s1106
        loop: start=0, step=1, limit=1
        $region306: #{bert_classifier_em_forward.1} parent=297 // loop_pre_header
          _
        $region307: #{bert_classifier_em_forward.1} parent=297 // loop_header
          %s1121 = sphi 0, %s1125
          %p1122 = scmp.ge.s32.totalorder %s1121, 1
          %s1126 = sphi %s1108, %s1108
          %s1127 = sphi %s1110, %s1110
        $region308: #{bert_classifier_em_forward.1} parent=297 // loop_header_branch
          %1124 = sbr.rel (%p1122) target = $region312
        $region309: #{bert_classifier_em_forward.1} parent=297 // loop_body
          %v1128 = vld [vmem:[%s1126] sm:%s1119]
          %1129 = vst [vmem:[%s1127] sm:%s1119] %v1128
          %v1130 = vld [vmem:[%s1126 + $0x10] sm:%s1119]
          %1131 = vst [vmem:[%s1127 + $0x4] sm:%s1119] %v1130
          %v1132 = vld [vmem:[%s1126 + $0x4] sm:%s1119]
          %1133 = vst [vmem:[%s1127 + $0x8] sm:%s1119] %v1132
          %v1134 = vld [vmem:[%s1126 + $0x14] sm:%s1119]
          %1135 = vst [vmem:[%s1127 + $0xc] sm:%s1119] %v1134
          %v1136 = vld [vmem:[%s1126 + $0x8] sm:%s1119]
          %1137 = vst [vmem:[%s1127 + $0x10] sm:%s1119] %v1136
          %v1138 = vld [vmem:[%s1126 + $0x18] sm:%s1119]
          %1139 = vst [vmem:[%s1127 + $0x14] sm:%s1119] %v1138
          %v1140 = vld [vmem:[%s1126 + $0xc] sm:%s1119]
          %1141 = vst [vmem:[%s1127 + $0x18] sm:%s1119] %v1140
          %v1142 = vld [vmem:[%s1126 + $0x1c] sm:%s1119]
          %1143 = vst [vmem:[%s1127 + $0x1c] sm:%s1119] %v1142
          %v1144 = vld [vmem:[%s1126 + $0x20] sm:%s1119]
          %1145 = vst [vmem:[%s1127 + $0x20] sm:%s1119] %v1144
          %v1146 = vld [vmem:[%s1126 + $0x30] sm:%s1119]
          %1147 = vst [vmem:[%s1127 + $0x24] sm:%s1119] %v1146
          %v1148 = vld [vmem:[%s1126 + $0x24] sm:%s1119]
          %1149 = vst [vmem:[%s1127 + $0x28] sm:%s1119] %v1148
          %v1150 = vld [vmem:[%s1126 + $0x34] sm:%s1119]
          %1151 = vst [vmem:[%s1127 + $0x2c] sm:%s1119] %v1150
          %v1152 = vld [vmem:[%s1126 + $0x28] sm:%s1119]
          %1153 = vst [vmem:[%s1127 + $0x30] sm:%s1119] %v1152
          %v1154 = vld [vmem:[%s1126 + $0x38] sm:%s1119]
          %1155 = vst [vmem:[%s1127 + $0x34] sm:%s1119] %v1154
          %v1156 = vld [vmem:[%s1126 + $0x2c] sm:%s1119]
          %1157 = vst [vmem:[%s1127 + $0x38] sm:%s1119] %v1156
          %v1158 = vld [vmem:[%s1126 + $0x3c] sm:%s1119]
          %1159 = vst [vmem:[%s1127 + $0x3c] sm:%s1119] %v1158
          %v1160 = vld [vmem:[%s1126 + $0x40] sm:%s1119]
          %1161 = vst [vmem:[%s1127 + $0x40] sm:%s1119] %v1160
          %v1162 = vld [vmem:[%s1126 + $0x50] sm:%s1119]
          %1163 = vst [vmem:[%s1127 + $0x44] sm:%s1119] %v1162
          %v1164 = vld [vmem:[%s1126 + $0x44] sm:%s1119]
          %1165 = vst [vmem:[%s1127 + $0x48] sm:%s1119] %v1164
          %v1166 = vld [vmem:[%s1126 + $0x54] sm:%s1119]
          %1167 = vst [vmem:[%s1127 + $0x4c] sm:%s1119] %v1166
          %v1168 = vld [vmem:[%s1126 + $0x48] sm:%s1119]
          %1169 = vst [vmem:[%s1127 + $0x50] sm:%s1119] %v1168
          %v1170 = vld [vmem:[%s1126 + $0x58] sm:%s1119]
          %1171 = vst [vmem:[%s1127 + $0x54] sm:%s1119] %v1170
          %v1172 = vld [vmem:[%s1126 + $0x4c] sm:%s1119]
          %1173 = vst [vmem:[%s1127 + $0x58] sm:%s1119] %v1172
          %v1174 = vld [vmem:[%s1126 + $0x5c] sm:%s1119]
          %1175 = vst [vmem:[%s1127 + $0x5c] sm:%s1119] %v1174
          %v1176 = vld [vmem:[%s1126 + $0x60] sm:%s1119]
          %1177 = vst [vmem:[%s1127 + $0x60] sm:%s1119] %v1176
          %v1178 = vld [vmem:[%s1126 + $0x70] sm:%s1119]
          %1179 = vst [vmem:[%s1127 + $0x64] sm:%s1119] %v1178
          %v1180 = vld [vmem:[%s1126 + $0x64] sm:%s1119]
          %1181 = vst [vmem:[%s1127 + $0x68] sm:%s1119] %v1180
          %v1182 = vld [vmem:[%s1126 + $0x74] sm:%s1119]
          %1183 = vst [vmem:[%s1127 + $0x6c] sm:%s1119] %v1182
          %v1184 = vld [vmem:[%s1126 + $0x68] sm:%s1119]
          %1185 = vst [vmem:[%s1127 + $0x70] sm:%s1119] %v1184
          %v1186 = vld [vmem:[%s1126 + $0x78] sm:%s1119]
          %1187 = vst [vmem:[%s1127 + $0x74] sm:%s1119] %v1186
          %v1188 = vld [vmem:[%s1126 + $0x6c] sm:%s1119]
          %1189 = vst [vmem:[%s1127 + $0x78] sm:%s1119] %v1188
          %v1190 = vld [vmem:[%s1126 + $0x7c] sm:%s1119]
          %1191 = vst [vmem:[%s1127 + $0x7c] sm:%s1119] %v1190
          %v1192 = vld [vmem:[%s1126 + $0x80] sm:%s1119]
          %1193 = vst [vmem:[%s1127 + $0x80] sm:%s1119] %v1192
          %v1194 = vld [vmem:[%s1126 + $0x90] sm:%s1119]
          %1195 = vst [vmem:[%s1127 + $0x84] sm:%s1119] %v1194
          %v1196 = vld [vmem:[%s1126 + $0x84] sm:%s1119]
          %1197 = vst [vmem:[%s1127 + $0x88] sm:%s1119] %v1196
          %v1198 = vld [vmem:[%s1126 + $0x94] sm:%s1119]
          %1199 = vst [vmem:[%s1127 + $0x8c] sm:%s1119] %v1198
          %v1200 = vld [vmem:[%s1126 + $0x88] sm:%s1119]
          %1201 = vst [vmem:[%s1127 + $0x90] sm:%s1119] %v1200
          %v1202 = vld [vmem:[%s1126 + $0x98] sm:%s1119]
          %1203 = vst [vmem:[%s1127 + $0x94] sm:%s1119] %v1202
          %v1204 = vld [vmem:[%s1126 + $0x8c] sm:%s1119]
          %1205 = vst [vmem:[%s1127 + $0x98] sm:%s1119] %v1204
          %v1206 = vld [vmem:[%s1126 + $0x9c] sm:%s1119]
          %1207 = vst [vmem:[%s1127 + $0x9c] sm:%s1119] %v1206
          %v1208 = vld [vmem:[%s1126 + $0xa0] sm:%s1119]
          %1209 = vst [vmem:[%s1127 + $0xa0] sm:%s1119] %v1208
          %v1210 = vld [vmem:[%s1126 + $0xb0] sm:%s1119]
          %1211 = vst [vmem:[%s1127 + $0xa4] sm:%s1119] %v1210
          %v1212 = vld [vmem:[%s1126 + $0xa4] sm:%s1119]
          %1213 = vst [vmem:[%s1127 + $0xa8] sm:%s1119] %v1212
          %v1214 = vld [vmem:[%s1126 + $0xb4] sm:%s1119]
          %1215 = vst [vmem:[%s1127 + $0xac] sm:%s1119] %v1214
          %v1216 = vld [vmem:[%s1126 + $0xa8] sm:%s1119]
          %1217 = vst [vmem:[%s1127 + $0xb0] sm:%s1119] %v1216
          %v1218 = vld [vmem:[%s1126 + $0xb8] sm:%s1119]
          %1219 = vst [vmem:[%s1127 + $0xb4] sm:%s1119] %v1218
          %v1220 = vld [vmem:[%s1126 + $0xac] sm:%s1119]
          %1221 = vst [vmem:[%s1127 + $0xb8] sm:%s1119] %v1220
          %v1222 = vld [vmem:[%s1126 + $0xbc] sm:%s1119]
          %1223 = vst [vmem:[%s1127 + $0xbc] sm:%s1119] %v1222
          %v1224 = vld [vmem:[%s1126 + $0xc0] sm:%s1119]
          %1225 = vst [vmem:[%s1127 + $0xc0] sm:%s1119] %v1224
          %v1226 = vld [vmem:[%s1126 + $0xd0] sm:%s1119]
          %1227 = vst [vmem:[%s1127 + $0xc4] sm:%s1119] %v1226
          %v1228 = vld [vmem:[%s1126 + $0xc4] sm:%s1119]
          %1229 = vst [vmem:[%s1127 + $0xc8] sm:%s1119] %v1228
          %v1230 = vld [vmem:[%s1126 + $0xd4] sm:%s1119]
          %1231 = vst [vmem:[%s1127 + $0xcc] sm:%s1119] %v1230
          %v1232 = vld [vmem:[%s1126 + $0xc8] sm:%s1119]
          %1233 = vst [vmem:[%s1127 + $0xd0] sm:%s1119] %v1232
          %v1234 = vld [vmem:[%s1126 + $0xd8] sm:%s1119]
          %1235 = vst [vmem:[%s1127 + $0xd4] sm:%s1119] %v1234
          %v1236 = vld [vmem:[%s1126 + $0xcc] sm:%s1119]
          %1237 = vst [vmem:[%s1127 + $0xd8] sm:%s1119] %v1236
          %v1238 = vld [vmem:[%s1126 + $0xdc] sm:%s1119]
          %1239 = vst [vmem:[%s1127 + $0xdc] sm:%s1119] %v1238
          %v1240 = vld [vmem:[%s1126 + $0xe0] sm:%s1119]
          %1241 = vst [vmem:[%s1127 + $0xe0] sm:%s1119] %v1240
          %v1242 = vld [vmem:[%s1126 + $0xf0] sm:%s1119]
          %1243 = vst [vmem:[%s1127 + $0xe4] sm:%s1119] %v1242
          %v1244 = vld [vmem:[%s1126 + $0xe4] sm:%s1119]
          %1245 = vst [vmem:[%s1127 + $0xe8] sm:%s1119] %v1244
          %v1246 = vld [vmem:[%s1126 + $0xf4] sm:%s1119]
          %1247 = vst [vmem:[%s1127 + $0xec] sm:%s1119] %v1246
          %v1248 = vld [vmem:[%s1126 + $0xe8] sm:%s1119]
          %1249 = vst [vmem:[%s1127 + $0xf0] sm:%s1119] %v1248
          %v1250 = vld [vmem:[%s1126 + $0xf8] sm:%s1119]
          %1251 = vst [vmem:[%s1127 + $0xf4] sm:%s1119] %v1250
          %v1252 = vld [vmem:[%s1126 + $0xec] sm:%s1119]
          %1253 = vst [vmem:[%s1127 + $0xf8] sm:%s1119] %v1252
          %v1254 = vld [vmem:[%s1126 + $0xfc] sm:%s1119]
          %1255 = vst [vmem:[%s1127 + $0xfc] sm:%s1119] %v1254
          %v1256 = vld [vmem:[%s1126 + $0x100] sm:%s1119]
          %1257 = vst [vmem:[%s1127 + $0x100] sm:%s1119] %v1256
          %v1258 = vld [vmem:[%s1126 + $0x110] sm:%s1119]
          %1259 = vst [vmem:[%s1127 + $0x104] sm:%s1119] %v1258
          %v1260 = vld [vmem:[%s1126 + $0x104] sm:%s1119]
          %1261 = vst [vmem:[%s1127 + $0x108] sm:%s1119] %v1260
          %v1262 = vld [vmem:[%s1126 + $0x114] sm:%s1119]
          %1263 = vst [vmem:[%s1127 + $0x10c] sm:%s1119] %v1262
          %v1264 = vld [vmem:[%s1126 + $0x108] sm:%s1119]
          %1265 = vst [vmem:[%s1127 + $0x110] sm:%s1119] %v1264
          %v1266 = vld [vmem:[%s1126 + $0x118] sm:%s1119]
          %1267 = vst [vmem:[%s1127 + $0x114] sm:%s1119] %v1266
          %v1268 = vld [vmem:[%s1126 + $0x10c] sm:%s1119]
          %1269 = vst [vmem:[%s1127 + $0x118] sm:%s1119] %v1268
          %v1270 = vld [vmem:[%s1126 + $0x11c] sm:%s1119]
          %1271 = vst [vmem:[%s1127 + $0x11c] sm:%s1119] %v1270
          %v1272 = vld [vmem:[%s1126 + $0x120] sm:%s1119]
          %1273 = vst [vmem:[%s1127 + $0x120] sm:%s1119] %v1272
          %v1274 = vld [vmem:[%s1126 + $0x130] sm:%s1119]
          %1275 = vst [vmem:[%s1127 + $0x124] sm:%s1119] %v1274
          %v1276 = vld [vmem:[%s1126 + $0x124] sm:%s1119]
          %1277 = vst [vmem:[%s1127 + $0x128] sm:%s1119] %v1276
          %v1278 = vld [vmem:[%s1126 + $0x134] sm:%s1119]
          %1279 = vst [vmem:[%s1127 + $0x12c] sm:%s1119] %v1278
          %v1280 = vld [vmem:[%s1126 + $0x128] sm:%s1119]
          %1281 = vst [vmem:[%s1127 + $0x130] sm:%s1119] %v1280
          %v1282 = vld [vmem:[%s1126 + $0x138] sm:%s1119]
          %1283 = vst [vmem:[%s1127 + $0x134] sm:%s1119] %v1282
          %v1284 = vld [vmem:[%s1126 + $0x12c] sm:%s1119]
          %1285 = vst [vmem:[%s1127 + $0x138] sm:%s1119] %v1284
          %v1286 = vld [vmem:[%s1126 + $0x13c] sm:%s1119]
          %1287 = vst [vmem:[%s1127 + $0x13c] sm:%s1119] %v1286
          %v1288 = vld [vmem:[%s1126 + $0x140] sm:%s1119]
          %1289 = vst [vmem:[%s1127 + $0x140] sm:%s1119] %v1288
          %v1290 = vld [vmem:[%s1126 + $0x150] sm:%s1119]
          %1291 = vst [vmem:[%s1127 + $0x144] sm:%s1119] %v1290
          %v1292 = vld [vmem:[%s1126 + $0x144] sm:%s1119]
          %1293 = vst [vmem:[%s1127 + $0x148] sm:%s1119] %v1292
          %v1294 = vld [vmem:[%s1126 + $0x154] sm:%s1119]
          %1295 = vst [vmem:[%s1127 + $0x14c] sm:%s1119] %v1294
          %v1296 = vld [vmem:[%s1126 + $0x148] sm:%s1119]
          %1297 = vst [vmem:[%s1127 + $0x150] sm:%s1119] %v1296
          %v1298 = vld [vmem:[%s1126 + $0x158] sm:%s1119]
          %1299 = vst [vmem:[%s1127 + $0x154] sm:%s1119] %v1298
          %v1300 = vld [vmem:[%s1126 + $0x14c] sm:%s1119]
          %1301 = vst [vmem:[%s1127 + $0x158] sm:%s1119] %v1300
          %v1302 = vld [vmem:[%s1126 + $0x15c] sm:%s1119]
          %1303 = vst [vmem:[%s1127 + $0x15c] sm:%s1119] %v1302
          %v1304 = vld [vmem:[%s1126 + $0x160] sm:%s1119]
          %1305 = vst [vmem:[%s1127 + $0x160] sm:%s1119] %v1304
          %v1306 = vld [vmem:[%s1126 + $0x170] sm:%s1119]
          %1307 = vst [vmem:[%s1127 + $0x164] sm:%s1119] %v1306
          %v1308 = vld [vmem:[%s1126 + $0x164] sm:%s1119]
          %1309 = vst [vmem:[%s1127 + $0x168] sm:%s1119] %v1308
          %v1310 = vld [vmem:[%s1126 + $0x174] sm:%s1119]
          %1311 = vst [vmem:[%s1127 + $0x16c] sm:%s1119] %v1310
          %v1312 = vld [vmem:[%s1126 + $0x168] sm:%s1119]
          %1313 = vst [vmem:[%s1127 + $0x170] sm:%s1119] %v1312
          %v1314 = vld [vmem:[%s1126 + $0x178] sm:%s1119]
          %1315 = vst [vmem:[%s1127 + $0x174] sm:%s1119] %v1314
          %v1316 = vld [vmem:[%s1126 + $0x16c] sm:%s1119]
          %1317 = vst [vmem:[%s1127 + $0x178] sm:%s1119] %v1316
          %v1318 = vld [vmem:[%s1126 + $0x17c] sm:%s1119]
          %1319 = vst [vmem:[%s1127 + $0x17c] sm:%s1119] %v1318
          %v1320 = vld [vmem:[%s1126 + $0x180] sm:%s1119]
          %1321 = vst [vmem:[%s1127 + $0x180] sm:%s1119] %v1320
          %v1322 = vld [vmem:[%s1126 + $0x190] sm:%s1119]
          %1323 = vst [vmem:[%s1127 + $0x184] sm:%s1119] %v1322
          %v1324 = vld [vmem:[%s1126 + $0x184] sm:%s1119]
          %1325 = vst [vmem:[%s1127 + $0x188] sm:%s1119] %v1324
          %v1326 = vld [vmem:[%s1126 + $0x194] sm:%s1119]
          %1327 = vst [vmem:[%s1127 + $0x18c] sm:%s1119] %v1326
          %v1328 = vld [vmem:[%s1126 + $0x188] sm:%s1119]
          %1329 = vst [vmem:[%s1127 + $0x190] sm:%s1119] %v1328
          %v1330 = vld [vmem:[%s1126 + $0x198] sm:%s1119]
          %1331 = vst [vmem:[%s1127 + $0x194] sm:%s1119] %v1330
          %v1332 = vld [vmem:[%s1126 + $0x18c] sm:%s1119]
          %1333 = vst [vmem:[%s1127 + $0x198] sm:%s1119] %v1332
          %v1334 = vld [vmem:[%s1126 + $0x19c] sm:%s1119]
          %1335 = vst [vmem:[%s1127 + $0x19c] sm:%s1119] %v1334
          %v1336 = vld [vmem:[%s1126 + $0x1a0] sm:%s1119]
          %1337 = vst [vmem:[%s1127 + $0x1a0] sm:%s1119] %v1336
          %v1338 = vld [vmem:[%s1126 + $0x1b0] sm:%s1119]
          %1339 = vst [vmem:[%s1127 + $0x1a4] sm:%s1119] %v1338
          %v1340 = vld [vmem:[%s1126 + $0x1a4] sm:%s1119]
          %1341 = vst [vmem:[%s1127 + $0x1a8] sm:%s1119] %v1340
          %v1342 = vld [vmem:[%s1126 + $0x1b4] sm:%s1119]
          %1343 = vst [vmem:[%s1127 + $0x1ac] sm:%s1119] %v1342
          %v1344 = vld [vmem:[%s1126 + $0x1a8] sm:%s1119]
          %1345 = vst [vmem:[%s1127 + $0x1b0] sm:%s1119] %v1344
          %v1346 = vld [vmem:[%s1126 + $0x1b8] sm:%s1119]
          %1347 = vst [vmem:[%s1127 + $0x1b4] sm:%s1119] %v1346
          %v1348 = vld [vmem:[%s1126 + $0x1ac] sm:%s1119]
          %1349 = vst [vmem:[%s1127 + $0x1b8] sm:%s1119] %v1348
          %v1350 = vld [vmem:[%s1126 + $0x1bc] sm:%s1119]
          %1351 = vst [vmem:[%s1127 + $0x1bc] sm:%s1119] %v1350
          %v1352 = vld [vmem:[%s1126 + $0x1c0] sm:%s1119]
          %1353 = vst [vmem:[%s1127 + $0x1c0] sm:%s1119] %v1352
          %v1354 = vld [vmem:[%s1126 + $0x1d0] sm:%s1119]
          %1355 = vst [vmem:[%s1127 + $0x1c4] sm:%s1119] %v1354
          %v1356 = vld [vmem:[%s1126 + $0x1c4] sm:%s1119]
          %1357 = vst [vmem:[%s1127 + $0x1c8] sm:%s1119] %v1356
          %v1358 = vld [vmem:[%s1126 + $0x1d4] sm:%s1119]
          %1359 = vst [vmem:[%s1127 + $0x1cc] sm:%s1119] %v1358
          %v1360 = vld [vmem:[%s1126 + $0x1c8] sm:%s1119]
          %1361 = vst [vmem:[%s1127 + $0x1d0] sm:%s1119] %v1360
          %v1362 = vld [vmem:[%s1126 + $0x1d8] sm:%s1119]
          %1363 = vst [vmem:[%s1127 + $0x1d4] sm:%s1119] %v1362
          %v1364 = vld [vmem:[%s1126 + $0x1cc] sm:%s1119]
          %1365 = vst [vmem:[%s1127 + $0x1d8] sm:%s1119] %v1364
          %v1366 = vld [vmem:[%s1126 + $0x1dc] sm:%s1119]
          %1367 = vst [vmem:[%s1127 + $0x1dc] sm:%s1119] %v1366
          %v1368 = vld [vmem:[%s1126 + $0x1e0] sm:%s1119]
          %1369 = vst [vmem:[%s1127 + $0x1e0] sm:%s1119] %v1368
          %v1370 = vld [vmem:[%s1126 + $0x1f0] sm:%s1119]
          %1371 = vst [vmem:[%s1127 + $0x1e4] sm:%s1119] %v1370
          %v1372 = vld [vmem:[%s1126 + $0x1e4] sm:%s1119]
          %1373 = vst [vmem:[%s1127 + $0x1e8] sm:%s1119] %v1372
          %v1374 = vld [vmem:[%s1126 + $0x1f4] sm:%s1119]
          %1375 = vst [vmem:[%s1127 + $0x1ec] sm:%s1119] %v1374
          %v1376 = vld [vmem:[%s1126 + $0x1e8] sm:%s1119]
          %1377 = vst [vmem:[%s1127 + $0x1f0] sm:%s1119] %v1376
          %v1378 = vld [vmem:[%s1126 + $0x1f8] sm:%s1119]
          %1379 = vst [vmem:[%s1127 + $0x1f4] sm:%s1119] %v1378
          %v1380 = vld [vmem:[%s1126 + $0x1ec] sm:%s1119]
          %1381 = vst [vmem:[%s1127 + $0x1f8] sm:%s1119] %v1380
          %v1382 = vld [vmem:[%s1126 + $0x1fc] sm:%s1119]
          %1383 = vst [vmem:[%s1127 + $0x1fc] sm:%s1119] %v1382
        $region310: #{bert_classifier_em_forward.1} parent=297 // loop_footer
          %s1125 = sadd.s32 1, %s1121
        $region311: #{bert_classifier_em_forward.1} parent=297 // loop_footer_branch
          %1120 = sbr.rel target = $region307
        $region312: #{bert_classifier_em_forward.1} parent=297 // loop_exit
          _
      $region298: #{bert_classifier_em_forward.1} parent=282 // pred_fallthru
        _
    $region283: #{bert_classifier_em_forward.1} parent=1 // pred_fallthru
      _
    // Predicated region
    $region284: #{bert_classifier_em_forward.1} parent=1 // pred_check
      %p833 = pneg %p829
    $region285: #{bert_classifier_em_forward.1} parent=1 // pred_check_branch
      %835 = sbr.rel (%p833) target = $region287
    $region286: #{bert_classifier_em_forward.1} parent=1 // pred_region
      %s836 = sshllo.u32 0, 4
      loop: start=0, step=1, limit=1
      $region288: #{bert_classifier_em_forward.1} parent=286 // loop_pre_header
        _
      $region289: #{bert_classifier_em_forward.1} parent=286 // loop_header
        %s838 = sphi 0, %s842
        %p839 = scmp.ge.s32.totalorder %s838, 1
        %s843 = sphi %s55, %s55
        %s844 = sphi [#allocation4], [#allocation4]
      $region290: #{bert_classifier_em_forward.1} parent=286 // loop_header_branch
        %841 = sbr.rel (%p839) target = $region294
      $region291: #{bert_classifier_em_forward.1} parent=286 // loop_body
        %v845 = vld [vmem:[%s843] sm:%s836]
        %846 = vst [vmem:[%s844] sm:%s836] %v845
        %v847 = vld [vmem:[%s843 + $0x10] sm:%s836]
        %848 = vst [vmem:[%s844 + $0x4] sm:%s836] %v847
        %v849 = vld [vmem:[%s843 + $0x4] sm:%s836]
        %850 = vst [vmem:[%s844 + $0x8] sm:%s836] %v849
        %v851 = vld [vmem:[%s843 + $0x14] sm:%s836]
        %852 = vst [vmem:[%s844 + $0xc] sm:%s836] %v851
        %v853 = vld [vmem:[%s843 + $0x8] sm:%s836]
        %854 = vst [vmem:[%s844 + $0x10] sm:%s836] %v853
        %v855 = vld [vmem:[%s843 + $0x18] sm:%s836]
        %856 = vst [vmem:[%s844 + $0x14] sm:%s836] %v855
        %v857 = vld [vmem:[%s843 + $0xc] sm:%s836]
        %858 = vst [vmem:[%s844 + $0x18] sm:%s836] %v857
        %v859 = vld [vmem:[%s843 + $0x1c] sm:%s836]
        %860 = vst [vmem:[%s844 + $0x1c] sm:%s836] %v859
        %v861 = vld [vmem:[%s843 + $0x20] sm:%s836]
        %862 = vst [vmem:[%s844 + $0x20] sm:%s836] %v861
        %v863 = vld [vmem:[%s843 + $0x30] sm:%s836]
        %864 = vst [vmem:[%s844 + $0x24] sm:%s836] %v863
        %v865 = vld [vmem:[%s843 + $0x24] sm:%s836]
        %866 = vst [vmem:[%s844 + $0x28] sm:%s836] %v865
        %v867 = vld [vmem:[%s843 + $0x34] sm:%s836]
        %868 = vst [vmem:[%s844 + $0x2c] sm:%s836] %v867
        %v869 = vld [vmem:[%s843 + $0x28] sm:%s836]
        %870 = vst [vmem:[%s844 + $0x30] sm:%s836] %v869
        %v871 = vld [vmem:[%s843 + $0x38] sm:%s836]
        %872 = vst [vmem:[%s844 + $0x34] sm:%s836] %v871
        %v873 = vld [vmem:[%s843 + $0x2c] sm:%s836]
        %874 = vst [vmem:[%s844 + $0x38] sm:%s836] %v873
        %v875 = vld [vmem:[%s843 + $0x3c] sm:%s836]
        %876 = vst [vmem:[%s844 + $0x3c] sm:%s836] %v875
        %v877 = vld [vmem:[%s843 + $0x40] sm:%s836]
        %878 = vst [vmem:[%s844 + $0x40] sm:%s836] %v877
        %v879 = vld [vmem:[%s843 + $0x50] sm:%s836]
        %880 = vst [vmem:[%s844 + $0x44] sm:%s836] %v879
        %v881 = vld [vmem:[%s843 + $0x44] sm:%s836]
        %882 = vst [vmem:[%s844 + $0x48] sm:%s836] %v881
        %v883 = vld [vmem:[%s843 + $0x54] sm:%s836]
        %884 = vst [vmem:[%s844 + $0x4c] sm:%s836] %v883
        %v885 = vld [vmem:[%s843 + $0x48] sm:%s836]
        %886 = vst [vmem:[%s844 + $0x50] sm:%s836] %v885
        %v887 = vld [vmem:[%s843 + $0x58] sm:%s836]
        %888 = vst [vmem:[%s844 + $0x54] sm:%s836] %v887
        %v889 = vld [vmem:[%s843 + $0x4c] sm:%s836]
        %890 = vst [vmem:[%s844 + $0x58] sm:%s836] %v889
        %v891 = vld [vmem:[%s843 + $0x5c] sm:%s836]
        %892 = vst [vmem:[%s844 + $0x5c] sm:%s836] %v891
        %v893 = vld [vmem:[%s843 + $0x60] sm:%s836]
        %894 = vst [vmem:[%s844 + $0x60] sm:%s836] %v893
        %v895 = vld [vmem:[%s843 + $0x70] sm:%s836]
        %896 = vst [vmem:[%s844 + $0x64] sm:%s836] %v895
        %v897 = vld [vmem:[%s843 + $0x64] sm:%s836]
        %898 = vst [vmem:[%s844 + $0x68] sm:%s836] %v897
        %v899 = vld [vmem:[%s843 + $0x74] sm:%s836]
        %900 = vst [vmem:[%s844 + $0x6c] sm:%s836] %v899
        %v901 = vld [vmem:[%s843 + $0x68] sm:%s836]
        %902 = vst [vmem:[%s844 + $0x70] sm:%s836] %v901
        %v903 = vld [vmem:[%s843 + $0x78] sm:%s836]
        %904 = vst [vmem:[%s844 + $0x74] sm:%s836] %v903
        %v905 = vld [vmem:[%s843 + $0x6c] sm:%s836]
        %906 = vst [vmem:[%s844 + $0x78] sm:%s836] %v905
        %v907 = vld [vmem:[%s843 + $0x7c] sm:%s836]
        %908 = vst [vmem:[%s844 + $0x7c] sm:%s836] %v907
        %v909 = vld [vmem:[%s843 + $0x80] sm:%s836]
        %910 = vst [vmem:[%s844 + $0x80] sm:%s836] %v909
        %v911 = vld [vmem:[%s843 + $0x90] sm:%s836]
        %912 = vst [vmem:[%s844 + $0x84] sm:%s836] %v911
        %v913 = vld [vmem:[%s843 + $0x84] sm:%s836]
        %914 = vst [vmem:[%s844 + $0x88] sm:%s836] %v913
        %v915 = vld [vmem:[%s843 + $0x94] sm:%s836]
        %916 = vst [vmem:[%s844 + $0x8c] sm:%s836] %v915
        %v917 = vld [vmem:[%s843 + $0x88] sm:%s836]
        %918 = vst [vmem:[%s844 + $0x90] sm:%s836] %v917
        %v919 = vld [vmem:[%s843 + $0x98] sm:%s836]
        %920 = vst [vmem:[%s844 + $0x94] sm:%s836] %v919
        %v921 = vld [vmem:[%s843 + $0x8c] sm:%s836]
        %922 = vst [vmem:[%s844 + $0x98] sm:%s836] %v921
        %v923 = vld [vmem:[%s843 + $0x9c] sm:%s836]
        %924 = vst [vmem:[%s844 + $0x9c] sm:%s836] %v923
        %v925 = vld [vmem:[%s843 + $0xa0] sm:%s836]
        %926 = vst [vmem:[%s844 + $0xa0] sm:%s836] %v925
        %v927 = vld [vmem:[%s843 + $0xb0] sm:%s836]
        %928 = vst [vmem:[%s844 + $0xa4] sm:%s836] %v927
        %v929 = vld [vmem:[%s843 + $0xa4] sm:%s836]
        %930 = vst [vmem:[%s844 + $0xa8] sm:%s836] %v929
        %v931 = vld [vmem:[%s843 + $0xb4] sm:%s836]
        %932 = vst [vmem:[%s844 + $0xac] sm:%s836] %v931
        %v933 = vld [vmem:[%s843 + $0xa8] sm:%s836]
        %934 = vst [vmem:[%s844 + $0xb0] sm:%s836] %v933
        %v935 = vld [vmem:[%s843 + $0xb8] sm:%s836]
        %936 = vst [vmem:[%s844 + $0xb4] sm:%s836] %v935
        %v937 = vld [vmem:[%s843 + $0xac] sm:%s836]
        %938 = vst [vmem:[%s844 + $0xb8] sm:%s836] %v937
        %v939 = vld [vmem:[%s843 + $0xbc] sm:%s836]
        %940 = vst [vmem:[%s844 + $0xbc] sm:%s836] %v939
        %v941 = vld [vmem:[%s843 + $0xc0] sm:%s836]
        %942 = vst [vmem:[%s844 + $0xc0] sm:%s836] %v941
        %v943 = vld [vmem:[%s843 + $0xd0] sm:%s836]
        %944 = vst [vmem:[%s844 + $0xc4] sm:%s836] %v943
        %v945 = vld [vmem:[%s843 + $0xc4] sm:%s836]
        %946 = vst [vmem:[%s844 + $0xc8] sm:%s836] %v945
        %v947 = vld [vmem:[%s843 + $0xd4] sm:%s836]
        %948 = vst [vmem:[%s844 + $0xcc] sm:%s836] %v947
        %v949 = vld [vmem:[%s843 + $0xc8] sm:%s836]
        %950 = vst [vmem:[%s844 + $0xd0] sm:%s836] %v949
        %v951 = vld [vmem:[%s843 + $0xd8] sm:%s836]
        %952 = vst [vmem:[%s844 + $0xd4] sm:%s836] %v951
        %v953 = vld [vmem:[%s843 + $0xcc] sm:%s836]
        %954 = vst [vmem:[%s844 + $0xd8] sm:%s836] %v953
        %v955 = vld [vmem:[%s843 + $0xdc] sm:%s836]
        %956 = vst [vmem:[%s844 + $0xdc] sm:%s836] %v955
        %v957 = vld [vmem:[%s843 + $0xe0] sm:%s836]
        %958 = vst [vmem:[%s844 + $0xe0] sm:%s836] %v957
        %v959 = vld [vmem:[%s843 + $0xf0] sm:%s836]
        %960 = vst [vmem:[%s844 + $0xe4] sm:%s836] %v959
        %v961 = vld [vmem:[%s843 + $0xe4] sm:%s836]
        %962 = vst [vmem:[%s844 + $0xe8] sm:%s836] %v961
        %v963 = vld [vmem:[%s843 + $0xf4] sm:%s836]
        %964 = vst [vmem:[%s844 + $0xec] sm:%s836] %v963
        %v965 = vld [vmem:[%s843 + $0xe8] sm:%s836]
        %966 = vst [vmem:[%s844 + $0xf0] sm:%s836] %v965
        %v967 = vld [vmem:[%s843 + $0xf8] sm:%s836]
        %968 = vst [vmem:[%s844 + $0xf4] sm:%s836] %v967
        %v969 = vld [vmem:[%s843 + $0xec] sm:%s836]
        %970 = vst [vmem:[%s844 + $0xf8] sm:%s836] %v969
        %v971 = vld [vmem:[%s843 + $0xfc] sm:%s836]
        %972 = vst [vmem:[%s844 + $0xfc] sm:%s836] %v971
        %v973 = vld [vmem:[%s843 + $0x100] sm:%s836]
        %974 = vst [vmem:[%s844 + $0x100] sm:%s836] %v973
        %v975 = vld [vmem:[%s843 + $0x110] sm:%s836]
        %976 = vst [vmem:[%s844 + $0x104] sm:%s836] %v975
        %v977 = vld [vmem:[%s843 + $0x104] sm:%s836]
        %978 = vst [vmem:[%s844 + $0x108] sm:%s836] %v977
        %v979 = vld [vmem:[%s843 + $0x114] sm:%s836]
        %980 = vst [vmem:[%s844 + $0x10c] sm:%s836] %v979
        %v981 = vld [vmem:[%s843 + $0x108] sm:%s836]
        %982 = vst [vmem:[%s844 + $0x110] sm:%s836] %v981
        %v983 = vld [vmem:[%s843 + $0x118] sm:%s836]
        %984 = vst [vmem:[%s844 + $0x114] sm:%s836] %v983
        %v985 = vld [vmem:[%s843 + $0x10c] sm:%s836]
        %986 = vst [vmem:[%s844 + $0x118] sm:%s836] %v985
        %v987 = vld [vmem:[%s843 + $0x11c] sm:%s836]
        %988 = vst [vmem:[%s844 + $0x11c] sm:%s836] %v987
        %v989 = vld [vmem:[%s843 + $0x120] sm:%s836]
        %990 = vst [vmem:[%s844 + $0x120] sm:%s836] %v989
        %v991 = vld [vmem:[%s843 + $0x130] sm:%s836]
        %992 = vst [vmem:[%s844 + $0x124] sm:%s836] %v991
        %v993 = vld [vmem:[%s843 + $0x124] sm:%s836]
        %994 = vst [vmem:[%s844 + $0x128] sm:%s836] %v993
        %v995 = vld [vmem:[%s843 + $0x134] sm:%s836]
        %996 = vst [vmem:[%s844 + $0x12c] sm:%s836] %v995
        %v997 = vld [vmem:[%s843 + $0x128] sm:%s836]
        %998 = vst [vmem:[%s844 + $0x130] sm:%s836] %v997
        %v999 = vld [vmem:[%s843 + $0x138] sm:%s836]
        %1000 = vst [vmem:[%s844 + $0x134] sm:%s836] %v999
        %v1001 = vld [vmem:[%s843 + $0x12c] sm:%s836]
        %1002 = vst [vmem:[%s844 + $0x138] sm:%s836] %v1001
        %v1003 = vld [vmem:[%s843 + $0x13c] sm:%s836]
        %1004 = vst [vmem:[%s844 + $0x13c] sm:%s836] %v1003
        %v1005 = vld [vmem:[%s843 + $0x140] sm:%s836]
        %1006 = vst [vmem:[%s844 + $0x140] sm:%s836] %v1005
        %v1007 = vld [vmem:[%s843 + $0x150] sm:%s836]
        %1008 = vst [vmem:[%s844 + $0x144] sm:%s836] %v1007
        %v1009 = vld [vmem:[%s843 + $0x144] sm:%s836]
        %1010 = vst [vmem:[%s844 + $0x148] sm:%s836] %v1009
        %v1011 = vld [vmem:[%s843 + $0x154] sm:%s836]
        %1012 = vst [vmem:[%s844 + $0x14c] sm:%s836] %v1011
        %v1013 = vld [vmem:[%s843 + $0x148] sm:%s836]
        %1014 = vst [vmem:[%s844 + $0x150] sm:%s836] %v1013
        %v1015 = vld [vmem:[%s843 + $0x158] sm:%s836]
        %1016 = vst [vmem:[%s844 + $0x154] sm:%s836] %v1015
        %v1017 = vld [vmem:[%s843 + $0x14c] sm:%s836]
        %1018 = vst [vmem:[%s844 + $0x158] sm:%s836] %v1017
        %v1019 = vld [vmem:[%s843 + $0x15c] sm:%s836]
        %1020 = vst [vmem:[%s844 + $0x15c] sm:%s836] %v1019
        %v1021 = vld [vmem:[%s843 + $0x160] sm:%s836]
        %1022 = vst [vmem:[%s844 + $0x160] sm:%s836] %v1021
        %v1023 = vld [vmem:[%s843 + $0x170] sm:%s836]
        %1024 = vst [vmem:[%s844 + $0x164] sm:%s836] %v1023
        %v1025 = vld [vmem:[%s843 + $0x164] sm:%s836]
        %1026 = vst [vmem:[%s844 + $0x168] sm:%s836] %v1025
        %v1027 = vld [vmem:[%s843 + $0x174] sm:%s836]
        %1028 = vst [vmem:[%s844 + $0x16c] sm:%s836] %v1027
        %v1029 = vld [vmem:[%s843 + $0x168] sm:%s836]
        %1030 = vst [vmem:[%s844 + $0x170] sm:%s836] %v1029
        %v1031 = vld [vmem:[%s843 + $0x178] sm:%s836]
        %1032 = vst [vmem:[%s844 + $0x174] sm:%s836] %v1031
        %v1033 = vld [vmem:[%s843 + $0x16c] sm:%s836]
        %1034 = vst [vmem:[%s844 + $0x178] sm:%s836] %v1033
        %v1035 = vld [vmem:[%s843 + $0x17c] sm:%s836]
        %1036 = vst [vmem:[%s844 + $0x17c] sm:%s836] %v1035
        %v1037 = vld [vmem:[%s843 + $0x180] sm:%s836]
        %1038 = vst [vmem:[%s844 + $0x180] sm:%s836] %v1037
        %v1039 = vld [vmem:[%s843 + $0x190] sm:%s836]
        %1040 = vst [vmem:[%s844 + $0x184] sm:%s836] %v1039
        %v1041 = vld [vmem:[%s843 + $0x184] sm:%s836]
        %1042 = vst [vmem:[%s844 + $0x188] sm:%s836] %v1041
        %v1043 = vld [vmem:[%s843 + $0x194] sm:%s836]
        %1044 = vst [vmem:[%s844 + $0x18c] sm:%s836] %v1043
        %v1045 = vld [vmem:[%s843 + $0x188] sm:%s836]
        %1046 = vst [vmem:[%s844 + $0x190] sm:%s836] %v1045
        %v1047 = vld [vmem:[%s843 + $0x198] sm:%s836]
        %1048 = vst [vmem:[%s844 + $0x194] sm:%s836] %v1047
        %v1049 = vld [vmem:[%s843 + $0x18c] sm:%s836]
        %1050 = vst [vmem:[%s844 + $0x198] sm:%s836] %v1049
        %v1051 = vld [vmem:[%s843 + $0x19c] sm:%s836]
        %1052 = vst [vmem:[%s844 + $0x19c] sm:%s836] %v1051
        %v1053 = vld [vmem:[%s843 + $0x1a0] sm:%s836]
        %1054 = vst [vmem:[%s844 + $0x1a0] sm:%s836] %v1053
        %v1055 = vld [vmem:[%s843 + $0x1b0] sm:%s836]
        %1056 = vst [vmem:[%s844 + $0x1a4] sm:%s836] %v1055
        %v1057 = vld [vmem:[%s843 + $0x1a4] sm:%s836]
        %1058 = vst [vmem:[%s844 + $0x1a8] sm:%s836] %v1057
        %v1059 = vld [vmem:[%s843 + $0x1b4] sm:%s836]
        %1060 = vst [vmem:[%s844 + $0x1ac] sm:%s836] %v1059
        %v1061 = vld [vmem:[%s843 + $0x1a8] sm:%s836]
        %1062 = vst [vmem:[%s844 + $0x1b0] sm:%s836] %v1061
        %v1063 = vld [vmem:[%s843 + $0x1b8] sm:%s836]
        %1064 = vst [vmem:[%s844 + $0x1b4] sm:%s836] %v1063
        %v1065 = vld [vmem:[%s843 + $0x1ac] sm:%s836]
        %1066 = vst [vmem:[%s844 + $0x1b8] sm:%s836] %v1065
        %v1067 = vld [vmem:[%s843 + $0x1bc] sm:%s836]
        %1068 = vst [vmem:[%s844 + $0x1bc] sm:%s836] %v1067
        %v1069 = vld [vmem:[%s843 + $0x1c0] sm:%s836]
        %1070 = vst [vmem:[%s844 + $0x1c0] sm:%s836] %v1069
        %v1071 = vld [vmem:[%s843 + $0x1d0] sm:%s836]
        %1072 = vst [vmem:[%s844 + $0x1c4] sm:%s836] %v1071
        %v1073 = vld [vmem:[%s843 + $0x1c4] sm:%s836]
        %1074 = vst [vmem:[%s844 + $0x1c8] sm:%s836] %v1073
        %v1075 = vld [vmem:[%s843 + $0x1d4] sm:%s836]
        %1076 = vst [vmem:[%s844 + $0x1cc] sm:%s836] %v1075
        %v1077 = vld [vmem:[%s843 + $0x1c8] sm:%s836]
        %1078 = vst [vmem:[%s844 + $0x1d0] sm:%s836] %v1077
        %v1079 = vld [vmem:[%s843 + $0x1d8] sm:%s836]
        %1080 = vst [vmem:[%s844 + $0x1d4] sm:%s836] %v1079
        %v1081 = vld [vmem:[%s843 + $0x1cc] sm:%s836]
        %1082 = vst [vmem:[%s844 + $0x1d8] sm:%s836] %v1081
        %v1083 = vld [vmem:[%s843 + $0x1dc] sm:%s836]
        %1084 = vst [vmem:[%s844 + $0x1dc] sm:%s836] %v1083
        %v1085 = vld [vmem:[%s843 + $0x1e0] sm:%s836]
        %1086 = vst [vmem:[%s844 + $0x1e0] sm:%s836] %v1085
        %v1087 = vld [vmem:[%s843 + $0x1f0] sm:%s836]
        %1088 = vst [vmem:[%s844 + $0x1e4] sm:%s836] %v1087
        %v1089 = vld [vmem:[%s843 + $0x1e4] sm:%s836]
        %1090 = vst [vmem:[%s844 + $0x1e8] sm:%s836] %v1089
        %v1091 = vld [vmem:[%s843 + $0x1f4] sm:%s836]
        %1092 = vst [vmem:[%s844 + $0x1ec] sm:%s836] %v1091
        %v1093 = vld [vmem:[%s843 + $0x1e8] sm:%s836]
        %1094 = vst [vmem:[%s844 + $0x1f0] sm:%s836] %v1093
        %v1095 = vld [vmem:[%s843 + $0x1f8] sm:%s836]
        %1096 = vst [vmem:[%s844 + $0x1f4] sm:%s836] %v1095
        %v1097 = vld [vmem:[%s843 + $0x1ec] sm:%s836]
        %1098 = vst [vmem:[%s844 + $0x1f8] sm:%s836] %v1097
        %v1099 = vld [vmem:[%s843 + $0x1fc] sm:%s836]
        %1100 = vst [vmem:[%s844 + $0x1fc] sm:%s836] %v1099
      $region292: #{bert_classifier_em_forward.1} parent=286 // loop_footer
        %s842 = sadd.s32 1, %s838
      $region293: #{bert_classifier_em_forward.1} parent=286 // loop_footer_branch
        %837 = sbr.rel target = $region289
      $region294: #{bert_classifier_em_forward.1} parent=286 // loop_exit
        _
    $region287: #{bert_classifier_em_forward.1} parent=1 // pred_fallthru
      _
    // Predicated region
    $region313: #{bert_classifier_em_forward.1} parent=1 // pred_check
      _
    $region314: #{bert_classifier_em_forward.1} parent=1 // pred_check_branch
      %1386 = sbr.rel (0) target = $region316
    $region315: #{bert_classifier_em_forward.1} parent=1 // pred_region
      %1387 = vsyncadd %s827, 8192
    $region316: #{bert_classifier_em_forward.1} parent=1 // pred_fallthru
      _
    %s1388 = scalar_lea.sflag [#allocation6], 3
    // Predicated region
    $region317: #{bert_classifier_em_forward.1} parent=1 // pred_check
      _
    $region318: #{bert_classifier_em_forward.1} parent=1 // pred_check_branch
      %1390 = sbr.rel target = $region320
    $region319: #{bert_classifier_em_forward.1} parent=1 // pred_region
      %1391 = sst [smem:[#allocation46]] [#allocation45]
      %1392 = sst [smem:[#allocation47]] [#allocation44]
    $region320: #{bert_classifier_em_forward.1} parent=1 // pred_fallthru
      _
    %1394 = shalt.err (0)
    %s1396 = sshll.u32 [#allocation5], 4
    %s1397 = int_to_ptr.vmem [resolvable:$true] %s1396
    %1399 = dma.hbm_to_vmem [thread:$0]  %s61, 3072, %s1397, %s1388
    %v1400 = vlaneseq
    %v1401 = vand.u32 %v1400, 127
    %v1402 = vld [vmem:[%s1] sm:$0xff]
    %v1403 = vld [vmem:[%s1 + $0x8] sm:$0xff]
    %1404 = vset.pattern.permute.xlu0 0
    %1405 = vperm.xlu0 %1404, %v1402
    %v1406 = vpop.permute.xlu0 %1405
    %1407 = vset.pattern.permute.xlu0 0
    %1408 = vperm.xlu0 %1407, %v1403
    %v1409 = vpop.permute.xlu0 %1408
    %vm1410 = vcmp.eq.s32.totalorder %v1401, %v1406
    %vm1411 = vcmp.eq.s32.totalorder %v1401, %v1409
    %v1412 = vsel %vm1410, 1, 0
    %v1413 = vsel %vm1411, 1, 0
    %v1414 = vcvt.s32.f32 %v1412
    %v1415 = vcvt.s32.f32 %v1413
    %v1416 = vld [vmem:[%s5] sm:$0xff]
    %v1417 = vld [vmem:[%s5 + $0x8] sm:$0xff]
    %v1418 = vld [vmem:[%s5 + $0x10] sm:$0xff]
    %v1419 = vld [vmem:[%s5 + $0x18] sm:$0xff]
    %v1420 = vld [vmem:[%s5 + $0x20] sm:$0xff]
    %v1421 = vld [vmem:[%s5 + $0x28] sm:$0xff]
    %v1422 = vld [vmem:[%s5 + $0x30] sm:$0xff]
    %v1423 = vld [vmem:[%s5 + $0x38] sm:$0xff]
    %v1424 = vld [vmem:[%s5 + $0x40] sm:$0xff]
    %v1425 = vld [vmem:[%s5 + $0x48] sm:$0xff]
    %v1426 = vld [vmem:[%s5 + $0x50] sm:$0xff]
    %v1427 = vld [vmem:[%s5 + $0x58] sm:$0xff]
    %v1428 = vld [vmem:[%s5 + $0x60] sm:$0xf]
    %vm1429 = vcmask 818176
    %v1431 = vsel %vm1429, %v1414, 0
    %v1434 = vsel %vm1429, %v1415, 0
    %vm1436 = vcmask 1043456
    %v1438 = vsel %vm1436, %v1428, 0
    %1440 = vmatprep.subr.mxu0 0.0
    %1441 = vmatpush1.msra.mxu0 %v1416
    %1442 = vmatprep.subr.mxu0 0.0
    %1443 = vmatpush1.msra.mxu0 %v1417
    %1444 = vmatprep.subr.mxu0 0.0
    %1445 = vmatpush1.msra.mxu0 %v1418
    %1446 = vmatprep.subr.mxu0 0.0
    %1447 = vmatpush1.msra.mxu0 %v1419
    %1448 = vmatprep.subr.mxu0 0.0
    %1449 = vmatpush1.msra.mxu0 %v1420
    %1450 = vmatprep.subr.mxu0 0.0
    %1451 = vmatpush1.msra.mxu0 %v1421
    %1452 = vmatprep.subr.mxu0 0.0
    %1453 = vmatpush1.msra.mxu0 %v1422
    %1454 = vmatprep.subr.mxu0 0.0
    %1455 = vmatpush1.msra.mxu0 %v1423
    %1456 = vmatprep.subr.mxu0 0.0
    %1457 = vmatpush1.msra.mxu0 %v1424
    %1458 = vmatprep.subr.mxu0 0.0
    %1459 = vmatpush1.msra.mxu0 %v1425
    %1460 = vmatprep.subr.mxu0 0.0
    %1461 = vmatpush1.msra.mxu0 %v1426
    %1462 = vmatprep.subr.mxu0 0.0
    %1463 = vmatpush1.msra.mxu0 %v1427
    %1464 = vmatprep.subr.mxu0 0.0
    %1465 = vmatpush1.msra.mxu0 %v1438
    %1466 = vmatprep.subr.mxu0 0.0
    %1467 = vmatpush1.msra.mxu0 0.0
    %1468 = vmatprep.subr.mxu0 0.0
    %1469 = vmatpush1.msra.mxu0 0.0
    %1470 = vmatprep.subr.mxu0 0.0
    %1471 = vmatpush1.msra.mxu0 0.0
    %1472 = vmatprep.subr.mxu0 0.0
    %1473 = vmatpush1.msra.mxu0 0.0
    %1474 = vmatprep.subr.mxu0 0.0
    %1475 = vmatpush1.msra.mxu0 0.0
    %1476 = vmatprep.subr.mxu0 0.0
    %1477 = vmatpush1.msra.mxu0 0.0
    %1478 = vmatprep.subr.mxu0 0.0
    %1479 = vmatpush1.msra.mxu0 0.0
    %1480 = vmatprep.subr.mxu0 0.0
    %1481 = vmatpush1.msra.mxu0 0.0
    %1482 = vmatprep.subr.mxu0 0.0
    %1483 = vmatpush1.msra.mxu0 0.0
    %1484 = vmatprep.subr.mxu0 0.0
    %1485 = vmatpush1.msra.mxu0 0.0
    %1486 = vmatprep.subr.mxu0 0.0
    %1487 = vmatpush1.msra.mxu0 0.0
    %1488 = vmatprep.subr.mxu0 0.0
    %1489 = vmatpush1.msra.mxu0 0.0
    %1490 = vmatprep.subr.mxu0 0.0
    %1491 = vmatpush1.msra.mxu0 0.0
    %1492 = vmatprep.subr.mxu0 0.0
    %1493 = vmatpush1.msra.mxu0 0.0
    %1494 = vmatprep.subr.mxu0 0.0
    %1495 = vmatpush1.msra.mxu0 0.0
    %1496 = vmatprep.subr.mxu0 0.0
    %1497 = vmatpush1.msra.mxu0 0.0
    %1498 = vmatprep.subr.mxu0 0.0
    %1499 = vmatpush1.msra.mxu0 0.0
    %1500 = vmatprep.subr.mxu0 0.0
    %1501 = vmatpush1.msra.mxu0 0.0
    %1502 = vmatprep.subr.mxu0 0.0
    %1503 = vmatpush1.msra.mxu0 0.0
    %1504 = vmatprep.mubr.f32.mxu0 0.0
    %1505 = vmatmul.mubr.f32.gmra.mrb[0].mxu0 %v1431
    %v1506 = vpop.f32.mrb[0].mxu0
    %v1507 = vadd.f32 0.0, %v1506
    %v1508 = vpop.f32.mrb[0].mxu0
    %1509 = vmatprep.mubr.f32.mxu0 0.0
    %1510 = vmatmul.mubr.f32.gmra.mrb[0].mxu0 %v1434
    %v1511 = vpop.f32.mrb[0].mxu0
    %v1512 = vadd.f32 0.0, %v1511
    %v1513 = vpop.f32.mrb[0].mxu0
    %1514 = vdwg.mxu0
    %v1515 = vld [vmem:[#allocation7] sm:$0xff]
    %v1516 = vadd.f32 %v1507, %v1515
    %v1517 = vadd.f32 %v1512, %v1515
    %v1518 = vld [vmem:[#allocation10] sm:$0x1]
    %v1519 = vld [vmem:[#allocation12] sm:$0x1]
    %vm1520 = vcmask 261120
    %v1521 = vsel %vm1520, %v1516, 0.0
    %1522 = vadd.xlane.f32.xlu0 %v1521
    %v1523 = vpop.xlane.xlu0 %1522
    %v1524 = vsel %vm1520, %v1517, 0.0
    %1525 = vadd.xlane.f32.xlu0 %v1524
    %v1526 = vpop.xlane.xlu0 %1525
    %v1527 = vrcp.pop 32.0
    %v1528 = vmul.f32 %v1523, %v1527
    %v1529 = vmul.f32 %v1526, %v1527
    %v1530 = vsub.f32 %v1516, %v1528
    %v1531 = vsub.f32 %v1517, %v1529
    %v1532 = vmul.f32 %v1530, %v1530
    %v1533 = vmul.f32 %v1531, %v1531
    %v1534 = vsel %vm1520, %v1532, 0.0
    %1535 = vadd.xlane.f32.xlu0 %v1534
    %v1536 = vpop.xlane.xlu0 %1535
    %v1537 = vsel %vm1520, %v1533, 0.0
    %1538 = vadd.xlane.f32.xlu0 %v1537
    %v1539 = vpop.xlane.xlu0 %1538
    %v1540 = vmul.f32 %v1536, %v1527
    %v1541 = vmul.f32 %v1539, %v1527
    %v1542 = vadd.f32 %v1540, 1e-12
    %v1543 = vadd.f32 %v1541, 1e-12
    %v1544 = vrsqrt.pop %v1542
    %v1545 = vrsqrt.pop %v1543
    %v1546 = vmul.f32 %v1530, %v1544
    %v1547 = vmul.f32 %v1531, %v1545
    %v1549 = vlaneseq
    %v1550 = vshrl.u32 %v1549, 7
    %v1551 = vsub.s32 0, %v1550
    %v1552 = vrot.slane %v1518, %v1551
    %v1554 = vmul.f32 %v1546, %v1552
    %v1555 = vmul.f32 %v1547, %v1552
    %v1557 = vlaneseq
    %v1558 = vshrl.u32 %v1557, 7
    %v1559 = vsub.s32 0, %v1558
    %v1560 = vrot.slane %v1519, %v1559
    %v1562 = vadd.f32 %v1554, %v1560
    %v1563 = vadd.f32 %v1555, %v1560
    %v1564 = vld [vmem:[%s3] sm:$0x3]
    %v1565 = vcvt.s32.f32 %v1564
    %v1566 = vsub.f32 1.0, %v1565
    %v1567 = vmul.f32 %v1566, -10000.0
    %v1570 = vunpack.c.l.s4 1966171168
    %v1571 = vunpack.c.0.s8 %v1570
    %v1572 = vlaneseq
    %v1573 = vshrl.u32 %v1572, 7
    %v1574 = vsub.s32 %v1571, %v1573
    %v1575 = vrot.slane %v1567, %v1574
    %v1576 = vcombine.high %v1575, %v1575
    %v1578 = vunpack.c.l.s4 1966171168
    %v1579 = vunpack.c.0.s8 %v1578
    %v1580 = vlaneseq
    %v1581 = vshrl.u32 %v1580, 7
    %v1582 = vsub.s32 %v1579, %v1581
    %v1583 = vrot.slane %v1575, %v1582
    %v1585 = vunpack.c.l.s4 1966171168
    %v1586 = vunpack.c.0.s8 %v1585
    %v1587 = vlaneseq
    %v1588 = vshrl.u32 %v1587, 7
    %v1589 = vsub.s32 %v1586, %v1588
    %v1590 = vrot.slane %v1576, %v1589
    %v1591 = vlaneseq
    %v1592 = vshrl.u32 %v1591, 7
    %v1593 = vsub.s32 0, %v1592
    %v1594 = vrot.slane %v1583, %v1593
    %v1595 = vlaneseq
    %v1596 = vshrl.u32 %v1595, 7
    %v1597 = vsub.s32 0, %v1596
    %v1598 = vrot.slane %v1590, %v1597
    %v1601 = vpack.c.bf16 %v1563, %v1562
    %v1602 = vld [vmem:[%s13] sm:$0xf]
    %v1603 = vld [vmem:[%s13 + $0x4] sm:$0xf]
    %v1604 = vld [vmem:[%s13 + $0x8] sm:$0xf]
    %v1605 = vld [vmem:[%s13 + $0xc] sm:$0xf]
    %v1606 = vld [vmem:[%s13 + $0x10] sm:$0xf]
    %v1607 = vld [vmem:[%s13 + $0x14] sm:$0xf]
    %v1608 = vld [vmem:[%s13 + $0x18] sm:$0xf]
    %v1609 = vld [vmem:[%s13 + $0x1c] sm:$0xf]
    %v1610 = vld [vmem:[%s13 + $0x20] sm:$0xf]
    %v1611 = vld [vmem:[%s13 + $0x24] sm:$0xf]
    %v1612 = vld [vmem:[%s13 + $0x28] sm:$0xf]
    %v1613 = vld [vmem:[%s13 + $0x2c] sm:$0xf]
    %v1614 = vld [vmem:[%s13 + $0x30] sm:$0xf]
    %v1615 = vld [vmem:[%s13 + $0x34] sm:$0xf]
    %v1616 = vld [vmem:[%s13 + $0x38] sm:$0xf]
    %v1617 = vld [vmem:[%s13 + $0x3c] sm:$0xf]
    %v1618 = vld [vmem:[%s15] sm:$0xf]
    %v1619 = vld [vmem:[%s15 + $0x4] sm:$0xf]
    %v1620 = vld [vmem:[%s15 + $0x8] sm:$0xf]
    %v1621 = vld [vmem:[%s15 + $0xc] sm:$0xf]
    %v1622 = vld [vmem:[%s15 + $0x10] sm:$0xf]
    %v1623 = vld [vmem:[%s15 + $0x14] sm:$0xf]
    %v1624 = vld [vmem:[%s15 + $0x18] sm:$0xf]
    %v1625 = vld [vmem:[%s15 + $0x1c] sm:$0xf]
    %v1626 = vld [vmem:[%s15 + $0x20] sm:$0xf]
    %v1627 = vld [vmem:[%s15 + $0x24] sm:$0xf]
    %v1628 = vld [vmem:[%s15 + $0x28] sm:$0xf]
    %v1629 = vld [vmem:[%s15 + $0x2c] sm:$0xf]
    %v1630 = vld [vmem:[%s15 + $0x30] sm:$0xf]
    %v1631 = vld [vmem:[%s15 + $0x34] sm:$0xf]
    %v1632 = vld [vmem:[%s15 + $0x38] sm:$0xf]
    %v1633 = vld [vmem:[%s15 + $0x3c] sm:$0xf]
    %v1634 = vld [vmem:[%s17] sm:$0xf]
    %v1635 = vld [vmem:[%s17 + $0x4] sm:$0xf]
    %v1636 = vld [vmem:[%s17 + $0x8] sm:$0xf]
    %v1637 = vld [vmem:[%s17 + $0xc] sm:$0xf]
    %v1638 = vld [vmem:[%s17 + $0x10] sm:$0xf]
    %v1639 = vld [vmem:[%s17 + $0x14] sm:$0xf]
    %v1640 = vld [vmem:[%s17 + $0x18] sm:$0xf]
    %v1641 = vld [vmem:[%s17 + $0x1c] sm:$0xf]
    %v1642 = vld [vmem:[%s17 + $0x20] sm:$0xf]
    %v1643 = vld [vmem:[%s17 + $0x24] sm:$0xf]
    %v1644 = vld [vmem:[%s17 + $0x28] sm:$0xf]
    %v1645 = vld [vmem:[%s17 + $0x2c] sm:$0xf]
    %v1646 = vld [vmem:[%s17 + $0x30] sm:$0xf]
    %v1647 = vld [vmem:[%s17 + $0x34] sm:$0xf]
    %v1648 = vld [vmem:[%s17 + $0x38] sm:$0xf]
    %v1649 = vld [vmem:[%s17 + $0x3c] sm:$0xf]
    %v1650 = vld [vmem:[#allocation13] sm:$0x1]
    %v1651 = vld [vmem:[#allocation13 + $0x1] sm:$0x1]
    %v1652 = vld [vmem:[#allocation13 + $0x2] sm:$0x1]
    %v1653 = vld [vmem:[#allocation13 + $0x3] sm:$0x1]
    %v1654 = vld [vmem:[#allocation15] sm:$0x1]
    %v1655 = vld [vmem:[#allocation15 + $0x1] sm:$0x1]
    %v1656 = vld [vmem:[#allocation15 + $0x2] sm:$0x1]
    %v1657 = vld [vmem:[#allocation15 + $0x3] sm:$0x1]
    %v1658 = vld [vmem:[#allocation16] sm:$0x1]
    %v1659 = vld [vmem:[#allocation16 + $0x1] sm:$0x1]
    %v1660 = vld [vmem:[#allocation16 + $0x2] sm:$0x1]
    %v1661 = vld [vmem:[#allocation16 + $0x3] sm:$0x1]
    %v1662 = vld [vmem:[%s25] sm:$0xf]
    %v1663 = vld [vmem:[%s25 + $0x4] sm:$0xf]
    %v1664 = vld [vmem:[%s25 + $0x8] sm:$0xf]
    %v1665 = vld [vmem:[%s25 + $0xc] sm:$0xf]
    %v1667 = vlaneseq
    %v1668 = vshrl.u32 %v1667, 7
    %v1669 = vsub.s32 0, %v1668
    %v1670 = vrot.slane %v1650, %v1669
    %v1676 = vunpack.c.l.b16 %v1602
    %v1677 = vunpack.c.l.b16 %v1603
    %v1678 = vunpack.c.l.b16 %v1604
    %v1679 = vunpack.c.l.b16 %v1605
    %v1680 = vpack.c.b16 %v1677, %v1676
    %v1681 = vpack.c.b16 %v1679, %v1678
    %v1685 = vsel %vm1520, %v1601, 0
    %1687 = vmatprep.subr.bf16.mxu0 0
    %1688 = vmatpush1.bf16.msra.mxu0 %v1680
    %1689 = vmatprep.subr.bf16.mxu0 0
    %1690 = vmatpush1.bf16.msra.mxu0 %v1681
    %1691 = vmatprep.subr.bf16.mxu0 0
    %1692 = vmatpush1.bf16.msra.mxu0 0
    %1693 = vmatprep.subr.bf16.mxu0 0
    %1694 = vmatpush1.bf16.msra.mxu0 0
    %1695 = vmatprep.subr.bf16.mxu0 0
    %1696 = vmatpush1.bf16.msra.mxu0 0
    %1697 = vmatprep.subr.bf16.mxu0 0
    %1698 = vmatpush1.bf16.msra.mxu0 0
    %1699 = vmatprep.subr.bf16.mxu0 0
    %1700 = vmatpush1.bf16.msra.mxu0 0
    %1701 = vmatprep.subr.bf16.mxu0 0
    %1702 = vmatpush1.bf16.msra.mxu0 0
    %1703 = vmatprep.subr.bf16.mxu0 0
    %1704 = vmatpush1.bf16.msra.mxu0 0
    %1705 = vmatprep.subr.bf16.mxu0 0
    %1706 = vmatpush1.bf16.msra.mxu0 0
    %1707 = vmatprep.subr.bf16.mxu0 0
    %1708 = vmatpush1.bf16.msra.mxu0 0
    %1709 = vmatprep.subr.bf16.mxu0 0
    %1710 = vmatpush1.bf16.msra.mxu0 0
    %1711 = vmatprep.subr.bf16.mxu0 0
    %1712 = vmatpush1.bf16.msra.mxu0 0
    %1713 = vmatprep.subr.bf16.mxu0 0
    %1714 = vmatpush1.bf16.msra.mxu0 0
    %1715 = vmatprep.subr.bf16.mxu0 0
    %1716 = vmatpush1.bf16.msra.mxu0 0
    %1717 = vmatprep.subr.bf16.mxu0 0
    %1718 = vmatpush1.bf16.msra.mxu0 0
    %1719 = vmatprep.mubr.bf16.mxu0 0
    %1720 = vmatmul.mubr.bf16.gmra.mrb[0].mxu0 %v1685
    %v1721 = vpop.f32.mrb[0].mxu0
    %v1722 = vadd.f32 %v1670, %v1721
    %v1723 = vpop.f32.mrb[0].mxu0
    %v1724 = vpop.f32.mrb[0].mxu0
    %v1725 = vadd.f32 %v1670, %v1724
    %v1726 = vpop.f32.mrb[0].mxu0
    %1727 = vdwg.mxu0
    %v1729 = vlaneseq
    %v1730 = vshrl.u32 %v1729, 7
    %v1731 = vsub.s32 0, %v1730
    %v1732 = vrot.slane %v1654, %v1731
    %v1738 = vunpack.c.l.b16 %v1618
    %v1739 = vunpack.c.l.b16 %v1619
    %v1740 = vunpack.c.l.b16 %v1620
    %v1741 = vunpack.c.l.b16 %v1621
    %v1742 = vpack.c.b16 %v1739, %v1738
    %v1743 = vpack.c.b16 %v1741, %v1740
    %1746 = vmatprep.subr.bf16.mxu0 0
    %1747 = vmatpush1.bf16.msra.mxu0 %v1742
    %1748 = vmatprep.subr.bf16.mxu0 0
    %1749 = vmatpush1.bf16.msra.mxu0 %v1743
    %1750 = vmatprep.subr.bf16.mxu0 0
    %1751 = vmatpush1.bf16.msra.mxu0 0
    %1752 = vmatprep.subr.bf16.mxu0 0
    %1753 = vmatpush1.bf16.msra.mxu0 0
    %1754 = vmatprep.subr.bf16.mxu0 0
    %1755 = vmatpush1.bf16.msra.mxu0 0
    %1756 = vmatprep.subr.bf16.mxu0 0
    %1757 = vmatpush1.bf16.msra.mxu0 0
    %1758 = vmatprep.subr.bf16.mxu0 0
    %1759 = vmatpush1.bf16.msra.mxu0 0
    %1760 = vmatprep.subr.bf16.mxu0 0
    %1761 = vmatpush1.bf16.msra.mxu0 0
    %1762 = vmatprep.subr.bf16.mxu0 0
    %1763 = vmatpush1.bf16.msra.mxu0 0
    %1764 = vmatprep.subr.bf16.mxu0 0
    %1765 = vmatpush1.bf16.msra.mxu0 0
    %1766 = vmatprep.subr.bf16.mxu0 0
    %1767 = vmatpush1.bf16.msra.mxu0 0
    %1768 = vmatprep.subr.bf16.mxu0 0
    %1769 = vmatpush1.bf16.msra.mxu0 0
    %1770 = vmatprep.subr.bf16.mxu0 0
    %1771 = vmatpush1.bf16.msra.mxu0 0
    %1772 = vmatprep.subr.bf16.mxu0 0
    %1773 = vmatpush1.bf16.msra.mxu0 0
    %1774 = vmatprep.subr.bf16.mxu0 0
    %1775 = vmatpush1.bf16.msra.mxu0 0
    %1776 = vmatprep.subr.bf16.mxu0 0
    %1777 = vmatpush1.bf16.msra.mxu0 0
    %1778 = vmatprep.mubr.bf16.mxu0 0
    %1779 = vmatmul.mubr.bf16.gmra.mrb[0].mxu0 %v1685
    %v1780 = vpop.f32.mrb[0].mxu0
    %v1781 = vadd.f32 %v1732, %v1780
    %v1782 = vpop.f32.mrb[0].mxu0
    %v1783 = vpop.f32.mrb[0].mxu0
    %v1784 = vadd.f32 %v1732, %v1783
    %v1785 = vpop.f32.mrb[0].mxu0
    %1786 = vdwg.mxu0
    %v1788 = vlaneseq
    %v1789 = vshrl.u32 %v1788, 7
    %v1790 = vsub.s32 0, %v1789
    %v1791 = vrot.slane %v1658, %v1790
    %v1797 = vunpack.c.l.b16 %v1634
    %v1798 = vunpack.c.l.b16 %v1635
    %v1799 = vunpack.c.l.b16 %v1636
    %v1800 = vunpack.c.l.b16 %v1637
    %v1801 = vpack.c.b16 %v1798, %v1797
    %v1802 = vpack.c.b16 %v1800, %v1799
    %1805 = vmatprep.subr.bf16.mxu0 0
    %1806 = vmatpush1.bf16.msra.mxu0 %v1801
    %1807 = vmatprep.subr.bf16.mxu0 0
    %1808 = vmatpush1.bf16.msra.mxu0 %v1802
    %1809 = vmatprep.subr.bf16.mxu0 0
    %1810 = vmatpush1.bf16.msra.mxu0 0
    %1811 = vmatprep.subr.bf16.mxu0 0
    %1812 = vmatpush1.bf16.msra.mxu0 0
    %1813 = vmatprep.subr.bf16.mxu0 0
    %1814 = vmatpush1.bf16.msra.mxu0 0
    %1815 = vmatprep.subr.bf16.mxu0 0
    %1816 = vmatpush1.bf16.msra.mxu0 0
    %1817 = vmatprep.subr.bf16.mxu0 0
    %1818 = vmatpush1.bf16.msra.mxu0 0
    %1819 = vmatprep.subr.bf16.mxu0 0
    %1820 = vmatpush1.bf16.msra.mxu0 0
    %1821 = vmatprep.subr.bf16.mxu0 0
    %1822 = vmatpush1.bf16.msra.mxu0 0
    %1823 = vmatprep.subr.bf16.mxu0 0
    %1824 = vmatpush1.bf16.msra.mxu0 0
    %1825 = vmatprep.subr.bf16.mxu0 0
    %1826 = vmatpush1.bf16.msra.mxu0 0
    %1827 = vmatprep.subr.bf16.mxu0 0
    %1828 = vmatpush1.bf16.msra.mxu0 0
    %1829 = vmatprep.subr.bf16.mxu0 0
    %1830 = vmatpush1.bf16.msra.mxu0 0
    %1831 = vmatprep.subr.bf16.mxu0 0
    %1832 = vmatpush1.bf16.msra.mxu0 0
    %1833 = vmatprep.subr.bf16.mxu0 0
    %1834 = vmatpush1.bf16.msra.mxu0 0
    %1835 = vmatprep.subr.bf16.mxu0 0
    %1836 = vmatpush1.bf16.msra.mxu0 0
    %1837 = vmatprep.mubr.bf16.mxu0 0
    %1838 = vmatmul.mubr.bf16.gmra.mrb[0].mxu0 %v1685
    %v1839 = vpop.f32.mrb[0].mxu0
    %v1840 = vadd.f32 %v1791, %v1839
    %v1841 = vpop.f32.mrb[0].mxu0
    %v1842 = vpop.f32.mrb[0].mxu0
    %v1843 = vadd.f32 %v1791, %v1842
    %v1844 = vpop.f32.mrb[0].mxu0
    %1845 = vdwg.mxu0
    %vm1846 = vcmask 64512
    %v1848 = vsel %vm1846, %v1722, 0
    %v1851 = vsel %vm1846, %v1781, 0
    %1853 = vmatprep.subr.mxu0 0.0
    %1854 = vmatpush1.xpose.msra.mxu0 %v1851
    %1855 = vmatprep.subr.mxu0 0.0
    %1856 = vmatpush1.xpose.msra.mxu0 0.0
    %1857 = vmatprep.subr.mxu0 0.0
    %1858 = vmatpush1.xpose.msra.mxu0 0.0
    %1859 = vmatprep.subr.mxu0 0.0
    %1860 = vmatpush1.xpose.msra.mxu0 0.0
    %1861 = vmatprep.subr.mxu0 0.0
    %1862 = vmatpush1.xpose.msra.mxu0 0.0
    %1863 = vmatprep.subr.mxu0 0.0
    %1864 = vmatpush1.xpose.msra.mxu0 0.0
    %1865 = vmatprep.subr.mxu0 0.0
    %1866 = vmatpush1.xpose.msra.mxu0 0.0
    %1867 = vmatprep.subr.mxu0 0.0
    %1868 = vmatpush1.xpose.msra.mxu0 0.0
    %1869 = vmatprep.subr.mxu0 0.0
    %1870 = vmatpush1.xpose.msra.mxu0 0.0
    %1871 = vmatprep.subr.mxu0 0.0
    %1872 = vmatpush1.xpose.msra.mxu0 0.0
    %1873 = vmatprep.subr.mxu0 0.0
    %1874 = vmatpush1.xpose.msra.mxu0 0.0
    %1875 = vmatprep.subr.mxu0 0.0
    %1876 = vmatpush1.xpose.msra.mxu0 0.0
    %1877 = vmatprep.subr.mxu0 0.0
    %1878 = vmatpush1.xpose.msra.mxu0 0.0
    %1879 = vmatprep.subr.mxu0 0.0
    %1880 = vmatpush1.xpose.msra.mxu0 0.0
    %1881 = vmatprep.subr.mxu0 0.0
    %1882 = vmatpush1.xpose.msra.mxu0 0.0
    %1883 = vmatprep.subr.mxu0 0.0
    %1884 = vmatpush1.xpose.msra.mxu0 0.0
    %1885 = vmatprep.subr.mxu0 0.0
    %1886 = vmatpush1.xpose.msra.mxu0 0.0
    %1887 = vmatprep.subr.mxu0 0.0
    %1888 = vmatpush1.xpose.msra.mxu0 0.0
    %1889 = vmatprep.subr.mxu0 0.0
    %1890 = vmatpush1.xpose.msra.mxu0 0.0
    %1891 = vmatprep.subr.mxu0 0.0
    %1892 = vmatpush1.xpose.msra.mxu0 0.0
    %1893 = vmatprep.subr.mxu0 0.0
    %1894 = vmatpush1.xpose.msra.mxu0 0.0
    %1895 = vmatprep.subr.mxu0 0.0
    %1896 = vmatpush1.xpose.msra.mxu0 0.0
    %1897 = vmatprep.subr.mxu0 0.0
    %1898 = vmatpush1.xpose.msra.mxu0 0.0
    %1899 = vmatprep.subr.mxu0 0.0
    %1900 = vmatpush1.xpose.msra.mxu0 0.0
    %1901 = vmatprep.subr.mxu0 0.0
    %1902 = vmatpush1.xpose.msra.mxu0 0.0
    %1903 = vmatprep.subr.mxu0 0.0
    %1904 = vmatpush1.xpose.msra.mxu0 0.0
    %1905 = vmatprep.subr.mxu0 0.0
    %1906 = vmatpush1.xpose.msra.mxu0 0.0
    %1907 = vmatprep.subr.mxu0 0.0
    %1908 = vmatpush1.xpose.msra.mxu0 0.0
    %1909 = vmatprep.subr.mxu0 0.0
    %1910 = vmatpush1.xpose.msra.mxu0 0.0
    %1911 = vmatprep.subr.mxu0 0.0
    %1912 = vmatpush1.xpose.msra.mxu0 0.0
    %1913 = vmatprep.subr.mxu0 0.0
    %1914 = vmatpush1.xpose.msra.mxu0 0.0
    %1915 = vmatprep.subr.mxu0 0.0
    %1916 = vmatpush1.xpose.msra.mxu0 0.0
    %1917 = vmatprep.mubr.f32.mxu0 0.0
    %1918 = vmatmul.mubr.f32.gmra.mrb[0].mxu0 %v1848
    %v1919 = vpop.f32.mrb[0].mxu0
    %v1920 = vadd.f32 %v1594, %v1919
    %v1921 = vpop.f32.mrb[0].mxu0
    %1922 = vdwg.mxu0
    %v1924 = vsel %vm1846, %v1725, 0
    %v1927 = vsel %vm1846, %v1784, 0
    %1929 = vmatprep.subr.mxu0 0.0
    %1930 = vmatpush1.xpose.msra.mxu0 %v1927
    %1931 = vmatprep.subr.mxu0 0.0
    %1932 = vmatpush1.xpose.msra.mxu0 0.0
    %1933 = vmatprep.subr.mxu0 0.0
    %1934 = vmatpush1.xpose.msra.mxu0 0.0
    %1935 = vmatprep.subr.mxu0 0.0
    %1936 = vmatpush1.xpose.msra.mxu0 0.0
    %1937 = vmatprep.subr.mxu0 0.0
    %1938 = vmatpush1.xpose.msra.mxu0 0.0
    %1939 = vmatprep.subr.mxu0 0.0
    %1940 = vmatpush1.xpose.msra.mxu0 0.0
    %1941 = vmatprep.subr.mxu0 0.0
    %1942 = vmatpush1.xpose.msra.mxu0 0.0
    %1943 = vmatprep.subr.mxu0 0.0
    %1944 = vmatpush1.xpose.msra.mxu0 0.0
    %1945 = vmatprep.subr.mxu0 0.0
    %1946 = vmatpush1.xpose.msra.mxu0 0.0
    %1947 = vmatprep.subr.mxu0 0.0
    %1948 = vmatpush1.xpose.msra.mxu0 0.0
    %1949 = vmatprep.subr.mxu0 0.0
    %1950 = vmatpush1.xpose.msra.mxu0 0.0
    %1951 = vmatprep.subr.mxu0 0.0
    %1952 = vmatpush1.xpose.msra.mxu0 0.0
    %1953 = vmatprep.subr.mxu0 0.0
    %1954 = vmatpush1.xpose.msra.mxu0 0.0
    %1955 = vmatprep.subr.mxu0 0.0
    %1956 = vmatpush1.xpose.msra.mxu0 0.0
    %1957 = vmatprep.subr.mxu0 0.0
    %1958 = vmatpush1.xpose.msra.mxu0 0.0
    %1959 = vmatprep.subr.mxu0 0.0
    %1960 = vmatpush1.xpose.msra.mxu0 0.0
    %1961 = vmatprep.subr.mxu0 0.0
    %1962 = vmatpush1.xpose.msra.mxu0 0.0
    %1963 = vmatprep.subr.mxu0 0.0
    %1964 = vmatpush1.xpose.msra.mxu0 0.0
    %1965 = vmatprep.subr.mxu0 0.0
    %1966 = vmatpush1.xpose.msra.mxu0 0.0
    %1967 = vmatprep.subr.mxu0 0.0
    %1968 = vmatpush1.xpose.msra.mxu0 0.0
    %1969 = vmatprep.subr.mxu0 0.0
    %1970 = vmatpush1.xpose.msra.mxu0 0.0
    %1971 = vmatprep.subr.mxu0 0.0
    %1972 = vmatpush1.xpose.msra.mxu0 0.0
    %1973 = vmatprep.subr.mxu0 0.0
    %1974 = vmatpush1.xpose.msra.mxu0 0.0
    %1975 = vmatprep.subr.mxu0 0.0
    %1976 = vmatpush1.xpose.msra.mxu0 0.0
    %1977 = vmatprep.subr.mxu0 0.0
    %1978 = vmatpush1.xpose.msra.mxu0 0.0
    %1979 = vmatprep.subr.mxu0 0.0
    %1980 = vmatpush1.xpose.msra.mxu0 0.0
    %1981 = vmatprep.subr.mxu0 0.0
    %1982 = vmatpush1.xpose.msra.mxu0 0.0
    %1983 = vmatprep.subr.mxu0 0.0
    %1984 = vmatpush1.xpose.msra.mxu0 0.0
    %1985 = vmatprep.subr.mxu0 0.0
    %1986 = vmatpush1.xpose.msra.mxu0 0.0
    %1987 = vmatprep.subr.mxu0 0.0
    %1988 = vmatpush1.xpose.msra.mxu0 0.0
    %1989 = vmatprep.subr.mxu0 0.0
    %1990 = vmatpush1.xpose.msra.mxu0 0.0
    %1991 = vmatprep.subr.mxu0 0.0
    %1992 = vmatpush1.xpose.msra.mxu0 0.0
    %1993 = vmatprep.mubr.f32.mxu0 0.0
    %1994 = vmatmul.mubr.f32.gmra.mrb[0].mxu0 %v1924
    %v1995 = vpop.f32.mrb[0].mxu0
    %v1996 = vadd.f32 %v1598, %v1995
    %v1997 = vpop.f32.mrb[0].mxu0
    %1998 = vdwg.mxu0
    %v1999 = vsel %vm1846, %v1920, -inf
    %2000 = vmax.xlane.f32.xlu0 %v1999
    %v2001 = vpop.xlane.xlu0 %2000
    %v2002 = vsel %vm1846, %v1996, -inf
    %2003 = vmax.xlane.f32.xlu0 %v2002
    %v2004 = vpop.xlane.xlu0 %2003
    %v2005 = vsub.f32 %v1920, %v2001
    %v2006 = vsub.f32 %v1996, %v2004
    %v2007 = vmul.f32 %v2005, 1.442695
    %v2008 = vpow.pop %v2007
    %v2009 = vmul.f32 %v2006, 1.442695
    %v2010 = vpow.pop %v2009
    %v2011 = vsel %vm1846, %v2008, 0.0
    %2012 = vadd.xlane.f32.xlu0 %v2011
    %v2013 = vpop.xlane.xlu0 %2012
    %v2014 = vsel %vm1846, %v2010, 0.0
    %2015 = vadd.xlane.f32.xlu0 %v2014
    %v2016 = vpop.xlane.xlu0 %2015
    %v2017 = vrcp.pop %v2013
    %v2018 = vrcp.pop %v2016
    %v2019 = vmul.f32 %v2008, %v2017
    %v2020 = vmul.f32 %v2010, %v2018
    %v2022 = vsel %vm1846, %v2019, 0
    %2024 = vmatprep.subr.mxu0 0.0
    %2025 = vmatpush1.msra.mxu0 %v1840
    %2026 = vmatprep.subr.mxu0 0.0
    %2027 = vmatpush1.msra.mxu0 0.0
    %2028 = vmatprep.subr.mxu0 0.0
    %2029 = vmatpush1.msra.mxu0 0.0
    %2030 = vmatprep.subr.mxu0 0.0
    %2031 = vmatpush1.msra.mxu0 0.0
    %2032 = vmatprep.subr.mxu0 0.0
    %2033 = vmatpush1.msra.mxu0 0.0
    %2034 = vmatprep.subr.mxu0 0.0
    %2035 = vmatpush1.msra.mxu0 0.0
    %2036 = vmatprep.subr.mxu0 0.0
    %2037 = vmatpush1.msra.mxu0 0.0
    %2038 = vmatprep.subr.mxu0 0.0
    %2039 = vmatpush1.msra.mxu0 0.0
    %2040 = vmatprep.subr.mxu0 0.0
    %2041 = vmatpush1.msra.mxu0 0.0
    %2042 = vmatprep.subr.mxu0 0.0
    %2043 = vmatpush1.msra.mxu0 0.0
    %2044 = vmatprep.subr.mxu0 0.0
    %2045 = vmatpush1.msra.mxu0 0.0
    %2046 = vmatprep.subr.mxu0 0.0
    %2047 = vmatpush1.msra.mxu0 0.0
    %2048 = vmatprep.subr.mxu0 0.0
    %2049 = vmatpush1.msra.mxu0 0.0
    %2050 = vmatprep.subr.mxu0 0.0
    %2051 = vmatpush1.msra.mxu0 0.0
    %2052 = vmatprep.subr.mxu0 0.0
    %2053 = vmatpush1.msra.mxu0 0.0
    %2054 = vmatprep.subr.mxu0 0.0
    %2055 = vmatpush1.msra.mxu0 0.0
    %2056 = vmatprep.subr.mxu0 0.0
    %2057 = vmatpush1.msra.mxu0 0.0
    %2058 = vmatprep.subr.mxu0 0.0
    %2059 = vmatpush1.msra.mxu0 0.0
    %2060 = vmatprep.subr.mxu0 0.0
    %2061 = vmatpush1.msra.mxu0 0.0
    %2062 = vmatprep.subr.mxu0 0.0
    %2063 = vmatpush1.msra.mxu0 0.0
    %2064 = vmatprep.subr.mxu0 0.0
    %2065 = vmatpush1.msra.mxu0 0.0
    %2066 = vmatprep.subr.mxu0 0.0
    %2067 = vmatpush1.msra.mxu0 0.0
    %2068 = vmatprep.subr.mxu0 0.0
    %2069 = vmatpush1.msra.mxu0 0.0
    %2070 = vmatprep.subr.mxu0 0.0
    %2071 = vmatpush1.msra.mxu0 0.0
    %2072 = vmatprep.subr.mxu0 0.0
    %2073 = vmatpush1.msra.mxu0 0.0
    %2074 = vmatprep.subr.mxu0 0.0
    %2075 = vmatpush1.msra.mxu0 0.0
    %2076 = vmatprep.subr.mxu0 0.0
    %2077 = vmatpush1.msra.mxu0 0.0
    %2078 = vmatprep.subr.mxu0 0.0
    %2079 = vmatpush1.msra.mxu0 0.0
    %2080 = vmatprep.subr.mxu0 0.0
    %2081 = vmatpush1.msra.mxu0 0.0
    %2082 = vmatprep.subr.mxu0 0.0
    %2083 = vmatpush1.msra.mxu0 0.0
    %2084 = vmatprep.subr.mxu0 0.0
    %2085 = vmatpush1.msra.mxu0 0.0
    %2086 = vmatprep.subr.mxu0 0.0
    %2087 = vmatpush1.msra.mxu0 0.0
    %2088 = vmatprep.mubr.f32.mxu0 0.0
    %2089 = vmatmul.mubr.f32.gmra.mrb[0].mxu0 %v2022
    %v2090 = vpop.f32.mrb[0].mxu0
    %v2091 = vadd.f32 0.0, %v2090
    %v2092 = vpop.f32.mrb[0].mxu0
    %2093 = vdwg.mxu0
    %v2095 = vsel %vm1846, %v2020, 0
    %2097 = vmatprep.subr.mxu0 0.0
    %2098 = vmatpush1.msra.mxu0 %v1843
    %2099 = vmatprep.subr.mxu0 0.0
    %2100 = vmatpush1.msra.mxu0 0.0
    %2101 = vmatprep.subr.mxu0 0.0
    %2102 = vmatpush1.msra.mxu0 0.0
    %2103 = vmatprep.subr.mxu0 0.0
    %2104 = vmatpush1.msra.mxu0 0.0
    %2105 = vmatprep.subr.mxu0 0.0
    %2106 = vmatpush1.msra.mxu0 0.0
    %2107 = vmatprep.subr.mxu0 0.0
    %2108 = vmatpush1.msra.mxu0 0.0
    %2109 = vmatprep.subr.mxu0 0.0
    %2110 = vmatpush1.msra.mxu0 0.0
    %2111 = vmatprep.subr.mxu0 0.0
    %2112 = vmatpush1.msra.mxu0 0.0
    %2113 = vmatprep.subr.mxu0 0.0
    %2114 = vmatpush1.msra.mxu0 0.0
    %2115 = vmatprep.subr.mxu0 0.0
    %2116 = vmatpush1.msra.mxu0 0.0
    %2117 = vmatprep.subr.mxu0 0.0
    %2118 = vmatpush1.msra.mxu0 0.0
    %2119 = vmatprep.subr.mxu0 0.0
    %2120 = vmatpush1.msra.mxu0 0.0
    %2121 = vmatprep.subr.mxu0 0.0
    %2122 = vmatpush1.msra.mxu0 0.0
    %2123 = vmatprep.subr.mxu0 0.0
    %2124 = vmatpush1.msra.mxu0 0.0
    %2125 = vmatprep.subr.mxu0 0.0
    %2126 = vmatpush1.msra.mxu0 0.0
    %2127 = vmatprep.subr.mxu0 0.0
    %2128 = vmatpush1.msra.mxu0 0.0
    %2129 = vmatprep.subr.mxu0 0.0
    %2130 = vmatpush1.msra.mxu0 0.0
    %2131 = vmatprep.subr.mxu0 0.0
    %2132 = vmatpush1.msra.mxu0 0.0
    %2133 = vmatprep.subr.mxu0 0.0
    %2134 = vmatpush1.msra.mxu0 0.0
    %2135 = vmatprep.subr.mxu0 0.0
    %2136 = vmatpush1.msra.mxu0 0.0
    %2137 = vmatprep.subr.mxu0 0.0
    %2138 = vmatpush1.msra.mxu0 0.0
    %2139 = vmatprep.subr.mxu0 0.0
    %2140 = vmatpush1.msra.mxu0 0.0
    %2141 = vmatprep.subr.mxu0 0.0
    %2142 = vmatpush1.msra.mxu0 0.0
    %2143 = vmatprep.subr.mxu0 0.0
    %2144 = vmatpush1.msra.mxu0 0.0
    %2145 = vmatprep.subr.mxu0 0.0
    %2146 = vmatpush1.msra.mxu0 0.0
    %2147 = vmatprep.subr.mxu0 0.0
    %2148 = vmatpush1.msra.mxu0 0.0
    %2149 = vmatprep.subr.mxu0 0.0
    %2150 = vmatpush1.msra.mxu0 0.0
    %2151 = vmatprep.subr.mxu0 0.0
    %2152 = vmatpush1.msra.mxu0 0.0
    %2153 = vmatprep.subr.mxu0 0.0
    %2154 = vmatpush1.msra.mxu0 0.0
    %2155 = vmatprep.subr.mxu0 0.0
    %2156 = vmatpush1.msra.mxu0 0.0
    %2157 = vmatprep.subr.mxu0 0.0
    %2158 = vmatpush1.msra.mxu0 0.0
    %2159 = vmatprep.subr.mxu0 0.0
    %2160 = vmatpush1.msra.mxu0 0.0
    %2161 = vmatprep.mubr.f32.mxu0 0.0
    %2162 = vmatmul.mubr.f32.gmra.mrb[0].mxu0 %v2095
    %v2163 = vpop.f32.mrb[0].mxu0
    %v2164 = vadd.f32 0.0, %v2163
    %v2165 = vpop.f32.mrb[0].mxu0
    %2166 = vdwg.mxu0
    %v2167 = vpack.c.bf16 %v2164, %v2091
    %v2169 = vlaneseq
    %v2170 = vshrl.u32 %v2169, 7
    %v2171 = vsub.s32 0, %v2170
    %v2172 = vrot.slane %v1651, %v2171
    %v2178 = vunpack.c.l.b16 %v1606
    %v2179 = vunpack.c.l.b16 %v1607
    %v2180 = vunpack.c.l.b16 %v1608
    %v2181 = vunpack.c.l.b16 %v1609
    %v2182 = vpack.c.b16 %v2179, %v2178
    %v2183 = vpack.c.b16 %v2181, %v2180
    %2186 = vmatprep.subr.bf16.mxu0 0
    %2187 = vmatpush1.bf16.msra.mxu0 %v2182
    %2188 = vmatprep.subr.bf16.mxu0 0
    %2189 = vmatpush1.bf16.msra.mxu0 %v2183
    %2190 = vmatprep.subr.bf16.mxu0 0
    %2191 = vmatpush1.bf16.msra.mxu0 0
    %2192 = vmatprep.subr.bf16.mxu0 0
    %2193 = vmatpush1.bf16.msra.mxu0 0
    %2194 = vmatprep.subr.bf16.mxu0 0
    %2195 = vmatpush1.bf16.msra.mxu0 0
    %2196 = vmatprep.subr.bf16.mxu0 0
    %2197 = vmatpush1.bf16.msra.mxu0 0
    %2198 = vmatprep.subr.bf16.mxu0 0
    %2199 = vmatpush1.bf16.msra.mxu0 0
    %2200 = vmatprep.subr.bf16.mxu0 0
    %2201 = vmatpush1.bf16.msra.mxu0 0
    %2202 = vmatprep.subr.bf16.mxu0 0
    %2203 = vmatpush1.bf16.msra.mxu0 0
    %2204 = vmatprep.subr.bf16.mxu0 0
    %2205 = vmatpush1.bf16.msra.mxu0 0
    %2206 = vmatprep.subr.bf16.mxu0 0
    %2207 = vmatpush1.bf16.msra.mxu0 0
    %2208 = vmatprep.subr.bf16.mxu0 0
    %2209 = vmatpush1.bf16.msra.mxu0 0
    %2210 = vmatprep.subr.bf16.mxu0 0
    %2211 = vmatpush1.bf16.msra.mxu0 0
    %2212 = vmatprep.subr.bf16.mxu0 0
    %2213 = vmatpush1.bf16.msra.mxu0 0
    %2214 = vmatprep.subr.bf16.mxu0 0
    %2215 = vmatpush1.bf16.msra.mxu0 0
    %2216 = vmatprep.subr.bf16.mxu0 0
    %2217 = vmatpush1.bf16.msra.mxu0 0
    %2218 = vmatprep.mubr.bf16.mxu0 0
    %2219 = vmatmul.mubr.bf16.gmra.mrb[0].mxu0 %v1685
    %v2220 = vpop.f32.mrb[0].mxu0
    %v2221 = vadd.f32 %v2172, %v2220
    %v2222 = vpop.f32.mrb[0].mxu0
    %v2223 = vpop.f32.mrb[0].mxu0
    %v2224 = vadd.f32 %v2172, %v2223
    %v2225 = vpop.f32.mrb[0].mxu0
    %2226 = vdwg.mxu0
    %v2228 = vlaneseq
    %v2229 = vshrl.u32 %v2228, 7
    %v2230 = vsub.s32 0, %v2229
    %v2231 = vrot.slane %v1655, %v2230
    %v2237 = vunpack.c.l.b16 %v1622
    %v2238 = vunpack.c.l.b16 %v1623
    %v2239 = vunpack.c.l.b16 %v1624
    %v2240 = vunpack.c.l.b16 %v1625
    %v2241 = vpack.c.b16 %v2238, %v2237
    %v2242 = vpack.c.b16 %v2240, %v2239
    %2245 = vmatprep.subr.bf16.mxu0 0
    %2246 = vmatpush1.bf16.msra.mxu0 %v2241
    %2247 = vmatprep.subr.bf16.mxu0 0
    %2248 = vmatpush1.bf16.msra.mxu0 %v2242
    %2249 = vmatprep.subr.bf16.mxu0 0
    %2250 = vmatpush1.bf16.msra.mxu0 0
    %2251 = vmatprep.subr.bf16.mxu0 0
    %2252 = vmatpush1.bf16.msra.mxu0 0
    %2253 = vmatprep.subr.bf16.mxu0 0
    %2254 = vmatpush1.bf16.msra.mxu0 0
    %2255 = vmatprep.subr.bf16.mxu0 0
    %2256 = vmatpush1.bf16.msra.mxu0 0
    %2257 = vmatprep.subr.bf16.mxu0 0
    %2258 = vmatpush1.bf16.msra.mxu0 0
    %2259 = vmatprep.subr.bf16.mxu0 0
    %2260 = vmatpush1.bf16.msra.mxu0 0
    %2261 = vmatprep.subr.bf16.mxu0 0
    %2262 = vmatpush1.bf16.msra.mxu0 0
    %2263 = vmatprep.subr.bf16.mxu0 0
    %2264 = vmatpush1.bf16.msra.mxu0 0
    %2265 = vmatprep.subr.bf16.mxu0 0
    %2266 = vmatpush1.bf16.msra.mxu0 0
    %2267 = vmatprep.subr.bf16.mxu0 0
    %2268 = vmatpush1.bf16.msra.mxu0 0
    %2269 = vmatprep.subr.bf16.mxu0 0
    %2270 = vmatpush1.bf16.msra.mxu0 0
    %2271 = vmatprep.subr.bf16.mxu0 0
    %2272 = vmatpush1.bf16.msra.mxu0 0
    %2273 = vmatprep.subr.bf16.mxu0 0
    %2274 = vmatpush1.bf16.msra.mxu0 0
    %2275 = vmatprep.subr.bf16.mxu0 0
    %2276 = vmatpush1.bf16.msra.mxu0 0
    %2277 = vmatprep.mubr.bf16.mxu0 0
    %2278 = vmatmul.mubr.bf16.gmra.mrb[0].mxu0 %v1685
    %v2279 = vpop.f32.mrb[0].mxu0
    %v2280 = vadd.f32 %v2231, %v2279
    %v2281 = vpop.f32.mrb[0].mxu0
    %v2282 = vpop.f32.mrb[0].mxu0
    %v2283 = vadd.f32 %v2231, %v2282
    %v2284 = vpop.f32.mrb[0].mxu0
    %2285 = vdwg.mxu0
    %v2287 = vlaneseq
    %v2288 = vshrl.u32 %v2287, 7
    %v2289 = vsub.s32 0, %v2288
    %v2290 = vrot.slane %v1659, %v2289
    %v2296 = vunpack.c.l.b16 %v1638
    %v2297 = vunpack.c.l.b16 %v1639
    %v2298 = vunpack.c.l.b16 %v1640
    %v2299 = vunpack.c.l.b16 %v1641
    %v2300 = vpack.c.b16 %v2297, %v2296
    %v2301 = vpack.c.b16 %v2299, %v2298
    %2304 = vmatprep.subr.bf16.mxu0 0
    %2305 = vmatpush1.bf16.msra.mxu0 %v2300
    %2306 = vmatprep.subr.bf16.mxu0 0
    %2307 = vmatpush1.bf16.msra.mxu0 %v2301
    %2308 = vmatprep.subr.bf16.mxu0 0
    %2309 = vmatpush1.bf16.msra.mxu0 0
    %2310 = vmatprep.subr.bf16.mxu0 0
    %2311 = vmatpush1.bf16.msra.mxu0 0
    %2312 = vmatprep.subr.bf16.mxu0 0
    %2313 = vmatpush1.bf16.msra.mxu0 0
    %2314 = vmatprep.subr.bf16.mxu0 0
    %2315 = vmatpush1.bf16.msra.mxu0 0
    %2316 = vmatprep.subr.bf16.mxu0 0
    %2317 = vmatpush1.bf16.msra.mxu0 0
    %2318 = vmatprep.subr.bf16.mxu0 0
    %2319 = vmatpush1.bf16.msra.mxu0 0
    %2320 = vmatprep.subr.bf16.mxu0 0
    %2321 = vmatpush1.bf16.msra.mxu0 0
    %2322 = vmatprep.subr.bf16.mxu0 0
    %2323 = vmatpush1.bf16.msra.mxu0 0
    %2324 = vmatprep.subr.bf16.mxu0 0
    %2325 = vmatpush1.bf16.msra.mxu0 0
    %2326 = vmatprep.subr.bf16.mxu0 0
    %2327 = vmatpush1.bf16.msra.mxu0 0
    %2328 = vmatprep.subr.bf16.mxu0 0
    %2329 = vmatpush1.bf16.msra.mxu0 0
    %2330 = vmatprep.subr.bf16.mxu0 0
    %2331 = vmatpush1.bf16.msra.mxu0 0
    %2332 = vmatprep.subr.bf16.mxu0 0
    %2333 = vmatpush1.bf16.msra.mxu0 0
    %2334 = vmatprep.subr.bf16.mxu0 0
    %2335 = vmatpush1.bf16.msra.mxu0 0
    %2336 = vmatprep.mubr.bf16.mxu0 0
    %2337 = vmatmul.mubr.bf16.gmra.mrb[0].mxu0 %v1685
    %v2338 = vpop.f32.mrb[0].mxu0
    %v2339 = vadd.f32 %v2290, %v2338
    %v2340 = vpop.f32.mrb[0].mxu0
    %v2341 = vpop.f32.mrb[0].mxu0
    %v2342 = vadd.f32 %v2290, %v2341
    %v2343 = vpop.f32.mrb[0].mxu0
    %2344 = vdwg.mxu0
    %v2346 = vsel %vm1846, %v2221, 0
    %v2349 = vsel %vm1846, %v2280, 0
    %2351 = vmatprep.subr.mxu0 0.0
    %2352 = vmatpush1.xpose.msra.mxu0 %v2349
    %2353 = vmatprep.subr.mxu0 0.0
    %2354 = vmatpush1.xpose.msra.mxu0 0.0
    %2355 = vmatprep.subr.mxu0 0.0
    %2356 = vmatpush1.xpose.msra.mxu0 0.0
    %2357 = vmatprep.subr.mxu0 0.0
    %2358 = vmatpush1.xpose.msra.mxu0 0.0
    %2359 = vmatprep.subr.mxu0 0.0
    %2360 = vmatpush1.xpose.msra.mxu0 0.0
    %2361 = vmatprep.subr.mxu0 0.0
    %2362 = vmatpush1.xpose.msra.mxu0 0.0
    %2363 = vmatprep.subr.mxu0 0.0
    %2364 = vmatpush1.xpose.msra.mxu0 0.0
    %2365 = vmatprep.subr.mxu0 0.0
    %2366 = vmatpush1.xpose.msra.mxu0 0.0
    %2367 = vmatprep.subr.mxu0 0.0
    %2368 = vmatpush1.xpose.msra.mxu0 0.0
    %2369 = vmatprep.subr.mxu0 0.0
    %2370 = vmatpush1.xpose.msra.mxu0 0.0
    %2371 = vmatprep.subr.mxu0 0.0
    %2372 = vmatpush1.xpose.msra.mxu0 0.0
    %2373 = vmatprep.subr.mxu0 0.0
    %2374 = vmatpush1.xpose.msra.mxu0 0.0
    %2375 = vmatprep.subr.mxu0 0.0
    %2376 = vmatpush1.xpose.msra.mxu0 0.0
    %2377 = vmatprep.subr.mxu0 0.0
    %2378 = vmatpush1.xpose.msra.mxu0 0.0
    %2379 = vmatprep.subr.mxu0 0.0
    %2380 = vmatpush1.xpose.msra.mxu0 0.0
    %2381 = vmatprep.subr.mxu0 0.0
    %2382 = vmatpush1.xpose.msra.mxu0 0.0
    %2383 = vmatprep.subr.mxu0 0.0
    %2384 = vmatpush1.xpose.msra.mxu0 0.0
    %2385 = vmatprep.subr.mxu0 0.0
    %2386 = vmatpush1.xpose.msra.mxu0 0.0
    %2387 = vmatprep.subr.mxu0 0.0
    %2388 = vmatpush1.xpose.msra.mxu0 0.0
    %2389 = vmatprep.subr.mxu0 0.0
    %2390 = vmatpush1.xpose.msra.mxu0 0.0
    %2391 = vmatprep.subr.mxu0 0.0
    %2392 = vmatpush1.xpose.msra.mxu0 0.0
    %2393 = vmatprep.subr.mxu0 0.0
    %2394 = vmatpush1.xpose.msra.mxu0 0.0
    %2395 = vmatprep.subr.mxu0 0.0
    %2396 = vmatpush1.xpose.msra.mxu0 0.0
    %2397 = vmatprep.subr.mxu0 0.0
    %2398 = vmatpush1.xpose.msra.mxu0 0.0
    %2399 = vmatprep.subr.mxu0 0.0
    %2400 = vmatpush1.xpose.msra.mxu0 0.0
    %2401 = vmatprep.subr.mxu0 0.0
    %2402 = vmatpush1.xpose.msra.mxu0 0.0
    %2403 = vmatprep.subr.mxu0 0.0
    %2404 = vmatpush1.xpose.msra.mxu0 0.0
    %2405 = vmatprep.subr.mxu0 0.0
    %2406 = vmatpush1.xpose.msra.mxu0 0.0
    %2407 = vmatprep.subr.mxu0 0.0
    %2408 = vmatpush1.xpose.msra.mxu0 0.0
    %2409 = vmatprep.subr.mxu0 0.0
    %2410 = vmatpush1.xpose.msra.mxu0 0.0
    %2411 = vmatprep.subr.mxu0 0.0
    %2412 = vmatpush1.xpose.msra.mxu0 0.0
    %2413 = vmatprep.subr.mxu0 0.0
    %2414 = vmatpush1.xpose.msra.mxu0 0.0
    %2415 = vmatprep.mubr.f32.mxu0 0.0
    %2416 = vmatmul.mubr.f32.gmra.mrb[0].mxu0 %v2346
    %v2417 = vpop.f32.mrb[0].mxu0
    %v2418 = vadd.f32 %v1594, %v2417
    %v2419 = vpop.f32.mrb[0].mxu0
    %2420 = vdwg.mxu0
    %v2422 = vsel %vm1846, %v2224, 0
    %v2425 = vsel %vm1846, %v2283, 0
    %2427 = vmatprep.subr.mxu0 0.0
    %2428 = vmatpush1.xpose.msra.mxu0 %v2425
    %2429 = vmatprep.subr.mxu0 0.0
    %2430 = vmatpush1.xpose.msra.mxu0 0.0
    %2431 = vmatprep.subr.mxu0 0.0
    %2432 = vmatpush1.xpose.msra.mxu0 0.0
    %2433 = vmatprep.subr.mxu0 0.0
    %2434 = vmatpush1.xpose.msra.mxu0 0.0
    %2435 = vmatprep.subr.mxu0 0.0
    %2436 = vmatpush1.xpose.msra.mxu0 0.0
    %2437 = vmatprep.subr.mxu0 0.0
    %2438 = vmatpush1.xpose.msra.mxu0 0.0
    %2439 = vmatprep.subr.mxu0 0.0
    %2440 = vmatpush1.xpose.msra.mxu0 0.0
    %2441 = vmatprep.subr.mxu0 0.0
    %2442 = vmatpush1.xpose.msra.mxu0 0.0
    %2443 = vmatprep.subr.mxu0 0.0
    %2444 = vmatpush1.xpose.msra.mxu0 0.0
    %2445 = vmatprep.subr.mxu0 0.0
    %2446 = vmatpush1.xpose.msra.mxu0 0.0
    %2447 = vmatprep.subr.mxu0 0.0
    %2448 = vmatpush1.xpose.msra.mxu0 0.0
    %2449 = vmatprep.subr.mxu0 0.0
    %2450 = vmatpush1.xpose.msra.mxu0 0.0
    %2451 = vmatprep.subr.mxu0 0.0
    %2452 = vmatpush1.xpose.msra.mxu0 0.0
    %2453 = vmatprep.subr.mxu0 0.0
    %2454 = vmatpush1.xpose.msra.mxu0 0.0
    %2455 = vmatprep.subr.mxu0 0.0
    %2456 = vmatpush1.xpose.msra.mxu0 0.0
    %2457 = vmatprep.subr.mxu0 0.0
    %2458 = vmatpush1.xpose.msra.mxu0 0.0
    %2459 = vmatprep.subr.mxu0 0.0
    %2460 = vmatpush1.xpose.msra.mxu0 0.0
    %2461 = vmatprep.subr.mxu0 0.0
    %2462 = vmatpush1.xpose.msra.mxu0 0.0
    %2463 = vmatprep.subr.mxu0 0.0
    %2464 = vmatpush1.xpose.msra.mxu0 0.0
    %2465 = vmatprep.subr.mxu0 0.0
    %2466 = vmatpush1.xpose.msra.mxu0 0.0
    %2467 = vmatprep.subr.mxu0 0.0
    %2468 = vmatpush1.xpose.msra.mxu0 0.0
    %2469 = vmatprep.subr.mxu0 0.0
    %2470 = vmatpush1.xpose.msra.mxu0 0.0
    %2471 = vmatprep.subr.mxu0 0.0
    %2472 = vmatpush1.xpose.msra.mxu0 0.0
    %2473 = vmatprep.subr.mxu0 0.0
    %2474 = vmatpush1.xpose.msra.mxu0 0.0
    %2475 = vmatprep.subr.mxu0 0.0
    %2476 = vmatpush1.xpose.msra.mxu0 0.0
    %2477 = vmatprep.subr.mxu0 0.0
    %2478 = vmatpush1.xpose.msra.mxu0 0.0
    %2479 = vmatprep.subr.mxu0 0.0
    %2480 = vmatpush1.xpose.msra.mxu0 0.0
    %2481 = vmatprep.subr.mxu0 0.0
    %2482 = vmatpush1.xpose.msra.mxu0 0.0
    %2483 = vmatprep.subr.mxu0 0.0
    %2484 = vmatpush1.xpose.msra.mxu0 0.0
    %2485 = vmatprep.subr.mxu0 0.0
    %2486 = vmatpush1.xpose.msra.mxu0 0.0
    %2487 = vmatprep.subr.mxu0 0.0
    %2488 = vmatpush1.xpose.msra.mxu0 0.0
    %2489 = vmatprep.subr.mxu0 0.0
    %2490 = vmatpush1.xpose.msra.mxu0 0.0
    %2491 = vmatprep.mubr.f32.mxu0 0.0
    %2492 = vmatmul.mubr.f32.gmra.mrb[0].mxu0 %v2422
    %v2493 = vpop.f32.mrb[0].mxu0
    %v2494 = vadd.f32 %v1598, %v2493
    %v2495 = vpop.f32.mrb[0].mxu0
    %2496 = vdwg.mxu0
    %v2497 = vsel %vm1846, %v2418, -inf
    %2498 = vmax.xlane.f32.xlu0 %v2497
    %v2499 = vpop.xlane.xlu0 %2498
    %v2500 = vsel %vm1846, %v2494, -inf
    %2501 = vmax.xlane.f32.xlu0 %v2500
    %v2502 = vpop.xlane.xlu0 %2501
    %v2503 = vsub.f32 %v2418, %v2499
    %v2504 = vsub.f32 %v2494, %v2502
    %v2505 = vmul.f32 %v2503, 1.442695
    %v2506 = vpow.pop %v2505
    %v2507 = vmul.f32 %v2504, 1.442695
    %v2508 = vpow.pop %v2507
    %v2509 = vsel %vm1846, %v2506, 0.0
    %2510 = vadd.xlane.f32.xlu0 %v2509
    %v2511 = vpop.xlane.xlu0 %2510
    %v2512 = vsel %vm1846, %v2508, 0.0
    %2513 = vadd.xlane.f32.xlu0 %v2512
    %v2514 = vpop.xlane.xlu0 %2513
    %v2515 = vrcp.pop %v2511
    %v2516 = vrcp.pop %v2514
    %v2517 = vmul.f32 %v2506, %v2515
    %v2518 = vmul.f32 %v2508, %v2516
    %v2520 = vsel %vm1846, %v2517, 0
    %2522 = vmatprep.subr.mxu0 0.0
    %2523 = vmatpush1.msra.mxu0 %v2339
    %2524 = vmatprep.subr.mxu0 0.0
    %2525 = vmatpush1.msra.mxu0 0.0
    %2526 = vmatprep.subr.mxu0 0.0
    %2527 = vmatpush1.msra.mxu0 0.0
    %2528 = vmatprep.subr.mxu0 0.0
    %2529 = vmatpush1.msra.mxu0 0.0
    %2530 = vmatprep.subr.mxu0 0.0
    %2531 = vmatpush1.msra.mxu0 0.0
    %2532 = vmatprep.subr.mxu0 0.0
    %2533 = vmatpush1.msra.mxu0 0.0
    %2534 = vmatprep.subr.mxu0 0.0
    %2535 = vmatpush1.msra.mxu0 0.0
    %2536 = vmatprep.subr.mxu0 0.0
    %2537 = vmatpush1.msra.mxu0 0.0
    %2538 = vmatprep.subr.mxu0 0.0
    %2539 = vmatpush1.msra.mxu0 0.0
    %2540 = vmatprep.subr.mxu0 0.0
    %2541 = vmatpush1.msra.mxu0 0.0
    %2542 = vmatprep.subr.mxu0 0.0
    %2543 = vmatpush1.msra.mxu0 0.0
    %2544 = vmatprep.subr.mxu0 0.0
    %2545 = vmatpush1.msra.mxu0 0.0
    %2546 = vmatprep.subr.mxu0 0.0
    %2547 = vmatpush1.msra.mxu0 0.0
    %2548 = vmatprep.subr.mxu0 0.0
    %2549 = vmatpush1.msra.mxu0 0.0
    %2550 = vmatprep.subr.mxu0 0.0
    %2551 = vmatpush1.msra.mxu0 0.0
    %2552 = vmatprep.subr.mxu0 0.0
    %2553 = vmatpush1.msra.mxu0 0.0
    %2554 = vmatprep.subr.mxu0 0.0
    %2555 = vmatpush1.msra.mxu0 0.0
    %2556 = vmatprep.subr.mxu0 0.0
    %2557 = vmatpush1.msra.mxu0 0.0
    %2558 = vmatprep.subr.mxu0 0.0
    %2559 = vmatpush1.msra.mxu0 0.0
    %2560 = vmatprep.subr.mxu0 0.0
    %2561 = vmatpush1.msra.mxu0 0.0
    %2562 = vmatprep.subr.mxu0 0.0
    %2563 = vmatpush1.msra.mxu0 0.0
    %2564 = vmatprep.subr.mxu0 0.0
    %2565 = vmatpush1.msra.mxu0 0.0
    %2566 = vmatprep.subr.mxu0 0.0
    %2567 = vmatpush1.msra.mxu0 0.0
    %2568 = vmatprep.subr.mxu0 0.0
    %2569 = vmatpush1.msra.mxu0 0.0
    %2570 = vmatprep.subr.mxu0 0.0
    %2571 = vmatpush1.msra.mxu0 0.0
    %2572 = vmatprep.subr.mxu0 0.0
    %2573 = vmatpush1.msra.mxu0 0.0
    %2574 = vmatprep.subr.mxu0 0.0
    %2575 = vmatpush1.msra.mxu0 0.0
    %2576 = vmatprep.subr.mxu0 0.0
    %2577 = vmatpush1.msra.mxu0 0.0
    %2578 = vmatprep.subr.mxu0 0.0
    %2579 = vmatpush1.msra.mxu0 0.0
    %2580 = vmatprep.subr.mxu0 0.0
    %2581 = vmatpush1.msra.mxu0 0.0
    %2582 = vmatprep.subr.mxu0 0.0
    %2583 = vmatpush1.msra.mxu0 0.0
    %2584 = vmatprep.subr.mxu0 0.0
    %2585 = vmatpush1.msra.mxu0 0.0
    %2586 = vmatprep.mubr.f32.mxu0 0.0
    %2587 = vmatmul.mubr.f32.gmra.mrb[0].mxu0 %v2520
    %v2588 = vpop.f32.mrb[0].mxu0
    %v2589 = vadd.f32 0.0, %v2588
    %v2590 = vpop.f32.mrb[0].mxu0
    %2591 = vdwg.mxu0
    %v2593 = vsel %vm1846, %v2518, 0
    %2595 = vmatprep.subr.mxu0 0.0
    %2596 = vmatpush1.msra.mxu0 %v2342
    %2597 = vmatprep.subr.mxu0 0.0
    %2598 = vmatpush1.msra.mxu0 0.0
    %2599 = vmatprep.subr.mxu0 0.0
    %2600 = vmatpush1.msra.mxu0 0.0
    %2601 = vmatprep.subr.mxu0 0.0
    %2602 = vmatpush1.msra.mxu0 0.0
    %2603 = vmatprep.subr.mxu0 0.0
    %2604 = vmatpush1.msra.mxu0 0.0
    %2605 = vmatprep.subr.mxu0 0.0
    %2606 = vmatpush1.msra.mxu0 0.0
    %2607 = vmatprep.subr.mxu0 0.0
    %2608 = vmatpush1.msra.mxu0 0.0
    %2609 = vmatprep.subr.mxu0 0.0
    %2610 = vmatpush1.msra.mxu0 0.0
    %2611 = vmatprep.subr.mxu0 0.0
    %2612 = vmatpush1.msra.mxu0 0.0
    %2613 = vmatprep.subr.mxu0 0.0
    %2614 = vmatpush1.msra.mxu0 0.0
    %2615 = vmatprep.subr.mxu0 0.0
    %2616 = vmatpush1.msra.mxu0 0.0
    %2617 = vmatprep.subr.mxu0 0.0
    %2618 = vmatpush1.msra.mxu0 0.0
    %2619 = vmatprep.subr.mxu0 0.0
    %2620 = vmatpush1.msra.mxu0 0.0
    %2621 = vmatprep.subr.mxu0 0.0
    %2622 = vmatpush1.msra.mxu0 0.0
    %2623 = vmatprep.subr.mxu0 0.0
    %2624 = vmatpush1.msra.mxu0 0.0
    %2625 = vmatprep.subr.mxu0 0.0
    %2626 = vmatpush1.msra.mxu0 0.0
    %2627 = vmatprep.subr.mxu0 0.0
    %2628 = vmatpush1.msra.mxu0 0.0
    %2629 = vmatprep.subr.mxu0 0.0
    %2630 = vmatpush1.msra.mxu0 0.0
    %2631 = vmatprep.subr.mxu0 0.0
    %2632 = vmatpush1.msra.mxu0 0.0
    %2633 = vmatprep.subr.mxu0 0.0
    %2634 = vmatpush1.msra.mxu0 0.0
    %2635 = vmatprep.subr.mxu0 0.0
    %2636 = vmatpush1.msra.mxu0 0.0
    %2637 = vmatprep.subr.mxu0 0.0
    %2638 = vmatpush1.msra.mxu0 0.0
    %2639 = vmatprep.subr.mxu0 0.0
    %2640 = vmatpush1.msra.mxu0 0.0
    %2641 = vmatprep.subr.mxu0 0.0
    %2642 = vmatpush1.msra.mxu0 0.0
    %2643 = vmatprep.subr.mxu0 0.0
    %2644 = vmatpush1.msra.mxu0 0.0
    %2645 = vmatprep.subr.mxu0 0.0
    %2646 = vmatpush1.msra.mxu0 0.0
    %2647 = vmatprep.subr.mxu0 0.0
    %2648 = vmatpush1.msra.mxu0 0.0
    %2649 = vmatprep.subr.mxu0 0.0
    %2650 = vmatpush1.msra.mxu0 0.0
    %2651 = vmatprep.subr.mxu0 0.0
    %2652 = vmatpush1.msra.mxu0 0.0
    %2653 = vmatprep.subr.mxu0 0.0
    %2654 = vmatpush1.msra.mxu0 0.0
    %2655 = vmatprep.subr.mxu0 0.0
    %2656 = vmatpush1.msra.mxu0 0.0
    %2657 = vmatprep.subr.mxu0 0.0
    %2658 = vmatpush1.msra.mxu0 0.0
    %2659 = vmatprep.mubr.f32.mxu0 0.0
    %2660 = vmatmul.mubr.f32.gmra.mrb[0].mxu0 %v2593
    %v2661 = vpop.f32.mrb[0].mxu0
    %v2662 = vadd.f32 0.0, %v2661
    %v2663 = vpop.f32.mrb[0].mxu0
    %2664 = vdwg.mxu0
    %v2665 = vpack.c.bf16 %v2662, %v2589
    %v2667 = vsel %vm1846, %v2665, 0
    %v2670 = vsel %vm1436, %v1663, 0
    %2672 = vmatprep.subr.bf16.mxu0 0
    %2673 = vmatpush1.bf16.msra.mxu0 %v2670
    %2674 = vmatprep.subr.bf16.mxu0 0
    %2675 = vmatpush1.bf16.msra.mxu0 0
    %2676 = vmatprep.subr.bf16.mxu0 0
    %2677 = vmatpush1.bf16.msra.mxu0 0
    %2678 = vmatprep.subr.bf16.mxu0 0
    %2679 = vmatpush1.bf16.msra.mxu0 0
    %2680 = vmatprep.subr.bf16.mxu0 0
    %2681 = vmatpush1.bf16.msra.mxu0 0
    %2682 = vmatprep.subr.bf16.mxu0 0
    %2683 = vmatpush1.bf16.msra.mxu0 0
    %2684 = vmatprep.subr.bf16.mxu0 0
    %2685 = vmatpush1.bf16.msra.mxu0 0
    %2686 = vmatprep.subr.bf16.mxu0 0
    %2687 = vmatpush1.bf16.msra.mxu0 0
    %2688 = vmatprep.subr.bf16.mxu0 0
    %2689 = vmatpush1.bf16.msra.mxu0 0
    %2690 = vmatprep.subr.bf16.mxu0 0
    %2691 = vmatpush1.bf16.msra.mxu0 0
    %2692 = vmatprep.subr.bf16.mxu0 0
    %2693 = vmatpush1.bf16.msra.mxu0 0
    %2694 = vmatprep.subr.bf16.mxu0 0
    %2695 = vmatpush1.bf16.msra.mxu0 0
    %2696 = vmatprep.subr.bf16.mxu0 0
    %2697 = vmatpush1.bf16.msra.mxu0 0
    %2698 = vmatprep.subr.bf16.mxu0 0
    %2699 = vmatpush1.bf16.msra.mxu0 0
    %2700 = vmatprep.subr.bf16.mxu0 0
    %2701 = vmatpush1.bf16.msra.mxu0 0
    %2702 = vmatprep.subr.bf16.mxu0 0
    %2703 = vmatpush1.bf16.msra.mxu0 0
    %2704 = vmatprep.mubr.bf16.mxu0 0
    %2705 = vmatmul.mubr.bf16.gmra.mrb[0].mxu0 %v2667
    %v2706 = vpop.f32.mrb[0].mxu0
    %v2707 = vadd.f32 0.0, %v2706
    %v2708 = vpop.f32.mrb[0].mxu0
    %v2709 = vpop.f32.mrb[0].mxu0
    %v2710 = vadd.f32 0.0, %v2709
    %v2711 = vpop.f32.mrb[0].mxu0
    %2712 = vdwg.mxu0
    %v2714 = vlaneseq
    %v2715 = vshrl.u32 %v2714, 7
    %v2716 = vsub.s32 0, %v2715
    %v2717 = vrot.slane %v1652, %v2716
    %v2723 = vunpack.c.l.b16 %v1610
    %v2724 = vunpack.c.l.b16 %v1611
    %v2725 = vunpack.c.l.b16 %v1612
    %v2726 = vunpack.c.l.b16 %v1613
    %v2727 = vpack.c.b16 %v2724, %v2723
    %v2728 = vpack.c.b16 %v2726, %v2725
    %2731 = vmatprep.subr.bf16.mxu0 0
    %2732 = vmatpush1.bf16.msra.mxu0 %v2727
    %2733 = vmatprep.subr.bf16.mxu0 0
    %2734 = vmatpush1.bf16.msra.mxu0 %v2728
    %2735 = vmatprep.subr.bf16.mxu0 0
    %2736 = vmatpush1.bf16.msra.mxu0 0
    %2737 = vmatprep.subr.bf16.mxu0 0
    %2738 = vmatpush1.bf16.msra.mxu0 0
    %2739 = vmatprep.subr.bf16.mxu0 0
    %2740 = vmatpush1.bf16.msra.mxu0 0
    %2741 = vmatprep.subr.bf16.mxu0 0
    %2742 = vmatpush1.bf16.msra.mxu0 0
    %2743 = vmatprep.subr.bf16.mxu0 0
    %2744 = vmatpush1.bf16.msra.mxu0 0
    %2745 = vmatprep.subr.bf16.mxu0 0
    %2746 = vmatpush1.bf16.msra.mxu0 0
    %2747 = vmatprep.subr.bf16.mxu0 0
    %2748 = vmatpush1.bf16.msra.mxu0 0
    %2749 = vmatprep.subr.bf16.mxu0 0
    %2750 = vmatpush1.bf16.msra.mxu0 0
    %2751 = vmatprep.subr.bf16.mxu0 0
    %2752 = vmatpush1.bf16.msra.mxu0 0
    %2753 = vmatprep.subr.bf16.mxu0 0
    %2754 = vmatpush1.bf16.msra.mxu0 0
    %2755 = vmatprep.subr.bf16.mxu0 0
    %2756 = vmatpush1.bf16.msra.mxu0 0
    %2757 = vmatprep.subr.bf16.mxu0 0
    %2758 = vmatpush1.bf16.msra.mxu0 0
    %2759 = vmatprep.subr.bf16.mxu0 0
    %2760 = vmatpush1.bf16.msra.mxu0 0
    %2761 = vmatprep.subr.bf16.mxu0 0
    %2762 = vmatpush1.bf16.msra.mxu0 0
    %2763 = vmatprep.mubr.bf16.mxu0 0
    %2764 = vmatmul.mubr.bf16.gmra.mrb[0].mxu0 %v1685
    %v2765 = vpop.f32.mrb[0].mxu0
    %v2766 = vadd.f32 %v2717, %v2765
    %v2767 = vpop.f32.mrb[0].mxu0
    %v2768 = vpop.f32.mrb[0].mxu0
    %v2769 = vadd.f32 %v2717, %v2768
    %v2770 = vpop.f32.mrb[0].mxu0
    %2771 = vdwg.mxu0
    %v2773 = vlaneseq
    %v2774 = vshrl.u32 %v2773, 7
    %v2775 = vsub.s32 0, %v2774
    %v2776 = vrot.slane %v1656, %v2775
    %v2782 = vunpack.c.l.b16 %v1626
    %v2783 = vunpack.c.l.b16 %v1627
    %v2784 = vunpack.c.l.b16 %v1628
    %v2785 = vunpack.c.l.b16 %v1629
    %v2786 = vpack.c.b16 %v2783, %v2782
    %v2787 = vpack.c.b16 %v2785, %v2784
    %2790 = vmatprep.subr.bf16.mxu0 0
    %2791 = vmatpush1.bf16.msra.mxu0 %v2786
    %2792 = vmatprep.subr.bf16.mxu0 0
    %2793 = vmatpush1.bf16.msra.mxu0 %v2787
    %2794 = vmatprep.subr.bf16.mxu0 0
    %2795 = vmatpush1.bf16.msra.mxu0 0
    %2796 = vmatprep.subr.bf16.mxu0 0
    %2797 = vmatpush1.bf16.msra.mxu0 0
    %2798 = vmatprep.subr.bf16.mxu0 0
    %2799 = vmatpush1.bf16.msra.mxu0 0
    %2800 = vmatprep.subr.bf16.mxu0 0
    %2801 = vmatpush1.bf16.msra.mxu0 0
    %2802 = vmatprep.subr.bf16.mxu0 0
    %2803 = vmatpush1.bf16.msra.mxu0 0
    %2804 = vmatprep.subr.bf16.mxu0 0
    %2805 = vmatpush1.bf16.msra.mxu0 0
    %2806 = vmatprep.subr.bf16.mxu0 0
    %2807 = vmatpush1.bf16.msra.mxu0 0
    %2808 = vmatprep.subr.bf16.mxu0 0
    %2809 = vmatpush1.bf16.msra.mxu0 0
    %2810 = vmatprep.subr.bf16.mxu0 0
    %2811 = vmatpush1.bf16.msra.mxu0 0
    %2812 = vmatprep.subr.bf16.mxu0 0
    %2813 = vmatpush1.bf16.msra.mxu0 0
    %2814 = vmatprep.subr.bf16.mxu0 0
    %2815 = vmatpush1.bf16.msra.mxu0 0
    %2816 = vmatprep.subr.bf16.mxu0 0
    %2817 = vmatpush1.bf16.msra.mxu0 0
    %2818 = vmatprep.subr.bf16.mxu0 0
    %2819 = vmatpush1.bf16.msra.mxu0 0
    %2820 = vmatprep.subr.bf16.mxu0 0
    %2821 = vmatpush1.bf16.msra.mxu0 0
    %2822 = vmatprep.mubr.bf16.mxu0 0
    %2823 = vmatmul.mubr.bf16.gmra.mrb[0].mxu0 %v1685
    %v2824 = vpop.f32.mrb[0].mxu0
    %v2825 = vadd.f32 %v2776, %v2824
    %v2826 = vpop.f32.mrb[0].mxu0
    %v2827 = vpop.f32.mrb[0].mxu0
    %v2828 = vadd.f32 %v2776, %v2827
    %v2829 = vpop.f32.mrb[0].mxu0
    %2830 = vdwg.mxu0
    %v2832 = vlaneseq
    %v2833 = vshrl.u32 %v2832, 7
    %v2834 = vsub.s32 0, %v2833
    %v2835 = vrot.slane %v1660, %v2834
    %v2841 = vunpack.c.l.b16 %v1642
    %v2842 = vunpack.c.l.b16 %v1643
    %v2843 = vunpack.c.l.b16 %v1644
    %v2844 = vunpack.c.l.b16 %v1645
    %v2845 = vpack.c.b16 %v2842, %v2841
    %v2846 = vpack.c.b16 %v2844, %v2843
    %2849 = vmatprep.subr.bf16.mxu0 0
    %2850 = vmatpush1.bf16.msra.mxu0 %v2845
    %2851 = vmatprep.subr.bf16.mxu0 0
    %2852 = vmatpush1.bf16.msra.mxu0 %v2846
    %2853 = vmatprep.subr.bf16.mxu0 0
    %2854 = vmatpush1.bf16.msra.mxu0 0
    %2855 = vmatprep.subr.bf16.mxu0 0
    %2856 = vmatpush1.bf16.msra.mxu0 0
    %2857 = vmatprep.subr.bf16.mxu0 0
    %2858 = vmatpush1.bf16.msra.mxu0 0
    %2859 = vmatprep.subr.bf16.mxu0 0
    %2860 = vmatpush1.bf16.msra.mxu0 0
    %2861 = vmatprep.subr.bf16.mxu0 0
    %2862 = vmatpush1.bf16.msra.mxu0 0
    %2863 = vmatprep.subr.bf16.mxu0 0
    %2864 = vmatpush1.bf16.msra.mxu0 0
    %2865 = vmatprep.subr.bf16.mxu0 0
    %2866 = vmatpush1.bf16.msra.mxu0 0
    %2867 = vmatprep.subr.bf16.mxu0 0
    %2868 = vmatpush1.bf16.msra.mxu0 0
    %2869 = vmatprep.subr.bf16.mxu0 0
    %2870 = vmatpush1.bf16.msra.mxu0 0
    %2871 = vmatprep.subr.bf16.mxu0 0
    %2872 = vmatpush1.bf16.msra.mxu0 0
    %2873 = vmatprep.subr.bf16.mxu0 0
    %2874 = vmatpush1.bf16.msra.mxu0 0
    %2875 = vmatprep.subr.bf16.mxu0 0
    %2876 = vmatpush1.bf16.msra.mxu0 0
    %2877 = vmatprep.subr.bf16.mxu0 0
    %2878 = vmatpush1.bf16.msra.mxu0 0
    %2879 = vmatprep.subr.bf16.mxu0 0
    %2880 = vmatpush1.bf16.msra.mxu0 0
    %2881 = vmatprep.mubr.bf16.mxu0 0
    %2882 = vmatmul.mubr.bf16.gmra.mrb[0].mxu0 %v1685
    %v2883 = vpop.f32.mrb[0].mxu0
    %v2884 = vadd.f32 %v2835, %v2883
    %v2885 = vpop.f32.mrb[0].mxu0
    %v2886 = vpop.f32.mrb[0].mxu0
    %v2887 = vadd.f32 %v2835, %v2886
    %v2888 = vpop.f32.mrb[0].mxu0
    %2889 = vdwg.mxu0
    %v2891 = vsel %vm1846, %v2766, 0
    %v2894 = vsel %vm1846, %v2825, 0
    %2896 = vmatprep.subr.mxu0 0.0
    %2897 = vmatpush1.xpose.msra.mxu0 %v2894
    %2898 = vmatprep.subr.mxu0 0.0
    %2899 = vmatpush1.xpose.msra.mxu0 0.0
    %2900 = vmatprep.subr.mxu0 0.0
    %2901 = vmatpush1.xpose.msra.mxu0 0.0
    %2902 = vmatprep.subr.mxu0 0.0
    %2903 = vmatpush1.xpose.msra.mxu0 0.0
    %2904 = vmatprep.subr.mxu0 0.0
    %2905 = vmatpush1.xpose.msra.mxu0 0.0
    %2906 = vmatprep.subr.mxu0 0.0
    %2907 = vmatpush1.xpose.msra.mxu0 0.0
    %2908 = vmatprep.subr.mxu0 0.0
    %2909 = vmatpush1.xpose.msra.mxu0 0.0
    %2910 = vmatprep.subr.mxu0 0.0
    %2911 = vmatpush1.xpose.msra.mxu0 0.0
    %2912 = vmatprep.subr.mxu0 0.0
    %2913 = vmatpush1.xpose.msra.mxu0 0.0
    %2914 = vmatprep.subr.mxu0 0.0
    %2915 = vmatpush1.xpose.msra.mxu0 0.0
    %2916 = vmatprep.subr.mxu0 0.0
    %2917 = vmatpush1.xpose.msra.mxu0 0.0
    %2918 = vmatprep.subr.mxu0 0.0
    %2919 = vmatpush1.xpose.msra.mxu0 0.0
    %2920 = vmatprep.subr.mxu0 0.0
    %2921 = vmatpush1.xpose.msra.mxu0 0.0
    %2922 = vmatprep.subr.mxu0 0.0
    %2923 = vmatpush1.xpose.msra.mxu0 0.0
    %2924 = vmatprep.subr.mxu0 0.0
    %2925 = vmatpush1.xpose.msra.mxu0 0.0
    %2926 = vmatprep.subr.mxu0 0.0
    %2927 = vmatpush1.xpose.msra.mxu0 0.0
    %2928 = vmatprep.subr.mxu0 0.0
    %2929 = vmatpush1.xpose.msra.mxu0 0.0
    %2930 = vmatprep.subr.mxu0 0.0
    %2931 = vmatpush1.xpose.msra.mxu0 0.0
    %2932 = vmatprep.subr.mxu0 0.0
    %2933 = vmatpush1.xpose.msra.mxu0 0.0
    %2934 = vmatprep.subr.mxu0 0.0
    %2935 = vmatpush1.xpose.msra.mxu0 0.0
    %2936 = vmatprep.subr.mxu0 0.0
    %2937 = vmatpush1.xpose.msra.mxu0 0.0
    %2938 = vmatprep.subr.mxu0 0.0
    %2939 = vmatpush1.xpose.msra.mxu0 0.0
    %2940 = vmatprep.subr.mxu0 0.0
    %2941 = vmatpush1.xpose.msra.mxu0 0.0
    %2942 = vmatprep.subr.mxu0 0.0
    %2943 = vmatpush1.xpose.msra.mxu0 0.0
    %2944 = vmatprep.subr.mxu0 0.0
    %2945 = vmatpush1.xpose.msra.mxu0 0.0
    %2946 = vmatprep.subr.mxu0 0.0
    %2947 = vmatpush1.xpose.msra.mxu0 0.0
    %2948 = vmatprep.subr.mxu0 0.0
    %2949 = vmatpush1.xpose.msra.mxu0 0.0
    %2950 = vmatprep.subr.mxu0 0.0
    %2951 = vmatpush1.xpose.msra.mxu0 0.0
    %2952 = vmatprep.subr.mxu0 0.0
    %2953 = vmatpush1.xpose.msra.mxu0 0.0
    %2954 = vmatprep.subr.mxu0 0.0
    %2955 = vmatpush1.xpose.msra.mxu0 0.0
    %2956 = vmatprep.subr.mxu0 0.0
    %2957 = vmatpush1.xpose.msra.mxu0 0.0
    %2958 = vmatprep.subr.mxu0 0.0
    %2959 = vmatpush1.xpose.msra.mxu0 0.0
    %2960 = vmatprep.mubr.f32.mxu0 0.0
    %2961 = vmatmul.mubr.f32.gmra.mrb[0].mxu0 %v2891
    %v2962 = vpop.f32.mrb[0].mxu0
    %v2963 = vadd.f32 %v1594, %v2962
    %v2964 = vpop.f32.mrb[0].mxu0
    %2965 = vdwg.mxu0
    %v2967 = vsel %vm1846, %v2769, 0
    %v2970 = vsel %vm1846, %v2828, 0
    %2972 = vmatprep.subr.mxu0 0.0
    %2973 = vmatpush1.xpose.msra.mxu0 %v2970
    %2974 = vmatprep.subr.mxu0 0.0
    %2975 = vmatpush1.xpose.msra.mxu0 0.0
    %2976 = vmatprep.subr.mxu0 0.0
    %2977 = vmatpush1.xpose.msra.mxu0 0.0
    %2978 = vmatprep.subr.mxu0 0.0
    %2979 = vmatpush1.xpose.msra.mxu0 0.0
    %2980 = vmatprep.subr.mxu0 0.0
    %2981 = vmatpush1.xpose.msra.mxu0 0.0
    %2982 = vmatprep.subr.mxu0 0.0
    %2983 = vmatpush1.xpose.msra.mxu0 0.0
    %2984 = vmatprep.subr.mxu0 0.0
    %2985 = vmatpush1.xpose.msra.mxu0 0.0
    %2986 = vmatprep.subr.mxu0 0.0
    %2987 = vmatpush1.xpose.msra.mxu0 0.0
    %2988 = vmatprep.subr.mxu0 0.0
    %2989 = vmatpush1.xpose.msra.mxu0 0.0
    %2990 = vmatprep.subr.mxu0 0.0
    %2991 = vmatpush1.xpose.msra.mxu0 0.0
    %2992 = vmatprep.subr.mxu0 0.0
    %2993 = vmatpush1.xpose.msra.mxu0 0.0
    %2994 = vmatprep.subr.mxu0 0.0
    %2995 = vmatpush1.xpose.msra.mxu0 0.0
    %2996 = vmatprep.subr.mxu0 0.0
    %2997 = vmatpush1.xpose.msra.mxu0 0.0
    %2998 = vmatprep.subr.mxu0 0.0
    %2999 = vmatpush1.xpose.msra.mxu0 0.0
    %3000 = vmatprep.subr.mxu0 0.0
    %3001 = vmatpush1.xpose.msra.mxu0 0.0
    %3002 = vmatprep.subr.mxu0 0.0
    %3003 = vmatpush1.xpose.msra.mxu0 0.0
    %3004 = vmatprep.subr.mxu0 0.0
    %3005 = vmatpush1.xpose.msra.mxu0 0.0
    %3006 = vmatprep.subr.mxu0 0.0
    %3007 = vmatpush1.xpose.msra.mxu0 0.0
    %3008 = vmatprep.subr.mxu0 0.0
    %3009 = vmatpush1.xpose.msra.mxu0 0.0
    %3010 = vmatprep.subr.mxu0 0.0
    %3011 = vmatpush1.xpose.msra.mxu0 0.0
    %3012 = vmatprep.subr.mxu0 0.0
    %3013 = vmatpush1.xpose.msra.mxu0 0.0
    %3014 = vmatprep.subr.mxu0 0.0
    %3015 = vmatpush1.xpose.msra.mxu0 0.0
    %3016 = vmatprep.subr.mxu0 0.0
    %3017 = vmatpush1.xpose.msra.mxu0 0.0
    %3018 = vmatprep.subr.mxu0 0.0
    %3019 = vmatpush1.xpose.msra.mxu0 0.0
    %3020 = vmatprep.subr.mxu0 0.0
    %3021 = vmatpush1.xpose.msra.mxu0 0.0
    %3022 = vmatprep.subr.mxu0 0.0
    %3023 = vmatpush1.xpose.msra.mxu0 0.0
    %3024 = vmatprep.subr.mxu0 0.0
    %3025 = vmatpush1.xpose.msra.mxu0 0.0
    %3026 = vmatprep.subr.mxu0 0.0
    %3027 = vmatpush1.xpose.msra.mxu0 0.0
    %3028 = vmatprep.subr.mxu0 0.0
    %3029 = vmatpush1.xpose.msra.mxu0 0.0
    %3030 = vmatprep.subr.mxu0 0.0
    %3031 = vmatpush1.xpose.msra.mxu0 0.0
    %3032 = vmatprep.subr.mxu0 0.0
    %3033 = vmatpush1.xpose.msra.mxu0 0.0
    %3034 = vmatprep.subr.mxu0 0.0
    %3035 = vmatpush1.xpose.msra.mxu0 0.0
    %3036 = vmatprep.mubr.f32.mxu0 0.0
    %3037 = vmatmul.mubr.f32.gmra.mrb[0].mxu0 %v2967
    %v3038 = vpop.f32.mrb[0].mxu0
    %v3039 = vadd.f32 %v1598, %v3038
    %v3040 = vpop.f32.mrb[0].mxu0
    %3041 = vdwg.mxu0
    %v3042 = vsel %vm1846, %v2963, -inf
    %3043 = vmax.xlane.f32.xlu0 %v3042
    %v3044 = vpop.xlane.xlu0 %3043
    %v3045 = vsel %vm1846, %v3039, -inf
    %3046 = vmax.xlane.f32.xlu0 %v3045
    %v3047 = vpop.xlane.xlu0 %3046
    %v3048 = vsub.f32 %v2963, %v3044
    %v3049 = vsub.f32 %v3039, %v3047
    %v3050 = vmul.f32 %v3048, 1.442695
    %v3051 = vpow.pop %v3050
    %v3052 = vmul.f32 %v3049, 1.442695
    %v3053 = vpow.pop %v3052
    %v3054 = vsel %vm1846, %v3051, 0.0
    %3055 = vadd.xlane.f32.xlu0 %v3054
    %v3056 = vpop.xlane.xlu0 %3055
    %v3057 = vsel %vm1846, %v3053, 0.0
    %3058 = vadd.xlane.f32.xlu0 %v3057
    %v3059 = vpop.xlane.xlu0 %3058
    %v3060 = vrcp.pop %v3056
    %v3061 = vrcp.pop %v3059
    %v3062 = vmul.f32 %v3051, %v3060
    %v3063 = vmul.f32 %v3053, %v3061
    %v3065 = vsel %vm1846, %v3062, 0
    %3067 = vmatprep.subr.mxu0 0.0
    %3068 = vmatpush1.msra.mxu0 %v2884
    %3069 = vmatprep.subr.mxu0 0.0
    %3070 = vmatpush1.msra.mxu0 0.0
    %3071 = vmatprep.subr.mxu0 0.0
    %3072 = vmatpush1.msra.mxu0 0.0
    %3073 = vmatprep.subr.mxu0 0.0
    %3074 = vmatpush1.msra.mxu0 0.0
    %3075 = vmatprep.subr.mxu0 0.0
    %3076 = vmatpush1.msra.mxu0 0.0
    %3077 = vmatprep.subr.mxu0 0.0
    %3078 = vmatpush1.msra.mxu0 0.0
    %3079 = vmatprep.subr.mxu0 0.0
    %3080 = vmatpush1.msra.mxu0 0.0
    %3081 = vmatprep.subr.mxu0 0.0
    %3082 = vmatpush1.msra.mxu0 0.0
    %3083 = vmatprep.subr.mxu0 0.0
    %3084 = vmatpush1.msra.mxu0 0.0
    %3085 = vmatprep.subr.mxu0 0.0
    %3086 = vmatpush1.msra.mxu0 0.0
    %3087 = vmatprep.subr.mxu0 0.0
    %3088 = vmatpush1.msra.mxu0 0.0
    %3089 = vmatprep.subr.mxu0 0.0
    %3090 = vmatpush1.msra.mxu0 0.0
    %3091 = vmatprep.subr.mxu0 0.0
    %3092 = vmatpush1.msra.mxu0 0.0
    %3093 = vmatprep.subr.mxu0 0.0
    %3094 = vmatpush1.msra.mxu0 0.0
    %3095 = vmatprep.subr.mxu0 0.0
    %3096 = vmatpush1.msra.mxu0 0.0
    %3097 = vmatprep.subr.mxu0 0.0
    %3098 = vmatpush1.msra.mxu0 0.0
    %3099 = vmatprep.subr.mxu0 0.0
    %3100 = vmatpush1.msra.mxu0 0.0
    %3101 = vmatprep.subr.mxu0 0.0
    %3102 = vmatpush1.msra.mxu0 0.0
    %3103 = vmatprep.subr.mxu0 0.0
    %3104 = vmatpush1.msra.mxu0 0.0
    %3105 = vmatprep.subr.mxu0 0.0
    %3106 = vmatpush1.msra.mxu0 0.0
    %3107 = vmatprep.subr.mxu0 0.0
    %3108 = vmatpush1.msra.mxu0 0.0
    %3109 = vmatprep.subr.mxu0 0.0
    %3110 = vmatpush1.msra.mxu0 0.0
    %3111 = vmatprep.subr.mxu0 0.0
    %3112 = vmatpush1.msra.mxu0 0.0
    %3113 = vmatprep.subr.mxu0 0.0
    %3114 = vmatpush1.msra.mxu0 0.0
    %3115 = vmatprep.subr.mxu0 0.0
    %3116 = vmatpush1.msra.mxu0 0.0
    %3117 = vmatprep.subr.mxu0 0.0
    %3118 = vmatpush1.msra.mxu0 0.0
    %3119 = vmatprep.subr.mxu0 0.0
    %3120 = vmatpush1.msra.mxu0 0.0
    %3121 = vmatprep.subr.mxu0 0.0
    %3122 = vmatpush1.msra.mxu0 0.0
    %3123 = vmatprep.subr.mxu0 0.0
    %3124 = vmatpush1.msra.mxu0 0.0
    %3125 = vmatprep.subr.mxu0 0.0
    %3126 = vmatpush1.msra.mxu0 0.0
    %3127 = vmatprep.subr.mxu0 0.0
    %3128 = vmatpush1.msra.mxu0 0.0
    %3129 = vmatprep.subr.mxu0 0.0
    %3130 = vmatpush1.msra.mxu0 0.0
    %3131 = vmatprep.mubr.f32.mxu0 0.0
    %3132 = vmatmul.mubr.f32.gmra.mrb[0].mxu0 %v3065
    %v3133 = vpop.f32.mrb[0].mxu0
    %v3134 = vadd.f32 0.0, %v3133
    %v3135 = vpop.f32.mrb[0].mxu0
    %3136 = vdwg.mxu0
    %v3138 = vsel %vm1846, %v3063, 0
    %3140 = vmatprep.subr.mxu0 0.0
    %3141 = vmatpush1.msra.mxu0 %v2887
    %3142 = vmatprep.subr.mxu0 0.0
    %3143 = vmatpush1.msra.mxu0 0.0
    %3144 = vmatprep.subr.mxu0 0.0
    %3145 = vmatpush1.msra.mxu0 0.0
    %3146 = vmatprep.subr.mxu0 0.0
    %3147 = vmatpush1.msra.mxu0 0.0
    %3148 = vmatprep.subr.mxu0 0.0
    %3149 = vmatpush1.msra.mxu0 0.0
    %3150 = vmatprep.subr.mxu0 0.0
    %3151 = vmatpush1.msra.mxu0 0.0
    %3152 = vmatprep.subr.mxu0 0.0
    %3153 = vmatpush1.msra.mxu0 0.0
    %3154 = vmatprep.subr.mxu0 0.0
    %3155 = vmatpush1.msra.mxu0 0.0
    %3156 = vmatprep.subr.mxu0 0.0
    %3157 = vmatpush1.msra.mxu0 0.0
    %3158 = vmatprep.subr.mxu0 0.0
    %3159 = vmatpush1.msra.mxu0 0.0
    %3160 = vmatprep.subr.mxu0 0.0
    %3161 = vmatpush1.msra.mxu0 0.0
    %3162 = vmatprep.subr.mxu0 0.0
    %3163 = vmatpush1.msra.mxu0 0.0
    %3164 = vmatprep.subr.mxu0 0.0
    %3165 = vmatpush1.msra.mxu0 0.0
    %3166 = vmatprep.subr.mxu0 0.0
    %3167 = vmatpush1.msra.mxu0 0.0
    %3168 = vmatprep.subr.mxu0 0.0
    %3169 = vmatpush1.msra.mxu0 0.0
    %3170 = vmatprep.subr.mxu0 0.0
    %3171 = vmatpush1.msra.mxu0 0.0
    %3172 = vmatprep.subr.mxu0 0.0
    %3173 = vmatpush1.msra.mxu0 0.0
    %3174 = vmatprep.subr.mxu0 0.0
    %3175 = vmatpush1.msra.mxu0 0.0
    %3176 = vmatprep.subr.mxu0 0.0
    %3177 = vmatpush1.msra.mxu0 0.0
    %3178 = vmatprep.subr.mxu0 0.0
    %3179 = vmatpush1.msra.mxu0 0.0
    %3180 = vmatprep.subr.mxu0 0.0
    %3181 = vmatpush1.msra.mxu0 0.0
    %3182 = vmatprep.subr.mxu0 0.0
    %3183 = vmatpush1.msra.mxu0 0.0
    %3184 = vmatprep.subr.mxu0 0.0
    %3185 = vmatpush1.msra.mxu0 0.0
    %3186 = vmatprep.subr.mxu0 0.0
    %3187 = vmatpush1.msra.mxu0 0.0
    %3188 = vmatprep.subr.mxu0 0.0
    %3189 = vmatpush1.msra.mxu0 0.0
    %3190 = vmatprep.subr.mxu0 0.0
    %3191 = vmatpush1.msra.mxu0 0.0
    %3192 = vmatprep.subr.mxu0 0.0
    %3193 = vmatpush1.msra.mxu0 0.0
    %3194 = vmatprep.subr.mxu0 0.0
    %3195 = vmatpush1.msra.mxu0 0.0
    %3196 = vmatprep.subr.mxu0 0.0
    %3197 = vmatpush1.msra.mxu0 0.0
    %3198 = vmatprep.subr.mxu0 0.0
    %3199 = vmatpush1.msra.mxu0 0.0
    %3200 = vmatprep.subr.mxu0 0.0
    %3201 = vmatpush1.msra.mxu0 0.0
    %3202 = vmatprep.subr.mxu0 0.0
    %3203 = vmatpush1.msra.mxu0 0.0
    %3204 = vmatprep.mubr.f32.mxu0 0.0
    %3205 = vmatmul.mubr.f32.gmra.mrb[0].mxu0 %v3138
    %v3206 = vpop.f32.mrb[0].mxu0
    %v3207 = vadd.f32 0.0, %v3206
    %v3208 = vpop.f32.mrb[0].mxu0
    %3209 = vdwg.mxu0
    %v3210 = vpack.c.bf16 %v3207, %v3134
    %v3212 = vlaneseq
    %v3213 = vshrl.u32 %v3212, 7
    %v3214 = vsub.s32 0, %v3213
    %v3215 = vrot.slane %v1653, %v3214
    %v3221 = vunpack.c.l.b16 %v1614
    %v3222 = vunpack.c.l.b16 %v1615
    %v3223 = vunpack.c.l.b16 %v1616
    %v3224 = vunpack.c.l.b16 %v1617
    %v3225 = vpack.c.b16 %v3222, %v3221
    %v3226 = vpack.c.b16 %v3224, %v3223
    %3229 = vmatprep.subr.bf16.mxu0 0
    %3230 = vmatpush1.bf16.msra.mxu0 %v3225
    %3231 = vmatprep.subr.bf16.mxu0 0
    %3232 = vmatpush1.bf16.msra.mxu0 %v3226
    %3233 = vmatprep.subr.bf16.mxu0 0
    %3234 = vmatpush1.bf16.msra.mxu0 0
    %3235 = vmatprep.subr.bf16.mxu0 0
    %3236 = vmatpush1.bf16.msra.mxu0 0
    %3237 = vmatprep.subr.bf16.mxu0 0
    %3238 = vmatpush1.bf16.msra.mxu0 0
    %3239 = vmatprep.subr.bf16.mxu0 0
    %3240 = vmatpush1.bf16.msra.mxu0 0
    %3241 = vmatprep.subr.bf16.mxu0 0
    %3242 = vmatpush1.bf16.msra.mxu0 0
    %3243 = vmatprep.subr.bf16.mxu0 0
    %3244 = vmatpush1.bf16.msra.mxu0 0
    %3245 = vmatprep.subr.bf16.mxu0 0
    %3246 = vmatpush1.bf16.msra.mxu0 0
    %3247 = vmatprep.subr.bf16.mxu0 0
    %3248 = vmatpush1.bf16.msra.mxu0 0
    %3249 = vmatprep.subr.bf16.mxu0 0
    %3250 = vmatpush1.bf16.msra.mxu0 0
    %3251 = vmatprep.subr.bf16.mxu0 0
    %3252 = vmatpush1.bf16.msra.mxu0 0
    %3253 = vmatprep.subr.bf16.mxu0 0
    %3254 = vmatpush1.bf16.msra.mxu0 0
    %3255 = vmatprep.subr.bf16.mxu0 0
    %3256 = vmatpush1.bf16.msra.mxu0 0
    %3257 = vmatprep.subr.bf16.mxu0 0
    %3258 = vmatpush1.bf16.msra.mxu0 0
    %3259 = vmatprep.subr.bf16.mxu0 0
    %3260 = vmatpush1.bf16.msra.mxu0 0
    %3261 = vmatprep.mubr.bf16.mxu0 0
    %3262 = vmatmul.mubr.bf16.gmra.mrb[0].mxu0 %v1685
    %v3263 = vpop.f32.mrb[0].mxu0
    %v3264 = vadd.f32 %v3215, %v3263
    %v3265 = vpop.f32.mrb[0].mxu0
    %v3266 = vpop.f32.mrb[0].mxu0
    %v3267 = vadd.f32 %v3215, %v3266
    %v3268 = vpop.f32.mrb[0].mxu0
    %3269 = vdwg.mxu0
    %v3271 = vlaneseq
    %v3272 = vshrl.u32 %v3271, 7
    %v3273 = vsub.s32 0, %v3272
    %v3274 = vrot.slane %v1657, %v3273
    %v3280 = vunpack.c.l.b16 %v1630
    %v3281 = vunpack.c.l.b16 %v1631
    %v3282 = vunpack.c.l.b16 %v1632
    %v3283 = vunpack.c.l.b16 %v1633
    %v3284 = vpack.c.b16 %v3281, %v3280
    %v3285 = vpack.c.b16 %v3283, %v3282
    %3288 = vmatprep.subr.bf16.mxu0 0
    %3289 = vmatpush1.bf16.msra.mxu0 %v3284
    %3290 = vmatprep.subr.bf16.mxu0 0
    %3291 = vmatpush1.bf16.msra.mxu0 %v3285
    %3292 = vmatprep.subr.bf16.mxu0 0
    %3293 = vmatpush1.bf16.msra.mxu0 0
    %3294 = vmatprep.subr.bf16.mxu0 0
    %3295 = vmatpush1.bf16.msra.mxu0 0
    %3296 = vmatprep.subr.bf16.mxu0 0
    %3297 = vmatpush1.bf16.msra.mxu0 0
    %3298 = vmatprep.subr.bf16.mxu0 0
    %3299 = vmatpush1.bf16.msra.mxu0 0
    %3300 = vmatprep.subr.bf16.mxu0 0
    %3301 = vmatpush1.bf16.msra.mxu0 0
    %3302 = vmatprep.subr.bf16.mxu0 0
    %3303 = vmatpush1.bf16.msra.mxu0 0
    %3304 = vmatprep.subr.bf16.mxu0 0
    %3305 = vmatpush1.bf16.msra.mxu0 0
    %3306 = vmatprep.subr.bf16.mxu0 0
    %3307 = vmatpush1.bf16.msra.mxu0 0
    %3308 = vmatprep.subr.bf16.mxu0 0
    %3309 = vmatpush1.bf16.msra.mxu0 0
    %3310 = vmatprep.subr.bf16.mxu0 0
    %3311 = vmatpush1.bf16.msra.mxu0 0
    %3312 = vmatprep.subr.bf16.mxu0 0
    %3313 = vmatpush1.bf16.msra.mxu0 0
    %3314 = vmatprep.subr.bf16.mxu0 0
    %3315 = vmatpush1.bf16.msra.mxu0 0
    %3316 = vmatprep.subr.bf16.mxu0 0
    %3317 = vmatpush1.bf16.msra.mxu0 0
    %3318 = vmatprep.subr.bf16.mxu0 0
    %3319 = vmatpush1.bf16.msra.mxu0 0
    %3320 = vmatprep.mubr.bf16.mxu0 0
    %3321 = vmatmul.mubr.bf16.gmra.mrb[0].mxu0 %v1685
    %v3322 = vpop.f32.mrb[0].mxu0
    %v3323 = vadd.f32 %v3274, %v3322
    %v3324 = vpop.f32.mrb[0].mxu0
    %v3325 = vpop.f32.mrb[0].mxu0
    %v3326 = vadd.f32 %v3274, %v3325
    %v3327 = vpop.f32.mrb[0].mxu0
    %3328 = vdwg.mxu0
    %v3330 = vlaneseq
    %v3331 = vshrl.u32 %v3330, 7
    %v3332 = vsub.s32 0, %v3331
    %v3333 = vrot.slane %v1661, %v3332
    %v3339 = vunpack.c.l.b16 %v1646
    %v3340 = vunpack.c.l.b16 %v1647
    %v3341 = vunpack.c.l.b16 %v1648
    %v3342 = vunpack.c.l.b16 %v1649
    %v3343 = vpack.c.b16 %v3340, %v3339
    %v3344 = vpack.c.b16 %v3342, %v3341
    %3347 = vmatprep.subr.bf16.mxu0 0
    %3348 = vmatpush1.bf16.msra.mxu0 %v3343
    %3349 = vmatprep.subr.bf16.mxu0 0
    %3350 = vmatpush1.bf16.msra.mxu0 %v3344
    %3351 = vmatprep.subr.bf16.mxu0 0
    %3352 = vmatpush1.bf16.msra.mxu0 0
    %3353 = vmatprep.subr.bf16.mxu0 0
    %3354 = vmatpush1.bf16.msra.mxu0 0
    %3355 = vmatprep.subr.bf16.mxu0 0
    %3356 = vmatpush1.bf16.msra.mxu0 0
    %3357 = vmatprep.subr.bf16.mxu0 0
    %3358 = vmatpush1.bf16.msra.mxu0 0
    %3359 = vmatprep.subr.bf16.mxu0 0
    %3360 = vmatpush1.bf16.msra.mxu0 0
    %3361 = vmatprep.subr.bf16.mxu0 0
    %3362 = vmatpush1.bf16.msra.mxu0 0
    %3363 = vmatprep.subr.bf16.mxu0 0
    %3364 = vmatpush1.bf16.msra.mxu0 0
    %3365 = vmatprep.subr.bf16.mxu0 0
    %3366 = vmatpush1.bf16.msra.mxu0 0
    %3367 = vmatprep.subr.bf16.mxu0 0
    %3368 = vmatpush1.bf16.msra.mxu0 0
    %3369 = vmatprep.subr.bf16.mxu0 0
    %3370 = vmatpush1.bf16.msra.mxu0 0
    %3371 = vmatprep.subr.bf16.mxu0 0
    %3372 = vmatpush1.bf16.msra.mxu0 0
    %3373 = vmatprep.subr.bf16.mxu0 0
    %3374 = vmatpush1.bf16.msra.mxu0 0
    %3375 = vmatprep.subr.bf16.mxu0 0
    %3376 = vmatpush1.bf16.msra.mxu0 0
    %3377 = vmatprep.subr.bf16.mxu0 0
    %3378 = vmatpush1.bf16.msra.mxu0 0
    %3379 = vmatprep.mubr.bf16.mxu0 0
    %3380 = vmatmul.mubr.bf16.gmra.mrb[0].mxu0 %v1685
    %v3381 = vpop.f32.mrb[0].mxu0
    %v3382 = vadd.f32 %v3333, %v3381
    %v3383 = vpop.f32.mrb[0].mxu0
    %v3384 = vpop.f32.mrb[0].mxu0
    %v3385 = vadd.f32 %v3333, %v3384
    %v3386 = vpop.f32.mrb[0].mxu0
    %3387 = vdwg.mxu0
    %v3389 = vsel %vm1846, %v3264, 0
    %v3392 = vsel %vm1846, %v3323, 0
    %3394 = vmatprep.subr.mxu0 0.0
    %3395 = vmatpush1.xpose.msra.mxu0 %v3392
    %3396 = vmatprep.subr.mxu0 0.0
    %3397 = vmatpush1.xpose.msra.mxu0 0.0
    %3398 = vmatprep.subr.mxu0 0.0
    %3399 = vmatpush1.xpose.msra.mxu0 0.0
    %3400 = vmatprep.subr.mxu0 0.0
    %3401 = vmatpush1.xpose.msra.mxu0 0.0
    %3402 = vmatprep.subr.mxu0 0.0
    %3403 = vmatpush1.xpose.msra.mxu0 0.0
    %3404 = vmatprep.subr.mxu0 0.0
    %3405 = vmatpush1.xpose.msra.mxu0 0.0
    %3406 = vmatprep.subr.mxu0 0.0
    %3407 = vmatpush1.xpose.msra.mxu0 0.0
    %3408 = vmatprep.subr.mxu0 0.0
    %3409 = vmatpush1.xpose.msra.mxu0 0.0
    %3410 = vmatprep.subr.mxu0 0.0
    %3411 = vmatpush1.xpose.msra.mxu0 0.0
    %3412 = vmatprep.subr.mxu0 0.0
    %3413 = vmatpush1.xpose.msra.mxu0 0.0
    %3414 = vmatprep.subr.mxu0 0.0
    %3415 = vmatpush1.xpose.msra.mxu0 0.0
    %3416 = vmatprep.subr.mxu0 0.0
    %3417 = vmatpush1.xpose.msra.mxu0 0.0
    %3418 = vmatprep.subr.mxu0 0.0
    %3419 = vmatpush1.xpose.msra.mxu0 0.0
    %3420 = vmatprep.subr.mxu0 0.0
    %3421 = vmatpush1.xpose.msra.mxu0 0.0
    %3422 = vmatprep.subr.mxu0 0.0
    %3423 = vmatpush1.xpose.msra.mxu0 0.0
    %3424 = vmatprep.subr.mxu0 0.0
    %3425 = vmatpush1.xpose.msra.mxu0 0.0
    %3426 = vmatprep.subr.mxu0 0.0
    %3427 = vmatpush1.xpose.msra.mxu0 0.0
    %3428 = vmatprep.subr.mxu0 0.0
    %3429 = vmatpush1.xpose.msra.mxu0 0.0
    %3430 = vmatprep.subr.mxu0 0.0
    %3431 = vmatpush1.xpose.msra.mxu0 0.0
    %3432 = vmatprep.subr.mxu0 0.0
    %3433 = vmatpush1.xpose.msra.mxu0 0.0
    %3434 = vmatprep.subr.mxu0 0.0
    %3435 = vmatpush1.xpose.msra.mxu0 0.0
    %3436 = vmatprep.subr.mxu0 0.0
    %3437 = vmatpush1.xpose.msra.mxu0 0.0
    %3438 = vmatprep.subr.mxu0 0.0
    %3439 = vmatpush1.xpose.msra.mxu0 0.0
    %3440 = vmatprep.subr.mxu0 0.0
    %3441 = vmatpush1.xpose.msra.mxu0 0.0
    %3442 = vmatprep.subr.mxu0 0.0
    %3443 = vmatpush1.xpose.msra.mxu0 0.0
    %3444 = vmatprep.subr.mxu0 0.0
    %3445 = vmatpush1.xpose.msra.mxu0 0.0
    %3446 = vmatprep.subr.mxu0 0.0
    %3447 = vmatpush1.xpose.msra.mxu0 0.0
    %3448 = vmatprep.subr.mxu0 0.0
    %3449 = vmatpush1.xpose.msra.mxu0 0.0
    %3450 = vmatprep.subr.mxu0 0.0
    %3451 = vmatpush1.xpose.msra.mxu0 0.0
    %3452 = vmatprep.subr.mxu0 0.0
    %3453 = vmatpush1.xpose.msra.mxu0 0.0
    %3454 = vmatprep.subr.mxu0 0.0
    %3455 = vmatpush1.xpose.msra.mxu0 0.0
    %3456 = vmatprep.subr.mxu0 0.0
    %3457 = vmatpush1.xpose.msra.mxu0 0.0
    %3458 = vmatprep.mubr.f32.mxu0 0.0
    %3459 = vmatmul.mubr.f32.gmra.mrb[0].mxu0 %v3389
    %v3460 = vpop.f32.mrb[0].mxu0
    %v3461 = vadd.f32 %v1594, %v3460
    %v3462 = vpop.f32.mrb[0].mxu0
    %3463 = vdwg.mxu0
    %v3465 = vsel %vm1846, %v3267, 0
    %v3468 = vsel %vm1846, %v3326, 0
    %3470 = vmatprep.subr.mxu0 0.0
    %3471 = vmatpush1.xpose.msra.mxu0 %v3468
    %3472 = vmatprep.subr.mxu0 0.0
    %3473 = vmatpush1.xpose.msra.mxu0 0.0
    %3474 = vmatprep.subr.mxu0 0.0
    %3475 = vmatpush1.xpose.msra.mxu0 0.0
    %3476 = vmatprep.subr.mxu0 0.0
    %3477 = vmatpush1.xpose.msra.mxu0 0.0
    %3478 = vmatprep.subr.mxu0 0.0
    %3479 = vmatpush1.xpose.msra.mxu0 0.0
    %3480 = vmatprep.subr.mxu0 0.0
    %3481 = vmatpush1.xpose.msra.mxu0 0.0
    %3482 = vmatprep.subr.mxu0 0.0
    %3483 = vmatpush1.xpose.msra.mxu0 0.0
    %3484 = vmatprep.subr.mxu0 0.0
    %3485 = vmatpush1.xpose.msra.mxu0 0.0
    %3486 = vmatprep.subr.mxu0 0.0
    %3487 = vmatpush1.xpose.msra.mxu0 0.0
    %3488 = vmatprep.subr.mxu0 0.0
    %3489 = vmatpush1.xpose.msra.mxu0 0.0
    %3490 = vmatprep.subr.mxu0 0.0
    %3491 = vmatpush1.xpose.msra.mxu0 0.0
    %3492 = vmatprep.subr.mxu0 0.0
    %3493 = vmatpush1.xpose.msra.mxu0 0.0
    %3494 = vmatprep.subr.mxu0 0.0
    %3495 = vmatpush1.xpose.msra.mxu0 0.0
    %3496 = vmatprep.subr.mxu0 0.0
    %3497 = vmatpush1.xpose.msra.mxu0 0.0
    %3498 = vmatprep.subr.mxu0 0.0
    %3499 = vmatpush1.xpose.msra.mxu0 0.0
    %3500 = vmatprep.subr.mxu0 0.0
    %3501 = vmatpush1.xpose.msra.mxu0 0.0
    %3502 = vmatprep.subr.mxu0 0.0
    %3503 = vmatpush1.xpose.msra.mxu0 0.0
    %3504 = vmatprep.subr.mxu0 0.0
    %3505 = vmatpush1.xpose.msra.mxu0 0.0
    %3506 = vmatprep.subr.mxu0 0.0
    %3507 = vmatpush1.xpose.msra.mxu0 0.0
    %3508 = vmatprep.subr.mxu0 0.0
    %3509 = vmatpush1.xpose.msra.mxu0 0.0
    %3510 = vmatprep.subr.mxu0 0.0
    %3511 = vmatpush1.xpose.msra.mxu0 0.0
    %3512 = vmatprep.subr.mxu0 0.0
    %3513 = vmatpush1.xpose.msra.mxu0 0.0
    %3514 = vmatprep.subr.mxu0 0.0
    %3515 = vmatpush1.xpose.msra.mxu0 0.0
    %3516 = vmatprep.subr.mxu0 0.0
    %3517 = vmatpush1.xpose.msra.mxu0 0.0
    %3518 = vmatprep.subr.mxu0 0.0
    %3519 = vmatpush1.xpose.msra.mxu0 0.0
    %3520 = vmatprep.subr.mxu0 0.0
    %3521 = vmatpush1.xpose.msra.mxu0 0.0
    %3522 = vmatprep.subr.mxu0 0.0
    %3523 = vmatpush1.xpose.msra.mxu0 0.0
    %3524 = vmatprep.subr.mxu0 0.0
    %3525 = vmatpush1.xpose.msra.mxu0 0.0
    %3526 = vmatprep.subr.mxu0 0.0
    %3527 = vmatpush1.xpose.msra.mxu0 0.0
    %3528 = vmatprep.subr.mxu0 0.0
    %3529 = vmatpush1.xpose.msra.mxu0 0.0
    %3530 = vmatprep.subr.mxu0 0.0
    %3531 = vmatpush1.xpose.msra.mxu0 0.0
    %3532 = vmatprep.subr.mxu0 0.0
    %3533 = vmatpush1.xpose.msra.mxu0 0.0
    %3534 = vmatprep.mubr.f32.mxu0 0.0
    %3535 = vmatmul.mubr.f32.gmra.mrb[0].mxu0 %v3465
    %v3536 = vpop.f32.mrb[0].mxu0
    %v3537 = vadd.f32 %v1598, %v3536
    %v3538 = vpop.f32.mrb[0].mxu0
    %3539 = vdwg.mxu0
    %v3540 = vsel %vm1846, %v3461, -inf
    %3541 = vmax.xlane.f32.xlu0 %v3540
    %v3542 = vpop.xlane.xlu0 %3541
    %v3543 = vsel %vm1846, %v3537, -inf
    %3544 = vmax.xlane.f32.xlu0 %v3543
    %v3545 = vpop.xlane.xlu0 %3544
    %v3546 = vsub.f32 %v3461, %v3542
    %v3547 = vsub.f32 %v3537, %v3545
    %v3548 = vmul.f32 %v3546, 1.442695
    %v3549 = vpow.pop %v3548
    %v3550 = vmul.f32 %v3547, 1.442695
    %v3551 = vpow.pop %v3550
    %v3552 = vsel %vm1846, %v3549, 0.0
    %3553 = vadd.xlane.f32.xlu0 %v3552
    %v3554 = vpop.xlane.xlu0 %3553
    %v3555 = vsel %vm1846, %v3551, 0.0
    %3556 = vadd.xlane.f32.xlu0 %v3555
    %v3557 = vpop.xlane.xlu0 %3556
    %v3558 = vrcp.pop %v3554
    %v3559 = vrcp.pop %v3557
    %v3560 = vmul.f32 %v3549, %v3558
    %v3561 = vmul.f32 %v3551, %v3559
    %v3563 = vsel %vm1846, %v3560, 0
    %3565 = vmatprep.subr.mxu0 0.0
    %3566 = vmatpush1.msra.mxu0 %v3382
    %3567 = vmatprep.subr.mxu0 0.0
    %3568 = vmatpush1.msra.mxu0 0.0
    %3569 = vmatprep.subr.mxu0 0.0
    %3570 = vmatpush1.msra.mxu0 0.0
    %3571 = vmatprep.subr.mxu0 0.0
    %3572 = vmatpush1.msra.mxu0 0.0
    %3573 = vmatprep.subr.mxu0 0.0
    %3574 = vmatpush1.msra.mxu0 0.0
    %3575 = vmatprep.subr.mxu0 0.0
    %3576 = vmatpush1.msra.mxu0 0.0
    %3577 = vmatprep.subr.mxu0 0.0
    %3578 = vmatpush1.msra.mxu0 0.0
    %3579 = vmatprep.subr.mxu0 0.0
    %3580 = vmatpush1.msra.mxu0 0.0
    %3581 = vmatprep.subr.mxu0 0.0
    %3582 = vmatpush1.msra.mxu0 0.0
    %3583 = vmatprep.subr.mxu0 0.0
    %3584 = vmatpush1.msra.mxu0 0.0
    %3585 = vmatprep.subr.mxu0 0.0
    %3586 = vmatpush1.msra.mxu0 0.0
    %3587 = vmatprep.subr.mxu0 0.0
    %3588 = vmatpush1.msra.mxu0 0.0
    %3589 = vmatprep.subr.mxu0 0.0
    %3590 = vmatpush1.msra.mxu0 0.0
    %3591 = vmatprep.subr.mxu0 0.0
    %3592 = vmatpush1.msra.mxu0 0.0
    %3593 = vmatprep.subr.mxu0 0.0
    %3594 = vmatpush1.msra.mxu0 0.0
    %3595 = vmatprep.subr.mxu0 0.0
    %3596 = vmatpush1.msra.mxu0 0.0
    %3597 = vmatprep.subr.mxu0 0.0
    %3598 = vmatpush1.msra.mxu0 0.0
    %3599 = vmatprep.subr.mxu0 0.0
    %3600 = vmatpush1.msra.mxu0 0.0
    %3601 = vmatprep.subr.mxu0 0.0
    %3602 = vmatpush1.msra.mxu0 0.0
    %3603 = vmatprep.subr.mxu0 0.0
    %3604 = vmatpush1.msra.mxu0 0.0
    %3605 = vmatprep.subr.mxu0 0.0
    %3606 = vmatpush1.msra.mxu0 0.0
    %3607 = vmatprep.subr.mxu0 0.0
    %3608 = vmatpush1.msra.mxu0 0.0
    %3609 = vmatprep.subr.mxu0 0.0
    %3610 = vmatpush1.msra.mxu0 0.0
    %3611 = vmatprep.subr.mxu0 0.0
    %3612 = vmatpush1.msra.mxu0 0.0
    %3613 = vmatprep.subr.mxu0 0.0
    %3614 = vmatpush1.msra.mxu0 0.0
    %3615 = vmatprep.subr.mxu0 0.0
    %3616 = vmatpush1.msra.mxu0 0.0
    %3617 = vmatprep.subr.mxu0 0.0
    %3618 = vmatpush1.msra.mxu0 0.0
    %3619 = vmatprep.subr.mxu0 0.0
    %3620 = vmatpush1.msra.mxu0 0.0
    %3621 = vmatprep.subr.mxu0 0.0
    %3622 = vmatpush1.msra.mxu0 0.0
    %3623 = vmatprep.subr.mxu0 0.0
    %3624 = vmatpush1.msra.mxu0 0.0
    %3625 = vmatprep.subr.mxu0 0.0
    %3626 = vmatpush1.msra.mxu0 0.0
    %3627 = vmatprep.subr.mxu0 0.0
    %3628 = vmatpush1.msra.mxu0 0.0
    %3629 = vmatprep.mubr.f32.mxu0 0.0
    %3630 = vmatmul.mubr.f32.gmra.mrb[0].mxu0 %v3563
    %v3631 = vpop.f32.mrb[0].mxu0
    %v3632 = vadd.f32 0.0, %v3631
    %v3633 = vpop.f32.mrb[0].mxu0
    %3634 = vdwg.mxu0
    %v3636 = vsel %vm1846, %v3561, 0
    %3638 = vmatprep.subr.mxu0 0.0
    %3639 = vmatpush1.msra.mxu0 %v3385
    %3640 = vmatprep.subr.mxu0 0.0
    %3641 = vmatpush1.msra.mxu0 0.0
    %3642 = vmatprep.subr.mxu0 0.0
    %3643 = vmatpush1.msra.mxu0 0.0
    %3644 = vmatprep.subr.mxu0 0.0
    %3645 = vmatpush1.msra.mxu0 0.0
    %3646 = vmatprep.subr.mxu0 0.0
    %3647 = vmatpush1.msra.mxu0 0.0
    %3648 = vmatprep.subr.mxu0 0.0
    %3649 = vmatpush1.msra.mxu0 0.0
    %3650 = vmatprep.subr.mxu0 0.0
    %3651 = vmatpush1.msra.mxu0 0.0
    %3652 = vmatprep.subr.mxu0 0.0
    %3653 = vmatpush1.msra.mxu0 0.0
    %3654 = vmatprep.subr.mxu0 0.0
    %3655 = vmatpush1.msra.mxu0 0.0
    %3656 = vmatprep.subr.mxu0 0.0
    %3657 = vmatpush1.msra.mxu0 0.0
    %3658 = vmatprep.subr.mxu0 0.0
    %3659 = vmatpush1.msra.mxu0 0.0
    %3660 = vmatprep.subr.mxu0 0.0
    %3661 = vmatpush1.msra.mxu0 0.0
    %3662 = vmatprep.subr.mxu0 0.0
    %3663 = vmatpush1.msra.mxu0 0.0
    %3664 = vmatprep.subr.mxu0 0.0
    %3665 = vmatpush1.msra.mxu0 0.0
    %3666 = vmatprep.subr.mxu0 0.0
    %3667 = vmatpush1.msra.mxu0 0.0
    %3668 = vmatprep.subr.mxu0 0.0
    %3669 = vmatpush1.msra.mxu0 0.0
    %3670 = vmatprep.subr.mxu0 0.0
    %3671 = vmatpush1.msra.mxu0 0.0
    %3672 = vmatprep.subr.mxu0 0.0
    %3673 = vmatpush1.msra.mxu0 0.0
    %3674 = vmatprep.subr.mxu0 0.0
    %3675 = vmatpush1.msra.mxu0 0.0
    %3676 = vmatprep.subr.mxu0 0.0
    %3677 = vmatpush1.msra.mxu0 0.0
    %3678 = vmatprep.subr.mxu0 0.0
    %3679 = vmatpush1.msra.mxu0 0.0
    %3680 = vmatprep.subr.mxu0 0.0
    %3681 = vmatpush1.msra.mxu0 0.0
    %3682 = vmatprep.subr.mxu0 0.0
    %3683 = vmatpush1.msra.mxu0 0.0
    %3684 = vmatprep.subr.mxu0 0.0
    %3685 = vmatpush1.msra.mxu0 0.0
    %3686 = vmatprep.subr.mxu0 0.0
    %3687 = vmatpush1.msra.mxu0 0.0
    %3688 = vmatprep.subr.mxu0 0.0
    %3689 = vmatpush1.msra.mxu0 0.0
    %3690 = vmatprep.subr.mxu0 0.0
    %3691 = vmatpush1.msra.mxu0 0.0
    %3692 = vmatprep.subr.mxu0 0.0
    %3693 = vmatpush1.msra.mxu0 0.0
    %3694 = vmatprep.subr.mxu0 0.0
    %3695 = vmatpush1.msra.mxu0 0.0
    %3696 = vmatprep.subr.mxu0 0.0
    %3697 = vmatpush1.msra.mxu0 0.0
    %3698 = vmatprep.subr.mxu0 0.0
    %3699 = vmatpush1.msra.mxu0 0.0
    %3700 = vmatprep.subr.mxu0 0.0
    %3701 = vmatpush1.msra.mxu0 0.0
    %3702 = vmatprep.mubr.f32.mxu0 0.0
    %3703 = vmatmul.mubr.f32.gmra.mrb[0].mxu0 %v3636
    %v3704 = vpop.f32.mrb[0].mxu0
    %v3705 = vadd.f32 0.0, %v3704
    %v3706 = vpop.f32.mrb[0].mxu0
    %3707 = vdwg.mxu0
    %v3708 = vpack.c.bf16 %v3705, %v3632
    %v3710 = vsel %vm1846, %v3708, 0
    %v3713 = vsel %vm1436, %v1665, 0
    %3715 = vmatprep.subr.bf16.mxu0 0
    %3716 = vmatpush1.bf16.msra.mxu0 %v3713
    %3717 = vmatprep.subr.bf16.mxu0 0
    %3718 = vmatpush1.bf16.msra.mxu0 0
    %3719 = vmatprep.subr.bf16.mxu0 0
    %3720 = vmatpush1.bf16.msra.mxu0 0
    %3721 = vmatprep.subr.bf16.mxu0 0
    %3722 = vmatpush1.bf16.msra.mxu0 0
    %3723 = vmatprep.subr.bf16.mxu0 0
    %3724 = vmatpush1.bf16.msra.mxu0 0
    %3725 = vmatprep.subr.bf16.mxu0 0
    %3726 = vmatpush1.bf16.msra.mxu0 0
    %3727 = vmatprep.subr.bf16.mxu0 0
    %3728 = vmatpush1.bf16.msra.mxu0 0
    %3729 = vmatprep.subr.bf16.mxu0 0
    %3730 = vmatpush1.bf16.msra.mxu0 0
    %3731 = vmatprep.subr.bf16.mxu0 0
    %3732 = vmatpush1.bf16.msra.mxu0 0
    %3733 = vmatprep.subr.bf16.mxu0 0
    %3734 = vmatpush1.bf16.msra.mxu0 0
    %3735 = vmatprep.subr.bf16.mxu0 0
    %3736 = vmatpush1.bf16.msra.mxu0 0
    %3737 = vmatprep.subr.bf16.mxu0 0
    %3738 = vmatpush1.bf16.msra.mxu0 0
    %3739 = vmatprep.subr.bf16.mxu0 0
    %3740 = vmatpush1.bf16.msra.mxu0 0
    %3741 = vmatprep.subr.bf16.mxu0 0
    %3742 = vmatpush1.bf16.msra.mxu0 0
    %3743 = vmatprep.subr.bf16.mxu0 0
    %3744 = vmatpush1.bf16.msra.mxu0 0
    %3745 = vmatprep.subr.bf16.mxu0 0
    %3746 = vmatpush1.bf16.msra.mxu0 0
    %3747 = vmatprep.mubr.bf16.mxu0 0
    %3748 = vmatmul.mubr.bf16.gmra.mrb[0].mxu0 %v3710
    %v3749 = vpop.f32.mrb[0].mxu0
    %v3750 = vadd.f32 0.0, %v3749
    %v3751 = vpop.f32.mrb[0].mxu0
    %v3752 = vpop.f32.mrb[0].mxu0
    %v3753 = vadd.f32 0.0, %v3752
    %v3754 = vpop.f32.mrb[0].mxu0
    %3755 = vdwg.mxu0
    %v3757 = vsel %vm1846, %v2167, 0
    %v3760 = vsel %vm1436, %v1662, 0
    %3762 = vmatprep.subr.bf16.mxu0 0
    %3763 = vmatpush1.bf16.msra.mxu0 %v3760
    %3764 = vmatprep.subr.bf16.mxu0 0
    %3765 = vmatpush1.bf16.msra.mxu0 0
    %3766 = vmatprep.subr.bf16.mxu0 0
    %3767 = vmatpush1.bf16.msra.mxu0 0
    %3768 = vmatprep.subr.bf16.mxu0 0
    %3769 = vmatpush1.bf16.msra.mxu0 0
    %3770 = vmatprep.subr.bf16.mxu0 0
    %3771 = vmatpush1.bf16.msra.mxu0 0
    %3772 = vmatprep.subr.bf16.mxu0 0
    %3773 = vmatpush1.bf16.msra.mxu0 0
    %3774 = vmatprep.subr.bf16.mxu0 0
    %3775 = vmatpush1.bf16.msra.mxu0 0
    %3776 = vmatprep.subr.bf16.mxu0 0
    %3777 = vmatpush1.bf16.msra.mxu0 0
    %3778 = vmatprep.subr.bf16.mxu0 0
    %3779 = vmatpush1.bf16.msra.mxu0 0
    %3780 = vmatprep.subr.bf16.mxu0 0
    %3781 = vmatpush1.bf16.msra.mxu0 0
    %3782 = vmatprep.subr.bf16.mxu0 0
    %3783 = vmatpush1.bf16.msra.mxu0 0
    %3784 = vmatprep.subr.bf16.mxu0 0
    %3785 = vmatpush1.bf16.msra.mxu0 0
    %3786 = vmatprep.subr.bf16.mxu0 0
    %3787 = vmatpush1.bf16.msra.mxu0 0
    %3788 = vmatprep.subr.bf16.mxu0 0
    %3789 = vmatpush1.bf16.msra.mxu0 0
    %3790 = vmatprep.subr.bf16.mxu0 0
    %3791 = vmatpush1.bf16.msra.mxu0 0
    %3792 = vmatprep.subr.bf16.mxu0 0
    %3793 = vmatpush1.bf16.msra.mxu0 0
    %3794 = vmatprep.mubr.bf16.mxu0 0
    %3795 = vmatmul.mubr.bf16.gmra.mrb[0].mxu0 %v3757
    %v3796 = vpop.f32.mrb[0].mxu0
    %v3797 = vadd.f32 %v2707, %v3796
    %v3798 = vpop.f32.mrb[0].mxu0
    %v3799 = vpop.f32.mrb[0].mxu0
    %v3800 = vadd.f32 %v2710, %v3799
    %v3801 = vpop.f32.mrb[0].mxu0
    %3802 = vdwg.mxu0
    %v3804 = vsel %vm1846, %v3210, 0
    %v3807 = vsel %vm1436, %v1664, 0
    %3809 = vmatprep.subr.bf16.mxu0 0
    %3810 = vmatpush1.bf16.msra.mxu0 %v3807
    %3811 = vmatprep.subr.bf16.mxu0 0
    %3812 = vmatpush1.bf16.msra.mxu0 0
    %3813 = vmatprep.subr.bf16.mxu0 0
    %3814 = vmatpush1.bf16.msra.mxu0 0
    %3815 = vmatprep.subr.bf16.mxu0 0
    %3816 = vmatpush1.bf16.msra.mxu0 0
    %3817 = vmatprep.subr.bf16.mxu0 0
    %3818 = vmatpush1.bf16.msra.mxu0 0
    %3819 = vmatprep.subr.bf16.mxu0 0
    %3820 = vmatpush1.bf16.msra.mxu0 0
    %3821 = vmatprep.subr.bf16.mxu0 0
    %3822 = vmatpush1.bf16.msra.mxu0 0
    %3823 = vmatprep.subr.bf16.mxu0 0
    %3824 = vmatpush1.bf16.msra.mxu0 0
    %3825 = vmatprep.subr.bf16.mxu0 0
    %3826 = vmatpush1.bf16.msra.mxu0 0
    %3827 = vmatprep.subr.bf16.mxu0 0
    %3828 = vmatpush1.bf16.msra.mxu0 0
    %3829 = vmatprep.subr.bf16.mxu0 0
    %3830 = vmatpush1.bf16.msra.mxu0 0
    %3831 = vmatprep.subr.bf16.mxu0 0
    %3832 = vmatpush1.bf16.msra.mxu0 0
    %3833 = vmatprep.subr.bf16.mxu0 0
    %3834 = vmatpush1.bf16.msra.mxu0 0
    %3835 = vmatprep.subr.bf16.mxu0 0
    %3836 = vmatpush1.bf16.msra.mxu0 0
    %3837 = vmatprep.subr.bf16.mxu0 0
    %3838 = vmatpush1.bf16.msra.mxu0 0
    %3839 = vmatprep.subr.bf16.mxu0 0
    %3840 = vmatpush1.bf16.msra.mxu0 0
    %3841 = vmatprep.mubr.bf16.mxu0 0
    %3842 = vmatmul.mubr.bf16.gmra.mrb[0].mxu0 %v3804
    %v3843 = vpop.f32.mrb[0].mxu0
    %v3844 = vadd.f32 %v3750, %v3843
    %v3845 = vpop.f32.mrb[0].mxu0
    %v3846 = vpop.f32.mrb[0].mxu0
    %v3847 = vadd.f32 %v3753, %v3846
    %v3848 = vpop.f32.mrb[0].mxu0
    %3849 = vdwg.mxu0
    %v3850 = vadd.f32 %v3797, %v3844
    %v3851 = vadd.f32 %v3800, %v3847
    %v3852 = vld [vmem:[#allocation18] sm:$0x1]
    %v3854 = vlaneseq
    %v3855 = vshrl.u32 %v3854, 7
    %v3856 = vsub.s32 0, %v3855
    %v3857 = vrot.slane %v3852, %v3856
    %v3859 = vadd.f32 %v3850, %v3857
    %v3860 = vadd.f32 %v3851, %v3857
    %v3861 = vadd.f32 %v3859, %v1562
    %v3862 = vadd.f32 %v3860, %v1563
    %v3863 = vld [vmem:[#allocation19] sm:$0x1]
    %v3864 = vld [vmem:[#allocation21] sm:$0x1]
    %v3865 = vsel %vm1520, %v3861, 0.0
    %3866 = vadd.xlane.f32.xlu0 %v3865
    %v3867 = vpop.xlane.xlu0 %3866
    %v3868 = vsel %vm1520, %v3862, 0.0
    %3869 = vadd.xlane.f32.xlu0 %v3868
    %v3870 = vpop.xlane.xlu0 %3869
    %v3871 = vmul.f32 %v3867, %v1527
    %v3872 = vmul.f32 %v3870, %v1527
    %v3873 = vsub.f32 %v3861, %v3871
    %v3874 = vsub.f32 %v3862, %v3872
    %v3875 = vmul.f32 %v3873, %v3873
    %v3876 = vmul.f32 %v3874, %v3874
    %v3877 = vsel %vm1520, %v3875, 0.0
    %3878 = vadd.xlane.f32.xlu0 %v3877
    %v3879 = vpop.xlane.xlu0 %3878
    %v3880 = vsel %vm1520, %v3876, 0.0
    %3881 = vadd.xlane.f32.xlu0 %v3880
    %v3882 = vpop.xlane.xlu0 %3881
    %v3883 = vmul.f32 %v3879, %v1527
    %v3884 = vmul.f32 %v3882, %v1527
    %v3885 = vadd.f32 %v3883, 1e-12
    %v3886 = vadd.f32 %v3884, 1e-12
    %v3887 = vrsqrt.pop %v3885
    %v3888 = vrsqrt.pop %v3886
    %v3889 = vmul.f32 %v3873, %v3887
    %v3890 = vmul.f32 %v3874, %v3888
    %v3892 = vlaneseq
    %v3893 = vshrl.u32 %v3892, 7
    %v3894 = vsub.s32 0, %v3893
    %v3895 = vrot.slane %v3863, %v3894
    %v3897 = vmul.f32 %v3889, %v3895
    %v3898 = vmul.f32 %v3890, %v3895
    %v3900 = vlaneseq
    %v3901 = vshrl.u32 %v3900, 7
    %v3902 = vsub.s32 0, %v3901
    %v3903 = vrot.slane %v3864, %v3902
    %v3905 = vadd.f32 %v3897, %v3903
    %v3906 = vadd.f32 %v3898, %v3903
    %v3907 = vld [vmem:[#allocation22] sm:$0xf]
    %v3908 = vld [vmem:[#allocation22 + $0x4] sm:$0xf]
    %v3909 = vld [vmem:[#allocation22 + $0x8] sm:$0xf]
    %v3910 = vld [vmem:[#allocation22 + $0xc] sm:$0xf]
    %v3911 = vld [vmem:[#allocation24] sm:$0x1]
    %v3912 = vpack.c.bf16 %v3906, %v3905
    %v3914 = vlaneseq
    %v3915 = vshrl.u32 %v3914, 7
    %v3916 = vsub.s32 0, %v3915
    %v3917 = vrot.slane %v3911, %v3916
    %v3923 = vunpack.c.l.b16 %v3907
    %v3924 = vunpack.c.l.b16 %v3908
    %v3925 = vunpack.c.l.b16 %v3909
    %v3926 = vunpack.c.l.b16 %v3910
    %v3927 = vpack.c.b16 %v3924, %v3923
    %v3928 = vpack.c.b16 %v3926, %v3925
    %v3932 = vsel %vm1520, %v3912, 0
    %3934 = vmatprep.subr.bf16.mxu0 0
    %3935 = vmatpush1.bf16.msra.mxu0 %v3927
    %3936 = vmatprep.subr.bf16.mxu0 0
    %3937 = vmatpush1.bf16.msra.mxu0 %v3928
    %3938 = vmatprep.subr.bf16.mxu0 0
    %3939 = vmatpush1.bf16.msra.mxu0 0
    %3940 = vmatprep.subr.bf16.mxu0 0
    %3941 = vmatpush1.bf16.msra.mxu0 0
    %3942 = vmatprep.subr.bf16.mxu0 0
    %3943 = vmatpush1.bf16.msra.mxu0 0
    %3944 = vmatprep.subr.bf16.mxu0 0
    %3945 = vmatpush1.bf16.msra.mxu0 0
    %3946 = vmatprep.subr.bf16.mxu0 0
    %3947 = vmatpush1.bf16.msra.mxu0 0
    %3948 = vmatprep.subr.bf16.mxu0 0
    %3949 = vmatpush1.bf16.msra.mxu0 0
    %3950 = vmatprep.subr.bf16.mxu0 0
    %3951 = vmatpush1.bf16.msra.mxu0 0
    %3952 = vmatprep.subr.bf16.mxu0 0
    %3953 = vmatpush1.bf16.msra.mxu0 0
    %3954 = vmatprep.subr.bf16.mxu0 0
    %3955 = vmatpush1.bf16.msra.mxu0 0
    %3956 = vmatprep.subr.bf16.mxu0 0
    %3957 = vmatpush1.bf16.msra.mxu0 0
    %3958 = vmatprep.subr.bf16.mxu0 0
    %3959 = vmatpush1.bf16.msra.mxu0 0
    %3960 = vmatprep.subr.bf16.mxu0 0
    %3961 = vmatpush1.bf16.msra.mxu0 0
    %3962 = vmatprep.subr.bf16.mxu0 0
    %3963 = vmatpush1.bf16.msra.mxu0 0
    %3964 = vmatprep.subr.bf16.mxu0 0
    %3965 = vmatpush1.bf16.msra.mxu0 0
    %3966 = vmatprep.mubr.bf16.mxu0 0
    %3967 = vmatmul.mubr.bf16.gmra.mrb[0].mxu0 %v3932
    %v3968 = vpop.f32.mrb[0].mxu0
    %v3969 = vadd.f32 %v3917, %v3968
    %v3970 = vpop.f32.mrb[0].mxu0
    %v3971 = vpop.f32.mrb[0].mxu0
    %v3972 = vadd.f32 %v3917, %v3971
    %v3973 = vpop.f32.mrb[0].mxu0
    %3974 = vdwg.mxu0
    %v3975 = vmul.f32 %v3969, %v3969
    %v3976 = vmul.f32 %v3972, %v3972
    %v3977 = vmul.f32 %v3969, %v3975
    %v3978 = vmul.f32 %v3972, %v3976
    %v3979 = vmul.f32 %v3977, 0.044715
    %v3980 = vmul.f32 %v3978, 0.044715
    %v3981 = vadd.f32 %v3969, %v3979
    %v3982 = vadd.f32 %v3972, %v3980
    %v3983 = vmul.f32 %v3981, 0.7978846
    %v3984 = vmul.f32 %v3982, 0.7978846
    %v3985 = vtanh.pop %v3983
    %v3986 = vtanh.pop %v3984
    %v3987 = vadd.f32 %v3985, 1.0
    %v3988 = vadd.f32 %v3986, 1.0
    %v3989 = vmul.f32 %v3987, 0.5
    %v3990 = vmul.f32 %v3988, 0.5
    %v3991 = vmul.f32 %v3969, %v3989
    %v3992 = vmul.f32 %v3972, %v3990
    %v3993 = vld [vmem:[%s37] sm:$0xf]
    %v3994 = vld [vmem:[%s37 + $0x4] sm:$0xf]
    %v3995 = vld [vmem:[%s37 + $0x8] sm:$0xf]
    %v3996 = vld [vmem:[%s37 + $0xc] sm:$0xf]
    %v3997 = vld [vmem:[%s37 + $0x10] sm:$0xf]
    %v3998 = vld [vmem:[%s37 + $0x14] sm:$0xf]
    %v3999 = vld [vmem:[%s37 + $0x18] sm:$0xf]
    %v4000 = vld [vmem:[%s37 + $0x1c] sm:$0xf]
    %v4001 = vld [vmem:[%s37 + $0x20] sm:$0xf]
    %v4002 = vld [vmem:[%s37 + $0x24] sm:$0xf]
    %v4003 = vld [vmem:[%s37 + $0x28] sm:$0xf]
    %v4004 = vld [vmem:[%s37 + $0x2c] sm:$0xf]
    %v4005 = vld [vmem:[%s37 + $0x30] sm:$0xf]
    %v4006 = vld [vmem:[%s37 + $0x34] sm:$0xf]
    %v4007 = vld [vmem:[%s37 + $0x38] sm:$0xf]
    %v4008 = vld [vmem:[%s37 + $0x3c] sm:$0xf]
    %v4009 = vld [vmem:[#allocation25] sm:$0x1]
    %v4010 = vpack.c.bf16 %v3992, %v3991
    %v4012 = vlaneseq
    %v4013 = vshrl.u32 %v4012, 7
    %v4014 = vsub.s32 0, %v4013
    %v4015 = vrot.slane %v4009, %v4014
    %v4033 = vunpack.c.l.b16 %v3993
    %v4034 = vunpack.c.l.b16 %v3994
    %v4035 = vunpack.c.l.b16 %v3995
    %v4036 = vunpack.c.l.b16 %v3996
    %v4037 = vunpack.c.l.b16 %v3997
    %v4038 = vunpack.c.l.b16 %v3998
    %v4039 = vunpack.c.l.b16 %v3999
    %v4040 = vunpack.c.l.b16 %v4000
    %v4041 = vunpack.c.l.b16 %v4001
    %v4042 = vunpack.c.l.b16 %v4002
    %v4043 = vunpack.c.l.b16 %v4003
    %v4044 = vunpack.c.l.b16 %v4004
    %v4045 = vunpack.c.l.b16 %v4005
    %v4046 = vunpack.c.l.b16 %v4006
    %v4047 = vunpack.c.l.b16 %v4007
    %v4048 = vunpack.c.l.b16 %v4008
    %v4049 = vpack.c.b16 %v4034, %v4033
    %v4050 = vpack.c.b16 %v4036, %v4035
    %v4051 = vpack.c.b16 %v4038, %v4037
    %v4052 = vpack.c.b16 %v4040, %v4039
    %v4053 = vpack.c.b16 %v4042, %v4041
    %v4054 = vpack.c.b16 %v4044, %v4043
    %v4055 = vpack.c.b16 %v4046, %v4045
    %v4056 = vpack.c.b16 %v4048, %v4047
    %4065 = vmatprep.subr.bf16.mxu0 0
    %4066 = vmatpush1.bf16.msra.mxu0 %v4049
    %4067 = vmatprep.subr.bf16.mxu0 0
    %4068 = vmatpush1.bf16.msra.mxu0 %v4050
    %4069 = vmatprep.subr.bf16.mxu0 0
    %4070 = vmatpush1.bf16.msra.mxu0 %v4051
    %4071 = vmatprep.subr.bf16.mxu0 0
    %4072 = vmatpush1.bf16.msra.mxu0 %v4052
    %4073 = vmatprep.subr.bf16.mxu0 0
    %4074 = vmatpush1.bf16.msra.mxu0 %v4053
    %4075 = vmatprep.subr.bf16.mxu0 0
    %4076 = vmatpush1.bf16.msra.mxu0 %v4054
    %4077 = vmatprep.subr.bf16.mxu0 0
    %4078 = vmatpush1.bf16.msra.mxu0 %v4055
    %4079 = vmatprep.subr.bf16.mxu0 0
    %4080 = vmatpush1.bf16.msra.mxu0 %v4056
    %4081 = vmatprep.subr.bf16.mxu0 0
    %4082 = vmatpush1.bf16.msra.mxu0 0
    %4083 = vmatprep.subr.bf16.mxu0 0
    %4084 = vmatpush1.bf16.msra.mxu0 0
    %4085 = vmatprep.subr.bf16.mxu0 0
    %4086 = vmatpush1.bf16.msra.mxu0 0
    %4087 = vmatprep.subr.bf16.mxu0 0
    %4088 = vmatpush1.bf16.msra.mxu0 0
    %4089 = vmatprep.subr.bf16.mxu0 0
    %4090 = vmatpush1.bf16.msra.mxu0 0
    %4091 = vmatprep.subr.bf16.mxu0 0
    %4092 = vmatpush1.bf16.msra.mxu0 0
    %4093 = vmatprep.subr.bf16.mxu0 0
    %4094 = vmatpush1.bf16.msra.mxu0 0
    %4095 = vmatprep.subr.bf16.mxu0 0
    %4096 = vmatpush1.bf16.msra.mxu0 0
    %4097 = vmatprep.mubr.bf16.mxu0 0
    %4098 = vmatmul.mubr.bf16.gmra.mrb[0].mxu0 %v4010
    %v4099 = vpop.f32.mrb[0].mxu0
    %v4100 = vadd.f32 %v4015, %v4099
    %v4101 = vpop.f32.mrb[0].mxu0
    %v4102 = vpop.f32.mrb[0].mxu0
    %v4103 = vadd.f32 %v4015, %v4102
    %v4104 = vpop.f32.mrb[0].mxu0
    %4105 = vdwg.mxu0
    %v4106 = vadd.f32 %v4100, %v3905
    %v4107 = vadd.f32 %v4103, %v3906
    %v4108 = vld [vmem:[#allocation27] sm:$0x1]
    %v4109 = vld [vmem:[#allocation28] sm:$0x1]
    %v4110 = vsel %vm1520, %v4106, 0.0
    %4111 = vadd.xlane.f32.xlu0 %v4110
    %v4112 = vpop.xlane.xlu0 %4111
    %v4113 = vsel %vm1520, %v4107, 0.0
    %4114 = vadd.xlane.f32.xlu0 %v4113
    %v4115 = vpop.xlane.xlu0 %4114
    %v4116 = vmul.f32 %v4112, %v1527
    %v4117 = vmul.f32 %v4115, %v1527
    %v4118 = vsub.f32 %v4106, %v4116
    %v4119 = vsub.f32 %v4107, %v4117
    %v4120 = vmul.f32 %v4118, %v4118
    %v4121 = vmul.f32 %v4119, %v4119
    %v4122 = vsel %vm1520, %v4120, 0.0
    %4123 = vadd.xlane.f32.xlu0 %v4122
    %v4124 = vpop.xlane.xlu0 %4123
    %v4125 = vsel %vm1520, %v4121, 0.0
    %4126 = vadd.xlane.f32.xlu0 %v4125
    %v4127 = vpop.xlane.xlu0 %4126
    %v4128 = vmul.f32 %v4124, %v1527
    %v4129 = vmul.f32 %v4127, %v1527
    %v4130 = vadd.f32 %v4128, 1e-12
    %v4131 = vadd.f32 %v4129, 1e-12
    %v4132 = vrsqrt.pop %v4130
    %v4133 = vrsqrt.pop %v4131
    %v4134 = vmul.f32 %v4118, %v4132
    %v4135 = vmul.f32 %v4119, %v4133
    %v4137 = vlaneseq
    %v4138 = vshrl.u32 %v4137, 7
    %v4139 = vsub.s32 0, %v4138
    %v4140 = vrot.slane %v4108, %v4139
    %v4142 = vmul.f32 %v4134, %v4140
    %v4143 = vmul.f32 %v4135, %v4140
    %v4145 = vlaneseq
    %v4146 = vshrl.u32 %v4145, 7
    %v4147 = vsub.s32 0, %v4146
    %v4148 = vrot.slane %v4109, %v4147
    %v4150 = vadd.f32 %v4142, %v4148
    %v4151 = vadd.f32 %v4143, %v4148
    %v4152 = vpack.c.bf16 %v4151, %v4150
    %s4153 = scalar_lea.vmem %s13, 64
    %v4154 = vld [vmem:[%s4153] sm:$0xf]
    %v4155 = vld [vmem:[%s4153 + $0x4] sm:$0xf]
    %v4156 = vld [vmem:[%s4153 + $0x8] sm:$0xf]
    %v4157 = vld [vmem:[%s4153 + $0xc] sm:$0xf]
    %v4158 = vld [vmem:[%s4153 + $0x10] sm:$0xf]
    %v4159 = vld [vmem:[%s4153 + $0x14] sm:$0xf]
    %v4160 = vld [vmem:[%s4153 + $0x18] sm:$0xf]
    %v4161 = vld [vmem:[%s4153 + $0x1c] sm:$0xf]
    %v4162 = vld [vmem:[%s4153 + $0x20] sm:$0xf]
    %v4163 = vld [vmem:[%s4153 + $0x24] sm:$0xf]
    %v4164 = vld [vmem:[%s4153 + $0x28] sm:$0xf]
    %v4165 = vld [vmem:[%s4153 + $0x2c] sm:$0xf]
    %v4166 = vld [vmem:[%s4153 + $0x30] sm:$0xf]
    %v4167 = vld [vmem:[%s4153 + $0x34] sm:$0xf]
    %v4168 = vld [vmem:[%s4153 + $0x38] sm:$0xf]
    %v4169 = vld [vmem:[%s4153 + $0x3c] sm:$0xf]
    %s4170 = scalar_lea.vmem %s15, 64
    %v4171 = vld [vmem:[%s4170] sm:$0xf]
    %v4172 = vld [vmem:[%s4170 + $0x4] sm:$0xf]
    %v4173 = vld [vmem:[%s4170 + $0x8] sm:$0xf]
    %v4174 = vld [vmem:[%s4170 + $0xc] sm:$0xf]
    %v4175 = vld [vmem:[%s4170 + $0x10] sm:$0xf]
    %v4176 = vld [vmem:[%s4170 + $0x14] sm:$0xf]
    %v4177 = vld [vmem:[%s4170 + $0x18] sm:$0xf]
    %v4178 = vld [vmem:[%s4170 + $0x1c] sm:$0xf]
    %v4179 = vld [vmem:[%s4170 + $0x20] sm:$0xf]
    %v4180 = vld [vmem:[%s4170 + $0x24] sm:$0xf]
    %v4181 = vld [vmem:[%s4170 + $0x28] sm:$0xf]
    %v4182 = vld [vmem:[%s4170 + $0x2c] sm:$0xf]
    %v4183 = vld [vmem:[%s4170 + $0x30] sm:$0xf]
    %v4184 = vld [vmem:[%s4170 + $0x34] sm:$0xf]
    %v4185 = vld [vmem:[%s4170 + $0x38] sm:$0xf]
    %v4186 = vld [vmem:[%s4170 + $0x3c] sm:$0xf]
    %s4187 = scalar_lea.vmem %s17, 64
    %v4188 = vld [vmem:[%s4187] sm:$0xf]
    %v4189 = vld [vmem:[%s4187 + $0x4] sm:$0xf]
    %v4190 = vld [vmem:[%s4187 + $0x8] sm:$0xf]
    %v4191 = vld [vmem:[%s4187 + $0xc] sm:$0xf]
    %v4192 = vld [vmem:[%s4187 + $0x10] sm:$0xf]
    %v4193 = vld [vmem:[%s4187 + $0x14] sm:$0xf]
    %v4194 = vld [vmem:[%s4187 + $0x18] sm:$0xf]
    %v4195 = vld [vmem:[%s4187 + $0x1c] sm:$0xf]
    %v4196 = vld [vmem:[%s4187 + $0x20] sm:$0xf]
    %v4197 = vld [vmem:[%s4187 + $0x24] sm:$0xf]
    %v4198 = vld [vmem:[%s4187 + $0x28] sm:$0xf]
    %v4199 = vld [vmem:[%s4187 + $0x2c] sm:$0xf]
    %v4200 = vld [vmem:[%s4187 + $0x30] sm:$0xf]
    %v4201 = vld [vmem:[%s4187 + $0x34] sm:$0xf]
    %v4202 = vld [vmem:[%s4187 + $0x38] sm:$0xf]
    %v4203 = vld [vmem:[%s4187 + $0x3c] sm:$0xf]
    %s4204 = scalar_lea.vmem [#allocation13], 4
    %v4205 = vld [vmem:[%s4204] sm:$0x1]
    %v4206 = vld [vmem:[%s4204 + $0x1] sm:$0x1]
    %v4207 = vld [vmem:[%s4204 + $0x2] sm:$0x1]
    %v4208 = vld [vmem:[%s4204 + $0x3] sm:$0x1]
    %s4209 = scalar_lea.vmem [#allocation15], 4
    %v4210 = vld [vmem:[%s4209] sm:$0x1]
    %v4211 = vld [vmem:[%s4209 + $0x1] sm:$0x1]
    %v4212 = vld [vmem:[%s4209 + $0x2] sm:$0x1]
    %v4213 = vld [vmem:[%s4209 + $0x3] sm:$0x1]
    %s4214 = scalar_lea.vmem [#allocation16], 4
    %v4215 = vld [vmem:[%s4214] sm:$0x1]
    %v4216 = vld [vmem:[%s4214 + $0x1] sm:$0x1]
    %v4217 = vld [vmem:[%s4214 + $0x2] sm:$0x1]
    %v4218 = vld [vmem:[%s4214 + $0x3] sm:$0x1]
    %s4219 = scalar_lea.vmem %s25, 16
    %v4220 = vld [vmem:[%s4219] sm:$0xf]
    %v4221 = vld [vmem:[%s4219 + $0x4] sm:$0xf]
    %v4222 = vld [vmem:[%s4219 + $0x8] sm:$0xf]
    %v4223 = vld [vmem:[%s4219 + $0xc] sm:$0xf]
    %v4225 = vlaneseq
    %v4226 = vshrl.u32 %v4225, 7
    %v4227 = vsub.s32 0, %v4226
    %v4228 = vrot.slane %v4205, %v4227
    %v4234 = vunpack.c.l.b16 %v4154
    %v4235 = vunpack.c.l.b16 %v4155
    %v4236 = vunpack.c.l.b16 %v4156
    %v4237 = vunpack.c.l.b16 %v4157
    %v4238 = vpack.c.b16 %v4235, %v4234
    %v4239 = vpack.c.b16 %v4237, %v4236
    %v4243 = vsel %vm1520, %v4152, 0
    %4245 = vmatprep.subr.bf16.mxu0 0
    %4246 = vmatpush1.bf16.msra.mxu0 %v4238
    %4247 = vmatprep.subr.bf16.mxu0 0
    %4248 = vmatpush1.bf16.msra.mxu0 %v4239
    %4249 = vmatprep.subr.bf16.mxu0 0
    %4250 = vmatpush1.bf16.msra.mxu0 0
    %4251 = vmatprep.subr.bf16.mxu0 0
    %4252 = vmatpush1.bf16.msra.mxu0 0
    %4253 = vmatprep.subr.bf16.mxu0 0
    %4254 = vmatpush1.bf16.msra.mxu0 0
    %4255 = vmatprep.subr.bf16.mxu0 0
    %4256 = vmatpush1.bf16.msra.mxu0 0
    %4257 = vmatprep.subr.bf16.mxu0 0
    %4258 = vmatpush1.bf16.msra.mxu0 0
    %4259 = vmatprep.subr.bf16.mxu0 0
    %4260 = vmatpush1.bf16.msra.mxu0 0
    %4261 = vmatprep.subr.bf16.mxu0 0
    %4262 = vmatpush1.bf16.msra.mxu0 0
    %4263 = vmatprep.subr.bf16.mxu0 0
    %4264 = vmatpush1.bf16.msra.mxu0 0
    %4265 = vmatprep.subr.bf16.mxu0 0
    %4266 = vmatpush1.bf16.msra.mxu0 0
    %4267 = vmatprep.subr.bf16.mxu0 0
    %4268 = vmatpush1.bf16.msra.mxu0 0
    %4269 = vmatprep.subr.bf16.mxu0 0
    %4270 = vmatpush1.bf16.msra.mxu0 0
    %4271 = vmatprep.subr.bf16.mxu0 0
    %4272 = vmatpush1.bf16.msra.mxu0 0
    %4273 = vmatprep.subr.bf16.mxu0 0
    %4274 = vmatpush1.bf16.msra.mxu0 0
    %4275 = vmatprep.subr.bf16.mxu0 0
    %4276 = vmatpush1.bf16.msra.mxu0 0
    %4277 = vmatprep.mubr.bf16.mxu0 0
    %4278 = vmatmul.mubr.bf16.gmra.mrb[0].mxu0 %v4243
    %v4279 = vpop.f32.mrb[0].mxu0
    %v4280 = vadd.f32 %v4228, %v4279
    %v4281 = vpop.f32.mrb[0].mxu0
    %v4282 = vpop.f32.mrb[0].mxu0
    %v4283 = vadd.f32 %v4228, %v4282
    %v4284 = vpop.f32.mrb[0].mxu0
    %4285 = vdwg.mxu0
    %v4287 = vlaneseq
    %v4288 = vshrl.u32 %v4287, 7
    %v4289 = vsub.s32 0, %v4288
    %v4290 = vrot.slane %v4210, %v4289
    %v4296 = vunpack.c.l.b16 %v4171
    %v4297 = vunpack.c.l.b16 %v4172
    %v4298 = vunpack.c.l.b16 %v4173
    %v4299 = vunpack.c.l.b16 %v4174
    %v4300 = vpack.c.b16 %v4297, %v4296
    %v4301 = vpack.c.b16 %v4299, %v4298
    %4304 = vmatprep.subr.bf16.mxu0 0
    %4305 = vmatpush1.bf16.msra.mxu0 %v4300
    %4306 = vmatprep.subr.bf16.mxu0 0
    %4307 = vmatpush1.bf16.msra.mxu0 %v4301
    %4308 = vmatprep.subr.bf16.mxu0 0
    %4309 = vmatpush1.bf16.msra.mxu0 0
    %4310 = vmatprep.subr.bf16.mxu0 0
    %4311 = vmatpush1.bf16.msra.mxu0 0
    %4312 = vmatprep.subr.bf16.mxu0 0
    %4313 = vmatpush1.bf16.msra.mxu0 0
    %4314 = vmatprep.subr.bf16.mxu0 0
    %4315 = vmatpush1.bf16.msra.mxu0 0
    %4316 = vmatprep.subr.bf16.mxu0 0
    %4317 = vmatpush1.bf16.msra.mxu0 0
    %4318 = vmatprep.subr.bf16.mxu0 0
    %4319 = vmatpush1.bf16.msra.mxu0 0
    %4320 = vmatprep.subr.bf16.mxu0 0
    %4321 = vmatpush1.bf16.msra.mxu0 0
    %4322 = vmatprep.subr.bf16.mxu0 0
    %4323 = vmatpush1.bf16.msra.mxu0 0
    %4324 = vmatprep.subr.bf16.mxu0 0
    %4325 = vmatpush1.bf16.msra.mxu0 0
    %4326 = vmatprep.subr.bf16.mxu0 0
    %4327 = vmatpush1.bf16.msra.mxu0 0
    %4328 = vmatprep.subr.bf16.mxu0 0
    %4329 = vmatpush1.bf16.msra.mxu0 0
    %4330 = vmatprep.subr.bf16.mxu0 0
    %4331 = vmatpush1.bf16.msra.mxu0 0
    %4332 = vmatprep.subr.bf16.mxu0 0
    %4333 = vmatpush1.bf16.msra.mxu0 0
    %4334 = vmatprep.subr.bf16.mxu0 0
    %4335 = vmatpush1.bf16.msra.mxu0 0
    %4336 = vmatprep.mubr.bf16.mxu0 0
    %4337 = vmatmul.mubr.bf16.gmra.mrb[0].mxu0 %v4243
    %v4338 = vpop.f32.mrb[0].mxu0
    %v4339 = vadd.f32 %v4290, %v4338
    %v4340 = vpop.f32.mrb[0].mxu0
    %v4341 = vpop.f32.mrb[0].mxu0
    %v4342 = vadd.f32 %v4290, %v4341
    %v4343 = vpop.f32.mrb[0].mxu0
    %4344 = vdwg.mxu0
    %v4346 = vlaneseq
    %v4347 = vshrl.u32 %v4346, 7
    %v4348 = vsub.s32 0, %v4347
    %v4349 = vrot.slane %v4215, %v4348
    %v4355 = vunpack.c.l.b16 %v4188
    %v4356 = vunpack.c.l.b16 %v4189
    %v4357 = vunpack.c.l.b16 %v4190
    %v4358 = vunpack.c.l.b16 %v4191
    %v4359 = vpack.c.b16 %v4356, %v4355
    %v4360 = vpack.c.b16 %v4358, %v4357
    %4363 = vmatprep.subr.bf16.mxu0 0
    %4364 = vmatpush1.bf16.msra.mxu0 %v4359
    %4365 = vmatprep.subr.bf16.mxu0 0
    %4366 = vmatpush1.bf16.msra.mxu0 %v4360
    %4367 = vmatprep.subr.bf16.mxu0 0
    %4368 = vmatpush1.bf16.msra.mxu0 0
    %4369 = vmatprep.subr.bf16.mxu0 0
    %4370 = vmatpush1.bf16.msra.mxu0 0
    %4371 = vmatprep.subr.bf16.mxu0 0
    %4372 = vmatpush1.bf16.msra.mxu0 0
    %4373 = vmatprep.subr.bf16.mxu0 0
    %4374 = vmatpush1.bf16.msra.mxu0 0
    %4375 = vmatprep.subr.bf16.mxu0 0
    %4376 = vmatpush1.bf16.msra.mxu0 0
    %4377 = vmatprep.subr.bf16.mxu0 0
    %4378 = vmatpush1.bf16.msra.mxu0 0
    %4379 = vmatprep.subr.bf16.mxu0 0
    %4380 = vmatpush1.bf16.msra.mxu0 0
    %4381 = vmatprep.subr.bf16.mxu0 0
    %4382 = vmatpush1.bf16.msra.mxu0 0
    %4383 = vmatprep.subr.bf16.mxu0 0
    %4384 = vmatpush1.bf16.msra.mxu0 0
    %4385 = vmatprep.subr.bf16.mxu0 0
    %4386 = vmatpush1.bf16.msra.mxu0 0
    %4387 = vmatprep.subr.bf16.mxu0 0
    %4388 = vmatpush1.bf16.msra.mxu0 0
    %4389 = vmatprep.subr.bf16.mxu0 0
    %4390 = vmatpush1.bf16.msra.mxu0 0
    %4391 = vmatprep.subr.bf16.mxu0 0
    %4392 = vmatpush1.bf16.msra.mxu0 0
    %4393 = vmatprep.subr.bf16.mxu0 0
    %4394 = vmatpush1.bf16.msra.mxu0 0
    %4395 = vmatprep.mubr.bf16.mxu0 0
    %4396 = vmatmul.mubr.bf16.gmra.mrb[0].mxu0 %v4243
    %v4397 = vpop.f32.mrb[0].mxu0
    %v4398 = vadd.f32 %v4349, %v4397
    %v4399 = vpop.f32.mrb[0].mxu0
    %v4400 = vpop.f32.mrb[0].mxu0
    %v4401 = vadd.f32 %v4349, %v4400
    %v4402 = vpop.f32.mrb[0].mxu0
    %4403 = vdwg.mxu0
    %v4405 = vsel %vm1846, %v4280, 0
    %v4408 = vsel %vm1846, %v4339, 0
    %4410 = vmatprep.subr.mxu0 0.0
    %4411 = vmatpush1.xpose.msra.mxu0 %v4408
    %4412 = vmatprep.subr.mxu0 0.0
    %4413 = vmatpush1.xpose.msra.mxu0 0.0
    %4414 = vmatprep.subr.mxu0 0.0
    %4415 = vmatpush1.xpose.msra.mxu0 0.0
    %4416 = vmatprep.subr.mxu0 0.0
    %4417 = vmatpush1.xpose.msra.mxu0 0.0
    %4418 = vmatprep.subr.mxu0 0.0
    %4419 = vmatpush1.xpose.msra.mxu0 0.0
    %4420 = vmatprep.subr.mxu0 0.0
    %4421 = vmatpush1.xpose.msra.mxu0 0.0
    %4422 = vmatprep.subr.mxu0 0.0
    %4423 = vmatpush1.xpose.msra.mxu0 0.0
    %4424 = vmatprep.subr.mxu0 0.0
    %4425 = vmatpush1.xpose.msra.mxu0 0.0
    %4426 = vmatprep.subr.mxu0 0.0
    %4427 = vmatpush1.xpose.msra.mxu0 0.0
    %4428 = vmatprep.subr.mxu0 0.0
    %4429 = vmatpush1.xpose.msra.mxu0 0.0
    %4430 = vmatprep.subr.mxu0 0.0
    %4431 = vmatpush1.xpose.msra.mxu0 0.0
    %4432 = vmatprep.subr.mxu0 0.0
    %4433 = vmatpush1.xpose.msra.mxu0 0.0
    %4434 = vmatprep.subr.mxu0 0.0
    %4435 = vmatpush1.xpose.msra.mxu0 0.0
    %4436 = vmatprep.subr.mxu0 0.0
    %4437 = vmatpush1.xpose.msra.mxu0 0.0
    %4438 = vmatprep.subr.mxu0 0.0
    %4439 = vmatpush1.xpose.msra.mxu0 0.0
    %4440 = vmatprep.subr.mxu0 0.0
    %4441 = vmatpush1.xpose.msra.mxu0 0.0
    %4442 = vmatprep.subr.mxu0 0.0
    %4443 = vmatpush1.xpose.msra.mxu0 0.0
    %4444 = vmatprep.subr.mxu0 0.0
    %4445 = vmatpush1.xpose.msra.mxu0 0.0
    %4446 = vmatprep.subr.mxu0 0.0
    %4447 = vmatpush1.xpose.msra.mxu0 0.0
    %4448 = vmatprep.subr.mxu0 0.0
    %4449 = vmatpush1.xpose.msra.mxu0 0.0
    %4450 = vmatprep.subr.mxu0 0.0
    %4451 = vmatpush1.xpose.msra.mxu0 0.0
    %4452 = vmatprep.subr.mxu0 0.0
    %4453 = vmatpush1.xpose.msra.mxu0 0.0
    %4454 = vmatprep.subr.mxu0 0.0
    %4455 = vmatpush1.xpose.msra.mxu0 0.0
    %4456 = vmatprep.subr.mxu0 0.0
    %4457 = vmatpush1.xpose.msra.mxu0 0.0
    %4458 = vmatprep.subr.mxu0 0.0
    %4459 = vmatpush1.xpose.msra.mxu0 0.0
    %4460 = vmatprep.subr.mxu0 0.0
    %4461 = vmatpush1.xpose.msra.mxu0 0.0
    %4462 = vmatprep.subr.mxu0 0.0
    %4463 = vmatpush1.xpose.msra.mxu0 0.0
    %4464 = vmatprep.subr.mxu0 0.0
    %4465 = vmatpush1.xpose.msra.mxu0 0.0
    %4466 = vmatprep.subr.mxu0 0.0
    %4467 = vmatpush1.xpose.msra.mxu0 0.0
    %4468 = vmatprep.subr.mxu0 0.0
    %4469 = vmatpush1.xpose.msra.mxu0 0.0
    %4470 = vmatprep.subr.mxu0 0.0
    %4471 = vmatpush1.xpose.msra.mxu0 0.0
    %4472 = vmatprep.subr.mxu0 0.0
    %4473 = vmatpush1.xpose.msra.mxu0 0.0
    %4474 = vmatprep.mubr.f32.mxu0 0.0
    %4475 = vmatmul.mubr.f32.gmra.mrb[0].mxu0 %v4405
    %v4476 = vpop.f32.mrb[0].mxu0
    %v4477 = vadd.f32 %v1594, %v4476
    %v4478 = vpop.f32.mrb[0].mxu0
    %4479 = vdwg.mxu0
    %v4481 = vsel %vm1846, %v4283, 0
    %v4484 = vsel %vm1846, %v4342, 0
    %4486 = vmatprep.subr.mxu0 0.0
    %4487 = vmatpush1.xpose.msra.mxu0 %v4484
    %4488 = vmatprep.subr.mxu0 0.0
    %4489 = vmatpush1.xpose.msra.mxu0 0.0
    %4490 = vmatprep.subr.mxu0 0.0
    %4491 = vmatpush1.xpose.msra.mxu0 0.0
    %4492 = vmatprep.subr.mxu0 0.0
    %4493 = vmatpush1.xpose.msra.mxu0 0.0
    %4494 = vmatprep.subr.mxu0 0.0
    %4495 = vmatpush1.xpose.msra.mxu0 0.0
    %4496 = vmatprep.subr.mxu0 0.0
    %4497 = vmatpush1.xpose.msra.mxu0 0.0
    %4498 = vmatprep.subr.mxu0 0.0
    %4499 = vmatpush1.xpose.msra.mxu0 0.0
    %4500 = vmatprep.subr.mxu0 0.0
    %4501 = vmatpush1.xpose.msra.mxu0 0.0
    %4502 = vmatprep.subr.mxu0 0.0
    %4503 = vmatpush1.xpose.msra.mxu0 0.0
    %4504 = vmatprep.subr.mxu0 0.0
    %4505 = vmatpush1.xpose.msra.mxu0 0.0
    %4506 = vmatprep.subr.mxu0 0.0
    %4507 = vmatpush1.xpose.msra.mxu0 0.0
    %4508 = vmatprep.subr.mxu0 0.0
    %4509 = vmatpush1.xpose.msra.mxu0 0.0
    %4510 = vmatprep.subr.mxu0 0.0
    %4511 = vmatpush1.xpose.msra.mxu0 0.0
    %4512 = vmatprep.subr.mxu0 0.0
    %4513 = vmatpush1.xpose.msra.mxu0 0.0
    %4514 = vmatprep.subr.mxu0 0.0
    %4515 = vmatpush1.xpose.msra.mxu0 0.0
    %4516 = vmatprep.subr.mxu0 0.0
    %4517 = vmatpush1.xpose.msra.mxu0 0.0
    %4518 = vmatprep.subr.mxu0 0.0
    %4519 = vmatpush1.xpose.msra.mxu0 0.0
    %4520 = vmatprep.subr.mxu0 0.0
    %4521 = vmatpush1.xpose.msra.mxu0 0.0
    %4522 = vmatprep.subr.mxu0 0.0
    %4523 = vmatpush1.xpose.msra.mxu0 0.0
    %4524 = vmatprep.subr.mxu0 0.0
    %4525 = vmatpush1.xpose.msra.mxu0 0.0
    %4526 = vmatprep.subr.mxu0 0.0
    %4527 = vmatpush1.xpose.msra.mxu0 0.0
    %4528 = vmatprep.subr.mxu0 0.0
    %4529 = vmatpush1.xpose.msra.mxu0 0.0
    %4530 = vmatprep.subr.mxu0 0.0
    %4531 = vmatpush1.xpose.msra.mxu0 0.0
    %4532 = vmatprep.subr.mxu0 0.0
    %4533 = vmatpush1.xpose.msra.mxu0 0.0
    %4534 = vmatprep.subr.mxu0 0.0
    %4535 = vmatpush1.xpose.msra.mxu0 0.0
    %4536 = vmatprep.subr.mxu0 0.0
    %4537 = vmatpush1.xpose.msra.mxu0 0.0
    %4538 = vmatprep.subr.mxu0 0.0
    %4539 = vmatpush1.xpose.msra.mxu0 0.0
    %4540 = vmatprep.subr.mxu0 0.0
    %4541 = vmatpush1.xpose.msra.mxu0 0.0
    %4542 = vmatprep.subr.mxu0 0.0
    %4543 = vmatpush1.xpose.msra.mxu0 0.0
    %4544 = vmatprep.subr.mxu0 0.0
    %4545 = vmatpush1.xpose.msra.mxu0 0.0
    %4546 = vmatprep.subr.mxu0 0.0
    %4547 = vmatpush1.xpose.msra.mxu0 0.0
    %4548 = vmatprep.subr.mxu0 0.0
    %4549 = vmatpush1.xpose.msra.mxu0 0.0
    %4550 = vmatprep.mubr.f32.mxu0 0.0
    %4551 = vmatmul.mubr.f32.gmra.mrb[0].mxu0 %v4481
    %v4552 = vpop.f32.mrb[0].mxu0
    %v4553 = vadd.f32 %v1598, %v4552
    %v4554 = vpop.f32.mrb[0].mxu0
    %4555 = vdwg.mxu0
    %v4556 = vsel %vm1846, %v4477, -inf
    %4557 = vmax.xlane.f32.xlu0 %v4556
    %v4558 = vpop.xlane.xlu0 %4557
    %v4559 = vsel %vm1846, %v4553, -inf
    %4560 = vmax.xlane.f32.xlu0 %v4559
    %v4561 = vpop.xlane.xlu0 %4560
    %v4562 = vsub.f32 %v4477, %v4558
    %v4563 = vsub.f32 %v4553, %v4561
    %v4564 = vmul.f32 %v4562, 1.442695
    %v4565 = vpow.pop %v4564
    %v4566 = vmul.f32 %v4563, 1.442695
    %v4567 = vpow.pop %v4566
    %v4568 = vsel %vm1846, %v4565, 0.0
    %4569 = vadd.xlane.f32.xlu0 %v4568
    %v4570 = vpop.xlane.xlu0 %4569
    %v4571 = vsel %vm1846, %v4567, 0.0
    %4572 = vadd.xlane.f32.xlu0 %v4571
    %v4573 = vpop.xlane.xlu0 %4572
    %v4574 = vrcp.pop %v4570
    %v4575 = vrcp.pop %v4573
    %v4576 = vmul.f32 %v4565, %v4574
    %v4577 = vmul.f32 %v4567, %v4575
    %v4579 = vsel %vm1846, %v4576, 0
    %4581 = vmatprep.subr.mxu0 0.0
    %4582 = vmatpush1.msra.mxu0 %v4398
    %4583 = vmatprep.subr.mxu0 0.0
    %4584 = vmatpush1.msra.mxu0 0.0
    %4585 = vmatprep.subr.mxu0 0.0
    %4586 = vmatpush1.msra.mxu0 0.0
    %4587 = vmatprep.subr.mxu0 0.0
    %4588 = vmatpush1.msra.mxu0 0.0
    %4589 = vmatprep.subr.mxu0 0.0
    %4590 = vmatpush1.msra.mxu0 0.0
    %4591 = vmatprep.subr.mxu0 0.0
    %4592 = vmatpush1.msra.mxu0 0.0
    %4593 = vmatprep.subr.mxu0 0.0
    %4594 = vmatpush1.msra.mxu0 0.0
    %4595 = vmatprep.subr.mxu0 0.0
    %4596 = vmatpush1.msra.mxu0 0.0
    %4597 = vmatprep.subr.mxu0 0.0
    %4598 = vmatpush1.msra.mxu0 0.0
    %4599 = vmatprep.subr.mxu0 0.0
    %4600 = vmatpush1.msra.mxu0 0.0
    %4601 = vmatprep.subr.mxu0 0.0
    %4602 = vmatpush1.msra.mxu0 0.0
    %4603 = vmatprep.subr.mxu0 0.0
    %4604 = vmatpush1.msra.mxu0 0.0
    %4605 = vmatprep.subr.mxu0 0.0
    %4606 = vmatpush1.msra.mxu0 0.0
    %4607 = vmatprep.subr.mxu0 0.0
    %4608 = vmatpush1.msra.mxu0 0.0
    %4609 = vmatprep.subr.mxu0 0.0
    %4610 = vmatpush1.msra.mxu0 0.0
    %4611 = vmatprep.subr.mxu0 0.0
    %4612 = vmatpush1.msra.mxu0 0.0
    %4613 = vmatprep.subr.mxu0 0.0
    %4614 = vmatpush1.msra.mxu0 0.0
    %4615 = vmatprep.subr.mxu0 0.0
    %4616 = vmatpush1.msra.mxu0 0.0
    %4617 = vmatprep.subr.mxu0 0.0
    %4618 = vmatpush1.msra.mxu0 0.0
    %4619 = vmatprep.subr.mxu0 0.0
    %4620 = vmatpush1.msra.mxu0 0.0
    %4621 = vmatprep.subr.mxu0 0.0
    %4622 = vmatpush1.msra.mxu0 0.0
    %4623 = vmatprep.subr.mxu0 0.0
    %4624 = vmatpush1.msra.mxu0 0.0
    %4625 = vmatprep.subr.mxu0 0.0
    %4626 = vmatpush1.msra.mxu0 0.0
    %4627 = vmatprep.subr.mxu0 0.0
    %4628 = vmatpush1.msra.mxu0 0.0
    %4629 = vmatprep.subr.mxu0 0.0
    %4630 = vmatpush1.msra.mxu0 0.0
    %4631 = vmatprep.subr.mxu0 0.0
    %4632 = vmatpush1.msra.mxu0 0.0
    %4633 = vmatprep.subr.mxu0 0.0
    %4634 = vmatpush1.msra.mxu0 0.0
    %4635 = vmatprep.subr.mxu0 0.0
    %4636 = vmatpush1.msra.mxu0 0.0
    %4637 = vmatprep.subr.mxu0 0.0
    %4638 = vmatpush1.msra.mxu0 0.0
    %4639 = vmatprep.subr.mxu0 0.0
    %4640 = vmatpush1.msra.mxu0 0.0
    %4641 = vmatprep.subr.mxu0 0.0
    %4642 = vmatpush1.msra.mxu0 0.0
    %4643 = vmatprep.subr.mxu0 0.0
    %4644 = vmatpush1.msra.mxu0 0.0
    %4645 = vmatprep.mubr.f32.mxu0 0.0
    %4646 = vmatmul.mubr.f32.gmra.mrb[0].mxu0 %v4579
    %v4647 = vpop.f32.mrb[0].mxu0
    %v4648 = vadd.f32 0.0, %v4647
    %v4649 = vpop.f32.mrb[0].mxu0
    %4650 = vdwg.mxu0
    %v4652 = vsel %vm1846, %v4577, 0
    %4654 = vmatprep.subr.mxu0 0.0
    %4655 = vmatpush1.msra.mxu0 %v4401
    %4656 = vmatprep.subr.mxu0 0.0
    %4657 = vmatpush1.msra.mxu0 0.0
    %4658 = vmatprep.subr.mxu0 0.0
    %4659 = vmatpush1.msra.mxu0 0.0
    %4660 = vmatprep.subr.mxu0 0.0
    %4661 = vmatpush1.msra.mxu0 0.0
    %4662 = vmatprep.subr.mxu0 0.0
    %4663 = vmatpush1.msra.mxu0 0.0
    %4664 = vmatprep.subr.mxu0 0.0
    %4665 = vmatpush1.msra.mxu0 0.0
    %4666 = vmatprep.subr.mxu0 0.0
    %4667 = vmatpush1.msra.mxu0 0.0
    %4668 = vmatprep.subr.mxu0 0.0
    %4669 = vmatpush1.msra.mxu0 0.0
    %4670 = vmatprep.subr.mxu0 0.0
    %4671 = vmatpush1.msra.mxu0 0.0
    %4672 = vmatprep.subr.mxu0 0.0
    %4673 = vmatpush1.msra.mxu0 0.0
    %4674 = vmatprep.subr.mxu0 0.0
    %4675 = vmatpush1.msra.mxu0 0.0
    %4676 = vmatprep.subr.mxu0 0.0
    %4677 = vmatpush1.msra.mxu0 0.0
    %4678 = vmatprep.subr.mxu0 0.0
    %4679 = vmatpush1.msra.mxu0 0.0
    %4680 = vmatprep.subr.mxu0 0.0
    %4681 = vmatpush1.msra.mxu0 0.0
    %4682 = vmatprep.subr.mxu0 0.0
    %4683 = vmatpush1.msra.mxu0 0.0
    %4684 = vmatprep.subr.mxu0 0.0
    %4685 = vmatpush1.msra.mxu0 0.0
    %4686 = vmatprep.subr.mxu0 0.0
    %4687 = vmatpush1.msra.mxu0 0.0
    %4688 = vmatprep.subr.mxu0 0.0
    %4689 = vmatpush1.msra.mxu0 0.0
    %4690 = vmatprep.subr.mxu0 0.0
    %4691 = vmatpush1.msra.mxu0 0.0
    %4692 = vmatprep.subr.mxu0 0.0
    %4693 = vmatpush1.msra.mxu0 0.0
    %4694 = vmatprep.subr.mxu0 0.0
    %4695 = vmatpush1.msra.mxu0 0.0
    %4696 = vmatprep.subr.mxu0 0.0
    %4697 = vmatpush1.msra.mxu0 0.0
    %4698 = vmatprep.subr.mxu0 0.0
    %4699 = vmatpush1.msra.mxu0 0.0
    %4700 = vmatprep.subr.mxu0 0.0
    %4701 = vmatpush1.msra.mxu0 0.0
    %4702 = vmatprep.subr.mxu0 0.0
    %4703 = vmatpush1.msra.mxu0 0.0
    %4704 = vmatprep.subr.mxu0 0.0
    %4705 = vmatpush1.msra.mxu0 0.0
    %4706 = vmatprep.subr.mxu0 0.0
    %4707 = vmatpush1.msra.mxu0 0.0
    %4708 = vmatprep.subr.mxu0 0.0
    %4709 = vmatpush1.msra.mxu0 0.0
    %4710 = vmatprep.subr.mxu0 0.0
    %4711 = vmatpush1.msra.mxu0 0.0
    %4712 = vmatprep.subr.mxu0 0.0
    %4713 = vmatpush1.msra.mxu0 0.0
    %4714 = vmatprep.subr.mxu0 0.0
    %4715 = vmatpush1.msra.mxu0 0.0
    %4716 = vmatprep.subr.mxu0 0.0
    %4717 = vmatpush1.msra.mxu0 0.0
    %4718 = vmatprep.mubr.f32.mxu0 0.0
    %4719 = vmatmul.mubr.f32.gmra.mrb[0].mxu0 %v4652
    %v4720 = vpop.f32.mrb[0].mxu0
    %v4721 = vadd.f32 0.0, %v4720
    %v4722 = vpop.f32.mrb[0].mxu0
    %4723 = vdwg.mxu0
    %v4724 = vpack.c.bf16 %v4721, %v4648
    %v4726 = vlaneseq
    %v4727 = vshrl.u32 %v4726, 7
    %v4728 = vsub.s32 0, %v4727
    %v4729 = vrot.slane %v4206, %v4728
    %v4735 = vunpack.c.l.b16 %v4158
    %v4736 = vunpack.c.l.b16 %v4159
    %v4737 = vunpack.c.l.b16 %v4160
    %v4738 = vunpack.c.l.b16 %v4161
    %v4739 = vpack.c.b16 %v4736, %v4735
    %v4740 = vpack.c.b16 %v4738, %v4737
    %4743 = vmatprep.subr.bf16.mxu0 0
    %4744 = vmatpush1.bf16.msra.mxu0 %v4739
    %4745 = vmatprep.subr.bf16.mxu0 0
    %4746 = vmatpush1.bf16.msra.mxu0 %v4740
    %4747 = vmatprep.subr.bf16.mxu0 0
    %4748 = vmatpush1.bf16.msra.mxu0 0
    %4749 = vmatprep.subr.bf16.mxu0 0
    %4750 = vmatpush1.bf16.msra.mxu0 0
    %4751 = vmatprep.subr.bf16.mxu0 0
    %4752 = vmatpush1.bf16.msra.mxu0 0
    %4753 = vmatprep.subr.bf16.mxu0 0
    %4754 = vmatpush1.bf16.msra.mxu0 0
    %4755 = vmatprep.subr.bf16.mxu0 0
    %4756 = vmatpush1.bf16.msra.mxu0 0
    %4757 = vmatprep.subr.bf16.mxu0 0
    %4758 = vmatpush1.bf16.msra.mxu0 0
    %4759 = vmatprep.subr.bf16.mxu0 0
    %4760 = vmatpush1.bf16.msra.mxu0 0
    %4761 = vmatprep.subr.bf16.mxu0 0
    %4762 = vmatpush1.bf16.msra.mxu0 0
    %4763 = vmatprep.subr.bf16.mxu0 0
    %4764 = vmatpush1.bf16.msra.mxu0 0
    %4765 = vmatprep.subr.bf16.mxu0 0
    %4766 = vmatpush1.bf16.msra.mxu0 0
    %4767 = vmatprep.subr.bf16.mxu0 0
    %4768 = vmatpush1.bf16.msra.mxu0 0
    %4769 = vmatprep.subr.bf16.mxu0 0
    %4770 = vmatpush1.bf16.msra.mxu0 0
    %4771 = vmatprep.subr.bf16.mxu0 0
    %4772 = vmatpush1.bf16.msra.mxu0 0
    %4773 = vmatprep.subr.bf16.mxu0 0
    %4774 = vmatpush1.bf16.msra.mxu0 0
    %4775 = vmatprep.mubr.bf16.mxu0 0
    %4776 = vmatmul.mubr.bf16.gmra.mrb[0].mxu0 %v4243
    %v4777 = vpop.f32.mrb[0].mxu0
    %v4778 = vadd.f32 %v4729, %v4777
    %v4779 = vpop.f32.mrb[0].mxu0
    %v4780 = vpop.f32.mrb[0].mxu0
    %v4781 = vadd.f32 %v4729, %v4780
    %v4782 = vpop.f32.mrb[0].mxu0
    %4783 = vdwg.mxu0
    %v4785 = vlaneseq
    %v4786 = vshrl.u32 %v4785, 7
    %v4787 = vsub.s32 0, %v4786
    %v4788 = vrot.slane %v4211, %v4787
    %v4794 = vunpack.c.l.b16 %v4175
    %v4795 = vunpack.c.l.b16 %v4176
    %v4796 = vunpack.c.l.b16 %v4177
    %v4797 = vunpack.c.l.b16 %v4178
    %v4798 = vpack.c.b16 %v4795, %v4794
    %v4799 = vpack.c.b16 %v4797, %v4796
    %4802 = vmatprep.subr.bf16.mxu0 0
    %4803 = vmatpush1.bf16.msra.mxu0 %v4798
    %4804 = vmatprep.subr.bf16.mxu0 0
    %4805 = vmatpush1.bf16.msra.mxu0 %v4799
    %4806 = vmatprep.subr.bf16.mxu0 0
    %4807 = vmatpush1.bf16.msra.mxu0 0
    %4808 = vmatprep.subr.bf16.mxu0 0
    %4809 = vmatpush1.bf16.msra.mxu0 0
    %4810 = vmatprep.subr.bf16.mxu0 0
    %4811 = vmatpush1.bf16.msra.mxu0 0
    %4812 = vmatprep.subr.bf16.mxu0 0
    %4813 = vmatpush1.bf16.msra.mxu0 0
    %4814 = vmatprep.subr.bf16.mxu0 0
    %4815 = vmatpush1.bf16.msra.mxu0 0
    %4816 = vmatprep.subr.bf16.mxu0 0
    %4817 = vmatpush1.bf16.msra.mxu0 0
    %4818 = vmatprep.subr.bf16.mxu0 0
    %4819 = vmatpush1.bf16.msra.mxu0 0
    %4820 = vmatprep.subr.bf16.mxu0 0
    %4821 = vmatpush1.bf16.msra.mxu0 0
    %4822 = vmatprep.subr.bf16.mxu0 0
    %4823 = vmatpush1.bf16.msra.mxu0 0
    %4824 = vmatprep.subr.bf16.mxu0 0
    %4825 = vmatpush1.bf16.msra.mxu0 0
    %4826 = vmatprep.subr.bf16.mxu0 0
    %4827 = vmatpush1.bf16.msra.mxu0 0
    %4828 = vmatprep.subr.bf16.mxu0 0
    %4829 = vmatpush1.bf16.msra.mxu0 0
    %4830 = vmatprep.subr.bf16.mxu0 0
    %4831 = vmatpush1.bf16.msra.mxu0 0
    %4832 = vmatprep.subr.bf16.mxu0 0
    %4833 = vmatpush1.bf16.msra.mxu0 0
    %4834 = vmatprep.mubr.bf16.mxu0 0
    %4835 = vmatmul.mubr.bf16.gmra.mrb[0].mxu0 %v4243
    %v4836 = vpop.f32.mrb[0].mxu0
    %v4837 = vadd.f32 %v4788, %v4836
    %v4838 = vpop.f32.mrb[0].mxu0
    %v4839 = vpop.f32.mrb[0].mxu0
    %v4840 = vadd.f32 %v4788, %v4839
    %v4841 = vpop.f32.mrb[0].mxu0
    %4842 = vdwg.mxu0
    %v4844 = vlaneseq
    %v4845 = vshrl.u32 %v4844, 7
    %v4846 = vsub.s32 0, %v4845
    %v4847 = vrot.slane %v4216, %v4846
    %v4853 = vunpack.c.l.b16 %v4192
    %v4854 = vunpack.c.l.b16 %v4193
    %v4855 = vunpack.c.l.b16 %v4194
    %v4856 = vunpack.c.l.b16 %v4195
    %v4857 = vpack.c.b16 %v4854, %v4853
    %v4858 = vpack.c.b16 %v4856, %v4855
    %4861 = vmatprep.subr.bf16.mxu0 0
    %4862 = vmatpush1.bf16.msra.mxu0 %v4857
    %4863 = vmatprep.subr.bf16.mxu0 0
    %4864 = vmatpush1.bf16.msra.mxu0 %v4858
    %4865 = vmatprep.subr.bf16.mxu0 0
    %4866 = vmatpush1.bf16.msra.mxu0 0
    %4867 = vmatprep.subr.bf16.mxu0 0
    %4868 = vmatpush1.bf16.msra.mxu0 0
    %4869 = vmatprep.subr.bf16.mxu0 0
    %4870 = vmatpush1.bf16.msra.mxu0 0
    %4871 = vmatprep.subr.bf16.mxu0 0
    %4872 = vmatpush1.bf16.msra.mxu0 0
    %4873 = vmatprep.subr.bf16.mxu0 0
    %4874 = vmatpush1.bf16.msra.mxu0 0
    %4875 = vmatprep.subr.bf16.mxu0 0
    %4876 = vmatpush1.bf16.msra.mxu0 0
    %4877 = vmatprep.subr.bf16.mxu0 0
    %4878 = vmatpush1.bf16.msra.mxu0 0
    %4879 = vmatprep.subr.bf16.mxu0 0
    %4880 = vmatpush1.bf16.msra.mxu0 0
    %4881 = vmatprep.subr.bf16.mxu0 0
    %4882 = vmatpush1.bf16.msra.mxu0 0
    %4883 = vmatprep.subr.bf16.mxu0 0
    %4884 = vmatpush1.bf16.msra.mxu0 0
    %4885 = vmatprep.subr.bf16.mxu0 0
    %4886 = vmatpush1.bf16.msra.mxu0 0
    %4887 = vmatprep.subr.bf16.mxu0 0
    %4888 = vmatpush1.bf16.msra.mxu0 0
    %4889 = vmatprep.subr.bf16.mxu0 0
    %4890 = vmatpush1.bf16.msra.mxu0 0
    %4891 = vmatprep.subr.bf16.mxu0 0
    %4892 = vmatpush1.bf16.msra.mxu0 0
    %4893 = vmatprep.mubr.bf16.mxu0 0
    %4894 = vmatmul.mubr.bf16.gmra.mrb[0].mxu0 %v4243
    %v4895 = vpop.f32.mrb[0].mxu0
    %v4896 = vadd.f32 %v4847, %v4895
    %v4897 = vpop.f32.mrb[0].mxu0
    %v4898 = vpop.f32.mrb[0].mxu0
    %v4899 = vadd.f32 %v4847, %v4898
    %v4900 = vpop.f32.mrb[0].mxu0
    %4901 = vdwg.mxu0
    %v4903 = vsel %vm1846, %v4778, 0
    %v4906 = vsel %vm1846, %v4837, 0
    %4908 = vmatprep.subr.mxu0 0.0
    %4909 = vmatpush1.xpose.msra.mxu0 %v4906
    %4910 = vmatprep.subr.mxu0 0.0
    %4911 = vmatpush1.xpose.msra.mxu0 0.0
    %4912 = vmatprep.subr.mxu0 0.0
    %4913 = vmatpush1.xpose.msra.mxu0 0.0
    %4914 = vmatprep.subr.mxu0 0.0
    %4915 = vmatpush1.xpose.msra.mxu0 0.0
    %4916 = vmatprep.subr.mxu0 0.0
    %4917 = vmatpush1.xpose.msra.mxu0 0.0
    %4918 = vmatprep.subr.mxu0 0.0
    %4919 = vmatpush1.xpose.msra.mxu0 0.0
    %4920 = vmatprep.subr.mxu0 0.0
    %4921 = vmatpush1.xpose.msra.mxu0 0.0
    %4922 = vmatprep.subr.mxu0 0.0
    %4923 = vmatpush1.xpose.msra.mxu0 0.0
    %4924 = vmatprep.subr.mxu0 0.0
    %4925 = vmatpush1.xpose.msra.mxu0 0.0
    %4926 = vmatprep.subr.mxu0 0.0
    %4927 = vmatpush1.xpose.msra.mxu0 0.0
    %4928 = vmatprep.subr.mxu0 0.0
    %4929 = vmatpush1.xpose.msra.mxu0 0.0
    %4930 = vmatprep.subr.mxu0 0.0
    %4931 = vmatpush1.xpose.msra.mxu0 0.0
    %4932 = vmatprep.subr.mxu0 0.0
    %4933 = vmatpush1.xpose.msra.mxu0 0.0
    %4934 = vmatprep.subr.mxu0 0.0
    %4935 = vmatpush1.xpose.msra.mxu0 0.0
    %4936 = vmatprep.subr.mxu0 0.0
    %4937 = vmatpush1.xpose.msra.mxu0 0.0
    %4938 = vmatprep.subr.mxu0 0.0
    %4939 = vmatpush1.xpose.msra.mxu0 0.0
    %4940 = vmatprep.subr.mxu0 0.0
    %4941 = vmatpush1.xpose.msra.mxu0 0.0
    %4942 = vmatprep.subr.mxu0 0.0
    %4943 = vmatpush1.xpose.msra.mxu0 0.0
    %4944 = vmatprep.subr.mxu0 0.0
    %4945 = vmatpush1.xpose.msra.mxu0 0.0
    %4946 = vmatprep.subr.mxu0 0.0
    %4947 = vmatpush1.xpose.msra.mxu0 0.0
    %4948 = vmatprep.subr.mxu0 0.0
    %4949 = vmatpush1.xpose.msra.mxu0 0.0
    %4950 = vmatprep.subr.mxu0 0.0
    %4951 = vmatpush1.xpose.msra.mxu0 0.0
    %4952 = vmatprep.subr.mxu0 0.0
    %4953 = vmatpush1.xpose.msra.mxu0 0.0
    %4954 = vmatprep.subr.mxu0 0.0
    %4955 = vmatpush1.xpose.msra.mxu0 0.0
    %4956 = vmatprep.subr.mxu0 0.0
    %4957 = vmatpush1.xpose.msra.mxu0 0.0
    %4958 = vmatprep.subr.mxu0 0.0
    %4959 = vmatpush1.xpose.msra.mxu0 0.0
    %4960 = vmatprep.subr.mxu0 0.0
    %4961 = vmatpush1.xpose.msra.mxu0 0.0
    %4962 = vmatprep.subr.mxu0 0.0
    %4963 = vmatpush1.xpose.msra.mxu0 0.0
    %4964 = vmatprep.subr.mxu0 0.0
    %4965 = vmatpush1.xpose.msra.mxu0 0.0
    %4966 = vmatprep.subr.mxu0 0.0
    %4967 = vmatpush1.xpose.msra.mxu0 0.0
    %4968 = vmatprep.subr.mxu0 0.0
    %4969 = vmatpush1.xpose.msra.mxu0 0.0
    %4970 = vmatprep.subr.mxu0 0.0
    %4971 = vmatpush1.xpose.msra.mxu0 0.0
    %4972 = vmatprep.mubr.f32.mxu0 0.0
    %4973 = vmatmul.mubr.f32.gmra.mrb[0].mxu0 %v4903
    %v4974 = vpop.f32.mrb[0].mxu0
    %v4975 = vadd.f32 %v1594, %v4974
    %v4976 = vpop.f32.mrb[0].mxu0
    %4977 = vdwg.mxu0
    %v4979 = vsel %vm1846, %v4781, 0
    %v4982 = vsel %vm1846, %v4840, 0
    %4984 = vmatprep.subr.mxu0 0.0
    %4985 = vmatpush1.xpose.msra.mxu0 %v4982
    %4986 = vmatprep.subr.mxu0 0.0
    %4987 = vmatpush1.xpose.msra.mxu0 0.0
    %4988 = vmatprep.subr.mxu0 0.0
    %4989 = vmatpush1.xpose.msra.mxu0 0.0
    %4990 = vmatprep.subr.mxu0 0.0
    %4991 = vmatpush1.xpose.msra.mxu0 0.0
    %4992 = vmatprep.subr.mxu0 0.0
    %4993 = vmatpush1.xpose.msra.mxu0 0.0
    %4994 = vmatprep.subr.mxu0 0.0
    %4995 = vmatpush1.xpose.msra.mxu0 0.0
    %4996 = vmatprep.subr.mxu0 0.0
    %4997 = vmatpush1.xpose.msra.mxu0 0.0
    %4998 = vmatprep.subr.mxu0 0.0
    %4999 = vmatpush1.xpose.msra.mxu0 0.0
    %5000 = vmatprep.subr.mxu0 0.0
    %5001 = vmatpush1.xpose.msra.mxu0 0.0
    %5002 = vmatprep.subr.mxu0 0.0
    %5003 = vmatpush1.xpose.msra.mxu0 0.0
    %5004 = vmatprep.subr.mxu0 0.0
    %5005 = vmatpush1.xpose.msra.mxu0 0.0
    %5006 = vmatprep.subr.mxu0 0.0
    %5007 = vmatpush1.xpose.msra.mxu0 0.0
    %5008 = vmatprep.subr.mxu0 0.0
    %5009 = vmatpush1.xpose.msra.mxu0 0.0
    %5010 = vmatprep.subr.mxu0 0.0
    %5011 = vmatpush1.xpose.msra.mxu0 0.0
    %5012 = vmatprep.subr.mxu0 0.0
    %5013 = vmatpush1.xpose.msra.mxu0 0.0
    %5014 = vmatprep.subr.mxu0 0.0
    %5015 = vmatpush1.xpose.msra.mxu0 0.0
    %5016 = vmatprep.subr.mxu0 0.0
    %5017 = vmatpush1.xpose.msra.mxu0 0.0
    %5018 = vmatprep.subr.mxu0 0.0
    %5019 = vmatpush1.xpose.msra.mxu0 0.0
    %5020 = vmatprep.subr.mxu0 0.0
    %5021 = vmatpush1.xpose.msra.mxu0 0.0
    %5022 = vmatprep.subr.mxu0 0.0
    %5023 = vmatpush1.xpose.msra.mxu0 0.0
    %5024 = vmatprep.subr.mxu0 0.0
    %5025 = vmatpush1.xpose.msra.mxu0 0.0
    %5026 = vmatprep.subr.mxu0 0.0
    %5027 = vmatpush1.xpose.msra.mxu0 0.0
    %5028 = vmatprep.subr.mxu0 0.0
    %5029 = vmatpush1.xpose.msra.mxu0 0.0
    %5030 = vmatprep.subr.mxu0 0.0
    %5031 = vmatpush1.xpose.msra.mxu0 0.0
    %5032 = vmatprep.subr.mxu0 0.0
    %5033 = vmatpush1.xpose.msra.mxu0 0.0
    %5034 = vmatprep.subr.mxu0 0.0
    %5035 = vmatpush1.xpose.msra.mxu0 0.0
    %5036 = vmatprep.subr.mxu0 0.0
    %5037 = vmatpush1.xpose.msra.mxu0 0.0
    %5038 = vmatprep.subr.mxu0 0.0
    %5039 = vmatpush1.xpose.msra.mxu0 0.0
    %5040 = vmatprep.subr.mxu0 0.0
    %5041 = vmatpush1.xpose.msra.mxu0 0.0
    %5042 = vmatprep.subr.mxu0 0.0
    %5043 = vmatpush1.xpose.msra.mxu0 0.0
    %5044 = vmatprep.subr.mxu0 0.0
    %5045 = vmatpush1.xpose.msra.mxu0 0.0
    %5046 = vmatprep.subr.mxu0 0.0
    %5047 = vmatpush1.xpose.msra.mxu0 0.0
    %5048 = vmatprep.mubr.f32.mxu0 0.0
    %5049 = vmatmul.mubr.f32.gmra.mrb[0].mxu0 %v4979
    %v5050 = vpop.f32.mrb[0].mxu0
    %v5051 = vadd.f32 %v1598, %v5050
    %v5052 = vpop.f32.mrb[0].mxu0
    %5053 = vdwg.mxu0
    %v5054 = vsel %vm1846, %v4975, -inf
    %5055 = vmax.xlane.f32.xlu0 %v5054
    %v5056 = vpop.xlane.xlu0 %5055
    %v5057 = vsel %vm1846, %v5051, -inf
    %5058 = vmax.xlane.f32.xlu0 %v5057
    %v5059 = vpop.xlane.xlu0 %5058
    %v5060 = vsub.f32 %v4975, %v5056
    %v5061 = vsub.f32 %v5051, %v5059
    %v5062 = vmul.f32 %v5060, 1.442695
    %v5063 = vpow.pop %v5062
    %v5064 = vmul.f32 %v5061, 1.442695
    %v5065 = vpow.pop %v5064
    %v5066 = vsel %vm1846, %v5063, 0.0
    %5067 = vadd.xlane.f32.xlu0 %v5066
    %v5068 = vpop.xlane.xlu0 %5067
    %v5069 = vsel %vm1846, %v5065, 0.0
    %5070 = vadd.xlane.f32.xlu0 %v5069
    %v5071 = vpop.xlane.xlu0 %5070
    %v5072 = vrcp.pop %v5068
    %v5073 = vrcp.pop %v5071
    %v5074 = vmul.f32 %v5063, %v5072
    %v5075 = vmul.f32 %v5065, %v5073
    %v5077 = vsel %vm1846, %v5074, 0
    %5079 = vmatprep.subr.mxu0 0.0
    %5080 = vmatpush1.msra.mxu0 %v4896
    %5081 = vmatprep.subr.mxu0 0.0
    %5082 = vmatpush1.msra.mxu0 0.0
    %5083 = vmatprep.subr.mxu0 0.0
    %5084 = vmatpush1.msra.mxu0 0.0
    %5085 = vmatprep.subr.mxu0 0.0
    %5086 = vmatpush1.msra.mxu0 0.0
    %5087 = vmatprep.subr.mxu0 0.0
    %5088 = vmatpush1.msra.mxu0 0.0
    %5089 = vmatprep.subr.mxu0 0.0
    %5090 = vmatpush1.msra.mxu0 0.0
    %5091 = vmatprep.subr.mxu0 0.0
    %5092 = vmatpush1.msra.mxu0 0.0
    %5093 = vmatprep.subr.mxu0 0.0
    %5094 = vmatpush1.msra.mxu0 0.0
    %5095 = vmatprep.subr.mxu0 0.0
    %5096 = vmatpush1.msra.mxu0 0.0
    %5097 = vmatprep.subr.mxu0 0.0
    %5098 = vmatpush1.msra.mxu0 0.0
    %5099 = vmatprep.subr.mxu0 0.0
    %5100 = vmatpush1.msra.mxu0 0.0
    %5101 = vmatprep.subr.mxu0 0.0
    %5102 = vmatpush1.msra.mxu0 0.0
    %5103 = vmatprep.subr.mxu0 0.0
    %5104 = vmatpush1.msra.mxu0 0.0
    %5105 = vmatprep.subr.mxu0 0.0
    %5106 = vmatpush1.msra.mxu0 0.0
    %5107 = vmatprep.subr.mxu0 0.0
    %5108 = vmatpush1.msra.mxu0 0.0
    %5109 = vmatprep.subr.mxu0 0.0
    %5110 = vmatpush1.msra.mxu0 0.0
    %5111 = vmatprep.subr.mxu0 0.0
    %5112 = vmatpush1.msra.mxu0 0.0
    %5113 = vmatprep.subr.mxu0 0.0
    %5114 = vmatpush1.msra.mxu0 0.0
    %5115 = vmatprep.subr.mxu0 0.0
    %5116 = vmatpush1.msra.mxu0 0.0
    %5117 = vmatprep.subr.mxu0 0.0
    %5118 = vmatpush1.msra.mxu0 0.0
    %5119 = vmatprep.subr.mxu0 0.0
    %5120 = vmatpush1.msra.mxu0 0.0
    %5121 = vmatprep.subr.mxu0 0.0
    %5122 = vmatpush1.msra.mxu0 0.0
    %5123 = vmatprep.subr.mxu0 0.0
    %5124 = vmatpush1.msra.mxu0 0.0
    %5125 = vmatprep.subr.mxu0 0.0
    %5126 = vmatpush1.msra.mxu0 0.0
    %5127 = vmatprep.subr.mxu0 0.0
    %5128 = vmatpush1.msra.mxu0 0.0
    %5129 = vmatprep.subr.mxu0 0.0
    %5130 = vmatpush1.msra.mxu0 0.0
    %5131 = vmatprep.subr.mxu0 0.0
    %5132 = vmatpush1.msra.mxu0 0.0
    %5133 = vmatprep.subr.mxu0 0.0
    %5134 = vmatpush1.msra.mxu0 0.0
    %5135 = vmatprep.subr.mxu0 0.0
    %5136 = vmatpush1.msra.mxu0 0.0
    %5137 = vmatprep.subr.mxu0 0.0
    %5138 = vmatpush1.msra.mxu0 0.0
    %5139 = vmatprep.subr.mxu0 0.0
    %5140 = vmatpush1.msra.mxu0 0.0
    %5141 = vmatprep.subr.mxu0 0.0
    %5142 = vmatpush1.msra.mxu0 0.0
    %5143 = vmatprep.mubr.f32.mxu0 0.0
    %5144 = vmatmul.mubr.f32.gmra.mrb[0].mxu0 %v5077
    %v5145 = vpop.f32.mrb[0].mxu0
    %v5146 = vadd.f32 0.0, %v5145
    %v5147 = vpop.f32.mrb[0].mxu0
    %5148 = vdwg.mxu0
    %v5150 = vsel %vm1846, %v5075, 0
    %5152 = vmatprep.subr.mxu0 0.0
    %5153 = vmatpush1.msra.mxu0 %v4899
    %5154 = vmatprep.subr.mxu0 0.0
    %5155 = vmatpush1.msra.mxu0 0.0
    %5156 = vmatprep.subr.mxu0 0.0
    %5157 = vmatpush1.msra.mxu0 0.0
    %5158 = vmatprep.subr.mxu0 0.0
    %5159 = vmatpush1.msra.mxu0 0.0
    %5160 = vmatprep.subr.mxu0 0.0
    %5161 = vmatpush1.msra.mxu0 0.0
    %5162 = vmatprep.subr.mxu0 0.0
    %5163 = vmatpush1.msra.mxu0 0.0
    %5164 = vmatprep.subr.mxu0 0.0
    %5165 = vmatpush1.msra.mxu0 0.0
    %5166 = vmatprep.subr.mxu0 0.0
    %5167 = vmatpush1.msra.mxu0 0.0
    %5168 = vmatprep.subr.mxu0 0.0
    %5169 = vmatpush1.msra.mxu0 0.0
    %5170 = vmatprep.subr.mxu0 0.0
    %5171 = vmatpush1.msra.mxu0 0.0
    %5172 = vmatprep.subr.mxu0 0.0
    %5173 = vmatpush1.msra.mxu0 0.0
    %5174 = vmatprep.subr.mxu0 0.0
    %5175 = vmatpush1.msra.mxu0 0.0
    %5176 = vmatprep.subr.mxu0 0.0
    %5177 = vmatpush1.msra.mxu0 0.0
    %5178 = vmatprep.subr.mxu0 0.0
    %5179 = vmatpush1.msra.mxu0 0.0
    %5180 = vmatprep.subr.mxu0 0.0
    %5181 = vmatpush1.msra.mxu0 0.0
    %5182 = vmatprep.subr.mxu0 0.0
    %5183 = vmatpush1.msra.mxu0 0.0
    %5184 = vmatprep.subr.mxu0 0.0
    %5185 = vmatpush1.msra.mxu0 0.0
    %5186 = vmatprep.subr.mxu0 0.0
    %5187 = vmatpush1.msra.mxu0 0.0
    %5188 = vmatprep.subr.mxu0 0.0
    %5189 = vmatpush1.msra.mxu0 0.0
    %5190 = vmatprep.subr.mxu0 0.0
    %5191 = vmatpush1.msra.mxu0 0.0
    %5192 = vmatprep.subr.mxu0 0.0
    %5193 = vmatpush1.msra.mxu0 0.0
    %5194 = vmatprep.subr.mxu0 0.0
    %5195 = vmatpush1.msra.mxu0 0.0
    %5196 = vmatprep.subr.mxu0 0.0
    %5197 = vmatpush1.msra.mxu0 0.0
    %5198 = vmatprep.subr.mxu0 0.0
    %5199 = vmatpush1.msra.mxu0 0.0
    %5200 = vmatprep.subr.mxu0 0.0
    %5201 = vmatpush1.msra.mxu0 0.0
    %5202 = vmatprep.subr.mxu0 0.0
    %5203 = vmatpush1.msra.mxu0 0.0
    %5204 = vmatprep.subr.mxu0 0.0
    %5205 = vmatpush1.msra.mxu0 0.0
    %5206 = vmatprep.subr.mxu0 0.0
    %5207 = vmatpush1.msra.mxu0 0.0
    %5208 = vmatprep.subr.mxu0 0.0
    %5209 = vmatpush1.msra.mxu0 0.0
    %5210 = vmatprep.subr.mxu0 0.0
    %5211 = vmatpush1.msra.mxu0 0.0
    %5212 = vmatprep.subr.mxu0 0.0
    %5213 = vmatpush1.msra.mxu0 0.0
    %5214 = vmatprep.subr.mxu0 0.0
    %5215 = vmatpush1.msra.mxu0 0.0
    %5216 = vmatprep.mubr.f32.mxu0 0.0
    %5217 = vmatmul.mubr.f32.gmra.mrb[0].mxu0 %v5150
    %v5218 = vpop.f32.mrb[0].mxu0
    %v5219 = vadd.f32 0.0, %v5218
    %v5220 = vpop.f32.mrb[0].mxu0
    %5221 = vdwg.mxu0
    %v5222 = vpack.c.bf16 %v5219, %v5146
    %v5224 = vsel %vm1846, %v5222, 0
    %v5227 = vsel %vm1436, %v4221, 0
    %5229 = vmatprep.subr.bf16.mxu0 0
    %5230 = vmatpush1.bf16.msra.mxu0 %v5227
    %5231 = vmatprep.subr.bf16.mxu0 0
    %5232 = vmatpush1.bf16.msra.mxu0 0
    %5233 = vmatprep.subr.bf16.mxu0 0
    %5234 = vmatpush1.bf16.msra.mxu0 0
    %5235 = vmatprep.subr.bf16.mxu0 0
    %5236 = vmatpush1.bf16.msra.mxu0 0
    %5237 = vmatprep.subr.bf16.mxu0 0
    %5238 = vmatpush1.bf16.msra.mxu0 0
    %5239 = vmatprep.subr.bf16.mxu0 0
    %5240 = vmatpush1.bf16.msra.mxu0 0
    %5241 = vmatprep.subr.bf16.mxu0 0
    %5242 = vmatpush1.bf16.msra.mxu0 0
    %5243 = vmatprep.subr.bf16.mxu0 0
    %5244 = vmatpush1.bf16.msra.mxu0 0
    %5245 = vmatprep.subr.bf16.mxu0 0
    %5246 = vmatpush1.bf16.msra.mxu0 0
    %5247 = vmatprep.subr.bf16.mxu0 0
    %5248 = vmatpush1.bf16.msra.mxu0 0
    %5249 = vmatprep.subr.bf16.mxu0 0
    %5250 = vmatpush1.bf16.msra.mxu0 0
    %5251 = vmatprep.subr.bf16.mxu0 0
    %5252 = vmatpush1.bf16.msra.mxu0 0
    %5253 = vmatprep.subr.bf16.mxu0 0
    %5254 = vmatpush1.bf16.msra.mxu0 0
    %5255 = vmatprep.subr.bf16.mxu0 0
    %5256 = vmatpush1.bf16.msra.mxu0 0
    %5257 = vmatprep.subr.bf16.mxu0 0
    %5258 = vmatpush1.bf16.msra.mxu0 0
    %5259 = vmatprep.subr.bf16.mxu0 0
    %5260 = vmatpush1.bf16.msra.mxu0 0
    %5261 = vmatprep.mubr.bf16.mxu0 0
    %5262 = vmatmul.mubr.bf16.gmra.mrb[0].mxu0 %v5224
    %v5263 = vpop.f32.mrb[0].mxu0
    %v5264 = vadd.f32 0.0, %v5263
    %v5265 = vpop.f32.mrb[0].mxu0
    %v5266 = vpop.f32.mrb[0].mxu0
    %v5267 = vadd.f32 0.0, %v5266
    %v5268 = vpop.f32.mrb[0].mxu0
    %5269 = vdwg.mxu0
    %v5271 = vlaneseq
    %v5272 = vshrl.u32 %v5271, 7
    %v5273 = vsub.s32 0, %v5272
    %v5274 = vrot.slane %v4207, %v5273
    %v5280 = vunpack.c.l.b16 %v4162
    %v5281 = vunpack.c.l.b16 %v4163
    %v5282 = vunpack.c.l.b16 %v4164
    %v5283 = vunpack.c.l.b16 %v4165
    %v5284 = vpack.c.b16 %v5281, %v5280
    %v5285 = vpack.c.b16 %v5283, %v5282
    %5288 = vmatprep.subr.bf16.mxu0 0
    %5289 = vmatpush1.bf16.msra.mxu0 %v5284
    %5290 = vmatprep.subr.bf16.mxu0 0
    %5291 = vmatpush1.bf16.msra.mxu0 %v5285
    %5292 = vmatprep.subr.bf16.mxu0 0
    %5293 = vmatpush1.bf16.msra.mxu0 0
    %5294 = vmatprep.subr.bf16.mxu0 0
    %5295 = vmatpush1.bf16.msra.mxu0 0
    %5296 = vmatprep.subr.bf16.mxu0 0
    %5297 = vmatpush1.bf16.msra.mxu0 0
    %5298 = vmatprep.subr.bf16.mxu0 0
    %5299 = vmatpush1.bf16.msra.mxu0 0
    %5300 = vmatprep.subr.bf16.mxu0 0
    %5301 = vmatpush1.bf16.msra.mxu0 0
    %5302 = vmatprep.subr.bf16.mxu0 0
    %5303 = vmatpush1.bf16.msra.mxu0 0
    %5304 = vmatprep.subr.bf16.mxu0 0
    %5305 = vmatpush1.bf16.msra.mxu0 0
    %5306 = vmatprep.subr.bf16.mxu0 0
    %5307 = vmatpush1.bf16.msra.mxu0 0
    %5308 = vmatprep.subr.bf16.mxu0 0
    %5309 = vmatpush1.bf16.msra.mxu0 0
    %5310 = vmatprep.subr.bf16.mxu0 0
    %5311 = vmatpush1.bf16.msra.mxu0 0
    %5312 = vmatprep.subr.bf16.mxu0 0
    %5313 = vmatpush1.bf16.msra.mxu0 0
    %5314 = vmatprep.subr.bf16.mxu0 0
    %5315 = vmatpush1.bf16.msra.mxu0 0
    %5316 = vmatprep.subr.bf16.mxu0 0
    %5317 = vmatpush1.bf16.msra.mxu0 0
    %5318 = vmatprep.subr.bf16.mxu0 0
    %5319 = vmatpush1.bf16.msra.mxu0 0
    %5320 = vmatprep.mubr.bf16.mxu0 0
    %5321 = vmatmul.mubr.bf16.gmra.mrb[0].mxu0 %v4243
    %v5322 = vpop.f32.mrb[0].mxu0
    %v5323 = vadd.f32 %v5274, %v5322
    %v5324 = vpop.f32.mrb[0].mxu0
    %v5325 = vpop.f32.mrb[0].mxu0
    %v5326 = vadd.f32 %v5274, %v5325
    %v5327 = vpop.f32.mrb[0].mxu0
    %5328 = vdwg.mxu0
    %v5330 = vlaneseq
    %v5331 = vshrl.u32 %v5330, 7
    %v5332 = vsub.s32 0, %v5331
    %v5333 = vrot.slane %v4212, %v5332
    %v5339 = vunpack.c.l.b16 %v4179
    %v5340 = vunpack.c.l.b16 %v4180
    %v5341 = vunpack.c.l.b16 %v4181
    %v5342 = vunpack.c.l.b16 %v4182
    %v5343 = vpack.c.b16 %v5340, %v5339
    %v5344 = vpack.c.b16 %v5342, %v5341
    %5347 = vmatprep.subr.bf16.mxu0 0
    %5348 = vmatpush1.bf16.msra.mxu0 %v5343
    %5349 = vmatprep.subr.bf16.mxu0 0
    %5350 = vmatpush1.bf16.msra.mxu0 %v5344
    %5351 = vmatprep.subr.bf16.mxu0 0
    %5352 = vmatpush1.bf16.msra.mxu0 0
    %5353 = vmatprep.subr.bf16.mxu0 0
    %5354 = vmatpush1.bf16.msra.mxu0 0
    %5355 = vmatprep.subr.bf16.mxu0 0
    %5356 = vmatpush1.bf16.msra.mxu0 0
    %5357 = vmatprep.subr.bf16.mxu0 0
    %5358 = vmatpush1.bf16.msra.mxu0 0
    %5359 = vmatprep.subr.bf16.mxu0 0
    %5360 = vmatpush1.bf16.msra.mxu0 0
    %5361 = vmatprep.subr.bf16.mxu0 0
    %5362 = vmatpush1.bf16.msra.mxu0 0
    %5363 = vmatprep.subr.bf16.mxu0 0
    %5364 = vmatpush1.bf16.msra.mxu0 0
    %5365 = vmatprep.subr.bf16.mxu0 0
    %5366 = vmatpush1.bf16.msra.mxu0 0
    %5367 = vmatprep.subr.bf16.mxu0 0
    %5368 = vmatpush1.bf16.msra.mxu0 0
    %5369 = vmatprep.subr.bf16.mxu0 0
    %5370 = vmatpush1.bf16.msra.mxu0 0
    %5371 = vmatprep.subr.bf16.mxu0 0
    %5372 = vmatpush1.bf16.msra.mxu0 0
    %5373 = vmatprep.subr.bf16.mxu0 0
    %5374 = vmatpush1.bf16.msra.mxu0 0
    %5375 = vmatprep.subr.bf16.mxu0 0
    %5376 = vmatpush1.bf16.msra.mxu0 0
    %5377 = vmatprep.subr.bf16.mxu0 0
    %5378 = vmatpush1.bf16.msra.mxu0 0
    %5379 = vmatprep.mubr.bf16.mxu0 0
    %5380 = vmatmul.mubr.bf16.gmra.mrb[0].mxu0 %v4243
    %v5381 = vpop.f32.mrb[0].mxu0
    %v5382 = vadd.f32 %v5333, %v5381
    %v5383 = vpop.f32.mrb[0].mxu0
    %v5384 = vpop.f32.mrb[0].mxu0
    %v5385 = vadd.f32 %v5333, %v5384
    %v5386 = vpop.f32.mrb[0].mxu0
    %5387 = vdwg.mxu0
    %v5389 = vlaneseq
    %v5390 = vshrl.u32 %v5389, 7
    %v5391 = vsub.s32 0, %v5390
    %v5392 = vrot.slane %v4217, %v5391
    %v5398 = vunpack.c.l.b16 %v4196
    %v5399 = vunpack.c.l.b16 %v4197
    %v5400 = vunpack.c.l.b16 %v4198
    %v5401 = vunpack.c.l.b16 %v4199
    %v5402 = vpack.c.b16 %v5399, %v5398
    %v5403 = vpack.c.b16 %v5401, %v5400
    %5406 = vmatprep.subr.bf16.mxu0 0
    %5407 = vmatpush1.bf16.msra.mxu0 %v5402
    %5408 = vmatprep.subr.bf16.mxu0 0
    %5409 = vmatpush1.bf16.msra.mxu0 %v5403
    %5410 = vmatprep.subr.bf16.mxu0 0
    %5411 = vmatpush1.bf16.msra.mxu0 0
    %5412 = vmatprep.subr.bf16.mxu0 0
    %5413 = vmatpush1.bf16.msra.mxu0 0
    %5414 = vmatprep.subr.bf16.mxu0 0
    %5415 = vmatpush1.bf16.msra.mxu0 0
    %5416 = vmatprep.subr.bf16.mxu0 0
    %5417 = vmatpush1.bf16.msra.mxu0 0
    %5418 = vmatprep.subr.bf16.mxu0 0
    %5419 = vmatpush1.bf16.msra.mxu0 0
    %5420 = vmatprep.subr.bf16.mxu0 0
    %5421 = vmatpush1.bf16.msra.mxu0 0
    %5422 = vmatprep.subr.bf16.mxu0 0
    %5423 = vmatpush1.bf16.msra.mxu0 0
    %5424 = vmatprep.subr.bf16.mxu0 0
    %5425 = vmatpush1.bf16.msra.mxu0 0
    %5426 = vmatprep.subr.bf16.mxu0 0
    %5427 = vmatpush1.bf16.msra.mxu0 0
    %5428 = vmatprep.subr.bf16.mxu0 0
    %5429 = vmatpush1.bf16.msra.mxu0 0
    %5430 = vmatprep.subr.bf16.mxu0 0
    %5431 = vmatpush1.bf16.msra.mxu0 0
    %5432 = vmatprep.subr.bf16.mxu0 0
    %5433 = vmatpush1.bf16.msra.mxu0 0
    %5434 = vmatprep.subr.bf16.mxu0 0
    %5435 = vmatpush1.bf16.msra.mxu0 0
    %5436 = vmatprep.subr.bf16.mxu0 0
    %5437 = vmatpush1.bf16.msra.mxu0 0
    %5438 = vmatprep.mubr.bf16.mxu0 0
    %5439 = vmatmul.mubr.bf16.gmra.mrb[0].mxu0 %v4243
    %v5440 = vpop.f32.mrb[0].mxu0
    %v5441 = vadd.f32 %v5392, %v5440
    %v5442 = vpop.f32.mrb[0].mxu0
    %v5443 = vpop.f32.mrb[0].mxu0
    %v5444 = vadd.f32 %v5392, %v5443
    %v5445 = vpop.f32.mrb[0].mxu0
    %5446 = vdwg.mxu0
    %v5448 = vsel %vm1846, %v5323, 0
    %v5451 = vsel %vm1846, %v5382, 0
    %5453 = vmatprep.subr.mxu0 0.0
    %5454 = vmatpush1.xpose.msra.mxu0 %v5451
    %5455 = vmatprep.subr.mxu0 0.0
    %5456 = vmatpush1.xpose.msra.mxu0 0.0
    %5457 = vmatprep.subr.mxu0 0.0
    %5458 = vmatpush1.xpose.msra.mxu0 0.0
    %5459 = vmatprep.subr.mxu0 0.0
    %5460 = vmatpush1.xpose.msra.mxu0 0.0
    %5461 = vmatprep.subr.mxu0 0.0
    %5462 = vmatpush1.xpose.msra.mxu0 0.0
    %5463 = vmatprep.subr.mxu0 0.0
    %5464 = vmatpush1.xpose.msra.mxu0 0.0
    %5465 = vmatprep.subr.mxu0 0.0
    %5466 = vmatpush1.xpose.msra.mxu0 0.0
    %5467 = vmatprep.subr.mxu0 0.0
    %5468 = vmatpush1.xpose.msra.mxu0 0.0
    %5469 = vmatprep.subr.mxu0 0.0
    %5470 = vmatpush1.xpose.msra.mxu0 0.0
    %5471 = vmatprep.subr.mxu0 0.0
    %5472 = vmatpush1.xpose.msra.mxu0 0.0
    %5473 = vmatprep.subr.mxu0 0.0
    %5474 = vmatpush1.xpose.msra.mxu0 0.0
    %5475 = vmatprep.subr.mxu0 0.0
    %5476 = vmatpush1.xpose.msra.mxu0 0.0
    %5477 = vmatprep.subr.mxu0 0.0
    %5478 = vmatpush1.xpose.msra.mxu0 0.0
    %5479 = vmatprep.subr.mxu0 0.0
    %5480 = vmatpush1.xpose.msra.mxu0 0.0
    %5481 = vmatprep.subr.mxu0 0.0
    %5482 = vmatpush1.xpose.msra.mxu0 0.0
    %5483 = vmatprep.subr.mxu0 0.0
    %5484 = vmatpush1.xpose.msra.mxu0 0.0
    %5485 = vmatprep.subr.mxu0 0.0
    %5486 = vmatpush1.xpose.msra.mxu0 0.0
    %5487 = vmatprep.subr.mxu0 0.0
    %5488 = vmatpush1.xpose.msra.mxu0 0.0
    %5489 = vmatprep.subr.mxu0 0.0
    %5490 = vmatpush1.xpose.msra.mxu0 0.0
    %5491 = vmatprep.subr.mxu0 0.0
    %5492 = vmatpush1.xpose.msra.mxu0 0.0
    %5493 = vmatprep.subr.mxu0 0.0
    %5494 = vmatpush1.xpose.msra.mxu0 0.0
    %5495 = vmatprep.subr.mxu0 0.0
    %5496 = vmatpush1.xpose.msra.mxu0 0.0
    %5497 = vmatprep.subr.mxu0 0.0
    %5498 = vmatpush1.xpose.msra.mxu0 0.0
    %5499 = vmatprep.subr.mxu0 0.0
    %5500 = vmatpush1.xpose.msra.mxu0 0.0
    %5501 = vmatprep.subr.mxu0 0.0
    %5502 = vmatpush1.xpose.msra.mxu0 0.0
    %5503 = vmatprep.subr.mxu0 0.0
    %5504 = vmatpush1.xpose.msra.mxu0 0.0
    %5505 = vmatprep.subr.mxu0 0.0
    %5506 = vmatpush1.xpose.msra.mxu0 0.0
    %5507 = vmatprep.subr.mxu0 0.0
    %5508 = vmatpush1.xpose.msra.mxu0 0.0
    %5509 = vmatprep.subr.mxu0 0.0
    %5510 = vmatpush1.xpose.msra.mxu0 0.0
    %5511 = vmatprep.subr.mxu0 0.0
    %5512 = vmatpush1.xpose.msra.mxu0 0.0
    %5513 = vmatprep.subr.mxu0 0.0
    %5514 = vmatpush1.xpose.msra.mxu0 0.0
    %5515 = vmatprep.subr.mxu0 0.0
    %5516 = vmatpush1.xpose.msra.mxu0 0.0
    %5517 = vmatprep.mubr.f32.mxu0 0.0
    %5518 = vmatmul.mubr.f32.gmra.mrb[0].mxu0 %v5448
    %v5519 = vpop.f32.mrb[0].mxu0
    %v5520 = vadd.f32 %v1594, %v5519
    %v5521 = vpop.f32.mrb[0].mxu0
    %5522 = vdwg.mxu0
    %v5524 = vsel %vm1846, %v5326, 0
    %v5527 = vsel %vm1846, %v5385, 0
    %5529 = vmatprep.subr.mxu0 0.0
    %5530 = vmatpush1.xpose.msra.mxu0 %v5527
    %5531 = vmatprep.subr.mxu0 0.0
    %5532 = vmatpush1.xpose.msra.mxu0 0.0
    %5533 = vmatprep.subr.mxu0 0.0
    %5534 = vmatpush1.xpose.msra.mxu0 0.0
    %5535 = vmatprep.subr.mxu0 0.0
    %5536 = vmatpush1.xpose.msra.mxu0 0.0
    %5537 = vmatprep.subr.mxu0 0.0
    %5538 = vmatpush1.xpose.msra.mxu0 0.0
    %5539 = vmatprep.subr.mxu0 0.0
    %5540 = vmatpush1.xpose.msra.mxu0 0.0
    %5541 = vmatprep.subr.mxu0 0.0
    %5542 = vmatpush1.xpose.msra.mxu0 0.0
    %5543 = vmatprep.subr.mxu0 0.0
    %5544 = vmatpush1.xpose.msra.mxu0 0.0
    %5545 = vmatprep.subr.mxu0 0.0
    %5546 = vmatpush1.xpose.msra.mxu0 0.0
    %5547 = vmatprep.subr.mxu0 0.0
    %5548 = vmatpush1.xpose.msra.mxu0 0.0
    %5549 = vmatprep.subr.mxu0 0.0
    %5550 = vmatpush1.xpose.msra.mxu0 0.0
    %5551 = vmatprep.subr.mxu0 0.0
    %5552 = vmatpush1.xpose.msra.mxu0 0.0
    %5553 = vmatprep.subr.mxu0 0.0
    %5554 = vmatpush1.xpose.msra.mxu0 0.0
    %5555 = vmatprep.subr.mxu0 0.0
    %5556 = vmatpush1.xpose.msra.mxu0 0.0
    %5557 = vmatprep.subr.mxu0 0.0
    %5558 = vmatpush1.xpose.msra.mxu0 0.0
    %5559 = vmatprep.subr.mxu0 0.0
    %5560 = vmatpush1.xpose.msra.mxu0 0.0
    %5561 = vmatprep.subr.mxu0 0.0
    %5562 = vmatpush1.xpose.msra.mxu0 0.0
    %5563 = vmatprep.subr.mxu0 0.0
    %5564 = vmatpush1.xpose.msra.mxu0 0.0
    %5565 = vmatprep.subr.mxu0 0.0
    %5566 = vmatpush1.xpose.msra.mxu0 0.0
    %5567 = vmatprep.subr.mxu0 0.0
    %5568 = vmatpush1.xpose.msra.mxu0 0.0
    %5569 = vmatprep.subr.mxu0 0.0
    %5570 = vmatpush1.xpose.msra.mxu0 0.0
    %5571 = vmatprep.subr.mxu0 0.0
    %5572 = vmatpush1.xpose.msra.mxu0 0.0
    %5573 = vmatprep.subr.mxu0 0.0
    %5574 = vmatpush1.xpose.msra.mxu0 0.0
    %5575 = vmatprep.subr.mxu0 0.0
    %5576 = vmatpush1.xpose.msra.mxu0 0.0
    %5577 = vmatprep.subr.mxu0 0.0
    %5578 = vmatpush1.xpose.msra.mxu0 0.0
    %5579 = vmatprep.subr.mxu0 0.0
    %5580 = vmatpush1.xpose.msra.mxu0 0.0
    %5581 = vmatprep.subr.mxu0 0.0
    %5582 = vmatpush1.xpose.msra.mxu0 0.0
    %5583 = vmatprep.subr.mxu0 0.0
    %5584 = vmatpush1.xpose.msra.mxu0 0.0
    %5585 = vmatprep.subr.mxu0 0.0
    %5586 = vmatpush1.xpose.msra.mxu0 0.0
    %5587 = vmatprep.subr.mxu0 0.0
    %5588 = vmatpush1.xpose.msra.mxu0 0.0
    %5589 = vmatprep.subr.mxu0 0.0
    %5590 = vmatpush1.xpose.msra.mxu0 0.0
    %5591 = vmatprep.subr.mxu0 0.0
    %5592 = vmatpush1.xpose.msra.mxu0 0.0
    %5593 = vmatprep.mubr.f32.mxu0 0.0
    %5594 = vmatmul.mubr.f32.gmra.mrb[0].mxu0 %v5524
    %v5595 = vpop.f32.mrb[0].mxu0
    %v5596 = vadd.f32 %v1598, %v5595
    %v5597 = vpop.f32.mrb[0].mxu0
    %5598 = vdwg.mxu0
    %v5599 = vsel %vm1846, %v5520, -inf
    %5600 = vmax.xlane.f32.xlu0 %v5599
    %v5601 = vpop.xlane.xlu0 %5600
    %v5602 = vsel %vm1846, %v5596, -inf
    %5603 = vmax.xlane.f32.xlu0 %v5602
    %v5604 = vpop.xlane.xlu0 %5603
    %v5605 = vsub.f32 %v5520, %v5601
    %v5606 = vsub.f32 %v5596, %v5604
    %v5607 = vmul.f32 %v5605, 1.442695
    %v5608 = vpow.pop %v5607
    %v5609 = vmul.f32 %v5606, 1.442695
    %v5610 = vpow.pop %v5609
    %v5611 = vsel %vm1846, %v5608, 0.0
    %5612 = vadd.xlane.f32.xlu0 %v5611
    %v5613 = vpop.xlane.xlu0 %5612
    %v5614 = vsel %vm1846, %v5610, 0.0
    %5615 = vadd.xlane.f32.xlu0 %v5614
    %v5616 = vpop.xlane.xlu0 %5615
    %v5617 = vrcp.pop %v5613
    %v5618 = vrcp.pop %v5616
    %v5619 = vmul.f32 %v5608, %v5617
    %v5620 = vmul.f32 %v5610, %v5618
    %v5622 = vsel %vm1846, %v5619, 0
    %5624 = vmatprep.subr.mxu0 0.0
    %5625 = vmatpush1.msra.mxu0 %v5441
    %5626 = vmatprep.subr.mxu0 0.0
    %5627 = vmatpush1.msra.mxu0 0.0
    %5628 = vmatprep.subr.mxu0 0.0
    %5629 = vmatpush1.msra.mxu0 0.0
    %5630 = vmatprep.subr.mxu0 0.0
    %5631 = vmatpush1.msra.mxu0 0.0
    %5632 = vmatprep.subr.mxu0 0.0
    %5633 = vmatpush1.msra.mxu0 0.0
    %5634 = vmatprep.subr.mxu0 0.0
    %5635 = vmatpush1.msra.mxu0 0.0
    %5636 = vmatprep.subr.mxu0 0.0
    %5637 = vmatpush1.msra.mxu0 0.0
    %5638 = vmatprep.subr.mxu0 0.0
    %5639 = vmatpush1.msra.mxu0 0.0
    %5640 = vmatprep.subr.mxu0 0.0
    %5641 = vmatpush1.msra.mxu0 0.0
    %5642 = vmatprep.subr.mxu0 0.0
    %5643 = vmatpush1.msra.mxu0 0.0
    %5644 = vmatprep.subr.mxu0 0.0
    %5645 = vmatpush1.msra.mxu0 0.0
    %5646 = vmatprep.subr.mxu0 0.0
    %5647 = vmatpush1.msra.mxu0 0.0
    %5648 = vmatprep.subr.mxu0 0.0
    %5649 = vmatpush1.msra.mxu0 0.0
    %5650 = vmatprep.subr.mxu0 0.0
    %5651 = vmatpush1.msra.mxu0 0.0
    %5652 = vmatprep.subr.mxu0 0.0
    %5653 = vmatpush1.msra.mxu0 0.0
    %5654 = vmatprep.subr.mxu0 0.0
    %5655 = vmatpush1.msra.mxu0 0.0
    %5656 = vmatprep.subr.mxu0 0.0
    %5657 = vmatpush1.msra.mxu0 0.0
    %5658 = vmatprep.subr.mxu0 0.0
    %5659 = vmatpush1.msra.mxu0 0.0
    %5660 = vmatprep.subr.mxu0 0.0
    %5661 = vmatpush1.msra.mxu0 0.0
    %5662 = vmatprep.subr.mxu0 0.0
    %5663 = vmatpush1.msra.mxu0 0.0
    %5664 = vmatprep.subr.mxu0 0.0
    %5665 = vmatpush1.msra.mxu0 0.0
    %5666 = vmatprep.subr.mxu0 0.0
    %5667 = vmatpush1.msra.mxu0 0.0
    %5668 = vmatprep.subr.mxu0 0.0
    %5669 = vmatpush1.msra.mxu0 0.0
    %5670 = vmatprep.subr.mxu0 0.0
    %5671 = vmatpush1.msra.mxu0 0.0
    %5672 = vmatprep.subr.mxu0 0.0
    %5673 = vmatpush1.msra.mxu0 0.0
    %5674 = vmatprep.subr.mxu0 0.0
    %5675 = vmatpush1.msra.mxu0 0.0
    %5676 = vmatprep.subr.mxu0 0.0
    %5677 = vmatpush1.msra.mxu0 0.0
    %5678 = vmatprep.subr.mxu0 0.0
    %5679 = vmatpush1.msra.mxu0 0.0
    %5680 = vmatprep.subr.mxu0 0.0
    %5681 = vmatpush1.msra.mxu0 0.0
    %5682 = vmatprep.subr.mxu0 0.0
    %5683 = vmatpush1.msra.mxu0 0.0
    %5684 = vmatprep.subr.mxu0 0.0
    %5685 = vmatpush1.msra.mxu0 0.0
    %5686 = vmatprep.subr.mxu0 0.0
    %5687 = vmatpush1.msra.mxu0 0.0
    %5688 = vmatprep.mubr.f32.mxu0 0.0
    %5689 = vmatmul.mubr.f32.gmra.mrb[0].mxu0 %v5622
    %v5690 = vpop.f32.mrb[0].mxu0
    %v5691 = vadd.f32 0.0, %v5690
    %v5692 = vpop.f32.mrb[0].mxu0
    %5693 = vdwg.mxu0
    %v5695 = vsel %vm1846, %v5620, 0
    %5697 = vmatprep.subr.mxu0 0.0
    %5698 = vmatpush1.msra.mxu0 %v5444
    %5699 = vmatprep.subr.mxu0 0.0
    %5700 = vmatpush1.msra.mxu0 0.0
    %5701 = vmatprep.subr.mxu0 0.0
    %5702 = vmatpush1.msra.mxu0 0.0
    %5703 = vmatprep.subr.mxu0 0.0
    %5704 = vmatpush1.msra.mxu0 0.0
    %5705 = vmatprep.subr.mxu0 0.0
    %5706 = vmatpush1.msra.mxu0 0.0
    %5707 = vmatprep.subr.mxu0 0.0
    %5708 = vmatpush1.msra.mxu0 0.0
    %5709 = vmatprep.subr.mxu0 0.0
    %5710 = vmatpush1.msra.mxu0 0.0
    %5711 = vmatprep.subr.mxu0 0.0
    %5712 = vmatpush1.msra.mxu0 0.0
    %5713 = vmatprep.subr.mxu0 0.0
    %5714 = vmatpush1.msra.mxu0 0.0
    %5715 = vmatprep.subr.mxu0 0.0
    %5716 = vmatpush1.msra.mxu0 0.0
    %5717 = vmatprep.subr.mxu0 0.0
    %5718 = vmatpush1.msra.mxu0 0.0
    %5719 = vmatprep.subr.mxu0 0.0
    %5720 = vmatpush1.msra.mxu0 0.0
    %5721 = vmatprep.subr.mxu0 0.0
    %5722 = vmatpush1.msra.mxu0 0.0
    %5723 = vmatprep.subr.mxu0 0.0
    %5724 = vmatpush1.msra.mxu0 0.0
    %5725 = vmatprep.subr.mxu0 0.0
    %5726 = vmatpush1.msra.mxu0 0.0
    %5727 = vmatprep.subr.mxu0 0.0
    %5728 = vmatpush1.msra.mxu0 0.0
    %5729 = vmatprep.subr.mxu0 0.0
    %5730 = vmatpush1.msra.mxu0 0.0
    %5731 = vmatprep.subr.mxu0 0.0
    %5732 = vmatpush1.msra.mxu0 0.0
    %5733 = vmatprep.subr.mxu0 0.0
    %5734 = vmatpush1.msra.mxu0 0.0
    %5735 = vmatprep.subr.mxu0 0.0
    %5736 = vmatpush1.msra.mxu0 0.0
    %5737 = vmatprep.subr.mxu0 0.0
    %5738 = vmatpush1.msra.mxu0 0.0
    %5739 = vmatprep.subr.mxu0 0.0
    %5740 = vmatpush1.msra.mxu0 0.0
    %5741 = vmatprep.subr.mxu0 0.0
    %5742 = vmatpush1.msra.mxu0 0.0
    %5743 = vmatprep.subr.mxu0 0.0
    %5744 = vmatpush1.msra.mxu0 0.0
    %5745 = vmatprep.subr.mxu0 0.0
    %5746 = vmatpush1.msra.mxu0 0.0
    %5747 = vmatprep.subr.mxu0 0.0
    %5748 = vmatpush1.msra.mxu0 0.0
    %5749 = vmatprep.subr.mxu0 0.0
    %5750 = vmatpush1.msra.mxu0 0.0
    %5751 = vmatprep.subr.mxu0 0.0
    %5752 = vmatpush1.msra.mxu0 0.0
    %5753 = vmatprep.subr.mxu0 0.0
    %5754 = vmatpush1.msra.mxu0 0.0
    %5755 = vmatprep.subr.mxu0 0.0
    %5756 = vmatpush1.msra.mxu0 0.0
    %5757 = vmatprep.subr.mxu0 0.0
    %5758 = vmatpush1.msra.mxu0 0.0
    %5759 = vmatprep.subr.mxu0 0.0
    %5760 = vmatpush1.msra.mxu0 0.0
    %5761 = vmatprep.mubr.f32.mxu0 0.0
    %5762 = vmatmul.mubr.f32.gmra.mrb[0].mxu0 %v5695
    %v5763 = vpop.f32.mrb[0].mxu0
    %v5764 = vadd.f32 0.0, %v5763
    %v5765 = vpop.f32.mrb[0].mxu0
    %5766 = vdwg.mxu0
    %v5767 = vpack.c.bf16 %v5764, %v5691
    %v5769 = vlaneseq
    %v5770 = vshrl.u32 %v5769, 7
    %v5771 = vsub.s32 0, %v5770
    %v5772 = vrot.slane %v4208, %v5771
    %v5778 = vunpack.c.l.b16 %v4166
    %v5779 = vunpack.c.l.b16 %v4167
    %v5780 = vunpack.c.l.b16 %v4168
    %v5781 = vunpack.c.l.b16 %v4169
    %v5782 = vpack.c.b16 %v5779, %v5778
    %v5783 = vpack.c.b16 %v5781, %v5780
    %5786 = vmatprep.subr.bf16.mxu0 0
    %5787 = vmatpush1.bf16.msra.mxu0 %v5782
    %5788 = vmatprep.subr.bf16.mxu0 0
    %5789 = vmatpush1.bf16.msra.mxu0 %v5783
    %5790 = vmatprep.subr.bf16.mxu0 0
    %5791 = vmatpush1.bf16.msra.mxu0 0
    %5792 = vmatprep.subr.bf16.mxu0 0
    %5793 = vmatpush1.bf16.msra.mxu0 0
    %5794 = vmatprep.subr.bf16.mxu0 0
    %5795 = vmatpush1.bf16.msra.mxu0 0
    %5796 = vmatprep.subr.bf16.mxu0 0
    %5797 = vmatpush1.bf16.msra.mxu0 0
    %5798 = vmatprep.subr.bf16.mxu0 0
    %5799 = vmatpush1.bf16.msra.mxu0 0
    %5800 = vmatprep.subr.bf16.mxu0 0
    %5801 = vmatpush1.bf16.msra.mxu0 0
    %5802 = vmatprep.subr.bf16.mxu0 0
    %5803 = vmatpush1.bf16.msra.mxu0 0
    %5804 = vmatprep.subr.bf16.mxu0 0
    %5805 = vmatpush1.bf16.msra.mxu0 0
    %5806 = vmatprep.subr.bf16.mxu0 0
    %5807 = vmatpush1.bf16.msra.mxu0 0
    %5808 = vmatprep.subr.bf16.mxu0 0
    %5809 = vmatpush1.bf16.msra.mxu0 0
    %5810 = vmatprep.subr.bf16.mxu0 0
    %5811 = vmatpush1.bf16.msra.mxu0 0
    %5812 = vmatprep.subr.bf16.mxu0 0
    %5813 = vmatpush1.bf16.msra.mxu0 0
    %5814 = vmatprep.subr.bf16.mxu0 0
    %5815 = vmatpush1.bf16.msra.mxu0 0
    %5816 = vmatprep.subr.bf16.mxu0 0
    %5817 = vmatpush1.bf16.msra.mxu0 0
    %5818 = vmatprep.mubr.bf16.mxu0 0
    %5819 = vmatmul.mubr.bf16.gmra.mrb[0].mxu0 %v4243
    %v5820 = vpop.f32.mrb[0].mxu0
    %v5821 = vadd.f32 %v5772, %v5820
    %v5822 = vpop.f32.mrb[0].mxu0
    %v5823 = vpop.f32.mrb[0].mxu0
    %v5824 = vadd.f32 %v5772, %v5823
    %v5825 = vpop.f32.mrb[0].mxu0
    %5826 = vdwg.mxu0
    %v5828 = vlaneseq
    %v5829 = vshrl.u32 %v5828, 7
    %v5830 = vsub.s32 0, %v5829
    %v5831 = vrot.slane %v4213, %v5830
    %v5837 = vunpack.c.l.b16 %v4183
    %v5838 = vunpack.c.l.b16 %v4184
    %v5839 = vunpack.c.l.b16 %v4185
    %v5840 = vunpack.c.l.b16 %v4186
    %v5841 = vpack.c.b16 %v5838, %v5837
    %v5842 = vpack.c.b16 %v5840, %v5839
    %5845 = vmatprep.subr.bf16.mxu0 0
    %5846 = vmatpush1.bf16.msra.mxu0 %v5841
    %5847 = vmatprep.subr.bf16.mxu0 0
    %5848 = vmatpush1.bf16.msra.mxu0 %v5842
    %5849 = vmatprep.subr.bf16.mxu0 0
    %5850 = vmatpush1.bf16.msra.mxu0 0
    %5851 = vmatprep.subr.bf16.mxu0 0
    %5852 = vmatpush1.bf16.msra.mxu0 0
    %5853 = vmatprep.subr.bf16.mxu0 0
    %5854 = vmatpush1.bf16.msra.mxu0 0
    %5855 = vmatprep.subr.bf16.mxu0 0
    %5856 = vmatpush1.bf16.msra.mxu0 0
    %5857 = vmatprep.subr.bf16.mxu0 0
    %5858 = vmatpush1.bf16.msra.mxu0 0
    %5859 = vmatprep.subr.bf16.mxu0 0
    %5860 = vmatpush1.bf16.msra.mxu0 0
    %5861 = vmatprep.subr.bf16.mxu0 0
    %5862 = vmatpush1.bf16.msra.mxu0 0
    %5863 = vmatprep.subr.bf16.mxu0 0
    %5864 = vmatpush1.bf16.msra.mxu0 0
    %5865 = vmatprep.subr.bf16.mxu0 0
    %5866 = vmatpush1.bf16.msra.mxu0 0
    %5867 = vmatprep.subr.bf16.mxu0 0
    %5868 = vmatpush1.bf16.msra.mxu0 0
    %5869 = vmatprep.subr.bf16.mxu0 0
    %5870 = vmatpush1.bf16.msra.mxu0 0
    %5871 = vmatprep.subr.bf16.mxu0 0
    %5872 = vmatpush1.bf16.msra.mxu0 0
    %5873 = vmatprep.subr.bf16.mxu0 0
    %5874 = vmatpush1.bf16.msra.mxu0 0
    %5875 = vmatprep.subr.bf16.mxu0 0
    %5876 = vmatpush1.bf16.msra.mxu0 0
    %5877 = vmatprep.mubr.bf16.mxu0 0
    %5878 = vmatmul.mubr.bf16.gmra.mrb[0].mxu0 %v4243
    %v5879 = vpop.f32.mrb[0].mxu0
    %v5880 = vadd.f32 %v5831, %v5879
    %v5881 = vpop.f32.mrb[0].mxu0
    %v5882 = vpop.f32.mrb[0].mxu0
    %v5883 = vadd.f32 %v5831, %v5882
    %v5884 = vpop.f32.mrb[0].mxu0
    %5885 = vdwg.mxu0
    %v5887 = vlaneseq
    %v5888 = vshrl.u32 %v5887, 7
    %v5889 = vsub.s32 0, %v5888
    %v5890 = vrot.slane %v4218, %v5889
    %v5896 = vunpack.c.l.b16 %v4200
    %v5897 = vunpack.c.l.b16 %v4201
    %v5898 = vunpack.c.l.b16 %v4202
    %v5899 = vunpack.c.l.b16 %v4203
    %v5900 = vpack.c.b16 %v5897, %v5896
    %v5901 = vpack.c.b16 %v5899, %v5898
    %5904 = vmatprep.subr.bf16.mxu0 0
    %5905 = vmatpush1.bf16.msra.mxu0 %v5900
    %5906 = vmatprep.subr.bf16.mxu0 0
    %5907 = vmatpush1.bf16.msra.mxu0 %v5901
    %5908 = vmatprep.subr.bf16.mxu0 0
    %5909 = vmatpush1.bf16.msra.mxu0 0
    %5910 = vmatprep.subr.bf16.mxu0 0
    %5911 = vmatpush1.bf16.msra.mxu0 0
    %5912 = vmatprep.subr.bf16.mxu0 0
    %5913 = vmatpush1.bf16.msra.mxu0 0
    %5914 = vmatprep.subr.bf16.mxu0 0
    %5915 = vmatpush1.bf16.msra.mxu0 0
    %5916 = vmatprep.subr.bf16.mxu0 0
    %5917 = vmatpush1.bf16.msra.mxu0 0
    %5918 = vmatprep.subr.bf16.mxu0 0
    %5919 = vmatpush1.bf16.msra.mxu0 0
    %5920 = vmatprep.subr.bf16.mxu0 0
    %5921 = vmatpush1.bf16.msra.mxu0 0
    %5922 = vmatprep.subr.bf16.mxu0 0
    %5923 = vmatpush1.bf16.msra.mxu0 0
    %5924 = vmatprep.subr.bf16.mxu0 0
    %5925 = vmatpush1.bf16.msra.mxu0 0
    %5926 = vmatprep.subr.bf16.mxu0 0
    %5927 = vmatpush1.bf16.msra.mxu0 0
    %5928 = vmatprep.subr.bf16.mxu0 0
    %5929 = vmatpush1.bf16.msra.mxu0 0
    %5930 = vmatprep.subr.bf16.mxu0 0
    %5931 = vmatpush1.bf16.msra.mxu0 0
    %5932 = vmatprep.subr.bf16.mxu0 0
    %5933 = vmatpush1.bf16.msra.mxu0 0
    %5934 = vmatprep.subr.bf16.mxu0 0
    %5935 = vmatpush1.bf16.msra.mxu0 0
    %5936 = vmatprep.mubr.bf16.mxu0 0
    %5937 = vmatmul.mubr.bf16.gmra.mrb[0].mxu0 %v4243
    %v5938 = vpop.f32.mrb[0].mxu0
    %v5939 = vadd.f32 %v5890, %v5938
    %v5940 = vpop.f32.mrb[0].mxu0
    %v5941 = vpop.f32.mrb[0].mxu0
    %v5942 = vadd.f32 %v5890, %v5941
    %v5943 = vpop.f32.mrb[0].mxu0
    %5944 = vdwg.mxu0
    %v5946 = vsel %vm1846, %v5821, 0
    %v5949 = vsel %vm1846, %v5880, 0
    %5951 = vmatprep.subr.mxu0 0.0
    %5952 = vmatpush1.xpose.msra.mxu0 %v5949
    %5953 = vmatprep.subr.mxu0 0.0
    %5954 = vmatpush1.xpose.msra.mxu0 0.0
    %5955 = vmatprep.subr.mxu0 0.0
    %5956 = vmatpush1.xpose.msra.mxu0 0.0
    %5957 = vmatprep.subr.mxu0 0.0
    %5958 = vmatpush1.xpose.msra.mxu0 0.0
    %5959 = vmatprep.subr.mxu0 0.0
    %5960 = vmatpush1.xpose.msra.mxu0 0.0
    %5961 = vmatprep.subr.mxu0 0.0
    %5962 = vmatpush1.xpose.msra.mxu0 0.0
    %5963 = vmatprep.subr.mxu0 0.0
    %5964 = vmatpush1.xpose.msra.mxu0 0.0
    %5965 = vmatprep.subr.mxu0 0.0
    %5966 = vmatpush1.xpose.msra.mxu0 0.0
    %5967 = vmatprep.subr.mxu0 0.0
    %5968 = vmatpush1.xpose.msra.mxu0 0.0
    %5969 = vmatprep.subr.mxu0 0.0
    %5970 = vmatpush1.xpose.msra.mxu0 0.0
    %5971 = vmatprep.subr.mxu0 0.0
    %5972 = vmatpush1.xpose.msra.mxu0 0.0
    %5973 = vmatprep.subr.mxu0 0.0
    %5974 = vmatpush1.xpose.msra.mxu0 0.0
    %5975 = vmatprep.subr.mxu0 0.0
    %5976 = vmatpush1.xpose.msra.mxu0 0.0
    %5977 = vmatprep.subr.mxu0 0.0
    %5978 = vmatpush1.xpose.msra.mxu0 0.0
    %5979 = vmatprep.subr.mxu0 0.0
    %5980 = vmatpush1.xpose.msra.mxu0 0.0
    %5981 = vmatprep.subr.mxu0 0.0
    %5982 = vmatpush1.xpose.msra.mxu0 0.0
    %5983 = vmatprep.subr.mxu0 0.0
    %5984 = vmatpush1.xpose.msra.mxu0 0.0
    %5985 = vmatprep.subr.mxu0 0.0
    %5986 = vmatpush1.xpose.msra.mxu0 0.0
    %5987 = vmatprep.subr.mxu0 0.0
    %5988 = vmatpush1.xpose.msra.mxu0 0.0
    %5989 = vmatprep.subr.mxu0 0.0
    %5990 = vmatpush1.xpose.msra.mxu0 0.0
    %5991 = vmatprep.subr.mxu0 0.0
    %5992 = vmatpush1.xpose.msra.mxu0 0.0
    %5993 = vmatprep.subr.mxu0 0.0
    %5994 = vmatpush1.xpose.msra.mxu0 0.0
    %5995 = vmatprep.subr.mxu0 0.0
    %5996 = vmatpush1.xpose.msra.mxu0 0.0
    %5997 = vmatprep.subr.mxu0 0.0
    %5998 = vmatpush1.xpose.msra.mxu0 0.0
    %5999 = vmatprep.subr.mxu0 0.0
    %6000 = vmatpush1.xpose.msra.mxu0 0.0
    %6001 = vmatprep.subr.mxu0 0.0
    %6002 = vmatpush1.xpose.msra.mxu0 0.0
    %6003 = vmatprep.subr.mxu0 0.0
    %6004 = vmatpush1.xpose.msra.mxu0 0.0
    %6005 = vmatprep.subr.mxu0 0.0
    %6006 = vmatpush1.xpose.msra.mxu0 0.0
    %6007 = vmatprep.subr.mxu0 0.0
    %6008 = vmatpush1.xpose.msra.mxu0 0.0
    %6009 = vmatprep.subr.mxu0 0.0
    %6010 = vmatpush1.xpose.msra.mxu0 0.0
    %6011 = vmatprep.subr.mxu0 0.0
    %6012 = vmatpush1.xpose.msra.mxu0 0.0
    %6013 = vmatprep.subr.mxu0 0.0
    %6014 = vmatpush1.xpose.msra.mxu0 0.0
    %6015 = vmatprep.mubr.f32.mxu0 0.0
    %6016 = vmatmul.mubr.f32.gmra.mrb[0].mxu0 %v5946
    %v6017 = vpop.f32.mrb[0].mxu0
    %v6018 = vadd.f32 %v1594, %v6017
    %v6019 = vpop.f32.mrb[0].mxu0
    %6020 = vdwg.mxu0
    %v6022 = vsel %vm1846, %v5824, 0
    %v6025 = vsel %vm1846, %v5883, 0
    %6027 = vmatprep.subr.mxu0 0.0
    %6028 = vmatpush1.xpose.msra.mxu0 %v6025
    %6029 = vmatprep.subr.mxu0 0.0
    %6030 = vmatpush1.xpose.msra.mxu0 0.0
    %6031 = vmatprep.subr.mxu0 0.0
    %6032 = vmatpush1.xpose.msra.mxu0 0.0
    %6033 = vmatprep.subr.mxu0 0.0
    %6034 = vmatpush1.xpose.msra.mxu0 0.0
    %6035 = vmatprep.subr.mxu0 0.0
    %6036 = vmatpush1.xpose.msra.mxu0 0.0
    %6037 = vmatprep.subr.mxu0 0.0
    %6038 = vmatpush1.xpose.msra.mxu0 0.0
    %6039 = vmatprep.subr.mxu0 0.0
    %6040 = vmatpush1.xpose.msra.mxu0 0.0
    %6041 = vmatprep.subr.mxu0 0.0
    %6042 = vmatpush1.xpose.msra.mxu0 0.0
    %6043 = vmatprep.subr.mxu0 0.0
    %6044 = vmatpush1.xpose.msra.mxu0 0.0
    %6045 = vmatprep.subr.mxu0 0.0
    %6046 = vmatpush1.xpose.msra.mxu0 0.0
    %6047 = vmatprep.subr.mxu0 0.0
    %6048 = vmatpush1.xpose.msra.mxu0 0.0
    %6049 = vmatprep.subr.mxu0 0.0
    %6050 = vmatpush1.xpose.msra.mxu0 0.0
    %6051 = vmatprep.subr.mxu0 0.0
    %6052 = vmatpush1.xpose.msra.mxu0 0.0
    %6053 = vmatprep.subr.mxu0 0.0
    %6054 = vmatpush1.xpose.msra.mxu0 0.0
    %6055 = vmatprep.subr.mxu0 0.0
    %6056 = vmatpush1.xpose.msra.mxu0 0.0
    %6057 = vmatprep.subr.mxu0 0.0
    %6058 = vmatpush1.xpose.msra.mxu0 0.0
    %6059 = vmatprep.subr.mxu0 0.0
    %6060 = vmatpush1.xpose.msra.mxu0 0.0
    %6061 = vmatprep.subr.mxu0 0.0
    %6062 = vmatpush1.xpose.msra.mxu0 0.0
    %6063 = vmatprep.subr.mxu0 0.0
    %6064 = vmatpush1.xpose.msra.mxu0 0.0
    %6065 = vmatprep.subr.mxu0 0.0
    %6066 = vmatpush1.xpose.msra.mxu0 0.0
    %6067 = vmatprep.subr.mxu0 0.0
    %6068 = vmatpush1.xpose.msra.mxu0 0.0
    %6069 = vmatprep.subr.mxu0 0.0
    %6070 = vmatpush1.xpose.msra.mxu0 0.0
    %6071 = vmatprep.subr.mxu0 0.0
    %6072 = vmatpush1.xpose.msra.mxu0 0.0
    %6073 = vmatprep.subr.mxu0 0.0
    %6074 = vmatpush1.xpose.msra.mxu0 0.0
    %6075 = vmatprep.subr.mxu0 0.0
    %6076 = vmatpush1.xpose.msra.mxu0 0.0
    %6077 = vmatprep.subr.mxu0 0.0
    %6078 = vmatpush1.xpose.msra.mxu0 0.0
    %6079 = vmatprep.subr.mxu0 0.0
    %6080 = vmatpush1.xpose.msra.mxu0 0.0
    %6081 = vmatprep.subr.mxu0 0.0
    %6082 = vmatpush1.xpose.msra.mxu0 0.0
    %6083 = vmatprep.subr.mxu0 0.0
    %6084 = vmatpush1.xpose.msra.mxu0 0.0
    %6085 = vmatprep.subr.mxu0 0.0
    %6086 = vmatpush1.xpose.msra.mxu0 0.0
    %6087 = vmatprep.subr.mxu0 0.0
    %6088 = vmatpush1.xpose.msra.mxu0 0.0
    %6089 = vmatprep.subr.mxu0 0.0
    %6090 = vmatpush1.xpose.msra.mxu0 0.0
    %6091 = vmatprep.mubr.f32.mxu0 0.0
    %6092 = vmatmul.mubr.f32.gmra.mrb[0].mxu0 %v6022
    %v6093 = vpop.f32.mrb[0].mxu0
    %v6094 = vadd.f32 %v1598, %v6093
    %v6095 = vpop.f32.mrb[0].mxu0
    %6096 = vdwg.mxu0
    %v6097 = vsel %vm1846, %v6018, -inf
    %6098 = vmax.xlane.f32.xlu0 %v6097
    %v6099 = vpop.xlane.xlu0 %6098
    %v6100 = vsel %vm1846, %v6094, -inf
    %6101 = vmax.xlane.f32.xlu0 %v6100
    %v6102 = vpop.xlane.xlu0 %6101
    %v6103 = vsub.f32 %v6018, %v6099
    %v6104 = vsub.f32 %v6094, %v6102
    %v6105 = vmul.f32 %v6103, 1.442695
    %v6106 = vpow.pop %v6105
    %v6107 = vmul.f32 %v6104, 1.442695
    %v6108 = vpow.pop %v6107
    %v6109 = vsel %vm1846, %v6106, 0.0
    %6110 = vadd.xlane.f32.xlu0 %v6109
    %v6111 = vpop.xlane.xlu0 %6110
    %v6112 = vsel %vm1846, %v6108, 0.0
    %6113 = vadd.xlane.f32.xlu0 %v6112
    %v6114 = vpop.xlane.xlu0 %6113
    %v6115 = vrcp.pop %v6111
    %v6116 = vrcp.pop %v6114
    %v6117 = vmul.f32 %v6106, %v6115
    %v6118 = vmul.f32 %v6108, %v6116
    %v6120 = vsel %vm1846, %v6117, 0
    %6122 = vmatprep.subr.mxu0 0.0
    %6123 = vmatpush1.msra.mxu0 %v5939
    %6124 = vmatprep.subr.mxu0 0.0
    %6125 = vmatpush1.msra.mxu0 0.0
    %6126 = vmatprep.subr.mxu0 0.0
    %6127 = vmatpush1.msra.mxu0 0.0
    %6128 = vmatprep.subr.mxu0 0.0
    %6129 = vmatpush1.msra.mxu0 0.0
    %6130 = vmatprep.subr.mxu0 0.0
    %6131 = vmatpush1.msra.mxu0 0.0
    %6132 = vmatprep.subr.mxu0 0.0
    %6133 = vmatpush1.msra.mxu0 0.0
    %6134 = vmatprep.subr.mxu0 0.0
    %6135 = vmatpush1.msra.mxu0 0.0
    %6136 = vmatprep.subr.mxu0 0.0
    %6137 = vmatpush1.msra.mxu0 0.0
    %6138 = vmatprep.subr.mxu0 0.0
    %6139 = vmatpush1.msra.mxu0 0.0
    %6140 = vmatprep.subr.mxu0 0.0
    %6141 = vmatpush1.msra.mxu0 0.0
    %6142 = vmatprep.subr.mxu0 0.0
    %6143 = vmatpush1.msra.mxu0 0.0
    %6144 = vmatprep.subr.mxu0 0.0
    %6145 = vmatpush1.msra.mxu0 0.0
    %6146 = vmatprep.subr.mxu0 0.0
    %6147 = vmatpush1.msra.mxu0 0.0
    %6148 = vmatprep.subr.mxu0 0.0
    %6149 = vmatpush1.msra.mxu0 0.0
    %6150 = vmatprep.subr.mxu0 0.0
    %6151 = vmatpush1.msra.mxu0 0.0
    %6152 = vmatprep.subr.mxu0 0.0
    %6153 = vmatpush1.msra.mxu0 0.0
    %6154 = vmatprep.subr.mxu0 0.0
    %6155 = vmatpush1.msra.mxu0 0.0
    %6156 = vmatprep.subr.mxu0 0.0
    %6157 = vmatpush1.msra.mxu0 0.0
    %6158 = vmatprep.subr.mxu0 0.0
    %6159 = vmatpush1.msra.mxu0 0.0
    %6160 = vmatprep.subr.mxu0 0.0
    %6161 = vmatpush1.msra.mxu0 0.0
    %6162 = vmatprep.subr.mxu0 0.0
    %6163 = vmatpush1.msra.mxu0 0.0
    %6164 = vmatprep.subr.mxu0 0.0
    %6165 = vmatpush1.msra.mxu0 0.0
    %6166 = vmatprep.subr.mxu0 0.0
    %6167 = vmatpush1.msra.mxu0 0.0
    %6168 = vmatprep.subr.mxu0 0.0
    %6169 = vmatpush1.msra.mxu0 0.0
    %6170 = vmatprep.subr.mxu0 0.0
    %6171 = vmatpush1.msra.mxu0 0.0
    %6172 = vmatprep.subr.mxu0 0.0
    %6173 = vmatpush1.msra.mxu0 0.0
    %6174 = vmatprep.subr.mxu0 0.0
    %6175 = vmatpush1.msra.mxu0 0.0
    %6176 = vmatprep.subr.mxu0 0.0
    %6177 = vmatpush1.msra.mxu0 0.0
    %6178 = vmatprep.subr.mxu0 0.0
    %6179 = vmatpush1.msra.mxu0 0.0
    %6180 = vmatprep.subr.mxu0 0.0
    %6181 = vmatpush1.msra.mxu0 0.0
    %6182 = vmatprep.subr.mxu0 0.0
    %6183 = vmatpush1.msra.mxu0 0.0
    %6184 = vmatprep.subr.mxu0 0.0
    %6185 = vmatpush1.msra.mxu0 0.0
    %6186 = vmatprep.mubr.f32.mxu0 0.0
    %6187 = vmatmul.mubr.f32.gmra.mrb[0].mxu0 %v6120
    %v6188 = vpop.f32.mrb[0].mxu0
    %v6189 = vadd.f32 0.0, %v6188
    %v6190 = vpop.f32.mrb[0].mxu0
    %6191 = vdwg.mxu0
    %v6193 = vsel %vm1846, %v6118, 0
    %6195 = vmatprep.subr.mxu0 0.0
    %6196 = vmatpush1.msra.mxu0 %v5942
    %6197 = vmatprep.subr.mxu0 0.0
    %6198 = vmatpush1.msra.mxu0 0.0
    %6199 = vmatprep.subr.mxu0 0.0
    %6200 = vmatpush1.msra.mxu0 0.0
    %6201 = vmatprep.subr.mxu0 0.0
    %6202 = vmatpush1.msra.mxu0 0.0
    %6203 = vmatprep.subr.mxu0 0.0
    %6204 = vmatpush1.msra.mxu0 0.0
    %6205 = vmatprep.subr.mxu0 0.0
    %6206 = vmatpush1.msra.mxu0 0.0
    %6207 = vmatprep.subr.mxu0 0.0
    %6208 = vmatpush1.msra.mxu0 0.0
    %6209 = vmatprep.subr.mxu0 0.0
    %6210 = vmatpush1.msra.mxu0 0.0
    %6211 = vmatprep.subr.mxu0 0.0
    %6212 = vmatpush1.msra.mxu0 0.0
    %6213 = vmatprep.subr.mxu0 0.0
    %6214 = vmatpush1.msra.mxu0 0.0
    %6215 = vmatprep.subr.mxu0 0.0
    %6216 = vmatpush1.msra.mxu0 0.0
    %6217 = vmatprep.subr.mxu0 0.0
    %6218 = vmatpush1.msra.mxu0 0.0
    %6219 = vmatprep.subr.mxu0 0.0
    %6220 = vmatpush1.msra.mxu0 0.0
    %6221 = vmatprep.subr.mxu0 0.0
    %6222 = vmatpush1.msra.mxu0 0.0
    %6223 = vmatprep.subr.mxu0 0.0
    %6224 = vmatpush1.msra.mxu0 0.0
    %6225 = vmatprep.subr.mxu0 0.0
    %6226 = vmatpush1.msra.mxu0 0.0
    %6227 = vmatprep.subr.mxu0 0.0
    %6228 = vmatpush1.msra.mxu0 0.0
    %6229 = vmatprep.subr.mxu0 0.0
    %6230 = vmatpush1.msra.mxu0 0.0
    %6231 = vmatprep.subr.mxu0 0.0
    %6232 = vmatpush1.msra.mxu0 0.0
    %6233 = vmatprep.subr.mxu0 0.0
    %6234 = vmatpush1.msra.mxu0 0.0
    %6235 = vmatprep.subr.mxu0 0.0
    %6236 = vmatpush1.msra.mxu0 0.0
    %6237 = vmatprep.subr.mxu0 0.0
    %6238 = vmatpush1.msra.mxu0 0.0
    %6239 = vmatprep.subr.mxu0 0.0
    %6240 = vmatpush1.msra.mxu0 0.0
    %6241 = vmatprep.subr.mxu0 0.0
    %6242 = vmatpush1.msra.mxu0 0.0
    %6243 = vmatprep.subr.mxu0 0.0
    %6244 = vmatpush1.msra.mxu0 0.0
    %6245 = vmatprep.subr.mxu0 0.0
    %6246 = vmatpush1.msra.mxu0 0.0
    %6247 = vmatprep.subr.mxu0 0.0
    %6248 = vmatpush1.msra.mxu0 0.0
    %6249 = vmatprep.subr.mxu0 0.0
    %6250 = vmatpush1.msra.mxu0 0.0
    %6251 = vmatprep.subr.mxu0 0.0
    %6252 = vmatpush1.msra.mxu0 0.0
    %6253 = vmatprep.subr.mxu0 0.0
    %6254 = vmatpush1.msra.mxu0 0.0
    %6255 = vmatprep.subr.mxu0 0.0
    %6256 = vmatpush1.msra.mxu0 0.0
    %6257 = vmatprep.subr.mxu0 0.0
    %6258 = vmatpush1.msra.mxu0 0.0
    %6259 = vmatprep.mubr.f32.mxu0 0.0
    %6260 = vmatmul.mubr.f32.gmra.mrb[0].mxu0 %v6193
    %v6261 = vpop.f32.mrb[0].mxu0
    %v6262 = vadd.f32 0.0, %v6261
    %v6263 = vpop.f32.mrb[0].mxu0
    %6264 = vdwg.mxu0
    %v6265 = vpack.c.bf16 %v6262, %v6189
    %v6267 = vsel %vm1846, %v6265, 0
    %v6270 = vsel %vm1436, %v4223, 0
    %6272 = vmatprep.subr.bf16.mxu0 0
    %6273 = vmatpush1.bf16.msra.mxu0 %v6270
    %6274 = vmatprep.subr.bf16.mxu0 0
    %6275 = vmatpush1.bf16.msra.mxu0 0
    %6276 = vmatprep.subr.bf16.mxu0 0
    %6277 = vmatpush1.bf16.msra.mxu0 0
    %6278 = vmatprep.subr.bf16.mxu0 0
    %6279 = vmatpush1.bf16.msra.mxu0 0
    %6280 = vmatprep.subr.bf16.mxu0 0
    %6281 = vmatpush1.bf16.msra.mxu0 0
    %6282 = vmatprep.subr.bf16.mxu0 0
    %6283 = vmatpush1.bf16.msra.mxu0 0
    %6284 = vmatprep.subr.bf16.mxu0 0
    %6285 = vmatpush1.bf16.msra.mxu0 0
    %6286 = vmatprep.subr.bf16.mxu0 0
    %6287 = vmatpush1.bf16.msra.mxu0 0
    %6288 = vmatprep.subr.bf16.mxu0 0
    %6289 = vmatpush1.bf16.msra.mxu0 0
    %6290 = vmatprep.subr.bf16.mxu0 0
    %6291 = vmatpush1.bf16.msra.mxu0 0
    %6292 = vmatprep.subr.bf16.mxu0 0
    %6293 = vmatpush1.bf16.msra.mxu0 0
    %6294 = vmatprep.subr.bf16.mxu0 0
    %6295 = vmatpush1.bf16.msra.mxu0 0
    %6296 = vmatprep.subr.bf16.mxu0 0
    %6297 = vmatpush1.bf16.msra.mxu0 0
    %6298 = vmatprep.subr.bf16.mxu0 0
    %6299 = vmatpush1.bf16.msra.mxu0 0
    %6300 = vmatprep.subr.bf16.mxu0 0
    %6301 = vmatpush1.bf16.msra.mxu0 0
    %6302 = vmatprep.subr.bf16.mxu0 0
    %6303 = vmatpush1.bf16.msra.mxu0 0
    %6304 = vmatprep.mubr.bf16.mxu0 0
    %6305 = vmatmul.mubr.bf16.gmra.mrb[0].mxu0 %v6267
    %v6306 = vpop.f32.mrb[0].mxu0
    %v6307 = vadd.f32 0.0, %v6306
    %v6308 = vpop.f32.mrb[0].mxu0
    %v6309 = vpop.f32.mrb[0].mxu0
    %v6310 = vadd.f32 0.0, %v6309
    %v6311 = vpop.f32.mrb[0].mxu0
    %6312 = vdwg.mxu0
    %v6314 = vsel %vm1846, %v4724, 0
    %v6317 = vsel %vm1436, %v4220, 0
    %6319 = vmatprep.subr.bf16.mxu0 0
    %6320 = vmatpush1.bf16.msra.mxu0 %v6317
    %6321 = vmatprep.subr.bf16.mxu0 0
    %6322 = vmatpush1.bf16.msra.mxu0 0
    %6323 = vmatprep.subr.bf16.mxu0 0
    %6324 = vmatpush1.bf16.msra.mxu0 0
    %6325 = vmatprep.subr.bf16.mxu0 0
    %6326 = vmatpush1.bf16.msra.mxu0 0
    %6327 = vmatprep.subr.bf16.mxu0 0
    %6328 = vmatpush1.bf16.msra.mxu0 0
    %6329 = vmatprep.subr.bf16.mxu0 0
    %6330 = vmatpush1.bf16.msra.mxu0 0
    %6331 = vmatprep.subr.bf16.mxu0 0
    %6332 = vmatpush1.bf16.msra.mxu0 0
    %6333 = vmatprep.subr.bf16.mxu0 0
    %6334 = vmatpush1.bf16.msra.mxu0 0
    %6335 = vmatprep.subr.bf16.mxu0 0
    %6336 = vmatpush1.bf16.msra.mxu0 0
    %6337 = vmatprep.subr.bf16.mxu0 0
    %6338 = vmatpush1.bf16.msra.mxu0 0
    %6339 = vmatprep.subr.bf16.mxu0 0
    %6340 = vmatpush1.bf16.msra.mxu0 0
    %6341 = vmatprep.subr.bf16.mxu0 0
    %6342 = vmatpush1.bf16.msra.mxu0 0
    %6343 = vmatprep.subr.bf16.mxu0 0
    %6344 = vmatpush1.bf16.msra.mxu0 0
    %6345 = vmatprep.subr.bf16.mxu0 0
    %6346 = vmatpush1.bf16.msra.mxu0 0
    %6347 = vmatprep.subr.bf16.mxu0 0
    %6348 = vmatpush1.bf16.msra.mxu0 0
    %6349 = vmatprep.subr.bf16.mxu0 0
    %6350 = vmatpush1.bf16.msra.mxu0 0
    %6351 = vmatprep.mubr.bf16.mxu0 0
    %6352 = vmatmul.mubr.bf16.gmra.mrb[0].mxu0 %v6314
    %v6353 = vpop.f32.mrb[0].mxu0
    %v6354 = vadd.f32 %v5264, %v6353
    %v6355 = vpop.f32.mrb[0].mxu0
    %v6356 = vpop.f32.mrb[0].mxu0
    %v6357 = vadd.f32 %v5267, %v6356
    %v6358 = vpop.f32.mrb[0].mxu0
    %6359 = vdwg.mxu0
    %v6361 = vsel %vm1846, %v5767, 0
    %v6364 = vsel %vm1436, %v4222, 0
    %6366 = vmatprep.subr.bf16.mxu0 0
    %6367 = vmatpush1.bf16.msra.mxu0 %v6364
    %6368 = vmatprep.subr.bf16.mxu0 0
    %6369 = vmatpush1.bf16.msra.mxu0 0
    %6370 = vmatprep.subr.bf16.mxu0 0
    %6371 = vmatpush1.bf16.msra.mxu0 0
    %6372 = vmatprep.subr.bf16.mxu0 0
    %6373 = vmatpush1.bf16.msra.mxu0 0
    %6374 = vmatprep.subr.bf16.mxu0 0
    %6375 = vmatpush1.bf16.msra.mxu0 0
    %6376 = vmatprep.subr.bf16.mxu0 0
    %6377 = vmatpush1.bf16.msra.mxu0 0
    %6378 = vmatprep.subr.bf16.mxu0 0
    %6379 = vmatpush1.bf16.msra.mxu0 0
    %6380 = vmatprep.subr.bf16.mxu0 0
    %6381 = vmatpush1.bf16.msra.mxu0 0
    %6382 = vmatprep.subr.bf16.mxu0 0
    %6383 = vmatpush1.bf16.msra.mxu0 0
    %6384 = vmatprep.subr.bf16.mxu0 0
    %6385 = vmatpush1.bf16.msra.mxu0 0
    %6386 = vmatprep.subr.bf16.mxu0 0
    %6387 = vmatpush1.bf16.msra.mxu0 0
    %6388 = vmatprep.subr.bf16.mxu0 0
    %6389 = vmatpush1.bf16.msra.mxu0 0
    %6390 = vmatprep.subr.bf16.mxu0 0
    %6391 = vmatpush1.bf16.msra.mxu0 0
    %6392 = vmatprep.subr.bf16.mxu0 0
    %6393 = vmatpush1.bf16.msra.mxu0 0
    %6394 = vmatprep.subr.bf16.mxu0 0
    %6395 = vmatpush1.bf16.msra.mxu0 0
    %6396 = vmatprep.subr.bf16.mxu0 0
    %6397 = vmatpush1.bf16.msra.mxu0 0
    %6398 = vmatprep.mubr.bf16.mxu0 0
    %6399 = vmatmul.mubr.bf16.gmra.mrb[0].mxu0 %v6361
    %v6400 = vpop.f32.mrb[0].mxu0
    %v6401 = vadd.f32 %v6307, %v6400
    %v6402 = vpop.f32.mrb[0].mxu0
    %v6403 = vpop.f32.mrb[0].mxu0
    %v6404 = vadd.f32 %v6310, %v6403
    %v6405 = vpop.f32.mrb[0].mxu0
    %6406 = vdwg.mxu0
    %v6407 = vadd.f32 %v6354, %v6401
    %v6408 = vadd.f32 %v6357, %v6404
    %s6409 = scalar_lea.vmem [#allocation18], 1
    %v6410 = vld [vmem:[%s6409] sm:$0x1]
    %v6412 = vlaneseq
    %v6413 = vshrl.u32 %v6412, 7
    %v6414 = vsub.s32 0, %v6413
    %v6415 = vrot.slane %v6410, %v6414
    %v6417 = vadd.f32 %v6407, %v6415
    %v6418 = vadd.f32 %v6408, %v6415
    %v6419 = vadd.f32 %v6417, %v4150
    %v6420 = vadd.f32 %v6418, %v4151
    %s6421 = scalar_lea.vmem [#allocation19], 1
    %v6422 = vld [vmem:[%s6421] sm:$0x1]
    %s6423 = scalar_lea.vmem [#allocation21], 1
    %v6424 = vld [vmem:[%s6423] sm:$0x1]
    %v6425 = vsel %vm1520, %v6419, 0.0
    %6426 = vadd.xlane.f32.xlu0 %v6425
    %v6427 = vpop.xlane.xlu0 %6426
    %v6428 = vsel %vm1520, %v6420, 0.0
    %6429 = vadd.xlane.f32.xlu0 %v6428
    %v6430 = vpop.xlane.xlu0 %6429
    %v6431 = vmul.f32 %v6427, %v1527
    %v6432 = vmul.f32 %v6430, %v1527
    %v6433 = vsub.f32 %v6419, %v6431
    %v6434 = vsub.f32 %v6420, %v6432
    %v6435 = vmul.f32 %v6433, %v6433
    %v6436 = vmul.f32 %v6434, %v6434
    %v6437 = vsel %vm1520, %v6435, 0.0
    %6438 = vadd.xlane.f32.xlu0 %v6437
    %v6439 = vpop.xlane.xlu0 %6438
    %v6440 = vsel %vm1520, %v6436, 0.0
    %6441 = vadd.xlane.f32.xlu0 %v6440
    %v6442 = vpop.xlane.xlu0 %6441
    %v6443 = vmul.f32 %v6439, %v1527
    %v6444 = vmul.f32 %v6442, %v1527
    %v6445 = vadd.f32 %v6443, 1e-12
    %v6446 = vadd.f32 %v6444, 1e-12
    %v6447 = vrsqrt.pop %v6445
    %v6448 = vrsqrt.pop %v6446
    %v6449 = vmul.f32 %v6433, %v6447
    %v6450 = vmul.f32 %v6434, %v6448
    %v6452 = vlaneseq
    %v6453 = vshrl.u32 %v6452, 7
    %v6454 = vsub.s32 0, %v6453
    %v6455 = vrot.slane %v6422, %v6454
    %v6457 = vmul.f32 %v6449, %v6455
    %v6458 = vmul.f32 %v6450, %v6455
    %v6460 = vlaneseq
    %v6461 = vshrl.u32 %v6460, 7
    %v6462 = vsub.s32 0, %v6461
    %v6463 = vrot.slane %v6424, %v6462
    %v6465 = vadd.f32 %v6457, %v6463
    %v6466 = vadd.f32 %v6458, %v6463
    %s6467 = scalar_lea.vmem [#allocation22], 16
    %v6468 = vld [vmem:[%s6467] sm:$0xf]
    %v6469 = vld [vmem:[%s6467 + $0x4] sm:$0xf]
    %v6470 = vld [vmem:[%s6467 + $0x8] sm:$0xf]
    %v6471 = vld [vmem:[%s6467 + $0xc] sm:$0xf]
    %s6472 = scalar_lea.vmem [#allocation24], 1
    %v6473 = vld [vmem:[%s6472] sm:$0x1]
    %v6474 = vpack.c.bf16 %v6466, %v6465
    %v6476 = vlaneseq
    %v6477 = vshrl.u32 %v6476, 7
    %v6478 = vsub.s32 0, %v6477
    %v6479 = vrot.slane %v6473, %v6478
    %v6485 = vunpack.c.l.b16 %v6468
    %v6486 = vunpack.c.l.b16 %v6469
    %v6487 = vunpack.c.l.b16 %v6470
    %v6488 = vunpack.c.l.b16 %v6471
    %v6489 = vpack.c.b16 %v6486, %v6485
    %v6490 = vpack.c.b16 %v6488, %v6487
    %v6494 = vsel %vm1520, %v6474, 0
    %6496 = vmatprep.subr.bf16.mxu0 0
    %6497 = vmatpush1.bf16.msra.mxu0 %v6489
    %6498 = vmatprep.subr.bf16.mxu0 0
    %6499 = vmatpush1.bf16.msra.mxu0 %v6490
    %6500 = vmatprep.subr.bf16.mxu0 0
    %6501 = vmatpush1.bf16.msra.mxu0 0
    %6502 = vmatprep.subr.bf16.mxu0 0
    %6503 = vmatpush1.bf16.msra.mxu0 0
    %6504 = vmatprep.subr.bf16.mxu0 0
    %6505 = vmatpush1.bf16.msra.mxu0 0
    %6506 = vmatprep.subr.bf16.mxu0 0
    %6507 = vmatpush1.bf16.msra.mxu0 0
    %6508 = vmatprep.subr.bf16.mxu0 0
    %6509 = vmatpush1.bf16.msra.mxu0 0
    %6510 = vmatprep.subr.bf16.mxu0 0
    %6511 = vmatpush1.bf16.msra.mxu0 0
    %6512 = vmatprep.subr.bf16.mxu0 0
    %6513 = vmatpush1.bf16.msra.mxu0 0
    %6514 = vmatprep.subr.bf16.mxu0 0
    %6515 = vmatpush1.bf16.msra.mxu0 0
    %6516 = vmatprep.subr.bf16.mxu0 0
    %6517 = vmatpush1.bf16.msra.mxu0 0
    %6518 = vmatprep.subr.bf16.mxu0 0
    %6519 = vmatpush1.bf16.msra.mxu0 0
    %6520 = vmatprep.subr.bf16.mxu0 0
    %6521 = vmatpush1.bf16.msra.mxu0 0
    %6522 = vmatprep.subr.bf16.mxu0 0
    %6523 = vmatpush1.bf16.msra.mxu0 0
    %6524 = vmatprep.subr.bf16.mxu0 0
    %6525 = vmatpush1.bf16.msra.mxu0 0
    %6526 = vmatprep.subr.bf16.mxu0 0
    %6527 = vmatpush1.bf16.msra.mxu0 0
    %6528 = vmatprep.mubr.bf16.mxu0 0
    %6529 = vmatmul.mubr.bf16.gmra.mrb[0].mxu0 %v6494
    %v6530 = vpop.f32.mrb[0].mxu0
    %v6531 = vadd.f32 %v6479, %v6530
    %v6532 = vpop.f32.mrb[0].mxu0
    %v6533 = vpop.f32.mrb[0].mxu0
    %v6534 = vadd.f32 %v6479, %v6533
    %v6535 = vpop.f32.mrb[0].mxu0
    %6536 = vdwg.mxu0
    %v6537 = vmul.f32 %v6531, %v6531
    %v6538 = vmul.f32 %v6534, %v6534
    %v6539 = vmul.f32 %v6531, %v6537
    %v6540 = vmul.f32 %v6534, %v6538
    %v6541 = vmul.f32 %v6539, 0.044715
    %v6542 = vmul.f32 %v6540, 0.044715
    %v6543 = vadd.f32 %v6531, %v6541
    %v6544 = vadd.f32 %v6534, %v6542
    %v6545 = vmul.f32 %v6543, 0.7978846
    %v6546 = vmul.f32 %v6544, 0.7978846
    %v6547 = vtanh.pop %v6545
    %v6548 = vtanh.pop %v6546
    %v6549 = vadd.f32 %v6547, 1.0
    %v6550 = vadd.f32 %v6548, 1.0
    %v6551 = vmul.f32 %v6549, 0.5
    %v6552 = vmul.f32 %v6550, 0.5
    %v6553 = vmul.f32 %v6531, %v6551
    %v6554 = vmul.f32 %v6534, %v6552
    %s6555 = scalar_lea.vmem %s37, 64
    %v6556 = vld [vmem:[%s6555] sm:$0xf]
    %v6557 = vld [vmem:[%s6555 + $0x4] sm:$0xf]
    %v6558 = vld [vmem:[%s6555 + $0x8] sm:$0xf]
    %v6559 = vld [vmem:[%s6555 + $0xc] sm:$0xf]
    %v6560 = vld [vmem:[%s6555 + $0x10] sm:$0xf]
    %v6561 = vld [vmem:[%s6555 + $0x14] sm:$0xf]
    %v6562 = vld [vmem:[%s6555 + $0x18] sm:$0xf]
    %v6563 = vld [vmem:[%s6555 + $0x1c] sm:$0xf]
    %v6564 = vld [vmem:[%s6555 + $0x20] sm:$0xf]
    %v6565 = vld [vmem:[%s6555 + $0x24] sm:$0xf]
    %v6566 = vld [vmem:[%s6555 + $0x28] sm:$0xf]
    %v6567 = vld [vmem:[%s6555 + $0x2c] sm:$0xf]
    %v6568 = vld [vmem:[%s6555 + $0x30] sm:$0xf]
    %v6569 = vld [vmem:[%s6555 + $0x34] sm:$0xf]
    %v6570 = vld [vmem:[%s6555 + $0x38] sm:$0xf]
    %v6571 = vld [vmem:[%s6555 + $0x3c] sm:$0xf]
    %s6572 = scalar_lea.vmem [#allocation25], 1
    %v6573 = vld [vmem:[%s6572] sm:$0x1]
    %v6574 = vpack.c.bf16 %v6554, %v6553
    %v6576 = vlaneseq
    %v6577 = vshrl.u32 %v6576, 7
    %v6578 = vsub.s32 0, %v6577
    %v6579 = vrot.slane %v6573, %v6578
    %v6597 = vunpack.c.l.b16 %v6556
    %v6598 = vunpack.c.l.b16 %v6557
    %v6599 = vunpack.c.l.b16 %v6558
    %v6600 = vunpack.c.l.b16 %v6559
    %v6601 = vunpack.c.l.b16 %v6560
    %v6602 = vunpack.c.l.b16 %v6561
    %v6603 = vunpack.c.l.b16 %v6562
    %v6604 = vunpack.c.l.b16 %v6563
    %v6605 = vunpack.c.l.b16 %v6564
    %v6606 = vunpack.c.l.b16 %v6565
    %v6607 = vunpack.c.l.b16 %v6566
    %v6608 = vunpack.c.l.b16 %v6567
    %v6609 = vunpack.c.l.b16 %v6568
    %v6610 = vunpack.c.l.b16 %v6569
    %v6611 = vunpack.c.l.b16 %v6570
    %v6612 = vunpack.c.l.b16 %v6571
    %v6613 = vpack.c.b16 %v6598, %v6597
    %v6614 = vpack.c.b16 %v6600, %v6599
    %v6615 = vpack.c.b16 %v6602, %v6601
    %v6616 = vpack.c.b16 %v6604, %v6603
    %v6617 = vpack.c.b16 %v6606, %v6605
    %v6618 = vpack.c.b16 %v6608, %v6607
    %v6619 = vpack.c.b16 %v6610, %v6609
    %v6620 = vpack.c.b16 %v6612, %v6611
    %6629 = vmatprep.subr.bf16.mxu0 0
    %6630 = vmatpush1.bf16.msra.mxu0 %v6613
    %6631 = vmatprep.subr.bf16.mxu0 0
    %6632 = vmatpush1.bf16.msra.mxu0 %v6614
    %6633 = vmatprep.subr.bf16.mxu0 0
    %6634 = vmatpush1.bf16.msra.mxu0 %v6615
    %6635 = vmatprep.subr.bf16.mxu0 0
    %6636 = vmatpush1.bf16.msra.mxu0 %v6616
    %6637 = vmatprep.subr.bf16.mxu0 0
    %6638 = vmatpush1.bf16.msra.mxu0 %v6617
    %6639 = vmatprep.subr.bf16.mxu0 0
    %6640 = vmatpush1.bf16.msra.mxu0 %v6618
    %6641 = vmatprep.subr.bf16.mxu0 0
    %6642 = vmatpush1.bf16.msra.mxu0 %v6619
    %6643 = vmatprep.subr.bf16.mxu0 0
    %6644 = vmatpush1.bf16.msra.mxu0 %v6620
    %6645 = vmatprep.subr.bf16.mxu0 0
    %6646 = vmatpush1.bf16.msra.mxu0 0
    %6647 = vmatprep.subr.bf16.mxu0 0
    %6648 = vmatpush1.bf16.msra.mxu0 0
    %6649 = vmatprep.subr.bf16.mxu0 0
    %6650 = vmatpush1.bf16.msra.mxu0 0
    %6651 = vmatprep.subr.bf16.mxu0 0
    %6652 = vmatpush1.bf16.msra.mxu0 0
    %6653 = vmatprep.subr.bf16.mxu0 0
    %6654 = vmatpush1.bf16.msra.mxu0 0
    %6655 = vmatprep.subr.bf16.mxu0 0
    %6656 = vmatpush1.bf16.msra.mxu0 0
    %6657 = vmatprep.subr.bf16.mxu0 0
    %6658 = vmatpush1.bf16.msra.mxu0 0
    %6659 = vmatprep.subr.bf16.mxu0 0
    %6660 = vmatpush1.bf16.msra.mxu0 0
    %6661 = vmatprep.mubr.bf16.mxu0 0
    %6662 = vmatmul.mubr.bf16.gmra.mrb[0].mxu0 %v6574
    %v6663 = vpop.f32.mrb[0].mxu0
    %v6664 = vadd.f32 %v6579, %v6663
    %v6665 = vpop.f32.mrb[0].mxu0
    %v6666 = vpop.f32.mrb[0].mxu0
    %v6667 = vadd.f32 %v6579, %v6666
    %v6668 = vpop.f32.mrb[0].mxu0
    %6669 = vdwg.mxu0
    %v6670 = vadd.f32 %v6664, %v6465
    %v6671 = vadd.f32 %v6667, %v6466
    %s6672 = scalar_lea.vmem [#allocation27], 1
    %v6673 = vld [vmem:[%s6672] sm:$0x1]
    %s6674 = scalar_lea.vmem [#allocation28], 1
    %v6675 = vld [vmem:[%s6674] sm:$0x1]
    %v6676 = vsel %vm1520, %v6670, 0.0
    %6677 = vadd.xlane.f32.xlu0 %v6676
    %v6678 = vpop.xlane.xlu0 %6677
    %v6679 = vsel %vm1520, %v6671, 0.0
    %6680 = vadd.xlane.f32.xlu0 %v6679
    %v6681 = vpop.xlane.xlu0 %6680
    %v6682 = vmul.f32 %v6678, %v1527
    %v6683 = vmul.f32 %v6681, %v1527
    %v6684 = vsub.f32 %v6670, %v6682
    %v6685 = vsub.f32 %v6671, %v6683
    %v6686 = vmul.f32 %v6684, %v6684
    %v6687 = vmul.f32 %v6685, %v6685
    %v6688 = vsel %vm1520, %v6686, 0.0
    %6689 = vadd.xlane.f32.xlu0 %v6688
    %v6690 = vpop.xlane.xlu0 %6689
    %v6691 = vsel %vm1520, %v6687, 0.0
    %6692 = vadd.xlane.f32.xlu0 %v6691
    %v6693 = vpop.xlane.xlu0 %6692
    %v6694 = vmul.f32 %v6690, %v1527
    %v6695 = vmul.f32 %v6693, %v1527
    %v6696 = vadd.f32 %v6694, 1e-12
    %v6697 = vadd.f32 %v6695, 1e-12
    %v6698 = vrsqrt.pop %v6696
    %v6699 = vrsqrt.pop %v6697
    %v6700 = vmul.f32 %v6684, %v6698
    %v6701 = vmul.f32 %v6685, %v6699
    %v6703 = vlaneseq
    %v6704 = vshrl.u32 %v6703, 7
    %v6705 = vsub.s32 0, %v6704
    %v6706 = vrot.slane %v6673, %v6705
    %v6708 = vmul.f32 %v6700, %v6706
    %v6709 = vmul.f32 %v6701, %v6706
    %v6711 = vlaneseq
    %v6712 = vshrl.u32 %v6711, 7
    %v6713 = vsub.s32 0, %v6712
    %v6714 = vrot.slane %v6675, %v6713
    %v6716 = vadd.f32 %v6708, %v6714
    %v6717 = vadd.f32 %v6709, %v6714
    %v6718 = vpack.c.bf16 %v6716, %v6716
    %v6719 = vpack.c.bf16 %v6717, %v6717
    %v6720 = vld [vmem:[#allocation30] sm:$0xf]
    %v6721 = vld [vmem:[#allocation30 + $0x4] sm:$0xf]
    %v6722 = vld [vmem:[#allocation30 + $0x8] sm:$0xf]
    %v6723 = vld [vmem:[#allocation30 + $0xc] sm:$0xf]
    %v6724 = vld [vmem:[#allocation31] sm:$0x1]
    %v6726 = vlaneseq
    %v6727 = vshrl.u32 %v6726, 7
    %v6728 = vsub.s32 0, %v6727
    %v6729 = vrot.slane %v6724, %v6728
    %v6733 = vunpack.c.l.b16 %v6718
    %v6734 = vunpack.c.l.b16 %v6719
    %v6735 = vrot.slane %v6734, 7
    %vm6736 = vcmask 1041409
    %v6737 = vsel %vm6736, %v6735, %v6733
    %v6738 = vpack.c.b16 %v6737, %v6737
    %v6743 = vunpack.c.l.b16 %v6720
    %v6744 = vunpack.c.l.b16 %v6721
    %v6745 = vunpack.c.l.b16 %v6722
    %v6746 = vunpack.c.l.b16 %v6723
    %v6747 = vpack.c.b16 %v6744, %v6743
    %v6748 = vpack.c.b16 %v6746, %v6745
    %v6752 = vsel %vm1520, %v6738, 0
    %6754 = vmatprep.subr.bf16.mxu0 0
    %6755 = vmatpush1.bf16.msra.mxu0 %v6747
    %6756 = vmatprep.subr.bf16.mxu0 0
    %6757 = vmatpush1.bf16.msra.mxu0 %v6748
    %6758 = vmatprep.subr.bf16.mxu0 0
    %6759 = vmatpush1.bf16.msra.mxu0 0
    %6760 = vmatprep.subr.bf16.mxu0 0
    %6761 = vmatpush1.bf16.msra.mxu0 0
    %6762 = vmatprep.subr.bf16.mxu0 0
    %6763 = vmatpush1.bf16.msra.mxu0 0
    %6764 = vmatprep.subr.bf16.mxu0 0
    %6765 = vmatpush1.bf16.msra.mxu0 0
    %6766 = vmatprep.subr.bf16.mxu0 0
    %6767 = vmatpush1.bf16.msra.mxu0 0
    %6768 = vmatprep.subr.bf16.mxu0 0
    %6769 = vmatpush1.bf16.msra.mxu0 0
    %6770 = vmatprep.subr.bf16.mxu0 0
    %6771 = vmatpush1.bf16.msra.mxu0 0
    %6772 = vmatprep.subr.bf16.mxu0 0
    %6773 = vmatpush1.bf16.msra.mxu0 0
    %6774 = vmatprep.subr.bf16.mxu0 0
    %6775 = vmatpush1.bf16.msra.mxu0 0
    %6776 = vmatprep.subr.bf16.mxu0 0
    %6777 = vmatpush1.bf16.msra.mxu0 0
    %6778 = vmatprep.subr.bf16.mxu0 0
    %6779 = vmatpush1.bf16.msra.mxu0 0
    %6780 = vmatprep.subr.bf16.mxu0 0
    %6781 = vmatpush1.bf16.msra.mxu0 0
    %6782 = vmatprep.subr.bf16.mxu0 0
    %6783 = vmatpush1.bf16.msra.mxu0 0
    %6784 = vmatprep.subr.bf16.mxu0 0
    %6785 = vmatpush1.bf16.msra.mxu0 0
    %6786 = vmatprep.mubr.bf16.mxu0 0
    %6787 = vmatmul.mubr.bf16.gmra.mrb[0].mxu0 %v6752
    %v6788 = vpop.f32.mrb[0].mxu0
    %v6789 = vadd.f32 %v6729, %v6788
    %v6790 = vpop.f32.mrb[0].mxu0
    %v6791 = vpop.f32.mrb[0].mxu0
    %v6792 = vpop.f32.mrb[0].mxu0
    %6793 = vdwg.mxu0
    %v6794 = vtanh.pop %v6789
    %s6795 = smul.u32 4, 4
    %s6796 = smul.u32 %s6795, 4
    %s6797 = sshll.u32 %s6796, 4
    %6798 = dma.done [#allocation6], %s6797
    %s6799 = smul.u32 4, 16
    %s6800 = smul.u32 %s6799, 4
    %s6801 = sshll.u32 %s6800, 4
    %6802 = dma.done %s522, %s6801
    %s6803 = smul.u32 4, 32
    %s6804 = smul.u32 %s6803, 4
    %s6805 = sshll.u32 %s6804, 4
    %6806 = dma.done %s827, %s6805
    %s6807 = smul.u32 4, 3
    %s6808 = smul.u32 %s6807, 16
    %s6809 = smul.u32 %s6808, 1
    %s6810 = sshll.u32 %s6809, 4
    %6811 = dma.done %s1388, %s6810
    %v6812 = vpack.c.bf16 %v6794, %v6794
    %v6813 = vld [vmem:[#allocation2] sm:$0xff]
    %v6814 = vld [vmem:[#allocation2 + $0x8] sm:$0xff]
    %v6815 = vld [vmem:[#allocation2 + $0x10] sm:$0xff]
    %v6816 = vld [vmem:[#allocation2 + $0x18] sm:$0xff]
    %v6817 = vld [vmem:[#allocation2 + $0x20] sm:$0xff]
    %v6818 = vld [vmem:[#allocation2 + $0x28] sm:$0xff]
    %v6819 = vld [vmem:[#allocation2 + $0x30] sm:$0xff]
    %v6820 = vld [vmem:[#allocation2 + $0x38] sm:$0xff]
    %v6821 = vld [vmem:[#allocation33] sm:$0xf]
    %v6823 = vlaneseq
    %v6824 = vshrl.u32 %v6823, 7
    %v6825 = vsub.s32 0, %v6824
    %v6826 = vrot.slane %v6821, %v6825
    %v6827 = vlaneseq
    %v6828 = vshrl.u32 %v6827, 7
    %v6829 = vsub.s32 1, %v6828
    %v6830 = vrot.slane %v6821, %v6829
    %v6831 = vlaneseq
    %v6832 = vshrl.u32 %v6831, 7
    %v6833 = vsub.s32 2, %v6832
    %v6834 = vrot.slane %v6821, %v6833
    %v6835 = vlaneseq
    %v6836 = vshrl.u32 %v6835, 7
    %v6837 = vsub.s32 3, %v6836
    %v6838 = vrot.slane %v6821, %v6837
    %v6844 = vsel %vm1520, %v6812, 0
    %6846 = vmatprep.subr.bf16.mxu0 %v6814
    %6847 = vmatpush1.bf16.msra.mxu0 %v6813
    %6848 = vmatprep.subr.bf16.mxu0 %v6818
    %6849 = vmatpush1.bf16.msra.mxu0 %v6817
    %6850 = vmatprep.subr.bf16.mxu0 0
    %6851 = vmatpush1.bf16.msra.mxu0 0
    %6852 = vmatprep.subr.bf16.mxu0 0
    %6853 = vmatpush1.bf16.msra.mxu0 0
    %6854 = vmatprep.subr.bf16.mxu0 0
    %6855 = vmatpush1.bf16.msra.mxu0 0
    %6856 = vmatprep.subr.bf16.mxu0 0
    %6857 = vmatpush1.bf16.msra.mxu0 0
    %6858 = vmatprep.subr.bf16.mxu0 0
    %6859 = vmatpush1.bf16.msra.mxu0 0
    %6860 = vmatprep.subr.bf16.mxu0 0
    %6861 = vmatpush1.bf16.msra.mxu0 0
    %6862 = vmatprep.subr.bf16.mxu0 0
    %6863 = vmatpush1.bf16.msra.mxu0 0
    %6864 = vmatprep.subr.bf16.mxu0 0
    %6865 = vmatpush1.bf16.msra.mxu0 0
    %6866 = vmatprep.subr.bf16.mxu0 0
    %6867 = vmatpush1.bf16.msra.mxu0 0
    %6868 = vmatprep.subr.bf16.mxu0 0
    %6869 = vmatpush1.bf16.msra.mxu0 0
    %6870 = vmatprep.subr.bf16.mxu0 0
    %6871 = vmatpush1.bf16.msra.mxu0 0
    %6872 = vmatprep.subr.bf16.mxu0 0
    %6873 = vmatpush1.bf16.msra.mxu0 0
    %6874 = vmatprep.subr.bf16.mxu0 0
    %6875 = vmatpush1.bf16.msra.mxu0 0
    %6876 = vmatprep.subr.bf16.mxu0 0
    %6877 = vmatpush1.bf16.msra.mxu0 0
    %6878 = vmatprep.mubr.bf16.mxu0 0
    %6879 = vmatmul.mubr.bf16.gmra.mrb[0].mxu0 %v6844
    %v6880 = vpop.f32.mrb[0].mxu0
    %v6881 = vadd.f32 %v6826, %v6880
    %v6882 = vpop.f32.mrb[0].mxu0
    %v6883 = vadd.f32 %v6830, %v6882
    %v6884 = vpop.f32.mrb[0].mxu0
    %v6885 = vpop.f32.mrb[0].mxu0
    %6886 = vdwg.mxu0
    %6887 = vmatprep.subr.bf16.mxu0 %v6816
    %6888 = vmatpush1.bf16.msra.mxu0 %v6815
    %6889 = vmatprep.subr.bf16.mxu0 %v6820
    %6890 = vmatpush1.bf16.msra.mxu0 %v6819
    %6891 = vmatprep.subr.bf16.mxu0 0
    %6892 = vmatpush1.bf16.msra.mxu0 0
    %6893 = vmatprep.subr.bf16.mxu0 0
    %6894 = vmatpush1.bf16.msra.mxu0 0
    %6895 = vmatprep.subr.bf16.mxu0 0
    %6896 = vmatpush1.bf16.msra.mxu0 0
    %6897 = vmatprep.subr.bf16.mxu0 0
    %6898 = vmatpush1.bf16.msra.mxu0 0
    %6899 = vmatprep.subr.bf16.mxu0 0
    %6900 = vmatpush1.bf16.msra.mxu0 0
    %6901 = vmatprep.subr.bf16.mxu0 0
    %6902 = vmatpush1.bf16.msra.mxu0 0
    %6903 = vmatprep.subr.bf16.mxu0 0
    %6904 = vmatpush1.bf16.msra.mxu0 0
    %6905 = vmatprep.subr.bf16.mxu0 0
    %6906 = vmatpush1.bf16.msra.mxu0 0
    %6907 = vmatprep.subr.bf16.mxu0 0
    %6908 = vmatpush1.bf16.msra.mxu0 0
    %6909 = vmatprep.subr.bf16.mxu0 0
    %6910 = vmatpush1.bf16.msra.mxu0 0
    %6911 = vmatprep.subr.bf16.mxu0 0
    %6912 = vmatpush1.bf16.msra.mxu0 0
    %6913 = vmatprep.subr.bf16.mxu0 0
    %6914 = vmatpush1.bf16.msra.mxu0 0
    %6915 = vmatprep.subr.bf16.mxu0 0
    %6916 = vmatpush1.bf16.msra.mxu0 0
    %6917 = vmatprep.subr.bf16.mxu0 0
    %6918 = vmatpush1.bf16.msra.mxu0 0
    %6919 = vmatprep.mubr.bf16.mxu0 0
    %6920 = vmatmul.mubr.bf16.gmra.mrb[0].mxu0 %v6844
    %v6921 = vpop.f32.mrb[0].mxu0
    %v6922 = vadd.f32 %v6834, %v6921
    %v6923 = vpop.f32.mrb[0].mxu0
    %v6924 = vadd.f32 %v6838, %v6923
    %v6925 = vpop.f32.mrb[0].mxu0
    %v6926 = vpop.f32.mrb[0].mxu0
    %6927 = vdwg.mxu0
    %v6928 = vld [vmem:[#allocation3] sm:$0xff]
    %v6929 = vld [vmem:[#allocation3 + $0x8] sm:$0xff]
    %v6930 = vld [vmem:[#allocation3 + $0x10] sm:$0xff]
    %v6931 = vld [vmem:[#allocation3 + $0x18] sm:$0xff]
    %v6932 = vld [vmem:[#allocation3 + $0x20] sm:$0xff]
    %v6933 = vld [vmem:[#allocation3 + $0x28] sm:$0xff]
    %v6934 = vld [vmem:[#allocation3 + $0x30] sm:$0xff]
    %v6935 = vld [vmem:[#allocation3 + $0x38] sm:$0xff]
    %v6936 = vld [vmem:[#allocation3 + $0x40] sm:$0xff]
    %v6937 = vld [vmem:[#allocation3 + $0x48] sm:$0xff]
    %v6938 = vld [vmem:[#allocation3 + $0x50] sm:$0xff]
    %v6939 = vld [vmem:[#allocation3 + $0x58] sm:$0xff]
    %v6940 = vld [vmem:[#allocation3 + $0x60] sm:$0xff]
    %v6941 = vld [vmem:[#allocation3 + $0x68] sm:$0xff]
    %v6942 = vld [vmem:[#allocation3 + $0x70] sm:$0xff]
    %v6943 = vld [vmem:[#allocation3 + $0x78] sm:$0xff]
    %v6944 = vld [vmem:[#allocation3 + $0x80] sm:$0xff]
    %v6945 = vld [vmem:[#allocation3 + $0x88] sm:$0xff]
    %v6946 = vld [vmem:[#allocation3 + $0x90] sm:$0xff]
    %v6947 = vld [vmem:[#allocation3 + $0x98] sm:$0xff]
    %v6948 = vld [vmem:[#allocation3 + $0xa0] sm:$0xff]
    %v6949 = vld [vmem:[#allocation3 + $0xa8] sm:$0xff]
    %v6950 = vld [vmem:[#allocation3 + $0xb0] sm:$0xff]
    %v6951 = vld [vmem:[#allocation3 + $0xb8] sm:$0xff]
    %v6952 = vld [vmem:[#allocation3 + $0xc0] sm:$0xff]
    %v6953 = vld [vmem:[#allocation3 + $0xc8] sm:$0xff]
    %v6954 = vld [vmem:[#allocation3 + $0xd0] sm:$0xff]
    %v6955 = vld [vmem:[#allocation3 + $0xd8] sm:$0xff]
    %v6956 = vld [vmem:[#allocation3 + $0xe0] sm:$0xff]
    %v6957 = vld [vmem:[#allocation3 + $0xe8] sm:$0xff]
    %v6958 = vld [vmem:[#allocation3 + $0xf0] sm:$0xff]
    %v6959 = vld [vmem:[#allocation3 + $0xf8] sm:$0xff]
    %v6960 = vld [vmem:[#allocation4] sm:$0xff]
    %v6961 = vld [vmem:[#allocation4 + $0x8] sm:$0xff]
    %v6962 = vld [vmem:[#allocation4 + $0x10] sm:$0xff]
    %v6963 = vld [vmem:[#allocation4 + $0x18] sm:$0xff]
    %v6964 = vld [vmem:[#allocation4 + $0x20] sm:$0xff]
    %v6965 = vld [vmem:[#allocation4 + $0x28] sm:$0xff]
    %v6966 = vld [vmem:[#allocation4 + $0x30] sm:$0xff]
    %v6967 = vld [vmem:[#allocation4 + $0x38] sm:$0xff]
    %v6968 = vld [vmem:[#allocation4 + $0x40] sm:$0xff]
    %v6969 = vld [vmem:[#allocation4 + $0x48] sm:$0xff]
    %v6970 = vld [vmem:[#allocation4 + $0x50] sm:$0xff]
    %v6971 = vld [vmem:[#allocation4 + $0x58] sm:$0xff]
    %v6972 = vld [vmem:[#allocation4 + $0x60] sm:$0xff]
    %v6973 = vld [vmem:[#allocation4 + $0x68] sm:$0xff]
    %v6974 = vld [vmem:[#allocation4 + $0x70] sm:$0xff]
    %v6975 = vld [vmem:[#allocation4 + $0x78] sm:$0xff]
    %v6976 = vld [vmem:[#allocation4 + $0x80] sm:$0xff]
    %v6977 = vld [vmem:[#allocation4 + $0x88] sm:$0xff]
    %v6978 = vld [vmem:[#allocation4 + $0x90] sm:$0xff]
    %v6979 = vld [vmem:[#allocation4 + $0x98] sm:$0xff]
    %v6980 = vld [vmem:[#allocation4 + $0xa0] sm:$0xff]
    %v6981 = vld [vmem:[#allocation4 + $0xa8] sm:$0xff]
    %v6982 = vld [vmem:[#allocation4 + $0xb0] sm:$0xff]
    %v6983 = vld [vmem:[#allocation4 + $0xb8] sm:$0xff]
    %v6984 = vld [vmem:[#allocation4 + $0xc0] sm:$0xff]
    %v6985 = vld [vmem:[#allocation4 + $0xc8] sm:$0xff]
    %v6986 = vld [vmem:[#allocation4 + $0xd0] sm:$0xff]
    %v6987 = vld [vmem:[#allocation4 + $0xd8] sm:$0xff]
    %v6988 = vld [vmem:[#allocation4 + $0xe0] sm:$0xff]
    %v6989 = vld [vmem:[#allocation4 + $0xe8] sm:$0xff]
    %v6990 = vld [vmem:[#allocation4 + $0xf0] sm:$0xff]
    %v6991 = vld [vmem:[#allocation4 + $0xf8] sm:$0xff]
    %v6992 = vld [vmem:[#allocation4 + $0x100] sm:$0xff]
    %v6993 = vld [vmem:[#allocation4 + $0x108] sm:$0xff]
    %v6994 = vld [vmem:[#allocation4 + $0x110] sm:$0xff]
    %v6995 = vld [vmem:[#allocation4 + $0x118] sm:$0xff]
    %v6996 = vld [vmem:[#allocation4 + $0x120] sm:$0xff]
    %v6997 = vld [vmem:[#allocation4 + $0x128] sm:$0xff]
    %v6998 = vld [vmem:[#allocation4 + $0x130] sm:$0xff]
    %v6999 = vld [vmem:[#allocation4 + $0x138] sm:$0xff]
    %v7000 = vld [vmem:[#allocation4 + $0x140] sm:$0xff]
    %v7001 = vld [vmem:[#allocation4 + $0x148] sm:$0xff]
    %v7002 = vld [vmem:[#allocation4 + $0x150] sm:$0xff]
    %v7003 = vld [vmem:[#allocation4 + $0x158] sm:$0xff]
    %v7004 = vld [vmem:[#allocation4 + $0x160] sm:$0xff]
    %v7005 = vld [vmem:[#allocation4 + $0x168] sm:$0xff]
    %v7006 = vld [vmem:[#allocation4 + $0x170] sm:$0xff]
    %v7007 = vld [vmem:[#allocation4 + $0x178] sm:$0xff]
    %v7008 = vld [vmem:[#allocation4 + $0x180] sm:$0xff]
    %v7009 = vld [vmem:[#allocation4 + $0x188] sm:$0xff]
    %v7010 = vld [vmem:[#allocation4 + $0x190] sm:$0xff]
    %v7011 = vld [vmem:[#allocation4 + $0x198] sm:$0xff]
    %v7012 = vld [vmem:[#allocation4 + $0x1a0] sm:$0xff]
    %v7013 = vld [vmem:[#allocation4 + $0x1a8] sm:$0xff]
    %v7014 = vld [vmem:[#allocation4 + $0x1b0] sm:$0xff]
    %v7015 = vld [vmem:[#allocation4 + $0x1b8] sm:$0xff]
    %v7016 = vld [vmem:[#allocation4 + $0x1c0] sm:$0xff]
    %v7017 = vld [vmem:[#allocation4 + $0x1c8] sm:$0xff]
    %v7018 = vld [vmem:[#allocation4 + $0x1d0] sm:$0xff]
    %v7019 = vld [vmem:[#allocation4 + $0x1d8] sm:$0xff]
    %v7020 = vld [vmem:[#allocation4 + $0x1e0] sm:$0xff]
    %v7021 = vld [vmem:[#allocation4 + $0x1e8] sm:$0xff]
    %v7022 = vld [vmem:[#allocation4 + $0x1f0] sm:$0xff]
    %v7023 = vld [vmem:[#allocation4 + $0x1f8] sm:$0xff]
    %v7024 = vld [vmem:[#allocation34] sm:$0xf]
    %7025 = vmatprep.subr.bf16.mxu0 %v6929
    %7026 = vmatpush1.bf16.msra.mxu0 %v6928
    %7027 = vmatprep.subr.bf16.mxu0 %v6933
    %7028 = vmatpush1.bf16.msra.mxu0 %v6932
    %7029 = vmatprep.subr.bf16.mxu0 %v6937
    %7030 = vmatpush1.bf16.msra.mxu0 %v6936
    %7031 = vmatprep.subr.bf16.mxu0 %v6941
    %7032 = vmatpush1.bf16.msra.mxu0 %v6940
    %7033 = vmatprep.subr.bf16.mxu0 %v6945
    %7034 = vmatpush1.bf16.msra.mxu0 %v6944
    %7035 = vmatprep.subr.bf16.mxu0 %v6949
    %7036 = vmatpush1.bf16.msra.mxu0 %v6948
    %7037 = vmatprep.subr.bf16.mxu0 %v6953
    %7038 = vmatpush1.bf16.msra.mxu0 %v6952
    %7039 = vmatprep.subr.bf16.mxu0 %v6957
    %7040 = vmatpush1.bf16.msra.mxu0 %v6956
    %7041 = vmatprep.subr.bf16.mxu0 0
    %7042 = vmatpush1.bf16.msra.mxu0 0
    %7043 = vmatprep.subr.bf16.mxu0 0
    %7044 = vmatpush1.bf16.msra.mxu0 0
    %7045 = vmatprep.subr.bf16.mxu0 0
    %7046 = vmatpush1.bf16.msra.mxu0 0
    %7047 = vmatprep.subr.bf16.mxu0 0
    %7048 = vmatpush1.bf16.msra.mxu0 0
    %7049 = vmatprep.subr.bf16.mxu0 0
    %7050 = vmatpush1.bf16.msra.mxu0 0
    %7051 = vmatprep.subr.bf16.mxu0 0
    %7052 = vmatpush1.bf16.msra.mxu0 0
    %7053 = vmatprep.subr.bf16.mxu0 0
    %7054 = vmatpush1.bf16.msra.mxu0 0
    %7055 = vmatprep.subr.bf16.mxu0 0
    %7056 = vmatpush1.bf16.msra.mxu0 0
    %7057 = vmatprep.mubr.bf16.mxu0 0
    %7058 = vmatmul.mubr.bf16.gmra.mrb[0].mxu0 0
    %v7059 = vpop.f32.mrb[0].mxu0
    %v7060 = vadd.f32 0.0, %v7059
    %v7061 = vpop.f32.mrb[0].mxu0
    %v7062 = vadd.f32 0.0, %v7061
    %v7063 = vpop.f32.mrb[0].mxu0
    %v7064 = vpop.f32.mrb[0].mxu0
    %7065 = vdwg.mxu0
    %7066 = vmatprep.subr.bf16.mxu0 %v6931
    %7067 = vmatpush1.bf16.msra.mxu0 %v6930
    %7068 = vmatprep.subr.bf16.mxu0 %v6935
    %7069 = vmatpush1.bf16.msra.mxu0 %v6934
    %7070 = vmatprep.subr.bf16.mxu0 %v6939
    %7071 = vmatpush1.bf16.msra.mxu0 %v6938
    %7072 = vmatprep.subr.bf16.mxu0 %v6943
    %7073 = vmatpush1.bf16.msra.mxu0 %v6942
    %7074 = vmatprep.subr.bf16.mxu0 %v6947
    %7075 = vmatpush1.bf16.msra.mxu0 %v6946
    %7076 = vmatprep.subr.bf16.mxu0 %v6951
    %7077 = vmatpush1.bf16.msra.mxu0 %v6950
    %7078 = vmatprep.subr.bf16.mxu0 %v6955
    %7079 = vmatpush1.bf16.msra.mxu0 %v6954
    %7080 = vmatprep.subr.bf16.mxu0 %v6959
    %7081 = vmatpush1.bf16.msra.mxu0 %v6958
    %7082 = vmatprep.subr.bf16.mxu0 0
    %7083 = vmatpush1.bf16.msra.mxu0 0
    %7084 = vmatprep.subr.bf16.mxu0 0
    %7085 = vmatpush1.bf16.msra.mxu0 0
    %7086 = vmatprep.subr.bf16.mxu0 0
    %7087 = vmatpush1.bf16.msra.mxu0 0
    %7088 = vmatprep.subr.bf16.mxu0 0
    %7089 = vmatpush1.bf16.msra.mxu0 0
    %7090 = vmatprep.subr.bf16.mxu0 0
    %7091 = vmatpush1.bf16.msra.mxu0 0
    %7092 = vmatprep.subr.bf16.mxu0 0
    %7093 = vmatpush1.bf16.msra.mxu0 0
    %7094 = vmatprep.subr.bf16.mxu0 0
    %7095 = vmatpush1.bf16.msra.mxu0 0
    %7096 = vmatprep.subr.bf16.mxu0 0
    %7097 = vmatpush1.bf16.msra.mxu0 0
    %7098 = vmatprep.mubr.bf16.mxu0 0
    %7099 = vmatmul.mubr.bf16.gmra.mrb[0].mxu0 0
    %v7100 = vpop.f32.mrb[0].mxu0
    %v7101 = vadd.f32 0.0, %v7100
    %v7102 = vpop.f32.mrb[0].mxu0
    %v7103 = vadd.f32 0.0, %v7102
    %v7104 = vpop.f32.mrb[0].mxu0
    %v7105 = vpop.f32.mrb[0].mxu0
    %7106 = vdwg.mxu0
    %v7107 = vadd.f32 %v6881, %v7060
    %v7108 = vadd.f32 %v6883, %v7062
    %v7109 = vadd.f32 %v6922, %v7101
    %v7110 = vadd.f32 %v6924, %v7103
    %v7111 = vxor.u32 %v7107, 2147483648
    %v7112 = vmul.f32 %v7111, 1.442695
    %v7113 = vpow.pop %v7112
    %v7114 = vadd.f32 %v7113, 1.0
    %v7115 = vrcp.pop %v7114
    %v7116 = vmul.f32 1.0, %v7115
    %v7117 = vxor.u32 %v7108, 2147483648
    %v7118 = vmul.f32 %v7117, 1.442695
    %v7119 = vpow.pop %v7118
    %v7120 = vadd.f32 %v7119, 1.0
    %v7121 = vrcp.pop %v7120
    %v7122 = vmul.f32 1.0, %v7121
    %v7123 = vtanh.pop %v7109
    %v7124 = vxor.u32 %v7110, 2147483648
    %v7125 = vmul.f32 %v7124, 1.442695
    %v7126 = vpow.pop %v7125
    %v7127 = vadd.f32 %v7126, 1.0
    %v7128 = vrcp.pop %v7127
    %v7129 = vmul.f32 1.0, %v7128
    %v7130 = vmul.f32 %v7122, 0.0
    %v7131 = vmul.f32 %v7116, %v7123
    %v7132 = vadd.f32 %v7130, %v7131
    %v7133 = vtanh.pop %v7132
    %v7134 = vmul.f32 %v7129, %v7133
    %v7135 = vpack.c.bf16 %v7134, %v7134
    %v7136 = vpack.c.bf16 0.0, 0.0
    %v7138 = vlaneseq
    %v7139 = vshrl.u32 %v7138, 7
    %v7140 = vsub.s32 0, %v7139
    %v7141 = vrot.slane %v7024, %v7140
    %v7142 = vlaneseq
    %v7143 = vshrl.u32 %v7142, 7
    %v7144 = vsub.s32 1, %v7143
    %v7145 = vrot.slane %v7024, %v7144
    %v7146 = vlaneseq
    %v7147 = vshrl.u32 %v7146, 7
    %v7148 = vsub.s32 2, %v7147
    %v7149 = vrot.slane %v7024, %v7148
    %v7150 = vlaneseq
    %v7151 = vshrl.u32 %v7150, 7
    %v7152 = vsub.s32 3, %v7151
    %v7153 = vrot.slane %v7024, %v7152
    %7158 = vmatprep.subr.bf16.mxu0 %v6961
    %7159 = vmatpush1.bf16.msra.mxu0 %v6960
    %7160 = vmatprep.subr.bf16.mxu0 %v6965
    %7161 = vmatpush1.bf16.msra.mxu0 %v6964
    %7162 = vmatprep.subr.bf16.mxu0 %v6969
    %7163 = vmatpush1.bf16.msra.mxu0 %v6968
    %7164 = vmatprep.subr.bf16.mxu0 %v6973
    %7165 = vmatpush1.bf16.msra.mxu0 %v6972
    %7166 = vmatprep.subr.bf16.mxu0 %v6977
    %7167 = vmatpush1.bf16.msra.mxu0 %v6976
    %7168 = vmatprep.subr.bf16.mxu0 %v6981
    %7169 = vmatpush1.bf16.msra.mxu0 %v6980
    %7170 = vmatprep.subr.bf16.mxu0 %v6985
    %7171 = vmatpush1.bf16.msra.mxu0 %v6984
    %7172 = vmatprep.subr.bf16.mxu0 %v6989
    %7173 = vmatpush1.bf16.msra.mxu0 %v6988
    %7174 = vmatprep.subr.bf16.mxu0 %v6993
    %7175 = vmatpush1.bf16.msra.mxu0 %v6992
    %7176 = vmatprep.subr.bf16.mxu0 %v6997
    %7177 = vmatpush1.bf16.msra.mxu0 %v6996
    %7178 = vmatprep.subr.bf16.mxu0 %v7001
    %7179 = vmatpush1.bf16.msra.mxu0 %v7000
    %7180 = vmatprep.subr.bf16.mxu0 %v7005
    %7181 = vmatpush1.bf16.msra.mxu0 %v7004
    %7182 = vmatprep.subr.bf16.mxu0 %v7009
    %7183 = vmatpush1.bf16.msra.mxu0 %v7008
    %7184 = vmatprep.subr.bf16.mxu0 %v7013
    %7185 = vmatpush1.bf16.msra.mxu0 %v7012
    %7186 = vmatprep.subr.bf16.mxu0 %v7017
    %7187 = vmatpush1.bf16.msra.mxu0 %v7016
    %7188 = vmatprep.subr.bf16.mxu0 %v7021
    %7189 = vmatpush1.bf16.msra.mxu0 %v7020
    %7190 = vmatprep.mubr.bf16.mxu0 %v7136
    %7191 = vmatmul.mubr.bf16.gmra.mrb[0].mxu0 %v7135
    %v7192 = vpop.f32.mrb[0].mxu0
    %v7193 = vadd.f32 %v7141, %v7192
    %v7194 = vpop.f32.mrb[0].mxu0
    %v7195 = vadd.f32 %v7145, %v7194
    %v7196 = vpop.f32.mrb[0].mxu0
    %v7197 = vpop.f32.mrb[0].mxu0
    %7198 = vdwg.mxu0
    %7199 = vmatprep.subr.bf16.mxu0 %v6963
    %7200 = vmatpush1.bf16.msra.mxu0 %v6962
    %7201 = vmatprep.subr.bf16.mxu0 %v6967
    %7202 = vmatpush1.bf16.msra.mxu0 %v6966
    %7203 = vmatprep.subr.bf16.mxu0 %v6971
    %7204 = vmatpush1.bf16.msra.mxu0 %v6970
    %7205 = vmatprep.subr.bf16.mxu0 %v6975
    %7206 = vmatpush1.bf16.msra.mxu0 %v6974
    %7207 = vmatprep.subr.bf16.mxu0 %v6979
    %7208 = vmatpush1.bf16.msra.mxu0 %v6978
    %7209 = vmatprep.subr.bf16.mxu0 %v6983
    %7210 = vmatpush1.bf16.msra.mxu0 %v6982
    %7211 = vmatprep.subr.bf16.mxu0 %v6987
    %7212 = vmatpush1.bf16.msra.mxu0 %v6986
    %7213 = vmatprep.subr.bf16.mxu0 %v6991
    %7214 = vmatpush1.bf16.msra.mxu0 %v6990
    %7215 = vmatprep.subr.bf16.mxu0 %v6995
    %7216 = vmatpush1.bf16.msra.mxu0 %v6994
    %7217 = vmatprep.subr.bf16.mxu0 %v6999
    %7218 = vmatpush1.bf16.msra.mxu0 %v6998
    %7219 = vmatprep.subr.bf16.mxu0 %v7003
    %7220 = vmatpush1.bf16.msra.mxu0 %v7002
    %7221 = vmatprep.subr.bf16.mxu0 %v7007
    %7222 = vmatpush1.bf16.msra.mxu0 %v7006
    %7223 = vmatprep.subr.bf16.mxu0 %v7011
    %7224 = vmatpush1.bf16.msra.mxu0 %v7010
    %7225 = vmatprep.subr.bf16.mxu0 %v7015
    %7226 = vmatpush1.bf16.msra.mxu0 %v7014
    %7227 = vmatprep.subr.bf16.mxu0 %v7019
    %7228 = vmatpush1.bf16.msra.mxu0 %v7018
    %7229 = vmatprep.subr.bf16.mxu0 %v7023
    %7230 = vmatpush1.bf16.msra.mxu0 %v7022
    %7231 = vmatprep.mubr.bf16.mxu0 %v7136
    %7232 = vmatmul.mubr.bf16.gmra.mrb[0].mxu0 %v7135
    %v7233 = vpop.f32.mrb[0].mxu0
    %v7234 = vadd.f32 %v7149, %v7233
    %v7235 = vpop.f32.mrb[0].mxu0
    %v7236 = vadd.f32 %v7153, %v7235
    %v7237 = vpop.f32.mrb[0].mxu0
    %v7238 = vpop.f32.mrb[0].mxu0
    %7239 = vdwg.mxu0
    %v7240 = vxor.u32 %v7193, 2147483648
    %v7241 = vmul.f32 %v7240, 1.442695
    %v7242 = vpow.pop %v7241
    %v7243 = vadd.f32 %v7242, 1.0
    %v7244 = vrcp.pop %v7243
    %v7245 = vmul.f32 1.0, %v7244
    %v7246 = vxor.u32 %v7195, 2147483648
    %v7247 = vmul.f32 %v7246, 1.442695
    %v7248 = vpow.pop %v7247
    %v7249 = vadd.f32 %v7248, 1.0
    %v7250 = vrcp.pop %v7249
    %v7251 = vmul.f32 1.0, %v7250
    %v7252 = vtanh.pop %v7234
    %v7253 = vxor.u32 %v7236, 2147483648
    %v7254 = vmul.f32 %v7253, 1.442695
    %v7255 = vpow.pop %v7254
    %v7256 = vadd.f32 %v7255, 1.0
    %v7257 = vrcp.pop %v7256
    %v7258 = vmul.f32 1.0, %v7257
    %v7259 = vmul.f32 %v7251, 0.0
    %v7260 = vmul.f32 %v7245, %v7252
    %v7261 = vadd.f32 %v7259, %v7260
    %v7262 = vtanh.pop %v7261
    %v7263 = vmul.f32 %v7258, %v7262
    %7264 = vmatprep.subr.bf16.mxu0 %v6929
    %7265 = vmatpush1.bf16.msra.mxu0 %v6928
    %7266 = vmatprep.subr.bf16.mxu0 %v6933
    %7267 = vmatpush1.bf16.msra.mxu0 %v6932
    %7268 = vmatprep.subr.bf16.mxu0 %v6937
    %7269 = vmatpush1.bf16.msra.mxu0 %v6936
    %7270 = vmatprep.subr.bf16.mxu0 %v6941
    %7271 = vmatpush1.bf16.msra.mxu0 %v6940
    %7272 = vmatprep.subr.bf16.mxu0 %v6945
    %7273 = vmatpush1.bf16.msra.mxu0 %v6944
    %7274 = vmatprep.subr.bf16.mxu0 %v6949
    %7275 = vmatpush1.bf16.msra.mxu0 %v6948
    %7276 = vmatprep.subr.bf16.mxu0 %v6953
    %7277 = vmatpush1.bf16.msra.mxu0 %v6952
    %7278 = vmatprep.subr.bf16.mxu0 %v6957
    %7279 = vmatpush1.bf16.msra.mxu0 %v6956
    %7280 = vmatprep.subr.bf16.mxu0 0
    %7281 = vmatpush1.bf16.msra.mxu0 0
    %7282 = vmatprep.subr.bf16.mxu0 0
    %7283 = vmatpush1.bf16.msra.mxu0 0
    %7284 = vmatprep.subr.bf16.mxu0 0
    %7285 = vmatpush1.bf16.msra.mxu0 0
    %7286 = vmatprep.subr.bf16.mxu0 0
    %7287 = vmatpush1.bf16.msra.mxu0 0
    %7288 = vmatprep.subr.bf16.mxu0 0
    %7289 = vmatpush1.bf16.msra.mxu0 0
    %7290 = vmatprep.subr.bf16.mxu0 0
    %7291 = vmatpush1.bf16.msra.mxu0 0
    %7292 = vmatprep.subr.bf16.mxu0 0
    %7293 = vmatpush1.bf16.msra.mxu0 0
    %7294 = vmatprep.subr.bf16.mxu0 0
    %7295 = vmatpush1.bf16.msra.mxu0 0
    %7296 = vmatprep.mubr.bf16.mxu0 0
    %7297 = vmatmul.mubr.bf16.gmra.mrb[0].mxu0 %v7135
    %v7298 = vpop.f32.mrb[0].mxu0
    %v7299 = vadd.f32 0.0, %v7298
    %v7300 = vpop.f32.mrb[0].mxu0
    %v7301 = vadd.f32 0.0, %v7300
    %v7302 = vpop.f32.mrb[0].mxu0
    %v7303 = vpop.f32.mrb[0].mxu0
    %7304 = vdwg.mxu0
    %7305 = vmatprep.subr.bf16.mxu0 %v6931
    %7306 = vmatpush1.bf16.msra.mxu0 %v6930
    %7307 = vmatprep.subr.bf16.mxu0 %v6935
    %7308 = vmatpush1.bf16.msra.mxu0 %v6934
    %7309 = vmatprep.subr.bf16.mxu0 %v6939
    %7310 = vmatpush1.bf16.msra.mxu0 %v6938
    %7311 = vmatprep.subr.bf16.mxu0 %v6943
    %7312 = vmatpush1.bf16.msra.mxu0 %v6942
    %7313 = vmatprep.subr.bf16.mxu0 %v6947
    %7314 = vmatpush1.bf16.msra.mxu0 %v6946
    %7315 = vmatprep.subr.bf16.mxu0 %v6951
    %7316 = vmatpush1.bf16.msra.mxu0 %v6950
    %7317 = vmatprep.subr.bf16.mxu0 %v6955
    %7318 = vmatpush1.bf16.msra.mxu0 %v6954
    %7319 = vmatprep.subr.bf16.mxu0 %v6959
    %7320 = vmatpush1.bf16.msra.mxu0 %v6958
    %7321 = vmatprep.subr.bf16.mxu0 0
    %7322 = vmatpush1.bf16.msra.mxu0 0
    %7323 = vmatprep.subr.bf16.mxu0 0
    %7324 = vmatpush1.bf16.msra.mxu0 0
    %7325 = vmatprep.subr.bf16.mxu0 0
    %7326 = vmatpush1.bf16.msra.mxu0 0
    %7327 = vmatprep.subr.bf16.mxu0 0
    %7328 = vmatpush1.bf16.msra.mxu0 0
    %7329 = vmatprep.subr.bf16.mxu0 0
    %7330 = vmatpush1.bf16.msra.mxu0 0
    %7331 = vmatprep.subr.bf16.mxu0 0
    %7332 = vmatpush1.bf16.msra.mxu0 0
    %7333 = vmatprep.subr.bf16.mxu0 0
    %7334 = vmatpush1.bf16.msra.mxu0 0
    %7335 = vmatprep.subr.bf16.mxu0 0
    %7336 = vmatpush1.bf16.msra.mxu0 0
    %7337 = vmatprep.mubr.bf16.mxu0 0
    %7338 = vmatmul.mubr.bf16.gmra.mrb[0].mxu0 %v7135
    %v7339 = vpop.f32.mrb[0].mxu0
    %v7340 = vadd.f32 0.0, %v7339
    %v7341 = vpop.f32.mrb[0].mxu0
    %v7342 = vadd.f32 0.0, %v7341
    %v7343 = vpop.f32.mrb[0].mxu0
    %v7344 = vpop.f32.mrb[0].mxu0
    %7345 = vdwg.mxu0
    %v7350 = vrot.slane %v7299, 7
    %v7351 = vrot.slane %v7301, 7
    %v7352 = vrot.slane %v7340, 7
    %v7353 = vrot.slane %v7342, 7
    %v7358 = vadd.f32 %v6881, %v7350
    %v7359 = vadd.f32 %v6883, %v7351
    %v7360 = vadd.f32 %v6922, %v7352
    %v7361 = vadd.f32 %v6924, %v7353
    %v7362 = vxor.u32 %v7358, 2147483648
    %v7363 = vmul.f32 %v7362, 1.442695
    %v7364 = vpow.pop %v7363
    %v7365 = vadd.f32 %v7364, 1.0
    %v7366 = vrcp.pop %v7365
    %v7367 = vmul.f32 1.0, %v7366
    %v7368 = vxor.u32 %v7359, 2147483648
    %v7369 = vmul.f32 %v7368, 1.442695
    %v7370 = vpow.pop %v7369
    %v7371 = vadd.f32 %v7370, 1.0
    %v7372 = vrcp.pop %v7371
    %v7373 = vmul.f32 1.0, %v7372
    %v7374 = vtanh.pop %v7360
    %v7375 = vxor.u32 %v7361, 2147483648
    %v7376 = vmul.f32 %v7375, 1.442695
    %v7377 = vpow.pop %v7376
    %v7378 = vadd.f32 %v7377, 1.0
    %v7379 = vrcp.pop %v7378
    %v7380 = vmul.f32 1.0, %v7379
    %v7382 = vrot.slane %v7132, 7
    %v7384 = vmul.f32 %v7373, %v7382
    %v7385 = vmul.f32 %v7367, %v7374
    %v7386 = vadd.f32 %v7384, %v7385
    %v7387 = vtanh.pop %v7386
    %v7388 = vmul.f32 %v7380, %v7387
    %v7390 = vrot.slane %v7263, 7
    %v7392 = vpack.c.bf16 %v7388, %v7388
    %v7393 = vpack.c.bf16 %v7390, %v7390
    %v7395 = vshrl.u32 %v7392, 16
    %v7398 = vshrl.u32 %v7393, 16
    %7402 = vmatprep.subr.bf16.mxu0 %v6961
    %7403 = vmatpush1.bf16.msra.mxu0 %v6960
    %7404 = vmatprep.subr.bf16.mxu0 %v6965
    %7405 = vmatpush1.bf16.msra.mxu0 %v6964
    %7406 = vmatprep.subr.bf16.mxu0 %v6969
    %7407 = vmatpush1.bf16.msra.mxu0 %v6968
    %7408 = vmatprep.subr.bf16.mxu0 %v6973
    %7409 = vmatpush1.bf16.msra.mxu0 %v6972
    %7410 = vmatprep.subr.bf16.mxu0 %v6977
    %7411 = vmatpush1.bf16.msra.mxu0 %v6976
    %7412 = vmatprep.subr.bf16.mxu0 %v6981
    %7413 = vmatpush1.bf16.msra.mxu0 %v6980
    %7414 = vmatprep.subr.bf16.mxu0 %v6985
    %7415 = vmatpush1.bf16.msra.mxu0 %v6984
    %7416 = vmatprep.subr.bf16.mxu0 %v6989
    %7417 = vmatpush1.bf16.msra.mxu0 %v6988
    %7418 = vmatprep.subr.bf16.mxu0 %v6993
    %7419 = vmatpush1.bf16.msra.mxu0 %v6992
    %7420 = vmatprep.subr.bf16.mxu0 %v6997
    %7421 = vmatpush1.bf16.msra.mxu0 %v6996
    %7422 = vmatprep.subr.bf16.mxu0 %v7001
    %7423 = vmatpush1.bf16.msra.mxu0 %v7000
    %7424 = vmatprep.subr.bf16.mxu0 %v7005
    %7425 = vmatpush1.bf16.msra.mxu0 %v7004
    %7426 = vmatprep.subr.bf16.mxu0 %v7009
    %7427 = vmatpush1.bf16.msra.mxu0 %v7008
    %7428 = vmatprep.subr.bf16.mxu0 %v7013
    %7429 = vmatpush1.bf16.msra.mxu0 %v7012
    %7430 = vmatprep.subr.bf16.mxu0 %v7017
    %7431 = vmatpush1.bf16.msra.mxu0 %v7016
    %7432 = vmatprep.subr.bf16.mxu0 %v7021
    %7433 = vmatpush1.bf16.msra.mxu0 %v7020
    %7434 = vmatprep.mubr.bf16.mxu0 %v7398
    %7435 = vmatmul.mubr.bf16.gmra.mrb[0].mxu0 %v7395
    %v7436 = vpop.f32.mrb[0].mxu0
    %v7437 = vadd.f32 %v7141, %v7436
    %v7438 = vpop.f32.mrb[0].mxu0
    %v7439 = vadd.f32 %v7145, %v7438
    %v7440 = vpop.f32.mrb[0].mxu0
    %v7441 = vpop.f32.mrb[0].mxu0
    %7442 = vdwg.mxu0
    %7443 = vmatprep.subr.bf16.mxu0 %v6963
    %7444 = vmatpush1.bf16.msra.mxu0 %v6962
    %7445 = vmatprep.subr.bf16.mxu0 %v6967
    %7446 = vmatpush1.bf16.msra.mxu0 %v6966
    %7447 = vmatprep.subr.bf16.mxu0 %v6971
    %7448 = vmatpush1.bf16.msra.mxu0 %v6970
    %7449 = vmatprep.subr.bf16.mxu0 %v6975
    %7450 = vmatpush1.bf16.msra.mxu0 %v6974
    %7451 = vmatprep.subr.bf16.mxu0 %v6979
    %7452 = vmatpush1.bf16.msra.mxu0 %v6978
    %7453 = vmatprep.subr.bf16.mxu0 %v6983
    %7454 = vmatpush1.bf16.msra.mxu0 %v6982
    %7455 = vmatprep.subr.bf16.mxu0 %v6987
    %7456 = vmatpush1.bf16.msra.mxu0 %v6986
    %7457 = vmatprep.subr.bf16.mxu0 %v6991
    %7458 = vmatpush1.bf16.msra.mxu0 %v6990
    %7459 = vmatprep.subr.bf16.mxu0 %v6995
    %7460 = vmatpush1.bf16.msra.mxu0 %v6994
    %7461 = vmatprep.subr.bf16.mxu0 %v6999
    %7462 = vmatpush1.bf16.msra.mxu0 %v6998
    %7463 = vmatprep.subr.bf16.mxu0 %v7003
    %7464 = vmatpush1.bf16.msra.mxu0 %v7002
    %7465 = vmatprep.subr.bf16.mxu0 %v7007
    %7466 = vmatpush1.bf16.msra.mxu0 %v7006
    %7467 = vmatprep.subr.bf16.mxu0 %v7011
    %7468 = vmatpush1.bf16.msra.mxu0 %v7010
    %7469 = vmatprep.subr.bf16.mxu0 %v7015
    %7470 = vmatpush1.bf16.msra.mxu0 %v7014
    %7471 = vmatprep.subr.bf16.mxu0 %v7019
    %7472 = vmatpush1.bf16.msra.mxu0 %v7018
    %7473 = vmatprep.subr.bf16.mxu0 %v7023
    %7474 = vmatpush1.bf16.msra.mxu0 %v7022
    %7475 = vmatprep.mubr.bf16.mxu0 %v7398
    %7476 = vmatmul.mubr.bf16.gmra.mrb[0].mxu0 %v7395
    %v7477 = vpop.f32.mrb[0].mxu0
    %v7478 = vadd.f32 %v7149, %v7477
    %v7479 = vpop.f32.mrb[0].mxu0
    %v7480 = vadd.f32 %v7153, %v7479
    %v7481 = vpop.f32.mrb[0].mxu0
    %v7482 = vpop.f32.mrb[0].mxu0
    %7483 = vdwg.mxu0
    %v7484 = vxor.u32 %v7437, 2147483648
    %v7485 = vmul.f32 %v7484, 1.442695
    %v7486 = vpow.pop %v7485
    %v7487 = vadd.f32 %v7486, 1.0
    %v7488 = vrcp.pop %v7487
    %v7489 = vmul.f32 1.0, %v7488
    %v7490 = vxor.u32 %v7439, 2147483648
    %v7491 = vmul.f32 %v7490, 1.442695
    %v7492 = vpow.pop %v7491
    %v7493 = vadd.f32 %v7492, 1.0
    %v7494 = vrcp.pop %v7493
    %v7495 = vmul.f32 1.0, %v7494
    %v7496 = vtanh.pop %v7478
    %v7497 = vxor.u32 %v7480, 2147483648
    %v7498 = vmul.f32 %v7497, 1.442695
    %v7499 = vpow.pop %v7498
    %v7500 = vadd.f32 %v7499, 1.0
    %v7501 = vrcp.pop %v7500
    %v7502 = vmul.f32 1.0, %v7501
    %v7503 = vmul.f32 %v7495, %v7261
    %v7504 = vmul.f32 %v7489, %v7496
    %v7505 = vadd.f32 %v7503, %v7504
    %v7506 = vtanh.pop %v7505
    %v7507 = vmul.f32 %v7502, %v7506
    %v7509 = vrot.slane %v7507, 7
    %vm7511 = vcmask 1040384
    %v7512 = vsel %vm7511, %v7263, %v7509
    %v7513 = vlaneseq
    %v7514 = vshrl.u32 %v7513, 7
    %v7515 = vadd.s32 %v7514, 8
    %vm7516 = vcmp.eq.s32.totalorder %v7514, %v1401
    %vm7517 = vcmp.eq.s32.totalorder %v7515, %v1401
    %v7518 = vsel %vm7516, 1, 0
    %v7519 = vsel %vm7517, 1, 0
    %v7520 = vcvt.s32.f32 %v7518
    %v7521 = vcvt.s32.f32 %v7519
    %v7522 = vld [vmem:[%s59] sm:$0x3]
    %vm7523 = vcmask 89088
    %v7525 = vsel %vm7523, %v7522, 0
    %vm7527 = vcmask 1042432
    %v7529 = vsel %vm7527, %v7521, 0
    %7531 = vmatprep.subr.mxu0 0.0
    %7532 = vmatpush1.msra.mxu0 %v7520
    %7533 = vmatprep.subr.mxu0 0.0
    %7534 = vmatpush1.msra.mxu0 %v7529
    %7535 = vmatprep.subr.mxu0 0.0
    %7536 = vmatpush1.msra.mxu0 0.0
    %7537 = vmatprep.subr.mxu0 0.0
    %7538 = vmatpush1.msra.mxu0 0.0
    %7539 = vmatprep.subr.mxu0 0.0
    %7540 = vmatpush1.msra.mxu0 0.0
    %7541 = vmatprep.subr.mxu0 0.0
    %7542 = vmatpush1.msra.mxu0 0.0
    %7543 = vmatprep.subr.mxu0 0.0
    %7544 = vmatpush1.msra.mxu0 0.0
    %7545 = vmatprep.subr.mxu0 0.0
    %7546 = vmatpush1.msra.mxu0 0.0
    %7547 = vmatprep.subr.mxu0 0.0
    %7548 = vmatpush1.msra.mxu0 0.0
    %7549 = vmatprep.subr.mxu0 0.0
    %7550 = vmatpush1.msra.mxu0 0.0
    %7551 = vmatprep.subr.mxu0 0.0
    %7552 = vmatpush1.msra.mxu0 0.0
    %7553 = vmatprep.subr.mxu0 0.0
    %7554 = vmatpush1.msra.mxu0 0.0
    %7555 = vmatprep.subr.mxu0 0.0
    %7556 = vmatpush1.msra.mxu0 0.0
    %7557 = vmatprep.subr.mxu0 0.0
    %7558 = vmatpush1.msra.mxu0 0.0
    %7559 = vmatprep.subr.mxu0 0.0
    %7560 = vmatpush1.msra.mxu0 0.0
    %7561 = vmatprep.subr.mxu0 0.0
    %7562 = vmatpush1.msra.mxu0 0.0
    %7563 = vmatprep.subr.mxu0 0.0
    %7564 = vmatpush1.msra.mxu0 0.0
    %7565 = vmatprep.subr.mxu0 0.0
    %7566 = vmatpush1.msra.mxu0 0.0
    %7567 = vmatprep.subr.mxu0 0.0
    %7568 = vmatpush1.msra.mxu0 0.0
    %7569 = vmatprep.subr.mxu0 0.0
    %7570 = vmatpush1.msra.mxu0 0.0
    %7571 = vmatprep.subr.mxu0 0.0
    %7572 = vmatpush1.msra.mxu0 0.0
    %7573 = vmatprep.subr.mxu0 0.0
    %7574 = vmatpush1.msra.mxu0 0.0
    %7575 = vmatprep.subr.mxu0 0.0
    %7576 = vmatpush1.msra.mxu0 0.0
    %7577 = vmatprep.subr.mxu0 0.0
    %7578 = vmatpush1.msra.mxu0 0.0
    %7579 = vmatprep.subr.mxu0 0.0
    %7580 = vmatpush1.msra.mxu0 0.0
    %7581 = vmatprep.subr.mxu0 0.0
    %7582 = vmatpush1.msra.mxu0 0.0
    %7583 = vmatprep.subr.mxu0 0.0
    %7584 = vmatpush1.msra.mxu0 0.0
    %7585 = vmatprep.subr.mxu0 0.0
    %7586 = vmatpush1.msra.mxu0 0.0
    %7587 = vmatprep.subr.mxu0 0.0
    %7588 = vmatpush1.msra.mxu0 0.0
    %7589 = vmatprep.subr.mxu0 0.0
    %7590 = vmatpush1.msra.mxu0 0.0
    %7591 = vmatprep.subr.mxu0 0.0
    %7592 = vmatpush1.msra.mxu0 0.0
    %7593 = vmatprep.subr.mxu0 0.0
    %7594 = vmatpush1.msra.mxu0 0.0
    %7595 = vmatprep.mubr.f32.mxu0 0.0
    %7596 = vmatmul.mubr.f32.gmra.mrb[0].mxu0 %v7525
    %v7597 = vpop.f32.mrb[0].mxu0
    %v7598 = vadd.f32 0.0, %v7597
    %v7599 = vpop.f32.mrb[0].mxu0
    %7600 = vdwg.mxu0
    %v7601 = vadd.f32 %v7512, %v7598
    %vm7602 = vcmp.lt.s32.totalorder %v1401, 11
    %v7603 = vsel %vm7602, 1, 0
    %v7604 = vcvt.s32.f32 %v7603
    %v7605 = vpack.c.bf16 %v7601, %v7601
    %v7606 = vld [vmem:[#allocation5] sm:$0xff]
    %v7607 = vld [vmem:[#allocation5 + $0x8] sm:$0xff]
    %v7608 = vld [vmem:[#allocation5 + $0x10] sm:$0xff]
    %v7609 = vld [vmem:[#allocation5 + $0x18] sm:$0xff]
    %v7610 = vld [vmem:[#allocation5 + $0x20] sm:$0xff]
    %v7611 = vld [vmem:[#allocation5 + $0x28] sm:$0xff]
    %v7612 = vld [vmem:[#allocation5 + $0x30] sm:$0xff]
    %v7613 = vld [vmem:[#allocation5 + $0x38] sm:$0xff]
    %v7614 = vld [vmem:[#allocation36] sm:$0x1]
    %v7616 = vlaneseq
    %v7617 = vshrl.u32 %v7616, 7
    %v7618 = vsub.s32 0, %v7617
    %v7619 = vrot.slane %v7614, %v7618
    %7621 = vmatprep.subr.bf16.mxu0 0
    %7622 = vmatpush1.bf16.msra.mxu0 %v7606
    %7623 = vmatprep.subr.bf16.mxu0 0
    %7624 = vmatpush1.bf16.msra.mxu0 %v7607
    %7625 = vmatprep.subr.bf16.mxu0 0
    %7626 = vmatpush1.bf16.msra.mxu0 %v7608
    %7627 = vmatprep.subr.bf16.mxu0 0
    %7628 = vmatpush1.bf16.msra.mxu0 %v7609
    %7629 = vmatprep.subr.bf16.mxu0 0
    %7630 = vmatpush1.bf16.msra.mxu0 %v7610
    %7631 = vmatprep.subr.bf16.mxu0 0
    %7632 = vmatpush1.bf16.msra.mxu0 %v7611
    %7633 = vmatprep.subr.bf16.mxu0 0
    %7634 = vmatpush1.bf16.msra.mxu0 %v7612
    %7635 = vmatprep.subr.bf16.mxu0 0
    %7636 = vmatpush1.bf16.msra.mxu0 %v7613
    %7637 = vmatprep.subr.bf16.mxu0 0
    %7638 = vmatpush1.bf16.msra.mxu0 0
    %7639 = vmatprep.subr.bf16.mxu0 0
    %7640 = vmatpush1.bf16.msra.mxu0 0
    %7641 = vmatprep.subr.bf16.mxu0 0
    %7642 = vmatpush1.bf16.msra.mxu0 0
    %7643 = vmatprep.subr.bf16.mxu0 0
    %7644 = vmatpush1.bf16.msra.mxu0 0
    %7645 = vmatprep.subr.bf16.mxu0 0
    %7646 = vmatpush1.bf16.msra.mxu0 0
    %7647 = vmatprep.subr.bf16.mxu0 0
    %7648 = vmatpush1.bf16.msra.mxu0 0
    %7649 = vmatprep.subr.bf16.mxu0 0
    %7650 = vmatpush1.bf16.msra.mxu0 0
    %7651 = vmatprep.subr.bf16.mxu0 0
    %7652 = vmatpush1.bf16.msra.mxu0 0
    %7653 = vmatprep.mubr.bf16.mxu0 0
    %7654 = vmatmul.mubr.bf16.gmra.mrb[0].mxu0 %v7605
    %v7655 = vpop.f32.mrb[0].mxu0
    %v7656 = vadd.f32 %v7619, %v7655
    %v7657 = vpop.f32.mrb[0].mxu0
    %v7658 = vpop.f32.mrb[0].mxu0
    %v7659 = vpop.f32.mrb[0].mxu0
    %7660 = vdwg.mxu0
    %v7661 = vld [vmem:[#allocation37] sm:$0x1]
    %v7662 = vld [vmem:[#allocation39] sm:$0x1]
    %v7663 = vmul.f32 %v7656, %v7604
    %vm7664 = vcmask 1041408
    %v7665 = vsel %vm7664, %v7663, 0.0
    %7666 = vadd.xlane.f32.xlu0 %v7665
    %v7667 = vpop.xlane.xlu0 %7666
    %v7668 = vmul.f32 %v7667, 0.09090909
    %v7669 = vsub.f32 %v7656, %v7668
    %v7670 = vmul.f32 %v7669, %v7604
    %v7671 = vmul.f32 %v7670, %v7670
    %v7672 = vsel %vm7664, %v7671, 0.0
    %7673 = vadd.xlane.f32.xlu0 %v7672
    %v7674 = vpop.xlane.xlu0 %7673
    %v7675 = vmul.f32 %v7674, 0.09090909
    %v7676 = vadd.f32 %v7675, 1e-05
    %v7677 = vrsqrt.pop %v7676
    %v7678 = vmul.f32 %v7670, %v7677
    %v7680 = vlaneseq
    %v7681 = vshrl.u32 %v7680, 7
    %v7682 = vsub.s32 0, %v7681
    %v7683 = vrot.slane %v7661, %v7682
    %v7685 = vmul.f32 %v7678, %v7683
    %v7687 = vlaneseq
    %v7688 = vshrl.u32 %v7687, 7
    %v7689 = vsub.s32 0, %v7688
    %v7690 = vrot.slane %v7662, %v7689
    %v7692 = vadd.f32 %v7685, %v7690
    %vm7693 = vcmp.ge.f32.partialorder %v7692, 0.0
    %v7694 = vmul.f32 %v7692, 0.01
    %v7695 = vsel %vm7693, %v7692, %v7694
    %v7696 = vpack.c.bf16 %v7695, %v7695
    %s7697 = scalar_lea.vmem [#allocation5], 64
    %v7698 = vld [vmem:[%s7697] sm:$0xff]
    %v7699 = vld [vmem:[%s7697 + $0x8] sm:$0xff]
    %v7700 = vld [vmem:[%s7697 + $0x10] sm:$0xff]
    %v7701 = vld [vmem:[%s7697 + $0x18] sm:$0xff]
    %v7702 = vld [vmem:[%s7697 + $0x20] sm:$0xff]
    %v7703 = vld [vmem:[%s7697 + $0x28] sm:$0xff]
    %v7704 = vld [vmem:[%s7697 + $0x30] sm:$0xff]
    %v7705 = vld [vmem:[%s7697 + $0x38] sm:$0xff]
    %s7706 = scalar_lea.vmem [#allocation36], 1
    %v7707 = vld [vmem:[%s7706] sm:$0x1]
    %v7709 = vlaneseq
    %v7710 = vshrl.u32 %v7709, 7
    %v7711 = vsub.s32 0, %v7710
    %v7712 = vrot.slane %v7707, %v7711
    %7714 = vmatprep.subr.bf16.mxu0 0
    %7715 = vmatpush1.bf16.msra.mxu0 %v7698
    %7716 = vmatprep.subr.bf16.mxu0 0
    %7717 = vmatpush1.bf16.msra.mxu0 %v7699
    %7718 = vmatprep.subr.bf16.mxu0 0
    %7719 = vmatpush1.bf16.msra.mxu0 %v7700
    %7720 = vmatprep.subr.bf16.mxu0 0
    %7721 = vmatpush1.bf16.msra.mxu0 %v7701
    %7722 = vmatprep.subr.bf16.mxu0 0
    %7723 = vmatpush1.bf16.msra.mxu0 %v7702
    %7724 = vmatprep.subr.bf16.mxu0 0
    %7725 = vmatpush1.bf16.msra.mxu0 %v7703
    %7726 = vmatprep.subr.bf16.mxu0 0
    %7727 = vmatpush1.bf16.msra.mxu0 %v7704
    %7728 = vmatprep.subr.bf16.mxu0 0
    %7729 = vmatpush1.bf16.msra.mxu0 %v7705
    %7730 = vmatprep.subr.bf16.mxu0 0
    %7731 = vmatpush1.bf16.msra.mxu0 0
    %7732 = vmatprep.subr.bf16.mxu0 0
    %7733 = vmatpush1.bf16.msra.mxu0 0
    %7734 = vmatprep.subr.bf16.mxu0 0
    %7735 = vmatpush1.bf16.msra.mxu0 0
    %7736 = vmatprep.subr.bf16.mxu0 0
    %7737 = vmatpush1.bf16.msra.mxu0 0
    %7738 = vmatprep.subr.bf16.mxu0 0
    %7739 = vmatpush1.bf16.msra.mxu0 0
    %7740 = vmatprep.subr.bf16.mxu0 0
    %7741 = vmatpush1.bf16.msra.mxu0 0
    %7742 = vmatprep.subr.bf16.mxu0 0
    %7743 = vmatpush1.bf16.msra.mxu0 0
    %7744 = vmatprep.subr.bf16.mxu0 0
    %7745 = vmatpush1.bf16.msra.mxu0 0
    %7746 = vmatprep.mubr.bf16.mxu0 0
    %7747 = vmatmul.mubr.bf16.gmra.mrb[0].mxu0 %v7696
    %v7748 = vpop.f32.mrb[0].mxu0
    %v7749 = vadd.f32 %v7712, %v7748
    %v7750 = vpop.f32.mrb[0].mxu0
    %v7751 = vpop.f32.mrb[0].mxu0
    %v7752 = vpop.f32.mrb[0].mxu0
    %7753 = vdwg.mxu0
    %s7754 = scalar_lea.vmem [#allocation37], 1
    %v7755 = vld [vmem:[%s7754] sm:$0x1]
    %s7756 = scalar_lea.vmem [#allocation39], 1
    %v7757 = vld [vmem:[%s7756] sm:$0x1]
    %v7758 = vmul.f32 %v7749, %v7604
    %v7759 = vsel %vm7664, %v7758, 0.0
    %7760 = vadd.xlane.f32.xlu0 %v7759
    %v7761 = vpop.xlane.xlu0 %7760
    %v7762 = vmul.f32 %v7761, 0.09090909
    %v7763 = vsub.f32 %v7749, %v7762
    %v7764 = vmul.f32 %v7763, %v7604
    %v7765 = vmul.f32 %v7764, %v7764
    %v7766 = vsel %vm7664, %v7765, 0.0
    %7767 = vadd.xlane.f32.xlu0 %v7766
    %v7768 = vpop.xlane.xlu0 %7767
    %v7769 = vmul.f32 %v7768, 0.09090909
    %v7770 = vadd.f32 %v7769, 1e-05
    %v7771 = vrsqrt.pop %v7770
    %v7772 = vmul.f32 %v7764, %v7771
    %v7774 = vlaneseq
    %v7775 = vshrl.u32 %v7774, 7
    %v7776 = vsub.s32 0, %v7775
    %v7777 = vrot.slane %v7755, %v7776
    %v7779 = vmul.f32 %v7772, %v7777
    %v7781 = vlaneseq
    %v7782 = vshrl.u32 %v7781, 7
    %v7783 = vsub.s32 0, %v7782
    %v7784 = vrot.slane %v7757, %v7783
    %v7786 = vadd.f32 %v7779, %v7784
    %vm7787 = vcmp.ge.f32.partialorder %v7786, 0.0
    %v7788 = vmul.f32 %v7786, 0.01
    %v7789 = vsel %vm7787, %v7786, %v7788
    %v7790 = vpack.c.bf16 %v7789, %v7789
    %s7791 = scalar_lea.vmem [#allocation5], 128
    %v7792 = vld [vmem:[%s7791] sm:$0xff]
    %v7793 = vld [vmem:[%s7791 + $0x8] sm:$0xff]
    %v7794 = vld [vmem:[%s7791 + $0x10] sm:$0xff]
    %v7795 = vld [vmem:[%s7791 + $0x18] sm:$0xff]
    %v7796 = vld [vmem:[%s7791 + $0x20] sm:$0xff]
    %v7797 = vld [vmem:[%s7791 + $0x28] sm:$0xff]
    %v7798 = vld [vmem:[%s7791 + $0x30] sm:$0xff]
    %v7799 = vld [vmem:[%s7791 + $0x38] sm:$0xff]
    %s7800 = scalar_lea.vmem [#allocation36], 2
    %v7801 = vld [vmem:[%s7800] sm:$0x1]
    %v7803 = vlaneseq
    %v7804 = vshrl.u32 %v7803, 7
    %v7805 = vsub.s32 0, %v7804
    %v7806 = vrot.slane %v7801, %v7805
    %7808 = vmatprep.subr.bf16.mxu0 0
    %7809 = vmatpush1.bf16.msra.mxu0 %v7792
    %7810 = vmatprep.subr.bf16.mxu0 0
    %7811 = vmatpush1.bf16.msra.mxu0 %v7793
    %7812 = vmatprep.subr.bf16.mxu0 0
    %7813 = vmatpush1.bf16.msra.mxu0 %v7794
    %7814 = vmatprep.subr.bf16.mxu0 0
    %7815 = vmatpush1.bf16.msra.mxu0 %v7795
    %7816 = vmatprep.subr.bf16.mxu0 0
    %7817 = vmatpush1.bf16.msra.mxu0 %v7796
    %7818 = vmatprep.subr.bf16.mxu0 0
    %7819 = vmatpush1.bf16.msra.mxu0 %v7797
    %7820 = vmatprep.subr.bf16.mxu0 0
    %7821 = vmatpush1.bf16.msra.mxu0 %v7798
    %7822 = vmatprep.subr.bf16.mxu0 0
    %7823 = vmatpush1.bf16.msra.mxu0 %v7799
    %7824 = vmatprep.subr.bf16.mxu0 0
    %7825 = vmatpush1.bf16.msra.mxu0 0
    %7826 = vmatprep.subr.bf16.mxu0 0
    %7827 = vmatpush1.bf16.msra.mxu0 0
    %7828 = vmatprep.subr.bf16.mxu0 0
    %7829 = vmatpush1.bf16.msra.mxu0 0
    %7830 = vmatprep.subr.bf16.mxu0 0
    %7831 = vmatpush1.bf16.msra.mxu0 0
    %7832 = vmatprep.subr.bf16.mxu0 0
    %7833 = vmatpush1.bf16.msra.mxu0 0
    %7834 = vmatprep.subr.bf16.mxu0 0
    %7835 = vmatpush1.bf16.msra.mxu0 0
    %7836 = vmatprep.subr.bf16.mxu0 0
    %7837 = vmatpush1.bf16.msra.mxu0 0
    %7838 = vmatprep.subr.bf16.mxu0 0
    %7839 = vmatpush1.bf16.msra.mxu0 0
    %7840 = vmatprep.mubr.bf16.mxu0 0
    %7841 = vmatmul.mubr.bf16.gmra.mrb[0].mxu0 %v7790
    %v7842 = vpop.f32.mrb[0].mxu0
    %v7843 = vadd.f32 %v7806, %v7842
    %v7844 = vpop.f32.mrb[0].mxu0
    %v7845 = vpop.f32.mrb[0].mxu0
    %v7846 = vpop.f32.mrb[0].mxu0
    %7847 = vdwg.mxu0
    %s7848 = scalar_lea.vmem [#allocation37], 2
    %v7849 = vld [vmem:[%s7848] sm:$0x1]
    %s7850 = scalar_lea.vmem [#allocation39], 2
    %v7851 = vld [vmem:[%s7850] sm:$0x1]
    %v7852 = vmul.f32 %v7843, %v7604
    %v7853 = vsel %vm7664, %v7852, 0.0
    %7854 = vadd.xlane.f32.xlu0 %v7853
    %v7855 = vpop.xlane.xlu0 %7854
    %v7856 = vmul.f32 %v7855, 0.09090909
    %v7857 = vsub.f32 %v7843, %v7856
    %v7858 = vmul.f32 %v7857, %v7604
    %v7859 = vmul.f32 %v7858, %v7858
    %v7860 = vsel %vm7664, %v7859, 0.0
    %7861 = vadd.xlane.f32.xlu0 %v7860
    %v7862 = vpop.xlane.xlu0 %7861
    %v7863 = vmul.f32 %v7862, 0.09090909
    %v7864 = vadd.f32 %v7863, 1e-05
    %v7865 = vrsqrt.pop %v7864
    %v7866 = vmul.f32 %v7858, %v7865
    %v7868 = vlaneseq
    %v7869 = vshrl.u32 %v7868, 7
    %v7870 = vsub.s32 0, %v7869
    %v7871 = vrot.slane %v7849, %v7870
    %v7873 = vmul.f32 %v7866, %v7871
    %v7875 = vlaneseq
    %v7876 = vshrl.u32 %v7875, 7
    %v7877 = vsub.s32 0, %v7876
    %v7878 = vrot.slane %v7851, %v7877
    %v7880 = vadd.f32 %v7873, %v7878
    %vm7881 = vcmp.ge.f32.partialorder %v7880, 0.0
    %v7882 = vmul.f32 %v7880, 0.01
    %v7883 = vsel %vm7881, %v7880, %v7882
    %vm7884 = vcmask 82944
    %7885 = vst.msk [vmem:[#allocation40] sm:$0x3] %vm7884, %v7883
    // Predicated region
    $region321: #{bert_classifier_em_forward.1} parent=1 // pred_check
      _
    $region322: #{bert_classifier_em_forward.1} parent=1 // pred_check_branch
      %7887 = sbr.rel (0) target = $region324
    $region323: #{bert_classifier_em_forward.1} parent=1 // pred_region
      %s7889 = ssub.s32 32, 32
      %7890 = vsyncadd [#allocation9], %s7889
      %s7892 = sshll.u32 [#allocation40], 4
      %s7893 = int_to_ptr.vmem [resolvable:$true] %s7892
      %7895 = dma.vmem_to_hbm [thread:$0]  %s7893, 32, %s69, [#allocation9]
    $region324: #{bert_classifier_em_forward.1} parent=1 // pred_fallthru
      _
    // Predicated region
    $region325: #{bert_classifier_em_forward.1} parent=1 // pred_check
      _
    $region326: #{bert_classifier_em_forward.1} parent=1 // pred_check_branch
      %7897 = sbr.rel (0) target = $region328
    $region327: #{bert_classifier_em_forward.1} parent=1 // pred_region
      %7898 = dma.done [#allocation9], 32
    $region328: #{bert_classifier_em_forward.1} parent=1 // pred_fallthru
      _
    %7899 = vsyncpa [#allocation8], 1
    %7900 = vsyncpa [#allocation11], 1
    %7901 = vsyncpa [#allocation14], 1
    %7902 = vsyncpa [#allocation17], 1
    %7903 = vsyncpa [#allocation20], 1
    %7904 = vsyncpa [#allocation23], 1
    %7905 = vsyncpa [#allocation26], 1
    %7906 = vsyncpa [#allocation29], 1
    %7907 = vsyncpa [#allocation32], 1
    %7908 = vsyncpa [#allocation35], 1
    %7909 = vsyncpa [#allocation38], 1
    %7910 = vsyncpa [#allocation9], 1
  %7911 = vsyncmov [#allocation6]
  %s7912 = vpop.sfrf %7911
  %p7913 = scmp.eq.s32.totalorder %s7912, 0
  %p7914 = pneg %p7913
  %7916 = shalt.err (%p7914)
  %s7917 = scalar_lea.sflag [#allocation6], 1
  %7918 = vsyncmov %s7917
  %s7919 = vpop.sfrf %7918
  %p7920 = scmp.eq.s32.totalorder %s7919, 0
  %p7921 = pneg %p7920
  %7923 = shalt.err (%p7921)
  %s7924 = scalar_lea.sflag [#allocation6], 2
  %7925 = vsyncmov %s7924
  %s7926 = vpop.sfrf %7925
  %p7927 = scmp.eq.s32.totalorder %s7926, 0
  %p7928 = pneg %p7927
  %7930 = shalt.err (%p7928)
  %s7931 = scalar_lea.sflag [#allocation6], 3
  %7932 = vsyncmov %s7931
  %s7933 = vpop.sfrf %7932
  %p7934 = scmp.eq.s32.totalorder %s7933, 0
  %p7935 = pneg %p7934
  %7937 = shalt.err (%p7935)

</llo_original>
